<compile_context>
chip_gen: v7x
topology: tpu7x:2x2x1
jax: 0.10.0
libtpu: 0.0.40
codegen_flags: <defaults>
</compile_context>

<pallas_src>
import functools

import jax
import jax.numpy as jnp
from jax import lax
from jax.experimental import pallas as pl
from jax.experimental.pallas import tpu as pltpu

POOL = 64        # max_pool2d kernel/stride hardcoded in the PyTorch module
_EPS = 1e-12     # l2norm guard (plain PyTorch would NaN on an all-zero row)

# lanes of the per-image (1, 8, 128) output tile
_NUM, _W, _S, _G, _LSE, _MIL = 0, 1, 2, 3, 4, 5


def _transgeo_kernel(grd_ref, sat_ref, gt_ref, lg_ref, ms_ref, part_ref, *,
                     temperature, margin):
    b = pl.program_id(0)                       # image index ("parallel" axis)
    out_lane = lax.broadcasted_iota(jnp.int32, (8, 128), 1)

    # ---- 64x64 max pool of the full heatmap --------------------------------
    gt_nat = gt_ref[0]                         # (H, W), native dtype (bf16 ok)
    h, w = gt_nat.shape
    hp, wp = ms_ref.shape[1], ms_ref.shape[2]

    # Row pool: split the sublane axis (64 is a multiple of the native sublane
    # tiling) and reduce.  This touches the full slab and stays in bf16.
    pr = jnp.max(gt_nat.reshape(hp, POOL, w), axis=1)              # (hp, W)
    # Column pool of the tiny (hp, W) remainder.  The transpose formulation is
    # kept (instead of reshaping the lane axis to (hp, wp, POOL)) because a
    # lane-splitting reshape risks an unsupported Mosaic lowering; this is a
    # one-shot ~50-vreg op on the otherwise-idle XLU slot.
    prf = pr.astype(jnp.float32)
    labels = jnp.max(prf.T.reshape(wp, POOL, hp), axis=1).T        # (hp, wp)

    # ---- L_sim partials: log-softmax form, per-image denominator ------------
    z = ms_ref[0].astype(jnp.float32) * (1.0 / temperature)        # (hp, wp)
    zmax = jnp.max(z, keepdims=True)
    inner = z - (zmax + jnp.log(jnp.sum(jnp.exp(z - zmax), keepdims=True)))
    msk = labels > 0.01
    num = jnp.sum(jnp.where(msk, inner * labels, 0.0), keepdims=True)   # (1,1)
    wsum = jnp.sum(jnp.where(msk, labels, 0.0), keepdims=True)          # (1,1)

    # ---- L_out partials: CE(logits, gt/sum(gt)) = lse - sum(gt*lg)/sum(gt) --
    gt = gt_nat.astype(jnp.float32)
    lg = lg_ref[0].astype(jnp.float32)
    s_sum = jnp.sum(gt * lg, keepdims=True)                             # (1,1)
    g_sum = jnp.sum(gt, keepdims=True)                                  # (1,1)
    m = jnp.max(lg, keepdims=True)
    lse = m + jnp.log(jnp.sum(jnp.exp(lg - m), keepdims=True))          # (1,1)

    # One lane-dense write of this image's partial scalars.
    part_ref[0] = (jnp.where(out_lane == _NUM, num, 0.0)
                   + jnp.where(out_lane == _W, wsum, 0.0)
                   + jnp.where(out_lane == _S, s_sum, 0.0)
                   + jnp.where(out_lane == _G, g_sum, 0.0)
                   + jnp.where(out_lane == _LSE, lse, 0.0))

    # ---- L_mil (tiny B x D work): computed once, on the step owning image 0 -
    @pl.when(b == 0)
    def _():
        g = grd_ref[...].astype(jnp.float32)
        s = sat_ref[...].astype(jnp.float32)
        g = g * lax.rsqrt(jnp.sum(g * g, axis=1, keepdims=True) + _EPS)
        s = s * lax.rsqrt(jnp.sum(s * s, axis=1, keepdims=True) + _EPS)
        scores = lax.dot_general(g, s, (((1,), (1,)), ((), ())),
                                 preferred_element_type=jnp.float32)    # (B,B)
        n = scores.shape[0]
        rows = lax.broadcasted_iota(jnp.int32, (n, n), 0)
        cols = lax.broadcasted_iota(jnp.int32, (n, n), 1)
        eye = rows == cols
        diag = jnp.where(eye, scores, 0.0)
        d1 = jnp.sum(diag, axis=1, keepdims=True)                       # (B,1)
        d2 = jnp.sum(diag, axis=0, keepdims=True)                       # (1,B)
        i2t = jnp.mean(jnp.where(eye, 0.0,
                                 jnp.maximum(margin + scores - d1, 0.0)),
                       keepdims=True)
        t2i = jnp.mean(jnp.where(eye, 0.0,
                                 jnp.maximum(margin + scores - d2, 0.0)),
                       keepdims=True)
        part_ref[0] = part_ref[0] + jnp.where(out_lane == _MIL, i2t + t2i, 0.0)


def fused_transgeo_kernel(x_grd_mil, x_sat_mil, gt, logits, matching_score, *,
                          temperature, margin):
    b_sz, h, w = gt.shape
    _, hp, wp = matching_score.shape
    assert h % POOL == 0 and w % POOL == 0
    assert hp == h // POOL and wp == w // POOL
    d = x_grd_mil.shape[1]

    # TODO(synk): for heatmaps much larger than the module's hardcoded 640x640
    # a row-chunked grid with an online-logsumexp carry would be needed; here a
    # whole image per grid step fits comfortably in VMEM.

    def nbytes(a):
        return a.size * a.dtype.itemsize

    cost = pl.CostEstimate(
        flops=8 * b_sz * h * w,
        transcendentals=b_sz * (h * w + hp * wp),
        bytes_accessed=(nbytes(gt) + nbytes(logits) + nbytes(matching_score)
                        + nbytes(x_grd_mil) + nbytes(x_sat_mil)
                        + b_sz * 8 * 128 * 4))

    partials = pl.pallas_call(
        functools.partial(_transgeo_kernel,
                          temperature=float(temperature), margin=float(margin)),
        grid=(b_sz,),
        in_specs=[
            pl.BlockSpec((b_sz, d), lambda b: (0, 0)),        # x_grd_mil
            pl.BlockSpec((b_sz, d), lambda b: (0, 0)),        # x_sat_mil
            pl.BlockSpec((1, h, w), lambda b: (b, 0, 0)),     # gt (full image)
            pl.BlockSpec((1, h, w), lambda b: (b, 0, 0)),     # logits
            pl.BlockSpec((1, hp, wp), lambda b: (b, 0, 0)),   # matching score
        ],
        out_specs=pl.BlockSpec((1, 8, 128), lambda b: (b, 0, 0)),
        out_shape=jax.ShapeDtypeStruct((b_sz, 8, 128), jnp.float32),
        compiler_params=pltpu.CompilerParams(
            dimension_semantics=("parallel",),
            vmem_limit_bytes=32 * 1024 * 1024),
        cost_estimate=cost,
    )(x_grd_mil, x_sat_mil, gt, logits, matching_score)

    # Tiny final reductions / divisions in plain JAX (exact, and keeps the
    # batch axis fully parallel inside the kernel).
    p = partials[:, 0, :]                                  # (B, 128)
    num, wsum = p[:, _NUM], p[:, _W]
    s_sum, g_sum, lse = p[:, _S], p[:, _G], p[:, _LSE]
    lmil = p[0, _MIL]
    # NOTE: matches PyTorch semantics (batch-global L_sim normalization); if
    # the masked label mass (or sum(gt)) is zero this is NaN/Inf, exactly like
    # the reference implementation.
    lsim = -jnp.sum(num) / jnp.sum(wsum)
    lout = jnp.mean(lse - s_sum / g_sum)
    return lmil, lsim, lout


def transgeo_loss_forward(x_grd, x_grd_global, x_sat, matching_score, gt, logits,
                          delta, x_grd_mil, x_sat_mil, tem, *,
                          margin=1.0, temperature=0.5,
                          sim_weight=1.0, out_weight=1.0, mil_weight=1.0):
    # x_grd, x_grd_global, x_sat, delta, tem are accepted for signature fidelity
    # but (as in the PyTorch forward) never used.
    b = x_grd_mil.shape[0]
    # Heatmaps stay in their native dtype (e.g. bf16) in HBM; the kernel
    # upcasts to f32 inside VMEM only where needed.
    gt3 = gt.reshape(b, gt.shape[-2], gt.shape[-1])
    lg3 = logits.reshape(b, logits.shape[-2], logits.shape[-1])
    ms3 = matching_score.reshape(
        b, matching_score.shape[-2], matching_score.shape[-1])

    lmil, lsim, lout = fused_transgeo_kernel(
        x_grd_mil, x_sat_mil, gt3, lg3, ms3,
        temperature=temperature, margin=margin)

    loss = mil_weight * lmil + sim_weight * lsim + out_weight * lout
    losses = {'L_mil': lmil, 'L_sim': lsim, 'L_out': lout}
    a = mil_weight * lmil
    b_term = sim_weight * lsim + out_weight * lout
    return loss, losses, [a, b_term]


if __name__ == "__main__":
    key = jax.random.PRNGKey(0)
    B, D = 2, 32
    H = W = 640            # module hardcodes 640x640 heatmaps (reshape to 640*640)
    Hp = Wp = H // POOL    # 10x10 bottleneck

    ks = jax.random.split(key, 8)
    x_grd = jax.random.normal(ks[0], (B, D), jnp.float32)            # unused
    x_grd_global = jax.random.normal(ks[1], (B, D), jnp.float32)     # unused
    x_sat = jax.random.normal(ks[2], (B, D), jnp.float32)            # unused
    matching_score = jax.random.normal(ks[3], (B, 1, Hp, Wp), jnp.float32)
    # heatmaps streamed as bf16 (kernel pools in bf16, accumulates in f32)
    gt = jax.random.uniform(ks[4], (B, 1, H, W), jnp.float32,
                            1e-3, 1.0).astype(jnp.bfloat16)
    logits = jax.random.normal(ks[5], (B, 1, H, W),
                               jnp.float32).astype(jnp.bfloat16)
    delta = jax.random.normal(ks[6], (B, 2), jnp.float32)            # unused
    x_grd_mil = jax.random.normal(ks[7], (B, D), jnp.float32)
    x_sat_mil = jax.random.normal(jax.random.fold_in(key, 99), (B, D), jnp.float32)
    tem = 1.0                                                        # unused

    fwd = jax.jit(functools.partial(
        transgeo_loss_forward, margin=1.0, temperature=0.5,
        sim_weight=1.0, out_weight=1.0, mil_weight=1.0))

    loss, losses, train_loss_tmp = fwd(
        x_grd, x_grd_global, x_sat, matching_score, gt, logits, delta,
        x_grd_mil, x_sat_mil, tem)

    jax.block_until_ready(loss)
    jax.block_until_ready(losses['L_mil'])
    jax.block_until_ready(losses['L_sim'])
    jax.block_until_ready(losses['L_out'])
    jax.block_until_ready(train_loss_tmp[0])
    jax.block_until_ready(train_loss_tmp[1])
    print("KERNEL_OK")
</pallas_src>

<mosaic_0001>
module attributes {stable_mosaic.version = 11 : i64} {
  func.func @_transgeo_kernel(%arg0: i32, %arg1: memref<2x32xf32, #tpu.memory_space<vmem>>, %arg2: memref<2x32xf32, #tpu.memory_space<vmem>>, %arg3: memref<1x640x640xbf16, #tpu.memory_space<vmem>>, %arg4: memref<1x640x640xbf16, #tpu.memory_space<vmem>>, %arg5: memref<1x10x10xf32, #tpu.memory_space<vmem>>, %arg6: memref<1x8x128xf32, #tpu.memory_space<vmem>>) attributes {dimension_semantics = [#tpu.dimension_semantics<parallel>], iteration_bounds = array<i64: 2>, scalar_prefetch = 0 : i64, scratch_operands = 0 : i64, tpu.core_type = #tpu.core_type<tc>, window_params = [{pipeline_mode = #tpu.pipeline_mode<synchronous>, transform_indices = @transform_0, window_bounds = array<i64: 2, 32>}, {pipeline_mode = #tpu.pipeline_mode<synchronous>, transform_indices = @transform_1, window_bounds = array<i64: 2, 32>}, {transform_indices = @transform_2, window_bounds = array<i64: 1, 640, 640>}, {transform_indices = @transform_3, window_bounds = array<i64: 1, 640, 640>}, {transform_indices = @transform_4, window_bounds = array<i64: 1, 10, 10>}, {transform_indices = @transform_5, window_bounds = array<i64: 1, 8, 128>}]} {
    %0 = tpu.iota {dimensions = array<i32: 1>} : vector<8x128xi32>
    %c0 = arith.constant 0 : index
    %c0_0 = arith.constant 0 : index
    %c0_1 = arith.constant 0 : index
    %1 = vector.load %arg3[%c0, %c0_0, %c0_1] : memref<1x640x640xbf16, #tpu.memory_space<vmem>>, vector<1x640x640xbf16>
    %2 = vector.shape_cast %1 : vector<1x640x640xbf16> to vector<640x640xbf16>
    %3 = vector.shape_cast %2 : vector<640x640xbf16> to vector<10x64x640xbf16>
    %cst = arith.constant dense<0xFF80> : vector<10x640xbf16>
    %4 = vector.multi_reduction <maximumf>, %3, %cst [1] : vector<10x64x640xbf16> to vector<10x640xbf16>
    %5 = arith.extf %4 : vector<10x640xbf16> to vector<10x640xf32>
    %6 = tpu.transpose %5, [1, 0] : vector<10x640xf32> -> vector<640x10xf32>
    %7 = vector.shape_cast %6 : vector<640x10xf32> to vector<10x64x10xf32>
    %cst_2 = arith.constant dense<0xFF800000> : vector<10x10xf32>
    %8 = vector.multi_reduction <maximumf>, %7, %cst_2 [1] : vector<10x64x10xf32> to vector<10x10xf32>
    %9 = tpu.transpose %8, [1, 0] : vector<10x10xf32> -> vector<10x10xf32>
    %c0_3 = arith.constant 0 : index
    %c0_4 = arith.constant 0 : index
    %c0_5 = arith.constant 0 : index
    %10 = vector.load %arg5[%c0_3, %c0_4, %c0_5] : memref<1x10x10xf32, #tpu.memory_space<vmem>>, vector<1x10x10xf32>
    %11 = vector.shape_cast %10 : vector<1x10x10xf32> to vector<10x10xf32>
    %cst_6 = arith.constant 2.000000e+00 : f32
    %12 = vector.broadcast %cst_6 : f32 to vector<10x10xf32>
    %13 = arith.mulf %11, %12 : vector<10x10xf32>
    %14 = vector.shape_cast %13 : vector<10x10xf32> to vector<1x10x10xf32>
    %cst_7 = arith.constant dense<0xFF800000> : vector<1xf32>
    %15 = vector.multi_reduction <maximumf>, %14, %cst_7 [1, 2] : vector<1x10x10xf32> to vector<1xf32>
    %16 = vector.shape_cast %15 : vector<1xf32> to vector<1x1x1xf32>
    %17 = vector.extract %16[0, 0, 0] : f32 from vector<1x1x1xf32>
    %18 = vector.broadcast %17 : f32 to vector<1x1xf32>
    %19 = vector.broadcast %18 : vector<1x1xf32> to vector<10x10xf32>
    %20 = arith.subf %13, %19 : vector<10x10xf32>
    %21 = math.exp %20 : vector<10x10xf32>
    %22 = vector.shape_cast %21 : vector<10x10xf32> to vector<1x10x10xf32>
    %cst_8 = arith.constant dense<0.000000e+00> : vector<1xf32>
    %23 = vector.multi_reduction <add>, %22, %cst_8 [1, 2] : vector<1x10x10xf32> to vector<1xf32>
    %24 = vector.shape_cast %23 : vector<1xf32> to vector<1x1x1xf32>
    %25 = vector.extract %24[0, 0, 0] : f32 from vector<1x1x1xf32>
    %26 = vector.broadcast %25 : f32 to vector<1x1xf32>
    %27 = math.log %26 : vector<1x1xf32>
    %28 = arith.addf %18, %27 : vector<1x1xf32>
    %29 = vector.broadcast %28 : vector<1x1xf32> to vector<10x10xf32>
    %30 = arith.subf %13, %29 : vector<10x10xf32>
    %cst_9 = arith.constant 0.00999999977 : f32
    %31 = vector.broadcast %cst_9 : f32 to vector<10x10xf32>
    %32 = arith.cmpf ogt, %9, %31 : vector<10x10xf32>
    %33 = arith.mulf %30, %9 : vector<10x10xf32>
    %cst_10 = arith.constant 0.000000e+00 : f32
    %34 = vector.broadcast %cst_10 : f32 to vector<10x10xf32>
    %35 = arith.select %32, %33, %34 : vector<10x10xi1>, vector<10x10xf32>
    %36 = vector.shape_cast %35 : vector<10x10xf32> to vector<1x10x10xf32>
    %cst_11 = arith.constant dense<0.000000e+00> : vector<1xf32>
    %37 = vector.multi_reduction <add>, %36, %cst_11 [1, 2] : vector<1x10x10xf32> to vector<1xf32>
    %38 = vector.shape_cast %37 : vector<1xf32> to vector<1x1x1xf32>
    %39 = vector.extract %38[0, 0, 0] : f32 from vector<1x1x1xf32>
    %40 = vector.broadcast %39 : f32 to vector<1x1xf32>
    %cst_12 = arith.constant 0.000000e+00 : f32
    %41 = vector.broadcast %cst_12 : f32 to vector<10x10xf32>
    %42 = arith.select %32, %9, %41 : vector<10x10xi1>, vector<10x10xf32>
    %43 = vector.shape_cast %42 : vector<10x10xf32> to vector<1x10x10xf32>
    %cst_13 = arith.constant dense<0.000000e+00> : vector<1xf32>
    %44 = vector.multi_reduction <add>, %43, %cst_13 [1, 2] : vector<1x10x10xf32> to vector<1xf32>
    %45 = vector.shape_cast %44 : vector<1xf32> to vector<1x1x1xf32>
    %46 = vector.extract %45[0, 0, 0] : f32 from vector<1x1x1xf32>
    %47 = vector.broadcast %46 : f32 to vector<1x1xf32>
    %48 = arith.extf %2 : vector<640x640xbf16> to vector<640x640xf32>
    %c0_14 = arith.constant 0 : index
    %c0_15 = arith.constant 0 : index
    %c0_16 = arith.constant 0 : index
    %49 = vector.load %arg4[%c0_14, %c0_15, %c0_16] : memref<1x640x640xbf16, #tpu.memory_space<vmem>>, vector<1x640x640xbf16>
    %50 = vector.shape_cast %49 : vector<1x640x640xbf16> to vector<640x640xbf16>
    %51 = arith.extf %50 : vector<640x640xbf16> to vector<640x640xf32>
    %52 = arith.mulf %48, %51 : vector<640x640xf32>
    %53 = vector.shape_cast %52 : vector<640x640xf32> to vector<1x640x640xf32>
    %cst_17 = arith.constant dense<0.000000e+00> : vector<1xf32>
    %54 = vector.multi_reduction <add>, %53, %cst_17 [1, 2] : vector<1x640x640xf32> to vector<1xf32>
    %55 = vector.shape_cast %54 : vector<1xf32> to vector<1x1x1xf32>
    %56 = vector.extract %55[0, 0, 0] : f32 from vector<1x1x1xf32>
    %57 = vector.broadcast %56 : f32 to vector<1x1xf32>
    %58 = vector.shape_cast %48 : vector<640x640xf32> to vector<1x640x640xf32>
    %cst_18 = arith.constant dense<0.000000e+00> : vector<1xf32>
    %59 = vector.multi_reduction <add>, %58, %cst_18 [1, 2] : vector<1x640x640xf32> to vector<1xf32>
    %60 = vector.shape_cast %59 : vector<1xf32> to vector<1x1x1xf32>
    %61 = vector.extract %60[0, 0, 0] : f32 from vector<1x1x1xf32>
    %62 = vector.broadcast %61 : f32 to vector<1x1xf32>
    %63 = vector.shape_cast %51 : vector<640x640xf32> to vector<1x640x640xf32>
    %cst_19 = arith.constant dense<0xFF800000> : vector<1xf32>
    %64 = vector.multi_reduction <maximumf>, %63, %cst_19 [1, 2] : vector<1x640x640xf32> to vector<1xf32>
    %65 = vector.shape_cast %64 : vector<1xf32> to vector<1x1x1xf32>
    %66 = vector.extract %65[0, 0, 0] : f32 from vector<1x1x1xf32>
    %67 = vector.broadcast %66 : f32 to vector<1x1xf32>
    %68 = vector.broadcast %67 : vector<1x1xf32> to vector<640x640xf32>
    %69 = arith.subf %51, %68 : vector<640x640xf32>
    %70 = math.exp %69 : vector<640x640xf32>
    %71 = vector.shape_cast %70 : vector<640x640xf32> to vector<1x640x640xf32>
    %cst_20 = arith.constant dense<0.000000e+00> : vector<1xf32>
    %72 = vector.multi_reduction <add>, %71, %cst_20 [1, 2] : vector<1x640x640xf32> to vector<1xf32>
    %73 = vector.shape_cast %72 : vector<1xf32> to vector<1x1x1xf32>
    %74 = vector.extract %73[0, 0, 0] : f32 from vector<1x1x1xf32>
    %75 = vector.broadcast %74 : f32 to vector<1x1xf32>
    %76 = math.log %75 : vector<1x1xf32>
    %77 = arith.addf %67, %76 : vector<1x1xf32>
    %c0_i32 = arith.constant 0 : i32
    %78 = vector.broadcast %c0_i32 : i32 to vector<8x128xi32>
    %79 = arith.cmpi eq, %0, %78 : vector<8x128xi32>
    %cst_21 = arith.constant 0.000000e+00 : f32
    %80 = vector.shape_cast %40 : vector<1x1xf32> to vector<1x1xf32>
    %81 = vector.broadcast %80 : vector<1x1xf32> to vector<8x128xf32>
    %82 = vector.broadcast %cst_21 : f32 to vector<8x128xf32>
    %83 = arith.select %79, %81, %82 : vector<8x128xi1>, vector<8x128xf32>
    %c1_i32 = arith.constant 1 : i32
    %84 = vector.broadcast %c1_i32 : i32 to vector<8x128xi32>
    %85 = arith.cmpi eq, %0, %84 : vector<8x128xi32>
    %cst_22 = arith.constant 0.000000e+00 : f32
    %86 = vector.shape_cast %47 : vector<1x1xf32> to vector<1x1xf32>
    %87 = vector.broadcast %86 : vector<1x1xf32> to vector<8x128xf32>
    %88 = vector.broadcast %cst_22 : f32 to vector<8x128xf32>
    %89 = arith.select %85, %87, %88 : vector<8x128xi1>, vector<8x128xf32>
    %90 = arith.addf %83, %89 : vector<8x128xf32>
    %c2_i32 = arith.constant 2 : i32
    %91 = vector.broadcast %c2_i32 : i32 to vector<8x128xi32>
    %92 = arith.cmpi eq, %0, %91 : vector<8x128xi32>
    %cst_23 = arith.constant 0.000000e+00 : f32
    %93 = vector.shape_cast %57 : vector<1x1xf32> to vector<1x1xf32>
    %94 = vector.broadcast %93 : vector<1x1xf32> to vector<8x128xf32>
    %95 = vector.broadcast %cst_23 : f32 to vector<8x128xf32>
    %96 = arith.select %92, %94, %95 : vector<8x128xi1>, vector<8x128xf32>
    %97 = arith.addf %90, %96 : vector<8x128xf32>
    %c3_i32 = arith.constant 3 : i32
    %98 = vector.broadcast %c3_i32 : i32 to vector<8x128xi32>
    %99 = arith.cmpi eq, %0, %98 : vector<8x128xi32>
    %cst_24 = arith.constant 0.000000e+00 : f32
    %100 = vector.shape_cast %62 : vector<1x1xf32> to vector<1x1xf32>
    %101 = vector.broadcast %100 : vector<1x1xf32> to vector<8x128xf32>
    %102 = vector.broadcast %cst_24 : f32 to vector<8x128xf32>
    %103 = arith.select %99, %101, %102 : vector<8x128xi1>, vector<8x128xf32>
    %104 = arith.addf %97, %103 : vector<8x128xf32>
    %c4_i32 = arith.constant 4 : i32
    %105 = vector.broadcast %c4_i32 : i32 to vector<8x128xi32>
    %106 = arith.cmpi eq, %0, %105 : vector<8x128xi32>
    %cst_25 = arith.constant 0.000000e+00 : f32
    %107 = vector.shape_cast %77 : vector<1x1xf32> to vector<1x1xf32>
    %108 = vector.broadcast %107 : vector<1x1xf32> to vector<8x128xf32>
    %109 = vector.broadcast %cst_25 : f32 to vector<8x128xf32>
    %110 = arith.select %106, %108, %109 : vector<8x128xi1>, vector<8x128xf32>
    %111 = arith.addf %104, %110 : vector<8x128xf32>
    %c0_26 = arith.constant 0 : index
    %c0_27 = arith.constant 0 : index
    %c0_28 = arith.constant 0 : index
    %112 = vector.load %arg6[%c0_26, %c0_27, %c0_28] : memref<1x8x128xf32, #tpu.memory_space<vmem>>, vector<1x8x128xf32>
    %113 = vector.shape_cast %112 : vector<1x8x128xf32> to vector<8x128xf32>
    %114 = vector.shape_cast %111 : vector<8x128xf32> to vector<1x8x128xf32>
    tpu.vector_store %arg6[%c0_26, %c0_27, %c0_28], %114 {strides = array<i32>} : memref<1x8x128xf32, #tpu.memory_space<vmem>>, vector<1x8x128xf32>,
    %c0_i32_29 = arith.constant 0 : i32
    %115 = arith.cmpi eq, %arg0, %c0_i32_29 : i32
    %116 = arith.extui %115 : i1 to i32
    %c0_i32_30 = arith.constant 0 : i32
    %117 = arith.cmpi ne, %116, %c0_i32_30 : i32
    scf.if %117 {
      %c0_31 = arith.constant 0 : index
      %c0_32 = arith.constant 0 : index
      %118 = vector.load %arg1[%c0_31, %c0_32] : memref<2x32xf32, #tpu.memory_space<vmem>>, vector<2x32xf32>
      %c0_33 = arith.constant 0 : index
      %c0_34 = arith.constant 0 : index
      %119 = vector.load %arg2[%c0_33, %c0_34] : memref<2x32xf32, #tpu.memory_space<vmem>>, vector<2x32xf32>
      %120 = arith.mulf %118, %118 : vector<2x32xf32>
      %cst_35 = arith.constant dense<0.000000e+00> : vector<2xf32>
      %121 = vector.multi_reduction <add>, %120, %cst_35 [1] : vector<2x32xf32> to vector<2xf32>
      %122 = vector.shape_cast %121 : vector<2xf32> to vector<2x1xf32>
      %cst_36 = arith.constant 9.99999996E-13 : f32
      %123 = vector.broadcast %cst_36 : f32 to vector<2x1xf32>
      %124 = arith.addf %122, %123 : vector<2x1xf32>
      %125 = math.rsqrt %124 : vector<2x1xf32>
      %126 = vector.broadcast %125 : vector<2x1xf32> to vector<2x32xf32>
      %127 = arith.mulf %118, %126 : vector<2x32xf32>
      %128 = arith.mulf %119, %119 : vector<2x32xf32>
      %cst_37 = arith.constant dense<0.000000e+00> : vector<2xf32>
      %129 = vector.multi_reduction <add>, %128, %cst_37 [1] : vector<2x32xf32> to vector<2xf32>
      %130 = vector.shape_cast %129 : vector<2xf32> to vector<2x1xf32>
      %cst_38 = arith.constant 9.99999996E-13 : f32
      %131 = vector.broadcast %cst_38 : f32 to vector<2x1xf32>
      %132 = arith.addf %130, %131 : vector<2x1xf32>
      %133 = math.rsqrt %132 : vector<2x1xf32>
      %134 = vector.broadcast %133 : vector<2x1xf32> to vector<2x32xf32>
      %135 = arith.mulf %119, %134 : vector<2x32xf32>
      %cst_39 = arith.constant dense<0.000000e+00> : vector<2x2xf32>
      %136 = tpu.matmul %127, %135, %cst_39 {dimension_numbers = #tpu.dot_dimension_numbers<[1], [1], [0], [0], [0, 0, 1, 0], [], []>} : vector<2x32xf32>, vector<2x32xf32>, vector<2x2xf32> -> vector<2x2xf32>
      %137 = tpu.iota {dimensions = array<i32: 0>} : vector<2x2xi32>
      %138 = tpu.iota {dimensions = array<i32: 1>} : vector<2x2xi32>
      %139 = arith.cmpi eq, %137, %138 : vector<2x2xi32>
      %cst_40 = arith.constant 0.000000e+00 : f32
      %140 = vector.broadcast %cst_40 : f32 to vector<2x2xf32>
      %141 = arith.select %139, %136, %140 : vector<2x2xi1>, vector<2x2xf32>
      %cst_41 = arith.constant dense<0.000000e+00> : vector<2xf32>
      %142 = vector.multi_reduction <add>, %141, %cst_41 [1] : vector<2x2xf32> to vector<2xf32>
      %143 = vector.shape_cast %142 : vector<2xf32> to vector<2x1xf32>
      %cst_42 = arith.constant dense<0.000000e+00> : vector<2xf32>
      %144 = vector.multi_reduction <add>, %141, %cst_42 [0] : vector<2x2xf32> to vector<2xf32>
      %145 = vector.shape_cast %144 : vector<2xf32> to vector<1x2xf32>
      %cst_43 = arith.constant 1.000000e+00 : f32
      %146 = vector.broadcast %cst_43 : f32 to vector<2x2xf32>
      %147 = arith.addf %146, %136 : vector<2x2xf32>
      %148 = vector.broadcast %143 : vector<2x1xf32> to vector<2x2xf32>
      %149 = arith.subf %147, %148 : vector<2x2xf32>
      %cst_44 = arith.constant 0.000000e+00 : f32
      %150 = vector.broadcast %cst_44 : f32 to vector<2x2xf32>
      %151 = arith.maximumf %149, %150 : vector<2x2xf32>
      %cst_45 = arith.constant 0.000000e+00 : f32
      %152 = vector.broadcast %cst_45 : f32 to vector<2x2xf32>
      %153 = arith.select %139, %152, %151 : vector<2x2xi1>, vector<2x2xf32>
      %154 = vector.shape_cast %153 : vector<2x2xf32> to vector<1x2x2xf32>
      %cst_46 = arith.constant dense<0.000000e+00> : vector<1xf32>
      %155 = vector.multi_reduction <add>, %154, %cst_46 [1, 2] : vector<1x2x2xf32> to vector<1xf32>
      %156 = vector.shape_cast %155 : vector<1xf32> to vector<1x1x1xf32>
      %157 = vector.extract %156[0, 0, 0] : f32 from vector<1x1x1xf32>
      %158 = vector.broadcast %157 : f32 to vector<1x1xf32>
      %cst_47 = arith.constant 4.000000e+00 : f32
      %159 = vector.broadcast %cst_47 : f32 to vector<1x1xf32>
      %160 = arith.divf %158, %159 : vector<1x1xf32>
      %cst_48 = arith.constant 1.000000e+00 : f32
      %161 = vector.broadcast %cst_48 : f32 to vector<2x2xf32>
      %162 = arith.addf %161, %136 : vector<2x2xf32>
      %163 = vector.broadcast %145 : vector<1x2xf32> to vector<2x2xf32>
      %164 = arith.subf %162, %163 : vector<2x2xf32>
      %cst_49 = arith.constant 0.000000e+00 : f32
      %165 = vector.broadcast %cst_49 : f32 to vector<2x2xf32>
      %166 = arith.maximumf %164, %165 : vector<2x2xf32>
      %cst_50 = arith.constant 0.000000e+00 : f32
      %167 = vector.broadcast %cst_50 : f32 to vector<2x2xf32>
      %168 = arith.select %139, %167, %166 : vector<2x2xi1>, vector<2x2xf32>
      %169 = vector.shape_cast %168 : vector<2x2xf32> to vector<1x2x2xf32>
      %cst_51 = arith.constant dense<0.000000e+00> : vector<1xf32>
      %170 = vector.multi_reduction <add>, %169, %cst_51 [1, 2] : vector<1x2x2xf32> to vector<1xf32>
      %171 = vector.shape_cast %170 : vector<1xf32> to vector<1x1x1xf32>
      %172 = vector.extract %171[0, 0, 0] : f32 from vector<1x1x1xf32>
      %173 = vector.broadcast %172 : f32 to vector<1x1xf32>
      %cst_52 = arith.constant 4.000000e+00 : f32
      %174 = vector.broadcast %cst_52 : f32 to vector<1x1xf32>
      %175 = arith.divf %173, %174 : vector<1x1xf32>
      %c0_53 = arith.constant 0 : index
      %c0_54 = arith.constant 0 : index
      %c0_55 = arith.constant 0 : index
      %176 = vector.load %arg6[%c0_53, %c0_54, %c0_55] : memref<1x8x128xf32, #tpu.memory_space<vmem>>, vector<1x8x128xf32>
      %177 = vector.shape_cast %176 : vector<1x8x128xf32> to vector<8x128xf32>
      %c5_i32 = arith.constant 5 : i32
      %178 = vector.broadcast %c5_i32 : i32 to vector<8x128xi32>
      %179 = arith.cmpi eq, %0, %178 : vector<8x128xi32>
      %180 = arith.addf %160, %175 : vector<1x1xf32>
      %cst_56 = arith.constant 0.000000e+00 : f32
      %181 = vector.shape_cast %180 : vector<1x1xf32> to vector<1x1xf32>
      %182 = vector.broadcast %181 : vector<1x1xf32> to vector<8x128xf32>
      %183 = vector.broadcast %cst_56 : f32 to vector<8x128xf32>
      %184 = arith.select %179, %182, %183 : vector<8x128xi1>, vector<8x128xf32>
      %185 = arith.addf %177, %184 : vector<8x128xf32>
      %c0_57 = arith.constant 0 : index
      %c0_58 = arith.constant 0 : index
      %c0_59 = arith.constant 0 : index
      %186 = vector.load %arg6[%c0_57, %c0_58, %c0_59] : memref<1x8x128xf32, #tpu.memory_space<vmem>>, vector<1x8x128xf32>
      %187 = vector.shape_cast %186 : vector<1x8x128xf32> to vector<8x128xf32>
      %188 = vector.shape_cast %185 : vector<8x128xf32> to vector<1x8x128xf32>
      tpu.vector_store %arg6[%c0_57, %c0_58, %c0_59], %188 {strides = array<i32>} : memref<1x8x128xf32, #tpu.memory_space<vmem>>, vector<1x8x128xf32>,
    } else {
    }
    return
  }
  func.func @transform_0(%arg0: i32) -> (i32, i32) {
    %c0_i32 = arith.constant 0 : i32
    %c0_i32_0 = arith.constant 0 : i32
    %c0_i32_1 = arith.constant 0 : i32
    return %c0_i32, %c0_i32_0 : i32, i32
  }
  func.func @transform_1(%arg0: i32) -> (i32, i32) {
    %c0_i32 = arith.constant 0 : i32
    %c0_i32_0 = arith.constant 0 : i32
    %c0_i32_1 = arith.constant 0 : i32
    return %c0_i32, %c0_i32_0 : i32, i32
  }
  func.func @transform_2(%arg0: i32) -> (i32, i32, i32) {
    %c0_i32 = arith.constant 0 : i32
    %c0_i32_0 = arith.constant 0 : i32
    %c0_i32_1 = arith.constant 0 : i32
    return %arg0, %c0_i32, %c0_i32_0 : i32, i32, i32
  }
  func.func @transform_3(%arg0: i32) -> (i32, i32, i32) {
    %c0_i32 = arith.constant 0 : i32
    %c0_i32_0 = arith.constant 0 : i32
    %c0_i32_1 = arith.constant 0 : i32
    return %arg0, %c0_i32, %c0_i32_0 : i32, i32, i32
  }
  func.func @transform_4(%arg0: i32) -> (i32, i32, i32) {
    %c0_i32 = arith.constant 0 : i32
    %c0_i32_0 = arith.constant 0 : i32
    %c0_i32_1 = arith.constant 0 : i32
    return %arg0, %c0_i32, %c0_i32_0 : i32, i32, i32
  }
  func.func @transform_5(%arg0: i32) -> (i32, i32, i32) {
    %c0_i32 = arith.constant 0 : i32
    %c0_i32_0 = arith.constant 0 : i32
    %c0_i32_1 = arith.constant 0 : i32
    return %arg0, %c0_i32, %c0_i32_0 : i32, i32, i32
  }
}

</mosaic_0001>

<llo_original>
// kernel: transgeo_loss_forward.1
$region0: #{transgeo_loss_forward.1}
  #allocation0 [shape = 'u32[]', space=smem, size = 0x4, offset = 0x4, fixed_abs, tag = 'smem constant byte address 0x4 - core index']
  #allocation1 [shape = 'u32[144,128]{1,0:T(1,128)}', space=vmem, size = 0x12000, scoped, tag = 'internal scratch']
  %s0 = inlined_call_operand.hbm [shape: f32[2,32], index: 0, kind: input, shape index: {}]
  %s1 = inlined_call_operand.hbm [shape: f32[2,32], index: 1, kind: input, shape index: {}]
  %s2 = inlined_call_operand.hbm [shape: bf16[2,640,640], index: 2, kind: input, shape index: {}]
  %s3 = inlined_call_operand.hbm [shape: bf16[2,640,640], index: 3, kind: input, shape index: {}]
  %s4 = inlined_call_operand.vmem [shape: f32[2,10,10], index: 4, kind: input, shape index: {}]
  %s5 = inlined_call_operand.vmem [shape: f32[2,8,128], index: 5, kind: output, shape index: {}]
  %s6 = sld [smem:[#allocation0]]
  $region73: #{transgeo_loss_forward.1} parent=0
    _
  %s8 = ssub.s32 1, %s6
  %s9 = scalar_select 0, %s8, %s6
  $region1: #{transgeo_loss_forward.1} parent=0
    #allocation2 [shape = 'u8[1024]{0}', space=vmem, size = 0x400, scoped, tag = 'input window, operand 0, single buffered']
    #allocation3 [shape = 's32[2]{0}', space=sflag, size = 0x8, scoped, tag = 'scoped memory for transgeo_loss_forward.1']
    #allocation4 [shape = 'u8[1024]{0}', space=vmem, size = 0x400, scoped, tag = 'input window, operand 1, single buffered']
    #allocation5 [shape = 's32[1]{0}', space=sflag, size = 0x4, scoped, tag = 'scoped memory for transgeo_loss_forward.1']
    #allocation6 [shape = 'u8[1638400]{0}', space=vmem, size = 0x190000, scoped, tag = 'input window, operand 2']
    #allocation7 [shape = 'u8[1638400]{0}', space=vmem, size = 0x190000, scoped, tag = 'input window, operand 3']
    %10 = vsyncpa [#allocation3], 0
    %11 = vsyncpa [#allocation5], 0
    loop: start=0, step=1, limit=4
    $region2: #{transgeo_loss_forward.1} parent=1 // loop_pre_header
      _
    $region3: #{transgeo_loss_forward.1} parent=1 // loop_header
      %s13 = sphi 0, %s17
      %p14 = scmp.ge.s32.totalorder %s13, 4
      %s21 = sphi 0, %s21
      %s23 = sphi 0, %s21
      %s24 = sphi 0, %s23
      %s38 = sphi 0, %s24
      %s42 = sphi 0, %s42
      %s44 = sphi 0, %s42
      %s45 = sphi 0, %s44
      %s59 = sphi 0, %s45
      %s65 = sphi 0, %s67
      %s68 = sphi 0, %s65
      %s69 = sphi 0, %s68
      %s85 = sphi 0, %s69
      %s91 = sphi 0, %s93
      %s94 = sphi 0, %s91
      %s95 = sphi 0, %s94
      %s111 = sphi 0, %s95
      %s117 = sphi 0, %s119
      %s120 = sphi 0, %s117
      %s121 = sphi 0, %s120
      %s137 = sphi 0, %s121
      %s143 = sphi 0, %s145
      %s146 = sphi 0, %s143
      %s147 = sphi 0, %s146
      %s163 = sphi 0, %s147
    $region4: #{transgeo_loss_forward.1} parent=1 // loop_header_branch
      %16 = sbr.rel (%p14) target = $region8
    $region5: #{transgeo_loss_forward.1} parent=1 // loop_body
      %s18 = ssub.s32 %s13, 1
      %s19 = ssub.s32 %s13, 2
      %s20 = sadd.s32 %s13, 1
      %s22 = sadd.s32 %s21, 1
      %p25 = scmp.eq.s32.totalorder %s13, 1
      %p26 = scmp.ne.s32.totalorder %s21, %s23
      %p27 = scmp.eq.s32.totalorder %s13, 0
      %p28 = por %p26, %p27
      %p29 = scmp.ne.s32.totalorder %s21, %s23
      %p30 = scmp.eq.s32.totalorder %s18, 1
      %p31 = por %p29, %p30
      %p32 = scmp.ne.s32.totalorder %s23, %s24
      %p33 = scmp.eq.s32.totalorder %s18, 0
      %p34 = por %p32, %p33
      %p35 = scmp.ne.s32.totalorder %s23, %s24
      %p36 = scmp.eq.s32.totalorder %s19, 1
      %p37 = por %p35, %p36
      %p39 = scmp.ne.s32.totalorder %s24, %s38
      %p40 = scmp.eq.s32.totalorder %s19, 0
      %p41 = por %p39, %p40
      %s43 = sadd.s32 %s42, 1
      %p46 = scmp.eq.s32.totalorder %s13, 1
      %p47 = scmp.ne.s32.totalorder %s42, %s44
      %p48 = scmp.eq.s32.totalorder %s13, 0
      %p49 = por %p47, %p48
      %p50 = scmp.ne.s32.totalorder %s42, %s44
      %p51 = scmp.eq.s32.totalorder %s18, 1
      %p52 = por %p50, %p51
      %p53 = scmp.ne.s32.totalorder %s44, %s45
      %p54 = scmp.eq.s32.totalorder %s18, 0
      %p55 = por %p53, %p54
      %p56 = scmp.ne.s32.totalorder %s44, %s45
      %p57 = scmp.eq.s32.totalorder %s19, 1
      %p58 = por %p56, %p57
      %p60 = scmp.ne.s32.totalorder %s45, %s59
      %p61 = scmp.eq.s32.totalorder %s19, 0
      %p62 = por %p60, %p61
      %s63 = ssub.s32 %s13, %s20
      %p64 = scmp.eq.s32.totalorder %s63, 0
      %s66 = sadd.s32 %s65, 1
      %s67 = scalar_select %p64, %s65, %s66
      %p70 = pneg %p64
      %p71 = scmp.eq.s32.totalorder %s13, 1
      %p72 = por %p70, %p71
      %p73 = scmp.ne.s32.totalorder %s65, %s68
      %p74 = scmp.eq.s32.totalorder %s13, 0
      %p75 = por %p73, %p74
      %p76 = scmp.ne.s32.totalorder %s65, %s68
      %p77 = scmp.eq.s32.totalorder %s18, 1
      %p78 = por %p76, %p77
      %p79 = scmp.ne.s32.totalorder %s68, %s69
      %p80 = scmp.eq.s32.totalorder %s18, 0
      %p81 = por %p79, %p80
      %p82 = scmp.ne.s32.totalorder %s68, %s69
      %p83 = scmp.eq.s32.totalorder %s19, 1
      %p84 = por %p82, %p83
      %p86 = scmp.ne.s32.totalorder %s69, %s85
      %p87 = scmp.eq.s32.totalorder %s19, 0
      %p88 = por %p86, %p87
      %s89 = ssub.s32 %s13, %s20
      %p90 = scmp.eq.s32.totalorder %s89, 0
      %s92 = sadd.s32 %s91, 1
      %s93 = scalar_select %p90, %s91, %s92
      %p96 = pneg %p90
      %p97 = scmp.eq.s32.totalorder %s13, 1
      %p98 = por %p96, %p97
      %p99 = scmp.ne.s32.totalorder %s91, %s94
      %p100 = scmp.eq.s32.totalorder %s13, 0
      %p101 = por %p99, %p100
      %p102 = scmp.ne.s32.totalorder %s91, %s94
      %p103 = scmp.eq.s32.totalorder %s18, 1
      %p104 = por %p102, %p103
      %p105 = scmp.ne.s32.totalorder %s94, %s95
      %p106 = scmp.eq.s32.totalorder %s18, 0
      %p107 = por %p105, %p106
      %p108 = scmp.ne.s32.totalorder %s94, %s95
      %p109 = scmp.eq.s32.totalorder %s19, 1
      %p110 = por %p108, %p109
      %p112 = scmp.ne.s32.totalorder %s95, %s111
      %p113 = scmp.eq.s32.totalorder %s19, 0
      %p114 = por %p112, %p113
      %s115 = ssub.s32 %s13, %s20
      %p116 = scmp.eq.s32.totalorder %s115, 0
      %s118 = sadd.s32 %s117, 1
      %s119 = scalar_select %p116, %s117, %s118
      %p122 = pneg %p116
      %p123 = scmp.eq.s32.totalorder %s13, 1
      %p124 = por %p122, %p123
      %p125 = scmp.ne.s32.totalorder %s117, %s120
      %p126 = scmp.eq.s32.totalorder %s13, 0
      %p127 = por %p125, %p126
      %p128 = scmp.ne.s32.totalorder %s117, %s120
      %p129 = scmp.eq.s32.totalorder %s18, 1
      %p130 = por %p128, %p129
      %p131 = scmp.ne.s32.totalorder %s120, %s121
      %p132 = scmp.eq.s32.totalorder %s18, 0
      %p133 = por %p131, %p132
      %p134 = scmp.ne.s32.totalorder %s120, %s121
      %p135 = scmp.eq.s32.totalorder %s19, 1
      %p136 = por %p134, %p135
      %p138 = scmp.ne.s32.totalorder %s121, %s137
      %p139 = scmp.eq.s32.totalorder %s19, 0
      %p140 = por %p138, %p139
      %s141 = ssub.s32 %s13, %s20
      %p142 = scmp.eq.s32.totalorder %s141, 0
      %s144 = sadd.s32 %s143, 1
      %s145 = scalar_select %p142, %s143, %s144
      %p148 = pneg %p142
      %p149 = scmp.eq.s32.totalorder %s13, 1
      %p150 = por %p148, %p149
      %p151 = scmp.ne.s32.totalorder %s143, %s146
      %p152 = scmp.eq.s32.totalorder %s13, 0
      %p153 = por %p151, %p152
      %p154 = scmp.ne.s32.totalorder %s143, %s146
      %p155 = scmp.eq.s32.totalorder %s18, 1
      %p156 = por %p154, %p155
      %p157 = scmp.ne.s32.totalorder %s146, %s147
      %p158 = scmp.eq.s32.totalorder %s18, 0
      %p159 = por %p157, %p158
      %p160 = scmp.ne.s32.totalorder %s146, %s147
      %p161 = scmp.eq.s32.totalorder %s19, 1
      %p162 = por %p160, %p161
      %p164 = scmp.ne.s32.totalorder %s147, %s163
      %p165 = scmp.eq.s32.totalorder %s19, 0
      %p166 = por %p164, %p165
      %p167 = scmp.le.s32.totalorder 1, %s13
      %p168 = scmp.lt.s32.totalorder %s13, 3
      %p169 = pnand %p167, %p168
      %p170 = pneg %p169
      // Predicated region
      $region9: #{transgeo_loss_forward.1} parent=5 // pred_check
        _
      $region10: #{transgeo_loss_forward.1} parent=5 // pred_check_branch
        %172 = sbr.rel (%p169) target = $region12
      $region11: #{transgeo_loss_forward.1} parent=5 // pred_region
        %s173 = ssub.s32 %s13, 1
        // Predicated region
        $region13: #{transgeo_loss_forward.1} parent=11 // pred_check
          %p174 = pneg %p34
        $region14: #{transgeo_loss_forward.1} parent=11 // pred_check_branch
          %176 = sbr.rel (%p174) target = $region16
        $region15: #{transgeo_loss_forward.1} parent=11 // pred_region
          %s178 = ssub.s32 32, 32
          %179 = vsyncadd [#allocation3], %s178
          %s181 = sshll.u32 [#allocation2], 4
          %s182 = int_to_ptr.vmem [resolvable:$true] %s181
          %184 = dma.hbm_to_vmem [thread:$0]  %s0, 32, %s182, [#allocation3]
        $region16: #{transgeo_loss_forward.1} parent=11 // pred_fallthru
          _
        // Predicated region
        $region17: #{transgeo_loss_forward.1} parent=11 // pred_check
          %p185 = pneg %p55
        $region18: #{transgeo_loss_forward.1} parent=11 // pred_check_branch
          %187 = sbr.rel (%p185) target = $region20
        $region19: #{transgeo_loss_forward.1} parent=11 // pred_region
          %s189 = ssub.s32 32, 32
          %190 = vsyncadd [#allocation5], %s189
          %s192 = sshll.u32 [#allocation4], 4
          %s193 = int_to_ptr.vmem [resolvable:$true] %s192
          %195 = dma.hbm_to_vmem [thread:$0]  %s1, 32, %s193, [#allocation5]
        $region20: #{transgeo_loss_forward.1} parent=11 // pred_fallthru
          _
      $region12: #{transgeo_loss_forward.1} parent=5 // pred_fallthru
        _
      %p196 = scmp.lt.s32.totalorder %s13, 2
      // Predicated region
      $region21: #{transgeo_loss_forward.1} parent=5 // pred_check
        %p197 = pneg %p196
      $region22: #{transgeo_loss_forward.1} parent=5 // pred_check_branch
        %199 = sbr.rel (%p197) target = $region24
      $region23: #{transgeo_loss_forward.1} parent=5 // pred_region
        // Predicated region
        $region25: #{transgeo_loss_forward.1} parent=23 // pred_check
          %p200 = pneg %p75
        $region26: #{transgeo_loss_forward.1} parent=23 // pred_check_branch
          %202 = sbr.rel (%p200) target = $region28
        $region27: #{transgeo_loss_forward.1} parent=23 // pred_region
          %s203 = sand.u32 %s13, 1
          %s204 = scalar_lea.sflag [#allocation3], %s203
          %s205 = sand.u32 %s65, 1
          %s206 = smul.addr %s205, 1600
          %s207 = scalar_lea.vmem [#allocation6], %s206
          %s209 = ssub.s32 25600, 25600
          %210 = vsyncadd %s204, %s209
          %s211 = smul.addr %s13, 400
          %s212 = smul.addr %s211, 64
          %s213 = scalar_lea.hbm %s2, %s212
          %s214 = sshll.u32 %s207, 4
          %s215 = int_to_ptr.vmem [resolvable:$true] %s214
          %220 = dma.hbm_to_vmem [thread:$0]  %s213, 25600, %s215, %s204, 320, 320, 20
        $region28: #{transgeo_loss_forward.1} parent=23 // pred_fallthru
          _
        // Predicated region
        $region29: #{transgeo_loss_forward.1} parent=23 // pred_check
          %p221 = pneg %p101
        $region30: #{transgeo_loss_forward.1} parent=23 // pred_check_branch
          %223 = sbr.rel (%p221) target = $region32
        $region31: #{transgeo_loss_forward.1} parent=23 // pred_region
          %s224 = sand.u32 %s13, 1
          %s225 = scalar_lea.sflag [#allocation3], %s224
          %s226 = sand.u32 %s91, 1
          %s227 = smul.addr %s226, 1600
          %s228 = scalar_lea.vmem [#allocation7], %s227
          %s230 = ssub.s32 25600, 25600
          %231 = vsyncadd %s225, %s230
          %s232 = smul.addr %s13, 400
          %s233 = smul.addr %s232, 64
          %s234 = scalar_lea.hbm %s3, %s233
          %s235 = sshll.u32 %s228, 4
          %s236 = int_to_ptr.vmem [resolvable:$true] %s235
          %241 = dma.hbm_to_vmem [thread:$0]  %s234, 25600, %s236, %s225, 320, 320, 20
        $region32: #{transgeo_loss_forward.1} parent=23 // pred_fallthru
          _
        // Predicated region
        $region33: #{transgeo_loss_forward.1} parent=23 // pred_check
          %p242 = pneg %p127
        $region34: #{transgeo_loss_forward.1} parent=23 // pred_check_branch
          %244 = sbr.rel (%p242) target = $region36
        $region35: #{transgeo_loss_forward.1} parent=23 // pred_region
          %p245 = scmp.lt.s32.totalorder %s13, 1
          %s246 = scalar_select %p245, %s13, 1
          %s247 = smul.addr %s246, 2
          %s248 = smul.addr %s247, 8
          %s249 = scalar_lea.vmem %s4, %s248
        $region36: #{transgeo_loss_forward.1} parent=23 // pred_fallthru
          _
      $region24: #{transgeo_loss_forward.1} parent=5 // pred_fallthru
        _
      %p250 = scmp.le.s32.totalorder 1, %s13
      %p251 = scmp.lt.s32.totalorder %s13, 3
      %p252 = pnand %p250, %p251
      %p253 = pneg %p252
      // Predicated region
      $region37: #{transgeo_loss_forward.1} parent=5 // pred_check
        _
      $region38: #{transgeo_loss_forward.1} parent=5 // pred_check_branch
        %255 = sbr.rel (%p252) target = $region40
      $region39: #{transgeo_loss_forward.1} parent=5 // pred_region
        %s256 = ssub.s32 %s13, 1
        // Predicated region
        $region41: #{transgeo_loss_forward.1} parent=39 // pred_check
          %p257 = pneg %p34
        $region42: #{transgeo_loss_forward.1} parent=39 // pred_check_branch
          %259 = sbr.rel (%p257) target = $region44
        $region43: #{transgeo_loss_forward.1} parent=39 // pred_region
          %260 = dma.done [#allocation3], 32
        $region44: #{transgeo_loss_forward.1} parent=39 // pred_fallthru
          _
        // Predicated region
        $region45: #{transgeo_loss_forward.1} parent=39 // pred_check
          %p261 = pneg %p55
        $region46: #{transgeo_loss_forward.1} parent=39 // pred_check_branch
          %263 = sbr.rel (%p261) target = $region48
        $region47: #{transgeo_loss_forward.1} parent=39 // pred_region
          %264 = dma.done [#allocation5], 32
        $region48: #{transgeo_loss_forward.1} parent=39 // pred_fallthru
          _
        %s265 = sand.u32 %s18, 1
        %s266 = scalar_lea.sflag [#allocation3], %s265
        %s267 = sand.u32 %s68, 1
        %s268 = smul.addr %s267, 1600
        %s269 = scalar_lea.vmem [#allocation6], %s268
        // Predicated region
        $region49: #{transgeo_loss_forward.1} parent=39 // pred_check
          %p270 = pneg %p81
        $region50: #{transgeo_loss_forward.1} parent=39 // pred_check_branch
          %272 = sbr.rel (%p270) target = $region52
        $region51: #{transgeo_loss_forward.1} parent=39 // pred_region
          %273 = dma.done %s266, 25600
        $region52: #{transgeo_loss_forward.1} parent=39 // pred_fallthru
          _
        %s274 = sand.u32 %s18, 1
        %s275 = scalar_lea.sflag [#allocation3], %s274
        %s276 = sand.u32 %s94, 1
        %s277 = smul.addr %s276, 1600
        %s278 = scalar_lea.vmem [#allocation7], %s277
        // Predicated region
        $region53: #{transgeo_loss_forward.1} parent=39 // pred_check
          %p279 = pneg %p107
        $region54: #{transgeo_loss_forward.1} parent=39 // pred_check_branch
          %281 = sbr.rel (%p279) target = $region56
        $region55: #{transgeo_loss_forward.1} parent=39 // pred_region
          %282 = dma.done %s275, 25600
        $region56: #{transgeo_loss_forward.1} parent=39 // pred_fallthru
          _
        %p283 = pneg %p34
        %p284 = pneg %p31
        %p285 = pneg %p55
        %p286 = pneg %p52
        %s287 = sand.u32 %s18, 1
        %s288 = scalar_lea.sflag [#allocation3], %s287
        %s289 = sand.u32 %s68, 1
        %s290 = smul.addr %s289, 1600
        %s291 = scalar_lea.vmem [#allocation6], %s290
        %p292 = pneg %p81
        %p293 = pneg %p78
        %s294 = sand.u32 %s18, 1
        %s295 = scalar_lea.sflag [#allocation3], %s294
        %s296 = sand.u32 %s94, 1
        %s297 = smul.addr %s296, 1600
        %s298 = scalar_lea.vmem [#allocation7], %s297
        %p299 = pneg %p107
        %p300 = pneg %p104
        %p301 = scmp.lt.s32.totalorder %s18, 1
        %s302 = scalar_select %p301, %s18, 1
        %s303 = smul.addr %s302, 2
        %s304 = smul.addr %s303, 8
        %s305 = scalar_lea.vmem %s4, %s304
        %p306 = pneg %p133
        %p307 = pneg %p130
        %p308 = pneg %p159
        %p309 = pneg %p156
        %p310 = scmp.lt.s32.totalorder %s18, 1
        %s311 = scalar_select %p310, %s18, 1
        %s312 = smul.addr %s311, 8
        %s313 = scalar_lea.vmem %s5, %s312
        %p314 = scmp.lt.s32.totalorder %s18, 1
        %s315 = scalar_select %p314, %s18, 1
        %s316 = smul.addr %s315, 2
        %s317 = smul.addr %s316, 8
        %s318 = scalar_lea.vmem %s4, %s317
        %p319 = scmp.lt.s32.totalorder %s18, 1
        %s320 = scalar_select %p319, %s18, 1
        %s321 = smul.addr %s320, 8
        %s322 = scalar_lea.vmem %s5, %s321
        %v323 = vlaneseq
        %v324 = vand.u32 %v323, 127
        %v325 = vld [vmem:[%s269] sm:$0xff]
        %v326 = vld [vmem:[%s269 + $0x8] sm:$0xff]
        %v327 = vld [vmem:[%s269 + $0x10] sm:$0xf]
        %v328 = vld [vmem:[%s269 + $0x14] sm:$0xff]
        %v329 = vld [vmem:[%s269 + $0x1c] sm:$0xff]
        %v330 = vld [vmem:[%s269 + $0x24] sm:$0xf]
        %v331 = vld [vmem:[%s269 + $0x28] sm:$0xff]
        %v332 = vld [vmem:[%s269 + $0x30] sm:$0xff]
        %v333 = vld [vmem:[%s269 + $0x38] sm:$0xf]
        %v334 = vld [vmem:[%s269 + $0x3c] sm:$0xff]
        %v335 = vld [vmem:[%s269 + $0x44] sm:$0xff]
        %v336 = vld [vmem:[%s269 + $0x4c] sm:$0xf]
        %v337 = vld [vmem:[%s269 + $0x50] sm:$0xff]
        %v338 = vld [vmem:[%s269 + $0x58] sm:$0xff]
        %v339 = vld [vmem:[%s269 + $0x60] sm:$0xf]
        %v340 = vld [vmem:[%s269 + $0x64] sm:$0xff]
        %v341 = vld [vmem:[%s269 + $0x6c] sm:$0xff]
        %v342 = vld [vmem:[%s269 + $0x74] sm:$0xf]
        %v343 = vld [vmem:[%s269 + $0x78] sm:$0xff]
        %v344 = vld [vmem:[%s269 + $0x80] sm:$0xff]
        %v345 = vld [vmem:[%s269 + $0x88] sm:$0xf]
        %v346 = vld [vmem:[%s269 + $0x8c] sm:$0xff]
        %v347 = vld [vmem:[%s269 + $0x94] sm:$0xff]
        %v348 = vld [vmem:[%s269 + $0x9c] sm:$0xf]
        %v349 = vld [vmem:[%s269 + $0xa0] sm:$0xff]
        %v350 = vld [vmem:[%s269 + $0xa8] sm:$0xff]
        %v351 = vld [vmem:[%s269 + $0xb0] sm:$0xf]
        %v352 = vld [vmem:[%s269 + $0xb4] sm:$0xff]
        %v353 = vld [vmem:[%s269 + $0xbc] sm:$0xff]
        %v354 = vld [vmem:[%s269 + $0xc4] sm:$0xf]
        %v355 = vld [vmem:[%s269 + $0xc8] sm:$0xff]
        %v356 = vld [vmem:[%s269 + $0xd0] sm:$0xff]
        %v357 = vld [vmem:[%s269 + $0xd8] sm:$0xf]
        %v358 = vld [vmem:[%s269 + $0xdc] sm:$0xff]
        %v359 = vld [vmem:[%s269 + $0xe4] sm:$0xff]
        %v360 = vld [vmem:[%s269 + $0xec] sm:$0xf]
        %v361 = vld [vmem:[%s269 + $0xf0] sm:$0xff]
        %v362 = vld [vmem:[%s269 + $0xf8] sm:$0xff]
        %v363 = vld [vmem:[%s269 + $0x100] sm:$0xf]
        %v364 = vld [vmem:[%s269 + $0x104] sm:$0xff]
        %v365 = vld [vmem:[%s269 + $0x10c] sm:$0xff]
        %v366 = vld [vmem:[%s269 + $0x114] sm:$0xf]
        %v367 = vld [vmem:[%s269 + $0x118] sm:$0xff]
        %v368 = vld [vmem:[%s269 + $0x120] sm:$0xff]
        %v369 = vld [vmem:[%s269 + $0x128] sm:$0xf]
        %v370 = vld [vmem:[%s269 + $0x12c] sm:$0xff]
        %v371 = vld [vmem:[%s269 + $0x134] sm:$0xff]
        %v372 = vld [vmem:[%s269 + $0x13c] sm:$0xf]
        %v373 = vld [vmem:[%s269 + $0x140] sm:$0xff]
        %v374 = vld [vmem:[%s269 + $0x148] sm:$0xff]
        %v375 = vld [vmem:[%s269 + $0x150] sm:$0xf]
        %v376 = vld [vmem:[%s269 + $0x154] sm:$0xff]
        %v377 = vld [vmem:[%s269 + $0x15c] sm:$0xff]
        %v378 = vld [vmem:[%s269 + $0x164] sm:$0xf]
        %v379 = vld [vmem:[%s269 + $0x168] sm:$0xff]
        %v380 = vld [vmem:[%s269 + $0x170] sm:$0xff]
        %v381 = vld [vmem:[%s269 + $0x178] sm:$0xf]
        %v382 = vld [vmem:[%s269 + $0x17c] sm:$0xff]
        %v383 = vld [vmem:[%s269 + $0x184] sm:$0xff]
        %v384 = vld [vmem:[%s269 + $0x18c] sm:$0xf]
        %v385 = vld [vmem:[%s269 + $0x190] sm:$0xff]
        %v386 = vld [vmem:[%s269 + $0x198] sm:$0xff]
        %v387 = vld [vmem:[%s269 + $0x1a0] sm:$0xf]
        %v388 = vld [vmem:[%s269 + $0x1a4] sm:$0xff]
        %v389 = vld [vmem:[%s269 + $0x1ac] sm:$0xff]
        %v390 = vld [vmem:[%s269 + $0x1b4] sm:$0xf]
        %v391 = vld [vmem:[%s269 + $0x1b8] sm:$0xff]
        %v392 = vld [vmem:[%s269 + $0x1c0] sm:$0xff]
        %v393 = vld [vmem:[%s269 + $0x1c8] sm:$0xf]
        %v394 = vld [vmem:[%s269 + $0x1cc] sm:$0xff]
        %v395 = vld [vmem:[%s269 + $0x1d4] sm:$0xff]
        %v396 = vld [vmem:[%s269 + $0x1dc] sm:$0xf]
        %v397 = vld [vmem:[%s269 + $0x1e0] sm:$0xff]
        %v398 = vld [vmem:[%s269 + $0x1e8] sm:$0xff]
        %v399 = vld [vmem:[%s269 + $0x1f0] sm:$0xf]
        %v400 = vld [vmem:[%s269 + $0x1f4] sm:$0xff]
        %v401 = vld [vmem:[%s269 + $0x1fc] sm:$0xff]
        %v402 = vld [vmem:[%s269 + $0x204] sm:$0xf]
        %v403 = vld [vmem:[%s269 + $0x208] sm:$0xff]
        %v404 = vld [vmem:[%s269 + $0x210] sm:$0xff]
        %v405 = vld [vmem:[%s269 + $0x218] sm:$0xf]
        %v406 = vld [vmem:[%s269 + $0x21c] sm:$0xff]
        %v407 = vld [vmem:[%s269 + $0x224] sm:$0xff]
        %v408 = vld [vmem:[%s269 + $0x22c] sm:$0xf]
        %v409 = vld [vmem:[%s269 + $0x230] sm:$0xff]
        %v410 = vld [vmem:[%s269 + $0x238] sm:$0xff]
        %v411 = vld [vmem:[%s269 + $0x240] sm:$0xf]
        %v412 = vld [vmem:[%s269 + $0x244] sm:$0xff]
        %v413 = vld [vmem:[%s269 + $0x24c] sm:$0xff]
        %v414 = vld [vmem:[%s269 + $0x254] sm:$0xf]
        %v415 = vld [vmem:[%s269 + $0x258] sm:$0xff]
        %v416 = vld [vmem:[%s269 + $0x260] sm:$0xff]
        %v417 = vld [vmem:[%s269 + $0x268] sm:$0xf]
        %v418 = vld [vmem:[%s269 + $0x26c] sm:$0xff]
        %v419 = vld [vmem:[%s269 + $0x274] sm:$0xff]
        %v420 = vld [vmem:[%s269 + $0x27c] sm:$0xf]
        %v421 = vld [vmem:[%s269 + $0x280] sm:$0xff]
        %v422 = vld [vmem:[%s269 + $0x288] sm:$0xff]
        %v423 = vld [vmem:[%s269 + $0x290] sm:$0xf]
        %v424 = vld [vmem:[%s269 + $0x294] sm:$0xff]
        %v425 = vld [vmem:[%s269 + $0x29c] sm:$0xff]
        %v426 = vld [vmem:[%s269 + $0x2a4] sm:$0xf]
        %v427 = vld [vmem:[%s269 + $0x2a8] sm:$0xff]
        %v428 = vld [vmem:[%s269 + $0x2b0] sm:$0xff]
        %v429 = vld [vmem:[%s269 + $0x2b8] sm:$0xf]
        %v430 = vld [vmem:[%s269 + $0x2bc] sm:$0xff]
        %v431 = vld [vmem:[%s269 + $0x2c4] sm:$0xff]
        %v432 = vld [vmem:[%s269 + $0x2cc] sm:$0xf]
        %v433 = vld [vmem:[%s269 + $0x2d0] sm:$0xff]
        %v434 = vld [vmem:[%s269 + $0x2d8] sm:$0xff]
        %v435 = vld [vmem:[%s269 + $0x2e0] sm:$0xf]
        %v436 = vld [vmem:[%s269 + $0x2e4] sm:$0xff]
        %v437 = vld [vmem:[%s269 + $0x2ec] sm:$0xff]
        %v438 = vld [vmem:[%s269 + $0x2f4] sm:$0xf]
        %v439 = vld [vmem:[%s269 + $0x2f8] sm:$0xff]
        %v440 = vld [vmem:[%s269 + $0x300] sm:$0xff]
        %v441 = vld [vmem:[%s269 + $0x308] sm:$0xf]
        %v442 = vld [vmem:[%s269 + $0x30c] sm:$0xff]
        %v443 = vld [vmem:[%s269 + $0x314] sm:$0xff]
        %v444 = vld [vmem:[%s269 + $0x31c] sm:$0xf]
        %v445 = vld [vmem:[%s269 + $0x320] sm:$0xff]
        %v446 = vld [vmem:[%s269 + $0x328] sm:$0xff]
        %v447 = vld [vmem:[%s269 + $0x330] sm:$0xf]
        %v448 = vld [vmem:[%s269 + $0x334] sm:$0xff]
        %v449 = vld [vmem:[%s269 + $0x33c] sm:$0xff]
        %v450 = vld [vmem:[%s269 + $0x344] sm:$0xf]
        %v451 = vld [vmem:[%s269 + $0x348] sm:$0xff]
        %v452 = vld [vmem:[%s269 + $0x350] sm:$0xff]
        %v453 = vld [vmem:[%s269 + $0x358] sm:$0xf]
        %v454 = vld [vmem:[%s269 + $0x35c] sm:$0xff]
        %v455 = vld [vmem:[%s269 + $0x364] sm:$0xff]
        %v456 = vld [vmem:[%s269 + $0x36c] sm:$0xf]
        %v457 = vld [vmem:[%s269 + $0x370] sm:$0xff]
        %v458 = vld [vmem:[%s269 + $0x378] sm:$0xff]
        %v459 = vld [vmem:[%s269 + $0x380] sm:$0xf]
        %v460 = vld [vmem:[%s269 + $0x384] sm:$0xff]
        %v461 = vld [vmem:[%s269 + $0x38c] sm:$0xff]
        %v462 = vld [vmem:[%s269 + $0x394] sm:$0xf]
        %v463 = vld [vmem:[%s269 + $0x398] sm:$0xff]
        %v464 = vld [vmem:[%s269 + $0x3a0] sm:$0xff]
        %v465 = vld [vmem:[%s269 + $0x3a8] sm:$0xf]
        %v466 = vld [vmem:[%s269 + $0x3ac] sm:$0xff]
        %v467 = vld [vmem:[%s269 + $0x3b4] sm:$0xff]
        %v468 = vld [vmem:[%s269 + $0x3bc] sm:$0xf]
        %v469 = vld [vmem:[%s269 + $0x3c0] sm:$0xff]
        %v470 = vld [vmem:[%s269 + $0x3c8] sm:$0xff]
        %v471 = vld [vmem:[%s269 + $0x3d0] sm:$0xf]
        %v472 = vld [vmem:[%s269 + $0x3d4] sm:$0xff]
        %v473 = vld [vmem:[%s269 + $0x3dc] sm:$0xff]
        %v474 = vld [vmem:[%s269 + $0x3e4] sm:$0xf]
        %v475 = vld [vmem:[%s269 + $0x3e8] sm:$0xff]
        %v476 = vld [vmem:[%s269 + $0x3f0] sm:$0xff]
        %v477 = vld [vmem:[%s269 + $0x3f8] sm:$0xf]
        %v478 = vld [vmem:[%s269 + $0x3fc] sm:$0xff]
        %v479 = vld [vmem:[%s269 + $0x404] sm:$0xff]
        %v480 = vld [vmem:[%s269 + $0x40c] sm:$0xf]
        %v481 = vld [vmem:[%s269 + $0x410] sm:$0xff]
        %v482 = vld [vmem:[%s269 + $0x418] sm:$0xff]
        %v483 = vld [vmem:[%s269 + $0x420] sm:$0xf]
        %v484 = vld [vmem:[%s269 + $0x424] sm:$0xff]
        %v485 = vld [vmem:[%s269 + $0x42c] sm:$0xff]
        %v486 = vld [vmem:[%s269 + $0x434] sm:$0xf]
        %v487 = vld [vmem:[%s269 + $0x438] sm:$0xff]
        %v488 = vld [vmem:[%s269 + $0x440] sm:$0xff]
        %v489 = vld [vmem:[%s269 + $0x448] sm:$0xf]
        %v490 = vld [vmem:[%s269 + $0x44c] sm:$0xff]
        %v491 = vld [vmem:[%s269 + $0x454] sm:$0xff]
        %v492 = vld [vmem:[%s269 + $0x45c] sm:$0xf]
        %v493 = vld [vmem:[%s269 + $0x460] sm:$0xff]
        %v494 = vld [vmem:[%s269 + $0x468] sm:$0xff]
        %v495 = vld [vmem:[%s269 + $0x470] sm:$0xf]
        %v496 = vld [vmem:[%s269 + $0x474] sm:$0xff]
        %v497 = vld [vmem:[%s269 + $0x47c] sm:$0xff]
        %v498 = vld [vmem:[%s269 + $0x484] sm:$0xf]
        %v499 = vld [vmem:[%s269 + $0x488] sm:$0xff]
        %v500 = vld [vmem:[%s269 + $0x490] sm:$0xff]
        %v501 = vld [vmem:[%s269 + $0x498] sm:$0xf]
        %v502 = vld [vmem:[%s269 + $0x49c] sm:$0xff]
        %v503 = vld [vmem:[%s269 + $0x4a4] sm:$0xff]
        %v504 = vld [vmem:[%s269 + $0x4ac] sm:$0xf]
        %v505 = vld [vmem:[%s269 + $0x4b0] sm:$0xff]
        %v506 = vld [vmem:[%s269 + $0x4b8] sm:$0xff]
        %v507 = vld [vmem:[%s269 + $0x4c0] sm:$0xf]
        %v508 = vld [vmem:[%s269 + $0x4c4] sm:$0xff]
        %v509 = vld [vmem:[%s269 + $0x4cc] sm:$0xff]
        %v510 = vld [vmem:[%s269 + $0x4d4] sm:$0xf]
        %v511 = vld [vmem:[%s269 + $0x4d8] sm:$0xff]
        %v512 = vld [vmem:[%s269 + $0x4e0] sm:$0xff]
        %v513 = vld [vmem:[%s269 + $0x4e8] sm:$0xf]
        %v514 = vld [vmem:[%s269 + $0x4ec] sm:$0xff]
        %v515 = vld [vmem:[%s269 + $0x4f4] sm:$0xff]
        %v516 = vld [vmem:[%s269 + $0x4fc] sm:$0xf]
        %v517 = vld [vmem:[%s269 + $0x500] sm:$0xff]
        %v518 = vld [vmem:[%s269 + $0x508] sm:$0xff]
        %v519 = vld [vmem:[%s269 + $0x510] sm:$0xf]
        %v520 = vld [vmem:[%s269 + $0x514] sm:$0xff]
        %v521 = vld [vmem:[%s269 + $0x51c] sm:$0xff]
        %v522 = vld [vmem:[%s269 + $0x524] sm:$0xf]
        %v523 = vld [vmem:[%s269 + $0x528] sm:$0xff]
        %v524 = vld [vmem:[%s269 + $0x530] sm:$0xff]
        %v525 = vld [vmem:[%s269 + $0x538] sm:$0xf]
        %v526 = vld [vmem:[%s269 + $0x53c] sm:$0xff]
        %v527 = vld [vmem:[%s269 + $0x544] sm:$0xff]
        %v528 = vld [vmem:[%s269 + $0x54c] sm:$0xf]
        %v529 = vld [vmem:[%s269 + $0x550] sm:$0xff]
        %v530 = vld [vmem:[%s269 + $0x558] sm:$0xff]
        %v531 = vld [vmem:[%s269 + $0x560] sm:$0xf]
        %v532 = vld [vmem:[%s269 + $0x564] sm:$0xff]
        %v533 = vld [vmem:[%s269 + $0x56c] sm:$0xff]
        %v534 = vld [vmem:[%s269 + $0x574] sm:$0xf]
        %v535 = vld [vmem:[%s269 + $0x578] sm:$0xff]
        %v536 = vld [vmem:[%s269 + $0x580] sm:$0xff]
        %v537 = vld [vmem:[%s269 + $0x588] sm:$0xf]
        %v538 = vld [vmem:[%s269 + $0x58c] sm:$0xff]
        %v539 = vld [vmem:[%s269 + $0x594] sm:$0xff]
        %v540 = vld [vmem:[%s269 + $0x59c] sm:$0xf]
        %v541 = vld [vmem:[%s269 + $0x5a0] sm:$0xff]
        %v542 = vld [vmem:[%s269 + $0x5a8] sm:$0xff]
        %v543 = vld [vmem:[%s269 + $0x5b0] sm:$0xf]
        %v544 = vld [vmem:[%s269 + $0x5b4] sm:$0xff]
        %v545 = vld [vmem:[%s269 + $0x5bc] sm:$0xff]
        %v546 = vld [vmem:[%s269 + $0x5c4] sm:$0xf]
        %v547 = vld [vmem:[%s269 + $0x5c8] sm:$0xff]
        %v548 = vld [vmem:[%s269 + $0x5d0] sm:$0xff]
        %v549 = vld [vmem:[%s269 + $0x5d8] sm:$0xf]
        %v550 = vld [vmem:[%s269 + $0x5dc] sm:$0xff]
        %v551 = vld [vmem:[%s269 + $0x5e4] sm:$0xff]
        %v552 = vld [vmem:[%s269 + $0x5ec] sm:$0xf]
        %v553 = vld [vmem:[%s269 + $0x5f0] sm:$0xff]
        %v554 = vld [vmem:[%s269 + $0x5f8] sm:$0xff]
        %v555 = vld [vmem:[%s269 + $0x600] sm:$0xf]
        %v556 = vld [vmem:[%s269 + $0x604] sm:$0xff]
        %v557 = vld [vmem:[%s269 + $0x60c] sm:$0xff]
        %v558 = vld [vmem:[%s269 + $0x614] sm:$0xf]
        %v559 = vld [vmem:[%s269 + $0x618] sm:$0xff]
        %v560 = vld [vmem:[%s269 + $0x620] sm:$0xff]
        %v561 = vld [vmem:[%s269 + $0x628] sm:$0xf]
        %v562 = vld [vmem:[%s269 + $0x62c] sm:$0xff]
        %v563 = vld [vmem:[%s269 + $0x634] sm:$0xff]
        %v564 = vld [vmem:[%s269 + $0x63c] sm:$0xf]
        %v805 = vunpack.c.l.b16 %v325
        %v806 = vunpack.c.h.b16 %v325
        %v807 = vunpack.c.l.b16 %v326
        %v808 = vunpack.c.h.b16 %v326
        %v809 = vunpack.c.l.b16 %v327
        %v810 = vunpack.c.l.b16 %v328
        %v811 = vunpack.c.h.b16 %v328
        %v812 = vunpack.c.l.b16 %v329
        %v813 = vunpack.c.h.b16 %v329
        %v814 = vunpack.c.l.b16 %v330
        %v815 = vunpack.c.l.b16 %v331
        %v816 = vunpack.c.h.b16 %v331
        %v817 = vunpack.c.l.b16 %v332
        %v818 = vunpack.c.h.b16 %v332
        %v819 = vunpack.c.l.b16 %v333
        %v820 = vunpack.c.l.b16 %v334
        %v821 = vunpack.c.h.b16 %v334
        %v822 = vunpack.c.l.b16 %v335
        %v823 = vunpack.c.h.b16 %v335
        %v824 = vunpack.c.l.b16 %v336
        %v825 = vunpack.c.l.b16 %v337
        %v826 = vunpack.c.h.b16 %v337
        %v827 = vunpack.c.l.b16 %v338
        %v828 = vunpack.c.h.b16 %v338
        %v829 = vunpack.c.l.b16 %v339
        %v830 = vunpack.c.l.b16 %v340
        %v831 = vunpack.c.h.b16 %v340
        %v832 = vunpack.c.l.b16 %v341
        %v833 = vunpack.c.h.b16 %v341
        %v834 = vunpack.c.l.b16 %v342
        %v835 = vunpack.c.l.b16 %v343
        %v836 = vunpack.c.h.b16 %v343
        %v837 = vunpack.c.l.b16 %v344
        %v838 = vunpack.c.h.b16 %v344
        %v839 = vunpack.c.l.b16 %v345
        %v840 = vunpack.c.l.b16 %v346
        %v841 = vunpack.c.h.b16 %v346
        %v842 = vunpack.c.l.b16 %v347
        %v843 = vunpack.c.h.b16 %v347
        %v844 = vunpack.c.l.b16 %v348
        %v845 = vunpack.c.l.b16 %v349
        %v846 = vunpack.c.h.b16 %v349
        %v847 = vunpack.c.l.b16 %v350
        %v848 = vunpack.c.h.b16 %v350
        %v849 = vunpack.c.l.b16 %v351
        %v850 = vunpack.c.l.b16 %v352
        %v851 = vunpack.c.h.b16 %v352
        %v852 = vunpack.c.l.b16 %v353
        %v853 = vunpack.c.h.b16 %v353
        %v854 = vunpack.c.l.b16 %v354
        %v855 = vunpack.c.l.b16 %v355
        %v856 = vunpack.c.h.b16 %v355
        %v857 = vunpack.c.l.b16 %v356
        %v858 = vunpack.c.h.b16 %v356
        %v859 = vunpack.c.l.b16 %v357
        %v860 = vunpack.c.l.b16 %v358
        %v861 = vunpack.c.h.b16 %v358
        %v862 = vunpack.c.l.b16 %v359
        %v863 = vunpack.c.h.b16 %v359
        %v864 = vunpack.c.l.b16 %v360
        %v865 = vunpack.c.l.b16 %v361
        %v866 = vunpack.c.h.b16 %v361
        %v867 = vunpack.c.l.b16 %v362
        %v868 = vunpack.c.h.b16 %v362
        %v869 = vunpack.c.l.b16 %v363
        %v870 = vunpack.c.l.b16 %v364
        %v871 = vunpack.c.h.b16 %v364
        %v872 = vunpack.c.l.b16 %v365
        %v873 = vunpack.c.h.b16 %v365
        %v874 = vunpack.c.l.b16 %v366
        %v875 = vunpack.c.l.b16 %v367
        %v876 = vunpack.c.h.b16 %v367
        %v877 = vunpack.c.l.b16 %v368
        %v878 = vunpack.c.h.b16 %v368
        %v879 = vunpack.c.l.b16 %v369
        %v880 = vunpack.c.l.b16 %v370
        %v881 = vunpack.c.h.b16 %v370
        %v882 = vunpack.c.l.b16 %v371
        %v883 = vunpack.c.h.b16 %v371
        %v884 = vunpack.c.l.b16 %v372
        %v885 = vunpack.c.l.b16 %v373
        %v886 = vunpack.c.h.b16 %v373
        %v887 = vunpack.c.l.b16 %v374
        %v888 = vunpack.c.h.b16 %v374
        %v889 = vunpack.c.l.b16 %v375
        %v890 = vunpack.c.l.b16 %v376
        %v891 = vunpack.c.h.b16 %v376
        %v892 = vunpack.c.l.b16 %v377
        %v893 = vunpack.c.h.b16 %v377
        %v894 = vunpack.c.l.b16 %v378
        %v895 = vunpack.c.l.b16 %v379
        %v896 = vunpack.c.h.b16 %v379
        %v897 = vunpack.c.l.b16 %v380
        %v898 = vunpack.c.h.b16 %v380
        %v899 = vunpack.c.l.b16 %v381
        %v900 = vunpack.c.l.b16 %v382
        %v901 = vunpack.c.h.b16 %v382
        %v902 = vunpack.c.l.b16 %v383
        %v903 = vunpack.c.h.b16 %v383
        %v904 = vunpack.c.l.b16 %v384
        %v905 = vunpack.c.l.b16 %v385
        %v906 = vunpack.c.h.b16 %v385
        %v907 = vunpack.c.l.b16 %v386
        %v908 = vunpack.c.h.b16 %v386
        %v909 = vunpack.c.l.b16 %v387
        %v910 = vunpack.c.l.b16 %v388
        %v911 = vunpack.c.h.b16 %v388
        %v912 = vunpack.c.l.b16 %v389
        %v913 = vunpack.c.h.b16 %v389
        %v914 = vunpack.c.l.b16 %v390
        %v915 = vunpack.c.l.b16 %v391
        %v916 = vunpack.c.h.b16 %v391
        %v917 = vunpack.c.l.b16 %v392
        %v918 = vunpack.c.h.b16 %v392
        %v919 = vunpack.c.l.b16 %v393
        %v920 = vunpack.c.l.b16 %v394
        %v921 = vunpack.c.h.b16 %v394
        %v922 = vunpack.c.l.b16 %v395
        %v923 = vunpack.c.h.b16 %v395
        %v924 = vunpack.c.l.b16 %v396
        %v925 = vunpack.c.l.b16 %v397
        %v926 = vunpack.c.h.b16 %v397
        %v927 = vunpack.c.l.b16 %v398
        %v928 = vunpack.c.h.b16 %v398
        %v929 = vunpack.c.l.b16 %v399
        %v930 = vunpack.c.l.b16 %v400
        %v931 = vunpack.c.h.b16 %v400
        %v932 = vunpack.c.l.b16 %v401
        %v933 = vunpack.c.h.b16 %v401
        %v934 = vunpack.c.l.b16 %v402
        %v935 = vunpack.c.l.b16 %v403
        %v936 = vunpack.c.h.b16 %v403
        %v937 = vunpack.c.l.b16 %v404
        %v938 = vunpack.c.h.b16 %v404
        %v939 = vunpack.c.l.b16 %v405
        %v940 = vunpack.c.l.b16 %v406
        %v941 = vunpack.c.h.b16 %v406
        %v942 = vunpack.c.l.b16 %v407
        %v943 = vunpack.c.h.b16 %v407
        %v944 = vunpack.c.l.b16 %v408
        %v945 = vunpack.c.l.b16 %v409
        %v946 = vunpack.c.h.b16 %v409
        %v947 = vunpack.c.l.b16 %v410
        %v948 = vunpack.c.h.b16 %v410
        %v949 = vunpack.c.l.b16 %v411
        %v950 = vunpack.c.l.b16 %v412
        %v951 = vunpack.c.h.b16 %v412
        %v952 = vunpack.c.l.b16 %v413
        %v953 = vunpack.c.h.b16 %v413
        %v954 = vunpack.c.l.b16 %v414
        %v955 = vunpack.c.l.b16 %v415
        %v956 = vunpack.c.h.b16 %v415
        %v957 = vunpack.c.l.b16 %v416
        %v958 = vunpack.c.h.b16 %v416
        %v959 = vunpack.c.l.b16 %v417
        %v960 = vunpack.c.l.b16 %v418
        %v961 = vunpack.c.h.b16 %v418
        %v962 = vunpack.c.l.b16 %v419
        %v963 = vunpack.c.h.b16 %v419
        %v964 = vunpack.c.l.b16 %v420
        %v965 = vunpack.c.l.b16 %v421
        %v966 = vunpack.c.h.b16 %v421
        %v967 = vunpack.c.l.b16 %v422
        %v968 = vunpack.c.h.b16 %v422
        %v969 = vunpack.c.l.b16 %v423
        %v970 = vunpack.c.l.b16 %v424
        %v971 = vunpack.c.h.b16 %v424
        %v972 = vunpack.c.l.b16 %v425
        %v973 = vunpack.c.h.b16 %v425
        %v974 = vunpack.c.l.b16 %v426
        %v975 = vunpack.c.l.b16 %v427
        %v976 = vunpack.c.h.b16 %v427
        %v977 = vunpack.c.l.b16 %v428
        %v978 = vunpack.c.h.b16 %v428
        %v979 = vunpack.c.l.b16 %v429
        %v980 = vunpack.c.l.b16 %v430
        %v981 = vunpack.c.h.b16 %v430
        %v982 = vunpack.c.l.b16 %v431
        %v983 = vunpack.c.h.b16 %v431
        %v984 = vunpack.c.l.b16 %v432
        %v985 = vunpack.c.l.b16 %v433
        %v986 = vunpack.c.h.b16 %v433
        %v987 = vunpack.c.l.b16 %v434
        %v988 = vunpack.c.h.b16 %v434
        %v989 = vunpack.c.l.b16 %v435
        %v990 = vunpack.c.l.b16 %v436
        %v991 = vunpack.c.h.b16 %v436
        %v992 = vunpack.c.l.b16 %v437
        %v993 = vunpack.c.h.b16 %v437
        %v994 = vunpack.c.l.b16 %v438
        %v995 = vunpack.c.l.b16 %v439
        %v996 = vunpack.c.h.b16 %v439
        %v997 = vunpack.c.l.b16 %v440
        %v998 = vunpack.c.h.b16 %v440
        %v999 = vunpack.c.l.b16 %v441
        %v1000 = vunpack.c.l.b16 %v442
        %v1001 = vunpack.c.h.b16 %v442
        %v1002 = vunpack.c.l.b16 %v443
        %v1003 = vunpack.c.h.b16 %v443
        %v1004 = vunpack.c.l.b16 %v444
        %v1005 = vunpack.c.l.b16 %v445
        %v1006 = vunpack.c.h.b16 %v445
        %v1007 = vunpack.c.l.b16 %v446
        %v1008 = vunpack.c.h.b16 %v446
        %v1009 = vunpack.c.l.b16 %v447
        %v1010 = vunpack.c.l.b16 %v448
        %v1011 = vunpack.c.h.b16 %v448
        %v1012 = vunpack.c.l.b16 %v449
        %v1013 = vunpack.c.h.b16 %v449
        %v1014 = vunpack.c.l.b16 %v450
        %v1015 = vunpack.c.l.b16 %v451
        %v1016 = vunpack.c.h.b16 %v451
        %v1017 = vunpack.c.l.b16 %v452
        %v1018 = vunpack.c.h.b16 %v452
        %v1019 = vunpack.c.l.b16 %v453
        %v1020 = vunpack.c.l.b16 %v454
        %v1021 = vunpack.c.h.b16 %v454
        %v1022 = vunpack.c.l.b16 %v455
        %v1023 = vunpack.c.h.b16 %v455
        %v1024 = vunpack.c.l.b16 %v456
        %v1025 = vunpack.c.l.b16 %v457
        %v1026 = vunpack.c.h.b16 %v457
        %v1027 = vunpack.c.l.b16 %v458
        %v1028 = vunpack.c.h.b16 %v458
        %v1029 = vunpack.c.l.b16 %v459
        %v1030 = vunpack.c.l.b16 %v460
        %v1031 = vunpack.c.h.b16 %v460
        %v1032 = vunpack.c.l.b16 %v461
        %v1033 = vunpack.c.h.b16 %v461
        %v1034 = vunpack.c.l.b16 %v462
        %v1035 = vunpack.c.l.b16 %v463
        %v1036 = vunpack.c.h.b16 %v463
        %v1037 = vunpack.c.l.b16 %v464
        %v1038 = vunpack.c.h.b16 %v464
        %v1039 = vunpack.c.l.b16 %v465
        %v1040 = vunpack.c.l.b16 %v466
        %v1041 = vunpack.c.h.b16 %v466
        %v1042 = vunpack.c.l.b16 %v467
        %v1043 = vunpack.c.h.b16 %v467
        %v1044 = vunpack.c.l.b16 %v468
        %v1045 = vunpack.c.l.b16 %v469
        %v1046 = vunpack.c.h.b16 %v469
        %v1047 = vunpack.c.l.b16 %v470
        %v1048 = vunpack.c.h.b16 %v470
        %v1049 = vunpack.c.l.b16 %v471
        %v1050 = vunpack.c.l.b16 %v472
        %v1051 = vunpack.c.h.b16 %v472
        %v1052 = vunpack.c.l.b16 %v473
        %v1053 = vunpack.c.h.b16 %v473
        %v1054 = vunpack.c.l.b16 %v474
        %v1055 = vunpack.c.l.b16 %v475
        %v1056 = vunpack.c.h.b16 %v475
        %v1057 = vunpack.c.l.b16 %v476
        %v1058 = vunpack.c.h.b16 %v476
        %v1059 = vunpack.c.l.b16 %v477
        %v1060 = vunpack.c.l.b16 %v478
        %v1061 = vunpack.c.h.b16 %v478
        %v1062 = vunpack.c.l.b16 %v479
        %v1063 = vunpack.c.h.b16 %v479
        %v1064 = vunpack.c.l.b16 %v480
        %v1065 = vunpack.c.l.b16 %v481
        %v1066 = vunpack.c.h.b16 %v481
        %v1067 = vunpack.c.l.b16 %v482
        %v1068 = vunpack.c.h.b16 %v482
        %v1069 = vunpack.c.l.b16 %v483
        %v1070 = vunpack.c.l.b16 %v484
        %v1071 = vunpack.c.h.b16 %v484
        %v1072 = vunpack.c.l.b16 %v485
        %v1073 = vunpack.c.h.b16 %v485
        %v1074 = vunpack.c.l.b16 %v486
        %v1075 = vunpack.c.l.b16 %v487
        %v1076 = vunpack.c.h.b16 %v487
        %v1077 = vunpack.c.l.b16 %v488
        %v1078 = vunpack.c.h.b16 %v488
        %v1079 = vunpack.c.l.b16 %v489
        %v1080 = vunpack.c.l.b16 %v490
        %v1081 = vunpack.c.h.b16 %v490
        %v1082 = vunpack.c.l.b16 %v491
        %v1083 = vunpack.c.h.b16 %v491
        %v1084 = vunpack.c.l.b16 %v492
        %v1085 = vunpack.c.l.b16 %v493
        %v1086 = vunpack.c.h.b16 %v493
        %v1087 = vunpack.c.l.b16 %v494
        %v1088 = vunpack.c.h.b16 %v494
        %v1089 = vunpack.c.l.b16 %v495
        %v1090 = vunpack.c.l.b16 %v496
        %v1091 = vunpack.c.h.b16 %v496
        %v1092 = vunpack.c.l.b16 %v497
        %v1093 = vunpack.c.h.b16 %v497
        %v1094 = vunpack.c.l.b16 %v498
        %v1095 = vunpack.c.l.b16 %v499
        %v1096 = vunpack.c.h.b16 %v499
        %v1097 = vunpack.c.l.b16 %v500
        %v1098 = vunpack.c.h.b16 %v500
        %v1099 = vunpack.c.l.b16 %v501
        %v1100 = vunpack.c.l.b16 %v502
        %v1101 = vunpack.c.h.b16 %v502
        %v1102 = vunpack.c.l.b16 %v503
        %v1103 = vunpack.c.h.b16 %v503
        %v1104 = vunpack.c.l.b16 %v504
        %v1105 = vunpack.c.l.b16 %v505
        %v1106 = vunpack.c.h.b16 %v505
        %v1107 = vunpack.c.l.b16 %v506
        %v1108 = vunpack.c.h.b16 %v506
        %v1109 = vunpack.c.l.b16 %v507
        %v1110 = vunpack.c.l.b16 %v508
        %v1111 = vunpack.c.h.b16 %v508
        %v1112 = vunpack.c.l.b16 %v509
        %v1113 = vunpack.c.h.b16 %v509
        %v1114 = vunpack.c.l.b16 %v510
        %v1115 = vunpack.c.l.b16 %v511
        %v1116 = vunpack.c.h.b16 %v511
        %v1117 = vunpack.c.l.b16 %v512
        %v1118 = vunpack.c.h.b16 %v512
        %v1119 = vunpack.c.l.b16 %v513
        %v1120 = vunpack.c.l.b16 %v514
        %v1121 = vunpack.c.h.b16 %v514
        %v1122 = vunpack.c.l.b16 %v515
        %v1123 = vunpack.c.h.b16 %v515
        %v1124 = vunpack.c.l.b16 %v516
        %v1125 = vunpack.c.l.b16 %v517
        %v1126 = vunpack.c.h.b16 %v517
        %v1127 = vunpack.c.l.b16 %v518
        %v1128 = vunpack.c.h.b16 %v518
        %v1129 = vunpack.c.l.b16 %v519
        %v1130 = vunpack.c.l.b16 %v520
        %v1131 = vunpack.c.h.b16 %v520
        %v1132 = vunpack.c.l.b16 %v521
        %v1133 = vunpack.c.h.b16 %v521
        %v1134 = vunpack.c.l.b16 %v522
        %v1135 = vunpack.c.l.b16 %v523
        %v1136 = vunpack.c.h.b16 %v523
        %v1137 = vunpack.c.l.b16 %v524
        %v1138 = vunpack.c.h.b16 %v524
        %v1139 = vunpack.c.l.b16 %v525
        %v1140 = vunpack.c.l.b16 %v526
        %v1141 = vunpack.c.h.b16 %v526
        %v1142 = vunpack.c.l.b16 %v527
        %v1143 = vunpack.c.h.b16 %v527
        %v1144 = vunpack.c.l.b16 %v528
        %v1145 = vunpack.c.l.b16 %v529
        %v1146 = vunpack.c.h.b16 %v529
        %v1147 = vunpack.c.l.b16 %v530
        %v1148 = vunpack.c.h.b16 %v530
        %v1149 = vunpack.c.l.b16 %v531
        %v1150 = vunpack.c.l.b16 %v532
        %v1151 = vunpack.c.h.b16 %v532
        %v1152 = vunpack.c.l.b16 %v533
        %v1153 = vunpack.c.h.b16 %v533
        %v1154 = vunpack.c.l.b16 %v534
        %v1155 = vunpack.c.l.b16 %v535
        %v1156 = vunpack.c.h.b16 %v535
        %v1157 = vunpack.c.l.b16 %v536
        %v1158 = vunpack.c.h.b16 %v536
        %v1159 = vunpack.c.l.b16 %v537
        %v1160 = vunpack.c.l.b16 %v538
        %v1161 = vunpack.c.h.b16 %v538
        %v1162 = vunpack.c.l.b16 %v539
        %v1163 = vunpack.c.h.b16 %v539
        %v1164 = vunpack.c.l.b16 %v540
        %v1165 = vunpack.c.l.b16 %v541
        %v1166 = vunpack.c.h.b16 %v541
        %v1167 = vunpack.c.l.b16 %v542
        %v1168 = vunpack.c.h.b16 %v542
        %v1169 = vunpack.c.l.b16 %v543
        %v1170 = vunpack.c.l.b16 %v544
        %v1171 = vunpack.c.h.b16 %v544
        %v1172 = vunpack.c.l.b16 %v545
        %v1173 = vunpack.c.h.b16 %v545
        %v1174 = vunpack.c.l.b16 %v546
        %v1175 = vunpack.c.l.b16 %v547
        %v1176 = vunpack.c.h.b16 %v547
        %v1177 = vunpack.c.l.b16 %v548
        %v1178 = vunpack.c.h.b16 %v548
        %v1179 = vunpack.c.l.b16 %v549
        %v1180 = vunpack.c.l.b16 %v550
        %v1181 = vunpack.c.h.b16 %v550
        %v1182 = vunpack.c.l.b16 %v551
        %v1183 = vunpack.c.h.b16 %v551
        %v1184 = vunpack.c.l.b16 %v552
        %v1185 = vunpack.c.l.b16 %v553
        %v1186 = vunpack.c.h.b16 %v553
        %v1187 = vunpack.c.l.b16 %v554
        %v1188 = vunpack.c.h.b16 %v554
        %v1189 = vunpack.c.l.b16 %v555
        %v1190 = vunpack.c.l.b16 %v556
        %v1191 = vunpack.c.h.b16 %v556
        %v1192 = vunpack.c.l.b16 %v557
        %v1193 = vunpack.c.h.b16 %v557
        %v1194 = vunpack.c.l.b16 %v558
        %v1195 = vunpack.c.l.b16 %v559
        %v1196 = vunpack.c.h.b16 %v559
        %v1197 = vunpack.c.l.b16 %v560
        %v1198 = vunpack.c.h.b16 %v560
        %v1199 = vunpack.c.l.b16 %v561
        %v1200 = vunpack.c.l.b16 %v562
        %v1201 = vunpack.c.h.b16 %v562
        %v1202 = vunpack.c.l.b16 %v563
        %v1203 = vunpack.c.h.b16 %v563
        %v1204 = vunpack.c.l.b16 %v564
        %v1205 = vpack.c.b16 %v810, %v805
        %v1206 = vpack.c.b16 %v811, %v806
        %v1207 = vpack.c.b16 %v812, %v807
        %v1208 = vpack.c.b16 %v813, %v808
        %v1209 = vpack.c.b16 %v814, %v809
        %v1210 = vpack.c.b16 %v820, %v815
        %v1211 = vpack.c.b16 %v821, %v816
        %v1212 = vpack.c.b16 %v822, %v817
        %v1213 = vpack.c.b16 %v823, %v818
        %v1214 = vpack.c.b16 %v824, %v819
        %v1215 = vpack.c.b16 %v830, %v825
        %v1216 = vpack.c.b16 %v831, %v826
        %v1217 = vpack.c.b16 %v832, %v827
        %v1218 = vpack.c.b16 %v833, %v828
        %v1219 = vpack.c.b16 %v834, %v829
        %v1220 = vpack.c.b16 %v840, %v835
        %v1221 = vpack.c.b16 %v841, %v836
        %v1222 = vpack.c.b16 %v842, %v837
        %v1223 = vpack.c.b16 %v843, %v838
        %v1224 = vpack.c.b16 %v844, %v839
        %v1225 = vpack.c.b16 %v850, %v845
        %v1226 = vpack.c.b16 %v851, %v846
        %v1227 = vpack.c.b16 %v852, %v847
        %v1228 = vpack.c.b16 %v853, %v848
        %v1229 = vpack.c.b16 %v854, %v849
        %v1230 = vpack.c.b16 %v860, %v855
        %v1231 = vpack.c.b16 %v861, %v856
        %v1232 = vpack.c.b16 %v862, %v857
        %v1233 = vpack.c.b16 %v863, %v858
        %v1234 = vpack.c.b16 %v864, %v859
        %v1235 = vpack.c.b16 %v870, %v865
        %v1236 = vpack.c.b16 %v871, %v866
        %v1237 = vpack.c.b16 %v872, %v867
        %v1238 = vpack.c.b16 %v873, %v868
        %v1239 = vpack.c.b16 %v874, %v869
        %v1240 = vpack.c.b16 %v880, %v875
        %v1241 = vpack.c.b16 %v881, %v876
        %v1242 = vpack.c.b16 %v882, %v877
        %v1243 = vpack.c.b16 %v883, %v878
        %v1244 = vpack.c.b16 %v884, %v879
        %v1245 = vpack.c.b16 %v890, %v885
        %v1246 = vpack.c.b16 %v891, %v886
        %v1247 = vpack.c.b16 %v892, %v887
        %v1248 = vpack.c.b16 %v893, %v888
        %v1249 = vpack.c.b16 %v894, %v889
        %v1250 = vpack.c.b16 %v900, %v895
        %v1251 = vpack.c.b16 %v901, %v896
        %v1252 = vpack.c.b16 %v902, %v897
        %v1253 = vpack.c.b16 %v903, %v898
        %v1254 = vpack.c.b16 %v904, %v899
        %v1255 = vpack.c.b16 %v910, %v905
        %v1256 = vpack.c.b16 %v911, %v906
        %v1257 = vpack.c.b16 %v912, %v907
        %v1258 = vpack.c.b16 %v913, %v908
        %v1259 = vpack.c.b16 %v914, %v909
        %v1260 = vpack.c.b16 %v920, %v915
        %v1261 = vpack.c.b16 %v921, %v916
        %v1262 = vpack.c.b16 %v922, %v917
        %v1263 = vpack.c.b16 %v923, %v918
        %v1264 = vpack.c.b16 %v924, %v919
        %v1265 = vpack.c.b16 %v930, %v925
        %v1266 = vpack.c.b16 %v931, %v926
        %v1267 = vpack.c.b16 %v932, %v927
        %v1268 = vpack.c.b16 %v933, %v928
        %v1269 = vpack.c.b16 %v934, %v929
        %v1270 = vpack.c.b16 %v940, %v935
        %v1271 = vpack.c.b16 %v941, %v936
        %v1272 = vpack.c.b16 %v942, %v937
        %v1273 = vpack.c.b16 %v943, %v938
        %v1274 = vpack.c.b16 %v944, %v939
        %v1275 = vpack.c.b16 %v950, %v945
        %v1276 = vpack.c.b16 %v951, %v946
        %v1277 = vpack.c.b16 %v952, %v947
        %v1278 = vpack.c.b16 %v953, %v948
        %v1279 = vpack.c.b16 %v954, %v949
        %v1280 = vpack.c.b16 %v960, %v955
        %v1281 = vpack.c.b16 %v961, %v956
        %v1282 = vpack.c.b16 %v962, %v957
        %v1283 = vpack.c.b16 %v963, %v958
        %v1284 = vpack.c.b16 %v964, %v959
        %v1285 = vpack.c.b16 %v970, %v965
        %v1286 = vpack.c.b16 %v971, %v966
        %v1287 = vpack.c.b16 %v972, %v967
        %v1288 = vpack.c.b16 %v973, %v968
        %v1289 = vpack.c.b16 %v974, %v969
        %v1290 = vpack.c.b16 %v980, %v975
        %v1291 = vpack.c.b16 %v981, %v976
        %v1292 = vpack.c.b16 %v982, %v977
        %v1293 = vpack.c.b16 %v983, %v978
        %v1294 = vpack.c.b16 %v984, %v979
        %v1295 = vpack.c.b16 %v990, %v985
        %v1296 = vpack.c.b16 %v991, %v986
        %v1297 = vpack.c.b16 %v992, %v987
        %v1298 = vpack.c.b16 %v993, %v988
        %v1299 = vpack.c.b16 %v994, %v989
        %v1300 = vpack.c.b16 %v1000, %v995
        %v1301 = vpack.c.b16 %v1001, %v996
        %v1302 = vpack.c.b16 %v1002, %v997
        %v1303 = vpack.c.b16 %v1003, %v998
        %v1304 = vpack.c.b16 %v1004, %v999
        %v1305 = vpack.c.b16 %v1010, %v1005
        %v1306 = vpack.c.b16 %v1011, %v1006
        %v1307 = vpack.c.b16 %v1012, %v1007
        %v1308 = vpack.c.b16 %v1013, %v1008
        %v1309 = vpack.c.b16 %v1014, %v1009
        %v1310 = vpack.c.b16 %v1020, %v1015
        %v1311 = vpack.c.b16 %v1021, %v1016
        %v1312 = vpack.c.b16 %v1022, %v1017
        %v1313 = vpack.c.b16 %v1023, %v1018
        %v1314 = vpack.c.b16 %v1024, %v1019
        %v1315 = vpack.c.b16 %v1030, %v1025
        %v1316 = vpack.c.b16 %v1031, %v1026
        %v1317 = vpack.c.b16 %v1032, %v1027
        %v1318 = vpack.c.b16 %v1033, %v1028
        %v1319 = vpack.c.b16 %v1034, %v1029
        %v1320 = vpack.c.b16 %v1040, %v1035
        %v1321 = vpack.c.b16 %v1041, %v1036
        %v1322 = vpack.c.b16 %v1042, %v1037
        %v1323 = vpack.c.b16 %v1043, %v1038
        %v1324 = vpack.c.b16 %v1044, %v1039
        %v1325 = vpack.c.b16 %v1050, %v1045
        %v1326 = vpack.c.b16 %v1051, %v1046
        %v1327 = vpack.c.b16 %v1052, %v1047
        %v1328 = vpack.c.b16 %v1053, %v1048
        %v1329 = vpack.c.b16 %v1054, %v1049
        %v1330 = vpack.c.b16 %v1060, %v1055
        %v1331 = vpack.c.b16 %v1061, %v1056
        %v1332 = vpack.c.b16 %v1062, %v1057
        %v1333 = vpack.c.b16 %v1063, %v1058
        %v1334 = vpack.c.b16 %v1064, %v1059
        %v1335 = vpack.c.b16 %v1070, %v1065
        %v1336 = vpack.c.b16 %v1071, %v1066
        %v1337 = vpack.c.b16 %v1072, %v1067
        %v1338 = vpack.c.b16 %v1073, %v1068
        %v1339 = vpack.c.b16 %v1074, %v1069
        %v1340 = vpack.c.b16 %v1080, %v1075
        %v1341 = vpack.c.b16 %v1081, %v1076
        %v1342 = vpack.c.b16 %v1082, %v1077
        %v1343 = vpack.c.b16 %v1083, %v1078
        %v1344 = vpack.c.b16 %v1084, %v1079
        %v1345 = vpack.c.b16 %v1090, %v1085
        %v1346 = vpack.c.b16 %v1091, %v1086
        %v1347 = vpack.c.b16 %v1092, %v1087
        %v1348 = vpack.c.b16 %v1093, %v1088
        %v1349 = vpack.c.b16 %v1094, %v1089
        %v1350 = vpack.c.b16 %v1100, %v1095
        %v1351 = vpack.c.b16 %v1101, %v1096
        %v1352 = vpack.c.b16 %v1102, %v1097
        %v1353 = vpack.c.b16 %v1103, %v1098
        %v1354 = vpack.c.b16 %v1104, %v1099
        %v1355 = vpack.c.b16 %v1110, %v1105
        %v1356 = vpack.c.b16 %v1111, %v1106
        %v1357 = vpack.c.b16 %v1112, %v1107
        %v1358 = vpack.c.b16 %v1113, %v1108
        %v1359 = vpack.c.b16 %v1114, %v1109
        %v1360 = vpack.c.b16 %v1120, %v1115
        %v1361 = vpack.c.b16 %v1121, %v1116
        %v1362 = vpack.c.b16 %v1122, %v1117
        %v1363 = vpack.c.b16 %v1123, %v1118
        %v1364 = vpack.c.b16 %v1124, %v1119
        %v1365 = vpack.c.b16 %v1130, %v1125
        %v1366 = vpack.c.b16 %v1131, %v1126
        %v1367 = vpack.c.b16 %v1132, %v1127
        %v1368 = vpack.c.b16 %v1133, %v1128
        %v1369 = vpack.c.b16 %v1134, %v1129
        %v1370 = vpack.c.b16 %v1140, %v1135
        %v1371 = vpack.c.b16 %v1141, %v1136
        %v1372 = vpack.c.b16 %v1142, %v1137
        %v1373 = vpack.c.b16 %v1143, %v1138
        %v1374 = vpack.c.b16 %v1144, %v1139
        %v1375 = vpack.c.b16 %v1150, %v1145
        %v1376 = vpack.c.b16 %v1151, %v1146
        %v1377 = vpack.c.b16 %v1152, %v1147
        %v1378 = vpack.c.b16 %v1153, %v1148
        %v1379 = vpack.c.b16 %v1154, %v1149
        %v1380 = vpack.c.b16 %v1160, %v1155
        %v1381 = vpack.c.b16 %v1161, %v1156
        %v1382 = vpack.c.b16 %v1162, %v1157
        %v1383 = vpack.c.b16 %v1163, %v1158
        %v1384 = vpack.c.b16 %v1164, %v1159
        %v1385 = vpack.c.b16 %v1170, %v1165
        %v1386 = vpack.c.b16 %v1171, %v1166
        %v1387 = vpack.c.b16 %v1172, %v1167
        %v1388 = vpack.c.b16 %v1173, %v1168
        %v1389 = vpack.c.b16 %v1174, %v1169
        %v1390 = vpack.c.b16 %v1180, %v1175
        %v1391 = vpack.c.b16 %v1181, %v1176
        %v1392 = vpack.c.b16 %v1182, %v1177
        %v1393 = vpack.c.b16 %v1183, %v1178
        %v1394 = vpack.c.b16 %v1184, %v1179
        %v1395 = vpack.c.b16 %v1190, %v1185
        %v1396 = vpack.c.b16 %v1191, %v1186
        %v1397 = vpack.c.b16 %v1192, %v1187
        %v1398 = vpack.c.b16 %v1193, %v1188
        %v1399 = vpack.c.b16 %v1194, %v1189
        %v1400 = vpack.c.b16 %v1200, %v1195
        %v1401 = vpack.c.b16 %v1201, %v1196
        %v1402 = vpack.c.b16 %v1202, %v1197
        %v1403 = vpack.c.b16 %v1203, %v1198
        %v1404 = vpack.c.b16 %v1204, %v1199
        %v1605 = vmax.bf16 %v1205, %v1210
        %v1606 = vmax.bf16 %v1605, %v1215
        %v1607 = vmax.bf16 %v1606, %v1220
        %v1608 = vunpack.i.l.bf16 %v1607
        %v1609 = vunpack.i.h.bf16 %v1607
        %v1610 = vmax.f32 %v1608, %v1609
        %v1611 = vrot.slane %v1610, 4
        %v1612 = vmax.f32 %v1610, %v1611
        %v1613 = vrot.slane %v1612, 2
        %v1614 = vmax.f32 %v1612, %v1613
        %v1615 = vrot.slane %v1614, 1
        %v1616 = vmax.f32 %v1614, %v1615
        %v1617 = vpack.i.bf16 %v1616, %v1616
        %v1618 = vmax.bf16 %v1206, %v1211
        %v1619 = vmax.bf16 %v1618, %v1216
        %v1620 = vmax.bf16 %v1619, %v1221
        %v1621 = vunpack.i.l.bf16 %v1620
        %v1622 = vunpack.i.h.bf16 %v1620
        %v1623 = vmax.f32 %v1621, %v1622
        %v1624 = vrot.slane %v1623, 4
        %v1625 = vmax.f32 %v1623, %v1624
        %v1626 = vrot.slane %v1625, 2
        %v1627 = vmax.f32 %v1625, %v1626
        %v1628 = vrot.slane %v1627, 1
        %v1629 = vmax.f32 %v1627, %v1628
        %v1630 = vpack.i.bf16 %v1629, %v1629
        %v1631 = vmax.bf16 %v1207, %v1212
        %v1632 = vmax.bf16 %v1631, %v1217
        %v1633 = vmax.bf16 %v1632, %v1222
        %v1634 = vunpack.i.l.bf16 %v1633
        %v1635 = vunpack.i.h.bf16 %v1633
        %v1636 = vmax.f32 %v1634, %v1635
        %v1637 = vrot.slane %v1636, 4
        %v1638 = vmax.f32 %v1636, %v1637
        %v1639 = vrot.slane %v1638, 2
        %v1640 = vmax.f32 %v1638, %v1639
        %v1641 = vrot.slane %v1640, 1
        %v1642 = vmax.f32 %v1640, %v1641
        %v1643 = vpack.i.bf16 %v1642, %v1642
        %v1644 = vmax.bf16 %v1208, %v1213
        %v1645 = vmax.bf16 %v1644, %v1218
        %v1646 = vmax.bf16 %v1645, %v1223
        %v1647 = vunpack.i.l.bf16 %v1646
        %v1648 = vunpack.i.h.bf16 %v1646
        %v1649 = vmax.f32 %v1647, %v1648
        %v1650 = vrot.slane %v1649, 4
        %v1651 = vmax.f32 %v1649, %v1650
        %v1652 = vrot.slane %v1651, 2
        %v1653 = vmax.f32 %v1651, %v1652
        %v1654 = vrot.slane %v1653, 1
        %v1655 = vmax.f32 %v1653, %v1654
        %v1656 = vpack.i.bf16 %v1655, %v1655
        %v1657 = vmax.bf16 %v1209, %v1214
        %v1658 = vmax.bf16 %v1657, %v1219
        %v1659 = vmax.bf16 %v1658, %v1224
        %v1660 = vunpack.i.l.bf16 %v1659
        %v1661 = vunpack.i.h.bf16 %v1659
        %v1662 = vmax.f32 %v1660, %v1661
        %v1663 = vrot.slane %v1662, 4
        %v1664 = vmax.f32 %v1662, %v1663
        %v1665 = vrot.slane %v1664, 2
        %v1666 = vmax.f32 %v1664, %v1665
        %v1667 = vrot.slane %v1666, 1
        %v1668 = vmax.f32 %v1666, %v1667
        %v1669 = vpack.i.bf16 %v1668, %v1668
        %v1670 = vmax.bf16 %v1225, %v1230
        %v1671 = vmax.bf16 %v1670, %v1235
        %v1672 = vmax.bf16 %v1671, %v1240
        %v1673 = vunpack.i.l.bf16 %v1672
        %v1674 = vunpack.i.h.bf16 %v1672
        %v1675 = vmax.f32 %v1673, %v1674
        %v1676 = vrot.slane %v1675, 4
        %v1677 = vmax.f32 %v1675, %v1676
        %v1678 = vrot.slane %v1677, 2
        %v1679 = vmax.f32 %v1677, %v1678
        %v1680 = vrot.slane %v1679, 1
        %v1681 = vmax.f32 %v1679, %v1680
        %v1682 = vpack.i.bf16 %v1681, %v1681
        %v1683 = vmax.bf16 %v1226, %v1231
        %v1684 = vmax.bf16 %v1683, %v1236
        %v1685 = vmax.bf16 %v1684, %v1241
        %v1686 = vunpack.i.l.bf16 %v1685
        %v1687 = vunpack.i.h.bf16 %v1685
        %v1688 = vmax.f32 %v1686, %v1687
        %v1689 = vrot.slane %v1688, 4
        %v1690 = vmax.f32 %v1688, %v1689
        %v1691 = vrot.slane %v1690, 2
        %v1692 = vmax.f32 %v1690, %v1691
        %v1693 = vrot.slane %v1692, 1
        %v1694 = vmax.f32 %v1692, %v1693
        %v1695 = vpack.i.bf16 %v1694, %v1694
        %v1696 = vmax.bf16 %v1227, %v1232
        %v1697 = vmax.bf16 %v1696, %v1237
        %v1698 = vmax.bf16 %v1697, %v1242
        %v1699 = vunpack.i.l.bf16 %v1698
        %v1700 = vunpack.i.h.bf16 %v1698
        %v1701 = vmax.f32 %v1699, %v1700
        %v1702 = vrot.slane %v1701, 4
        %v1703 = vmax.f32 %v1701, %v1702
        %v1704 = vrot.slane %v1703, 2
        %v1705 = vmax.f32 %v1703, %v1704
        %v1706 = vrot.slane %v1705, 1
        %v1707 = vmax.f32 %v1705, %v1706
        %v1708 = vpack.i.bf16 %v1707, %v1707
        %v1709 = vmax.bf16 %v1228, %v1233
        %v1710 = vmax.bf16 %v1709, %v1238
        %v1711 = vmax.bf16 %v1710, %v1243
        %v1712 = vunpack.i.l.bf16 %v1711
        %v1713 = vunpack.i.h.bf16 %v1711
        %v1714 = vmax.f32 %v1712, %v1713
        %v1715 = vrot.slane %v1714, 4
        %v1716 = vmax.f32 %v1714, %v1715
        %v1717 = vrot.slane %v1716, 2
        %v1718 = vmax.f32 %v1716, %v1717
        %v1719 = vrot.slane %v1718, 1
        %v1720 = vmax.f32 %v1718, %v1719
        %v1721 = vpack.i.bf16 %v1720, %v1720
        %v1722 = vmax.bf16 %v1229, %v1234
        %v1723 = vmax.bf16 %v1722, %v1239
        %v1724 = vmax.bf16 %v1723, %v1244
        %v1725 = vunpack.i.l.bf16 %v1724
        %v1726 = vunpack.i.h.bf16 %v1724
        %v1727 = vmax.f32 %v1725, %v1726
        %v1728 = vrot.slane %v1727, 4
        %v1729 = vmax.f32 %v1727, %v1728
        %v1730 = vrot.slane %v1729, 2
        %v1731 = vmax.f32 %v1729, %v1730
        %v1732 = vrot.slane %v1731, 1
        %v1733 = vmax.f32 %v1731, %v1732
        %v1734 = vpack.i.bf16 %v1733, %v1733
        %v1735 = vmax.bf16 %v1245, %v1250
        %v1736 = vmax.bf16 %v1735, %v1255
        %v1737 = vmax.bf16 %v1736, %v1260
        %v1738 = vunpack.i.l.bf16 %v1737
        %v1739 = vunpack.i.h.bf16 %v1737
        %v1740 = vmax.f32 %v1738, %v1739
        %v1741 = vrot.slane %v1740, 4
        %v1742 = vmax.f32 %v1740, %v1741
        %v1743 = vrot.slane %v1742, 2
        %v1744 = vmax.f32 %v1742, %v1743
        %v1745 = vrot.slane %v1744, 1
        %v1746 = vmax.f32 %v1744, %v1745
        %v1747 = vpack.i.bf16 %v1746, %v1746
        %v1748 = vmax.bf16 %v1246, %v1251
        %v1749 = vmax.bf16 %v1748, %v1256
        %v1750 = vmax.bf16 %v1749, %v1261
        %v1751 = vunpack.i.l.bf16 %v1750
        %v1752 = vunpack.i.h.bf16 %v1750
        %v1753 = vmax.f32 %v1751, %v1752
        %v1754 = vrot.slane %v1753, 4
        %v1755 = vmax.f32 %v1753, %v1754
        %v1756 = vrot.slane %v1755, 2
        %v1757 = vmax.f32 %v1755, %v1756
        %v1758 = vrot.slane %v1757, 1
        %v1759 = vmax.f32 %v1757, %v1758
        %v1760 = vpack.i.bf16 %v1759, %v1759
        %v1761 = vmax.bf16 %v1247, %v1252
        %v1762 = vmax.bf16 %v1761, %v1257
        %v1763 = vmax.bf16 %v1762, %v1262
        %v1764 = vunpack.i.l.bf16 %v1763
        %v1765 = vunpack.i.h.bf16 %v1763
        %v1766 = vmax.f32 %v1764, %v1765
        %v1767 = vrot.slane %v1766, 4
        %v1768 = vmax.f32 %v1766, %v1767
        %v1769 = vrot.slane %v1768, 2
        %v1770 = vmax.f32 %v1768, %v1769
        %v1771 = vrot.slane %v1770, 1
        %v1772 = vmax.f32 %v1770, %v1771
        %v1773 = vpack.i.bf16 %v1772, %v1772
        %v1774 = vmax.bf16 %v1248, %v1253
        %v1775 = vmax.bf16 %v1774, %v1258
        %v1776 = vmax.bf16 %v1775, %v1263
        %v1777 = vunpack.i.l.bf16 %v1776
        %v1778 = vunpack.i.h.bf16 %v1776
        %v1779 = vmax.f32 %v1777, %v1778
        %v1780 = vrot.slane %v1779, 4
        %v1781 = vmax.f32 %v1779, %v1780
        %v1782 = vrot.slane %v1781, 2
        %v1783 = vmax.f32 %v1781, %v1782
        %v1784 = vrot.slane %v1783, 1
        %v1785 = vmax.f32 %v1783, %v1784
        %v1786 = vpack.i.bf16 %v1785, %v1785
        %v1787 = vmax.bf16 %v1249, %v1254
        %v1788 = vmax.bf16 %v1787, %v1259
        %v1789 = vmax.bf16 %v1788, %v1264
        %v1790 = vunpack.i.l.bf16 %v1789
        %v1791 = vunpack.i.h.bf16 %v1789
        %v1792 = vmax.f32 %v1790, %v1791
        %v1793 = vrot.slane %v1792, 4
        %v1794 = vmax.f32 %v1792, %v1793
        %v1795 = vrot.slane %v1794, 2
        %v1796 = vmax.f32 %v1794, %v1795
        %v1797 = vrot.slane %v1796, 1
        %v1798 = vmax.f32 %v1796, %v1797
        %v1799 = vpack.i.bf16 %v1798, %v1798
        %v1800 = vmax.bf16 %v1265, %v1270
        %v1801 = vmax.bf16 %v1800, %v1275
        %v1802 = vmax.bf16 %v1801, %v1280
        %v1803 = vunpack.i.l.bf16 %v1802
        %v1804 = vunpack.i.h.bf16 %v1802
        %v1805 = vmax.f32 %v1803, %v1804
        %v1806 = vrot.slane %v1805, 4
        %v1807 = vmax.f32 %v1805, %v1806
        %v1808 = vrot.slane %v1807, 2
        %v1809 = vmax.f32 %v1807, %v1808
        %v1810 = vrot.slane %v1809, 1
        %v1811 = vmax.f32 %v1809, %v1810
        %v1812 = vpack.i.bf16 %v1811, %v1811
        %v1813 = vmax.bf16 %v1266, %v1271
        %v1814 = vmax.bf16 %v1813, %v1276
        %v1815 = vmax.bf16 %v1814, %v1281
        %v1816 = vunpack.i.l.bf16 %v1815
        %v1817 = vunpack.i.h.bf16 %v1815
        %v1818 = vmax.f32 %v1816, %v1817
        %v1819 = vrot.slane %v1818, 4
        %v1820 = vmax.f32 %v1818, %v1819
        %v1821 = vrot.slane %v1820, 2
        %v1822 = vmax.f32 %v1820, %v1821
        %v1823 = vrot.slane %v1822, 1
        %v1824 = vmax.f32 %v1822, %v1823
        %v1825 = vpack.i.bf16 %v1824, %v1824
        %v1826 = vmax.bf16 %v1267, %v1272
        %v1827 = vmax.bf16 %v1826, %v1277
        %v1828 = vmax.bf16 %v1827, %v1282
        %v1829 = vunpack.i.l.bf16 %v1828
        %v1830 = vunpack.i.h.bf16 %v1828
        %v1831 = vmax.f32 %v1829, %v1830
        %v1832 = vrot.slane %v1831, 4
        %v1833 = vmax.f32 %v1831, %v1832
        %v1834 = vrot.slane %v1833, 2
        %v1835 = vmax.f32 %v1833, %v1834
        %v1836 = vrot.slane %v1835, 1
        %v1837 = vmax.f32 %v1835, %v1836
        %v1838 = vpack.i.bf16 %v1837, %v1837
        %v1839 = vmax.bf16 %v1268, %v1273
        %v1840 = vmax.bf16 %v1839, %v1278
        %v1841 = vmax.bf16 %v1840, %v1283
        %v1842 = vunpack.i.l.bf16 %v1841
        %v1843 = vunpack.i.h.bf16 %v1841
        %v1844 = vmax.f32 %v1842, %v1843
        %v1845 = vrot.slane %v1844, 4
        %v1846 = vmax.f32 %v1844, %v1845
        %v1847 = vrot.slane %v1846, 2
        %v1848 = vmax.f32 %v1846, %v1847
        %v1849 = vrot.slane %v1848, 1
        %v1850 = vmax.f32 %v1848, %v1849
        %v1851 = vpack.i.bf16 %v1850, %v1850
        %v1852 = vmax.bf16 %v1269, %v1274
        %v1853 = vmax.bf16 %v1852, %v1279
        %v1854 = vmax.bf16 %v1853, %v1284
        %v1855 = vunpack.i.l.bf16 %v1854
        %v1856 = vunpack.i.h.bf16 %v1854
        %v1857 = vmax.f32 %v1855, %v1856
        %v1858 = vrot.slane %v1857, 4
        %v1859 = vmax.f32 %v1857, %v1858
        %v1860 = vrot.slane %v1859, 2
        %v1861 = vmax.f32 %v1859, %v1860
        %v1862 = vrot.slane %v1861, 1
        %v1863 = vmax.f32 %v1861, %v1862
        %v1864 = vpack.i.bf16 %v1863, %v1863
        %v1865 = vmax.bf16 %v1285, %v1290
        %v1866 = vmax.bf16 %v1865, %v1295
        %v1867 = vmax.bf16 %v1866, %v1300
        %v1868 = vunpack.i.l.bf16 %v1867
        %v1869 = vunpack.i.h.bf16 %v1867
        %v1870 = vmax.f32 %v1868, %v1869
        %v1871 = vrot.slane %v1870, 4
        %v1872 = vmax.f32 %v1870, %v1871
        %v1873 = vrot.slane %v1872, 2
        %v1874 = vmax.f32 %v1872, %v1873
        %v1875 = vrot.slane %v1874, 1
        %v1876 = vmax.f32 %v1874, %v1875
        %v1877 = vpack.i.bf16 %v1876, %v1876
        %v1878 = vmax.bf16 %v1286, %v1291
        %v1879 = vmax.bf16 %v1878, %v1296
        %v1880 = vmax.bf16 %v1879, %v1301
        %v1881 = vunpack.i.l.bf16 %v1880
        %v1882 = vunpack.i.h.bf16 %v1880
        %v1883 = vmax.f32 %v1881, %v1882
        %v1884 = vrot.slane %v1883, 4
        %v1885 = vmax.f32 %v1883, %v1884
        %v1886 = vrot.slane %v1885, 2
        %v1887 = vmax.f32 %v1885, %v1886
        %v1888 = vrot.slane %v1887, 1
        %v1889 = vmax.f32 %v1887, %v1888
        %v1890 = vpack.i.bf16 %v1889, %v1889
        %v1891 = vmax.bf16 %v1287, %v1292
        %v1892 = vmax.bf16 %v1891, %v1297
        %v1893 = vmax.bf16 %v1892, %v1302
        %v1894 = vunpack.i.l.bf16 %v1893
        %v1895 = vunpack.i.h.bf16 %v1893
        %v1896 = vmax.f32 %v1894, %v1895
        %v1897 = vrot.slane %v1896, 4
        %v1898 = vmax.f32 %v1896, %v1897
        %v1899 = vrot.slane %v1898, 2
        %v1900 = vmax.f32 %v1898, %v1899
        %v1901 = vrot.slane %v1900, 1
        %v1902 = vmax.f32 %v1900, %v1901
        %v1903 = vpack.i.bf16 %v1902, %v1902
        %v1904 = vmax.bf16 %v1288, %v1293
        %v1905 = vmax.bf16 %v1904, %v1298
        %v1906 = vmax.bf16 %v1905, %v1303
        %v1907 = vunpack.i.l.bf16 %v1906
        %v1908 = vunpack.i.h.bf16 %v1906
        %v1909 = vmax.f32 %v1907, %v1908
        %v1910 = vrot.slane %v1909, 4
        %v1911 = vmax.f32 %v1909, %v1910
        %v1912 = vrot.slane %v1911, 2
        %v1913 = vmax.f32 %v1911, %v1912
        %v1914 = vrot.slane %v1913, 1
        %v1915 = vmax.f32 %v1913, %v1914
        %v1916 = vpack.i.bf16 %v1915, %v1915
        %v1917 = vmax.bf16 %v1289, %v1294
        %v1918 = vmax.bf16 %v1917, %v1299
        %v1919 = vmax.bf16 %v1918, %v1304
        %v1920 = vunpack.i.l.bf16 %v1919
        %v1921 = vunpack.i.h.bf16 %v1919
        %v1922 = vmax.f32 %v1920, %v1921
        %v1923 = vrot.slane %v1922, 4
        %v1924 = vmax.f32 %v1922, %v1923
        %v1925 = vrot.slane %v1924, 2
        %v1926 = vmax.f32 %v1924, %v1925
        %v1927 = vrot.slane %v1926, 1
        %v1928 = vmax.f32 %v1926, %v1927
        %v1929 = vpack.i.bf16 %v1928, %v1928
        %v1930 = vmax.bf16 %v1305, %v1310
        %v1931 = vmax.bf16 %v1930, %v1315
        %v1932 = vmax.bf16 %v1931, %v1320
        %v1933 = vunpack.i.l.bf16 %v1932
        %v1934 = vunpack.i.h.bf16 %v1932
        %v1935 = vmax.f32 %v1933, %v1934
        %v1936 = vrot.slane %v1935, 4
        %v1937 = vmax.f32 %v1935, %v1936
        %v1938 = vrot.slane %v1937, 2
        %v1939 = vmax.f32 %v1937, %v1938
        %v1940 = vrot.slane %v1939, 1
        %v1941 = vmax.f32 %v1939, %v1940
        %v1942 = vpack.i.bf16 %v1941, %v1941
        %v1943 = vmax.bf16 %v1306, %v1311
        %v1944 = vmax.bf16 %v1943, %v1316
        %v1945 = vmax.bf16 %v1944, %v1321
        %v1946 = vunpack.i.l.bf16 %v1945
        %v1947 = vunpack.i.h.bf16 %v1945
        %v1948 = vmax.f32 %v1946, %v1947
        %v1949 = vrot.slane %v1948, 4
        %v1950 = vmax.f32 %v1948, %v1949
        %v1951 = vrot.slane %v1950, 2
        %v1952 = vmax.f32 %v1950, %v1951
        %v1953 = vrot.slane %v1952, 1
        %v1954 = vmax.f32 %v1952, %v1953
        %v1955 = vpack.i.bf16 %v1954, %v1954
        %v1956 = vmax.bf16 %v1307, %v1312
        %v1957 = vmax.bf16 %v1956, %v1317
        %v1958 = vmax.bf16 %v1957, %v1322
        %v1959 = vunpack.i.l.bf16 %v1958
        %v1960 = vunpack.i.h.bf16 %v1958
        %v1961 = vmax.f32 %v1959, %v1960
        %v1962 = vrot.slane %v1961, 4
        %v1963 = vmax.f32 %v1961, %v1962
        %v1964 = vrot.slane %v1963, 2
        %v1965 = vmax.f32 %v1963, %v1964
        %v1966 = vrot.slane %v1965, 1
        %v1967 = vmax.f32 %v1965, %v1966
        %v1968 = vpack.i.bf16 %v1967, %v1967
        %v1969 = vmax.bf16 %v1308, %v1313
        %v1970 = vmax.bf16 %v1969, %v1318
        %v1971 = vmax.bf16 %v1970, %v1323
        %v1972 = vunpack.i.l.bf16 %v1971
        %v1973 = vunpack.i.h.bf16 %v1971
        %v1974 = vmax.f32 %v1972, %v1973
        %v1975 = vrot.slane %v1974, 4
        %v1976 = vmax.f32 %v1974, %v1975
        %v1977 = vrot.slane %v1976, 2
        %v1978 = vmax.f32 %v1976, %v1977
        %v1979 = vrot.slane %v1978, 1
        %v1980 = vmax.f32 %v1978, %v1979
        %v1981 = vpack.i.bf16 %v1980, %v1980
        %v1982 = vmax.bf16 %v1309, %v1314
        %v1983 = vmax.bf16 %v1982, %v1319
        %v1984 = vmax.bf16 %v1983, %v1324
        %v1985 = vunpack.i.l.bf16 %v1984
        %v1986 = vunpack.i.h.bf16 %v1984
        %v1987 = vmax.f32 %v1985, %v1986
        %v1988 = vrot.slane %v1987, 4
        %v1989 = vmax.f32 %v1987, %v1988
        %v1990 = vrot.slane %v1989, 2
        %v1991 = vmax.f32 %v1989, %v1990
        %v1992 = vrot.slane %v1991, 1
        %v1993 = vmax.f32 %v1991, %v1992
        %v1994 = vpack.i.bf16 %v1993, %v1993
        %v1995 = vmax.bf16 %v1325, %v1330
        %v1996 = vmax.bf16 %v1995, %v1335
        %v1997 = vmax.bf16 %v1996, %v1340
        %v1998 = vunpack.i.l.bf16 %v1997
        %v1999 = vunpack.i.h.bf16 %v1997
        %v2000 = vmax.f32 %v1998, %v1999
        %v2001 = vrot.slane %v2000, 4
        %v2002 = vmax.f32 %v2000, %v2001
        %v2003 = vrot.slane %v2002, 2
        %v2004 = vmax.f32 %v2002, %v2003
        %v2005 = vrot.slane %v2004, 1
        %v2006 = vmax.f32 %v2004, %v2005
        %v2007 = vpack.i.bf16 %v2006, %v2006
        %v2008 = vmax.bf16 %v1326, %v1331
        %v2009 = vmax.bf16 %v2008, %v1336
        %v2010 = vmax.bf16 %v2009, %v1341
        %v2011 = vunpack.i.l.bf16 %v2010
        %v2012 = vunpack.i.h.bf16 %v2010
        %v2013 = vmax.f32 %v2011, %v2012
        %v2014 = vrot.slane %v2013, 4
        %v2015 = vmax.f32 %v2013, %v2014
        %v2016 = vrot.slane %v2015, 2
        %v2017 = vmax.f32 %v2015, %v2016
        %v2018 = vrot.slane %v2017, 1
        %v2019 = vmax.f32 %v2017, %v2018
        %v2020 = vpack.i.bf16 %v2019, %v2019
        %v2021 = vmax.bf16 %v1327, %v1332
        %v2022 = vmax.bf16 %v2021, %v1337
        %v2023 = vmax.bf16 %v2022, %v1342
        %v2024 = vunpack.i.l.bf16 %v2023
        %v2025 = vunpack.i.h.bf16 %v2023
        %v2026 = vmax.f32 %v2024, %v2025
        %v2027 = vrot.slane %v2026, 4
        %v2028 = vmax.f32 %v2026, %v2027
        %v2029 = vrot.slane %v2028, 2
        %v2030 = vmax.f32 %v2028, %v2029
        %v2031 = vrot.slane %v2030, 1
        %v2032 = vmax.f32 %v2030, %v2031
        %v2033 = vpack.i.bf16 %v2032, %v2032
        %v2034 = vmax.bf16 %v1328, %v1333
        %v2035 = vmax.bf16 %v2034, %v1338
        %v2036 = vmax.bf16 %v2035, %v1343
        %v2037 = vunpack.i.l.bf16 %v2036
        %v2038 = vunpack.i.h.bf16 %v2036
        %v2039 = vmax.f32 %v2037, %v2038
        %v2040 = vrot.slane %v2039, 4
        %v2041 = vmax.f32 %v2039, %v2040
        %v2042 = vrot.slane %v2041, 2
        %v2043 = vmax.f32 %v2041, %v2042
        %v2044 = vrot.slane %v2043, 1
        %v2045 = vmax.f32 %v2043, %v2044
        %v2046 = vpack.i.bf16 %v2045, %v2045
        %v2047 = vmax.bf16 %v1329, %v1334
        %v2048 = vmax.bf16 %v2047, %v1339
        %v2049 = vmax.bf16 %v2048, %v1344
        %v2050 = vunpack.i.l.bf16 %v2049
        %v2051 = vunpack.i.h.bf16 %v2049
        %v2052 = vmax.f32 %v2050, %v2051
        %v2053 = vrot.slane %v2052, 4
        %v2054 = vmax.f32 %v2052, %v2053
        %v2055 = vrot.slane %v2054, 2
        %v2056 = vmax.f32 %v2054, %v2055
        %v2057 = vrot.slane %v2056, 1
        %v2058 = vmax.f32 %v2056, %v2057
        %v2059 = vpack.i.bf16 %v2058, %v2058
        %v2060 = vmax.bf16 %v1345, %v1350
        %v2061 = vmax.bf16 %v2060, %v1355
        %v2062 = vmax.bf16 %v2061, %v1360
        %v2063 = vunpack.i.l.bf16 %v2062
        %v2064 = vunpack.i.h.bf16 %v2062
        %v2065 = vmax.f32 %v2063, %v2064
        %v2066 = vrot.slane %v2065, 4
        %v2067 = vmax.f32 %v2065, %v2066
        %v2068 = vrot.slane %v2067, 2
        %v2069 = vmax.f32 %v2067, %v2068
        %v2070 = vrot.slane %v2069, 1
        %v2071 = vmax.f32 %v2069, %v2070
        %v2072 = vpack.i.bf16 %v2071, %v2071
        %v2073 = vmax.bf16 %v1346, %v1351
        %v2074 = vmax.bf16 %v2073, %v1356
        %v2075 = vmax.bf16 %v2074, %v1361
        %v2076 = vunpack.i.l.bf16 %v2075
        %v2077 = vunpack.i.h.bf16 %v2075
        %v2078 = vmax.f32 %v2076, %v2077
        %v2079 = vrot.slane %v2078, 4
        %v2080 = vmax.f32 %v2078, %v2079
        %v2081 = vrot.slane %v2080, 2
        %v2082 = vmax.f32 %v2080, %v2081
        %v2083 = vrot.slane %v2082, 1
        %v2084 = vmax.f32 %v2082, %v2083
        %v2085 = vpack.i.bf16 %v2084, %v2084
        %v2086 = vmax.bf16 %v1347, %v1352
        %v2087 = vmax.bf16 %v2086, %v1357
        %v2088 = vmax.bf16 %v2087, %v1362
        %v2089 = vunpack.i.l.bf16 %v2088
        %v2090 = vunpack.i.h.bf16 %v2088
        %v2091 = vmax.f32 %v2089, %v2090
        %v2092 = vrot.slane %v2091, 4
        %v2093 = vmax.f32 %v2091, %v2092
        %v2094 = vrot.slane %v2093, 2
        %v2095 = vmax.f32 %v2093, %v2094
        %v2096 = vrot.slane %v2095, 1
        %v2097 = vmax.f32 %v2095, %v2096
        %v2098 = vpack.i.bf16 %v2097, %v2097
        %v2099 = vmax.bf16 %v1348, %v1353
        %v2100 = vmax.bf16 %v2099, %v1358
        %v2101 = vmax.bf16 %v2100, %v1363
        %v2102 = vunpack.i.l.bf16 %v2101
        %v2103 = vunpack.i.h.bf16 %v2101
        %v2104 = vmax.f32 %v2102, %v2103
        %v2105 = vrot.slane %v2104, 4
        %v2106 = vmax.f32 %v2104, %v2105
        %v2107 = vrot.slane %v2106, 2
        %v2108 = vmax.f32 %v2106, %v2107
        %v2109 = vrot.slane %v2108, 1
        %v2110 = vmax.f32 %v2108, %v2109
        %v2111 = vpack.i.bf16 %v2110, %v2110
        %v2112 = vmax.bf16 %v1349, %v1354
        %v2113 = vmax.bf16 %v2112, %v1359
        %v2114 = vmax.bf16 %v2113, %v1364
        %v2115 = vunpack.i.l.bf16 %v2114
        %v2116 = vunpack.i.h.bf16 %v2114
        %v2117 = vmax.f32 %v2115, %v2116
        %v2118 = vrot.slane %v2117, 4
        %v2119 = vmax.f32 %v2117, %v2118
        %v2120 = vrot.slane %v2119, 2
        %v2121 = vmax.f32 %v2119, %v2120
        %v2122 = vrot.slane %v2121, 1
        %v2123 = vmax.f32 %v2121, %v2122
        %v2124 = vpack.i.bf16 %v2123, %v2123
        %v2125 = vmax.bf16 %v1365, %v1370
        %v2126 = vmax.bf16 %v2125, %v1375
        %v2127 = vmax.bf16 %v2126, %v1380
        %v2128 = vunpack.i.l.bf16 %v2127
        %v2129 = vunpack.i.h.bf16 %v2127
        %v2130 = vmax.f32 %v2128, %v2129
        %v2131 = vrot.slane %v2130, 4
        %v2132 = vmax.f32 %v2130, %v2131
        %v2133 = vrot.slane %v2132, 2
        %v2134 = vmax.f32 %v2132, %v2133
        %v2135 = vrot.slane %v2134, 1
        %v2136 = vmax.f32 %v2134, %v2135
        %v2137 = vpack.i.bf16 %v2136, %v2136
        %v2138 = vmax.bf16 %v1366, %v1371
        %v2139 = vmax.bf16 %v2138, %v1376
        %v2140 = vmax.bf16 %v2139, %v1381
        %v2141 = vunpack.i.l.bf16 %v2140
        %v2142 = vunpack.i.h.bf16 %v2140
        %v2143 = vmax.f32 %v2141, %v2142
        %v2144 = vrot.slane %v2143, 4
        %v2145 = vmax.f32 %v2143, %v2144
        %v2146 = vrot.slane %v2145, 2
        %v2147 = vmax.f32 %v2145, %v2146
        %v2148 = vrot.slane %v2147, 1
        %v2149 = vmax.f32 %v2147, %v2148
        %v2150 = vpack.i.bf16 %v2149, %v2149
        %v2151 = vmax.bf16 %v1367, %v1372
        %v2152 = vmax.bf16 %v2151, %v1377
        %v2153 = vmax.bf16 %v2152, %v1382
        %v2154 = vunpack.i.l.bf16 %v2153
        %v2155 = vunpack.i.h.bf16 %v2153
        %v2156 = vmax.f32 %v2154, %v2155
        %v2157 = vrot.slane %v2156, 4
        %v2158 = vmax.f32 %v2156, %v2157
        %v2159 = vrot.slane %v2158, 2
        %v2160 = vmax.f32 %v2158, %v2159
        %v2161 = vrot.slane %v2160, 1
        %v2162 = vmax.f32 %v2160, %v2161
        %v2163 = vpack.i.bf16 %v2162, %v2162
        %v2164 = vmax.bf16 %v1368, %v1373
        %v2165 = vmax.bf16 %v2164, %v1378
        %v2166 = vmax.bf16 %v2165, %v1383
        %v2167 = vunpack.i.l.bf16 %v2166
        %v2168 = vunpack.i.h.bf16 %v2166
        %v2169 = vmax.f32 %v2167, %v2168
        %v2170 = vrot.slane %v2169, 4
        %v2171 = vmax.f32 %v2169, %v2170
        %v2172 = vrot.slane %v2171, 2
        %v2173 = vmax.f32 %v2171, %v2172
        %v2174 = vrot.slane %v2173, 1
        %v2175 = vmax.f32 %v2173, %v2174
        %v2176 = vpack.i.bf16 %v2175, %v2175
        %v2177 = vmax.bf16 %v1369, %v1374
        %v2178 = vmax.bf16 %v2177, %v1379
        %v2179 = vmax.bf16 %v2178, %v1384
        %v2180 = vunpack.i.l.bf16 %v2179
        %v2181 = vunpack.i.h.bf16 %v2179
        %v2182 = vmax.f32 %v2180, %v2181
        %v2183 = vrot.slane %v2182, 4
        %v2184 = vmax.f32 %v2182, %v2183
        %v2185 = vrot.slane %v2184, 2
        %v2186 = vmax.f32 %v2184, %v2185
        %v2187 = vrot.slane %v2186, 1
        %v2188 = vmax.f32 %v2186, %v2187
        %v2189 = vpack.i.bf16 %v2188, %v2188
        %v2190 = vmax.bf16 %v1385, %v1390
        %v2191 = vmax.bf16 %v2190, %v1395
        %v2192 = vmax.bf16 %v2191, %v1400
        %v2193 = vunpack.i.l.bf16 %v2192
        %v2194 = vunpack.i.h.bf16 %v2192
        %v2195 = vmax.f32 %v2193, %v2194
        %v2196 = vrot.slane %v2195, 4
        %v2197 = vmax.f32 %v2195, %v2196
        %v2198 = vrot.slane %v2197, 2
        %v2199 = vmax.f32 %v2197, %v2198
        %v2200 = vrot.slane %v2199, 1
        %v2201 = vmax.f32 %v2199, %v2200
        %v2202 = vpack.i.bf16 %v2201, %v2201
        %v2203 = vmax.bf16 %v1386, %v1391
        %v2204 = vmax.bf16 %v2203, %v1396
        %v2205 = vmax.bf16 %v2204, %v1401
        %v2206 = vunpack.i.l.bf16 %v2205
        %v2207 = vunpack.i.h.bf16 %v2205
        %v2208 = vmax.f32 %v2206, %v2207
        %v2209 = vrot.slane %v2208, 4
        %v2210 = vmax.f32 %v2208, %v2209
        %v2211 = vrot.slane %v2210, 2
        %v2212 = vmax.f32 %v2210, %v2211
        %v2213 = vrot.slane %v2212, 1
        %v2214 = vmax.f32 %v2212, %v2213
        %v2215 = vpack.i.bf16 %v2214, %v2214
        %v2216 = vmax.bf16 %v1387, %v1392
        %v2217 = vmax.bf16 %v2216, %v1397
        %v2218 = vmax.bf16 %v2217, %v1402
        %v2219 = vunpack.i.l.bf16 %v2218
        %v2220 = vunpack.i.h.bf16 %v2218
        %v2221 = vmax.f32 %v2219, %v2220
        %v2222 = vrot.slane %v2221, 4
        %v2223 = vmax.f32 %v2221, %v2222
        %v2224 = vrot.slane %v2223, 2
        %v2225 = vmax.f32 %v2223, %v2224
        %v2226 = vrot.slane %v2225, 1
        %v2227 = vmax.f32 %v2225, %v2226
        %v2228 = vpack.i.bf16 %v2227, %v2227
        %v2229 = vmax.bf16 %v1388, %v1393
        %v2230 = vmax.bf16 %v2229, %v1398
        %v2231 = vmax.bf16 %v2230, %v1403
        %v2232 = vunpack.i.l.bf16 %v2231
        %v2233 = vunpack.i.h.bf16 %v2231
        %v2234 = vmax.f32 %v2232, %v2233
        %v2235 = vrot.slane %v2234, 4
        %v2236 = vmax.f32 %v2234, %v2235
        %v2237 = vrot.slane %v2236, 2
        %v2238 = vmax.f32 %v2236, %v2237
        %v2239 = vrot.slane %v2238, 1
        %v2240 = vmax.f32 %v2238, %v2239
        %v2241 = vpack.i.bf16 %v2240, %v2240
        %v2242 = vmax.bf16 %v1389, %v1394
        %v2243 = vmax.bf16 %v2242, %v1399
        %v2244 = vmax.bf16 %v2243, %v1404
        %v2245 = vunpack.i.l.bf16 %v2244
        %v2246 = vunpack.i.h.bf16 %v2244
        %v2247 = vmax.f32 %v2245, %v2246
        %v2248 = vrot.slane %v2247, 4
        %v2249 = vmax.f32 %v2247, %v2248
        %v2250 = vrot.slane %v2249, 2
        %v2251 = vmax.f32 %v2249, %v2250
        %v2252 = vrot.slane %v2251, 1
        %v2253 = vmax.f32 %v2251, %v2252
        %v2254 = vpack.i.bf16 %v2253, %v2253
        %v2255 = vunpack.c.l.bf16 %v1617
        %v2256 = vunpack.c.l.bf16 %v1630
        %v2257 = vunpack.c.l.bf16 %v1643
        %v2258 = vunpack.c.l.bf16 %v1656
        %v2259 = vunpack.c.l.bf16 %v1669
        %v2260 = vunpack.c.l.bf16 %v1682
        %v2261 = vunpack.c.l.bf16 %v1695
        %v2262 = vunpack.c.l.bf16 %v1708
        %v2263 = vunpack.c.l.bf16 %v1721
        %v2264 = vunpack.c.l.bf16 %v1734
        %v2265 = vunpack.c.l.bf16 %v1747
        %v2266 = vunpack.c.l.bf16 %v1760
        %v2267 = vunpack.c.l.bf16 %v1773
        %v2268 = vunpack.c.l.bf16 %v1786
        %v2269 = vunpack.c.l.bf16 %v1799
        %v2270 = vunpack.c.l.bf16 %v1812
        %v2271 = vunpack.c.l.bf16 %v1825
        %v2272 = vunpack.c.l.bf16 %v1838
        %v2273 = vunpack.c.l.bf16 %v1851
        %v2274 = vunpack.c.l.bf16 %v1864
        %v2275 = vunpack.c.l.bf16 %v1877
        %v2276 = vunpack.c.l.bf16 %v1890
        %v2277 = vunpack.c.l.bf16 %v1903
        %v2278 = vunpack.c.l.bf16 %v1916
        %v2279 = vunpack.c.l.bf16 %v1929
        %v2280 = vunpack.c.l.bf16 %v1942
        %v2281 = vunpack.c.l.bf16 %v1955
        %v2282 = vunpack.c.l.bf16 %v1968
        %v2283 = vunpack.c.l.bf16 %v1981
        %v2284 = vunpack.c.l.bf16 %v1994
        %v2285 = vunpack.c.l.bf16 %v2007
        %v2286 = vunpack.c.l.bf16 %v2020
        %v2287 = vunpack.c.l.bf16 %v2033
        %v2288 = vunpack.c.l.bf16 %v2046
        %v2289 = vunpack.c.l.bf16 %v2059
        %v2290 = vunpack.c.l.bf16 %v2072
        %v2291 = vunpack.c.l.bf16 %v2085
        %v2292 = vunpack.c.l.bf16 %v2098
        %v2293 = vunpack.c.l.bf16 %v2111
        %v2294 = vunpack.c.l.bf16 %v2124
        %v2295 = vunpack.c.l.bf16 %v2137
        %v2296 = vunpack.c.l.bf16 %v2150
        %v2297 = vunpack.c.l.bf16 %v2163
        %v2298 = vunpack.c.l.bf16 %v2176
        %v2299 = vunpack.c.l.bf16 %v2189
        %v2300 = vunpack.c.l.bf16 %v2202
        %v2301 = vunpack.c.l.bf16 %v2215
        %v2302 = vunpack.c.l.bf16 %v2228
        %v2303 = vunpack.c.l.bf16 %v2241
        %v2304 = vunpack.c.l.bf16 %v2254
        %vm2355 = vcmask 1041409
        %v2356 = vsel %vm2355, %v2260, %v2255
        %vm2357 = vcmask 1042434
        %v2358 = vsel %vm2357, %v2265, %v2356
        %vm2359 = vcmask 1043459
        %v2360 = vsel %vm2359, %v2270, %v2358
        %vm2361 = vcmask 1044484
        %v2362 = vsel %vm2361, %v2275, %v2360
        %vm2363 = vcmask 1045509
        %v2364 = vsel %vm2363, %v2280, %v2362
        %vm2365 = vcmask 1046534
        %v2366 = vsel %vm2365, %v2285, %v2364
        %vm2367 = vcmask 1047559
        %v2368 = vsel %vm2367, %v2290, %v2366
        %v2369 = vsel %vm2355, %v2261, %v2256
        %v2370 = vsel %vm2357, %v2266, %v2369
        %v2371 = vsel %vm2359, %v2271, %v2370
        %v2372 = vsel %vm2361, %v2276, %v2371
        %v2373 = vsel %vm2363, %v2281, %v2372
        %v2374 = vsel %vm2365, %v2286, %v2373
        %v2375 = vsel %vm2367, %v2291, %v2374
        %v2376 = vsel %vm2355, %v2262, %v2257
        %v2377 = vsel %vm2357, %v2267, %v2376
        %v2378 = vsel %vm2359, %v2272, %v2377
        %v2379 = vsel %vm2361, %v2277, %v2378
        %v2380 = vsel %vm2363, %v2282, %v2379
        %v2381 = vsel %vm2365, %v2287, %v2380
        %v2382 = vsel %vm2367, %v2292, %v2381
        %v2383 = vsel %vm2355, %v2263, %v2258
        %v2384 = vsel %vm2357, %v2268, %v2383
        %v2385 = vsel %vm2359, %v2273, %v2384
        %v2386 = vsel %vm2361, %v2278, %v2385
        %v2387 = vsel %vm2363, %v2283, %v2386
        %v2388 = vsel %vm2365, %v2288, %v2387
        %v2389 = vsel %vm2367, %v2293, %v2388
        %v2390 = vsel %vm2355, %v2264, %v2259
        %v2391 = vsel %vm2357, %v2269, %v2390
        %v2392 = vsel %vm2359, %v2274, %v2391
        %v2393 = vsel %vm2361, %v2279, %v2392
        %v2394 = vsel %vm2363, %v2284, %v2393
        %v2395 = vsel %vm2365, %v2289, %v2394
        %v2396 = vsel %vm2367, %v2294, %v2395
        %v2397 = vsel %vm2355, %v2300, %v2295
        %v2398 = vsel %vm2355, %v2301, %v2296
        %v2399 = vsel %vm2355, %v2302, %v2297
        %v2400 = vsel %vm2355, %v2303, %v2298
        %v2401 = vsel %vm2355, %v2304, %v2299
        %2412 = vxpose.xlu0.b32.start [1/16] %v2368, 128
        %2413 = vxpose.xlu0.b32.cont [2/16] %v2397, 128
        %2414 = vxpose.xlu0.b32.cont [3/16] 0.0, 128
        %2415 = vxpose.xlu0.b32.cont [4/16] 0.0, 128
        %2416 = vxpose.xlu0.b32.cont [5/16] 0.0, 128
        %2417 = vxpose.xlu0.b32.cont [6/16] 0.0, 128
        %2418 = vxpose.xlu0.b32.cont [7/16] 0.0, 128
        %2419 = vxpose.xlu0.b32.cont [8/16] 0.0, 128
        %2420 = vxpose.xlu0.b32.cont [9/16] 0.0, 128
        %2421 = vxpose.xlu0.b32.cont [10/16] 0.0, 128
        %2422 = vxpose.xlu0.b32.cont [11/16] 0.0, 128
        %2423 = vxpose.xlu0.b32.cont [12/16] 0.0, 128
        %2424 = vxpose.xlu0.b32.cont [13/16] 0.0, 128
        %2425 = vxpose.xlu0.b32.cont [14/16] 0.0, 128
        %2426 = vxpose.xlu0.b32.cont [15/16] 0.0, 128
        %2427 = vxpose.xlu0.b32.end [16/16] 0.0, 128
        %v2428 = vpop.trf.xlu0
        %v2429 = vpop.trf.xlu0
        %v2430 = vpop.trf.xlu0
        %v2431 = vpop.trf.xlu0
        %v2432 = vpop.trf.xlu0
        %v2433 = vpop.trf.xlu0
        %v2434 = vpop.trf.xlu0
        %v2435 = vpop.trf.xlu0
        %v2436 = vpop.trf.xlu0
        %v2437 = vpop.trf.xlu0
        %v2438 = vpop.trf.xlu0
        %v2439 = vpop.trf.xlu0
        %v2440 = vpop.trf.xlu0
        %v2441 = vpop.trf.xlu0
        %v2442 = vpop.trf.xlu0
        %v2443 = vpop.trf.xlu0
        %2444 = vxpose.xlu0.b32.start [1/16] %v2375, 128
        %2445 = vxpose.xlu0.b32.cont [2/16] %v2398, 128
        %2446 = vxpose.xlu0.b32.cont [3/16] 0.0, 128
        %2447 = vxpose.xlu0.b32.cont [4/16] 0.0, 128
        %2448 = vxpose.xlu0.b32.cont [5/16] 0.0, 128
        %2449 = vxpose.xlu0.b32.cont [6/16] 0.0, 128
        %2450 = vxpose.xlu0.b32.cont [7/16] 0.0, 128
        %2451 = vxpose.xlu0.b32.cont [8/16] 0.0, 128
        %2452 = vxpose.xlu0.b32.cont [9/16] 0.0, 128
        %2453 = vxpose.xlu0.b32.cont [10/16] 0.0, 128
        %2454 = vxpose.xlu0.b32.cont [11/16] 0.0, 128
        %2455 = vxpose.xlu0.b32.cont [12/16] 0.0, 128
        %2456 = vxpose.xlu0.b32.cont [13/16] 0.0, 128
        %2457 = vxpose.xlu0.b32.cont [14/16] 0.0, 128
        %2458 = vxpose.xlu0.b32.cont [15/16] 0.0, 128
        %2459 = vxpose.xlu0.b32.end [16/16] 0.0, 128
        %v2460 = vpop.trf.xlu0
        %v2461 = vpop.trf.xlu0
        %v2462 = vpop.trf.xlu0
        %v2463 = vpop.trf.xlu0
        %v2464 = vpop.trf.xlu0
        %v2465 = vpop.trf.xlu0
        %v2466 = vpop.trf.xlu0
        %v2467 = vpop.trf.xlu0
        %v2468 = vpop.trf.xlu0
        %v2469 = vpop.trf.xlu0
        %v2470 = vpop.trf.xlu0
        %v2471 = vpop.trf.xlu0
        %v2472 = vpop.trf.xlu0
        %v2473 = vpop.trf.xlu0
        %v2474 = vpop.trf.xlu0
        %v2475 = vpop.trf.xlu0
        %2476 = vxpose.xlu0.b32.start [1/16] %v2382, 128
        %2477 = vxpose.xlu0.b32.cont [2/16] %v2399, 128
        %2478 = vxpose.xlu0.b32.cont [3/16] 0.0, 128
        %2479 = vxpose.xlu0.b32.cont [4/16] 0.0, 128
        %2480 = vxpose.xlu0.b32.cont [5/16] 0.0, 128
        %2481 = vxpose.xlu0.b32.cont [6/16] 0.0, 128
        %2482 = vxpose.xlu0.b32.cont [7/16] 0.0, 128
        %2483 = vxpose.xlu0.b32.cont [8/16] 0.0, 128
        %2484 = vxpose.xlu0.b32.cont [9/16] 0.0, 128
        %2485 = vxpose.xlu0.b32.cont [10/16] 0.0, 128
        %2486 = vxpose.xlu0.b32.cont [11/16] 0.0, 128
        %2487 = vxpose.xlu0.b32.cont [12/16] 0.0, 128
        %2488 = vxpose.xlu0.b32.cont [13/16] 0.0, 128
        %2489 = vxpose.xlu0.b32.cont [14/16] 0.0, 128
        %2490 = vxpose.xlu0.b32.cont [15/16] 0.0, 128
        %2491 = vxpose.xlu0.b32.end [16/16] 0.0, 128
        %v2492 = vpop.trf.xlu0
        %v2493 = vpop.trf.xlu0
        %v2494 = vpop.trf.xlu0
        %v2495 = vpop.trf.xlu0
        %v2496 = vpop.trf.xlu0
        %v2497 = vpop.trf.xlu0
        %v2498 = vpop.trf.xlu0
        %v2499 = vpop.trf.xlu0
        %v2500 = vpop.trf.xlu0
        %v2501 = vpop.trf.xlu0
        %v2502 = vpop.trf.xlu0
        %v2503 = vpop.trf.xlu0
        %v2504 = vpop.trf.xlu0
        %v2505 = vpop.trf.xlu0
        %v2506 = vpop.trf.xlu0
        %v2507 = vpop.trf.xlu0
        %2508 = vxpose.xlu0.b32.start [1/16] %v2389, 128
        %2509 = vxpose.xlu0.b32.cont [2/16] %v2400, 128
        %2510 = vxpose.xlu0.b32.cont [3/16] 0.0, 128
        %2511 = vxpose.xlu0.b32.cont [4/16] 0.0, 128
        %2512 = vxpose.xlu0.b32.cont [5/16] 0.0, 128
        %2513 = vxpose.xlu0.b32.cont [6/16] 0.0, 128
        %2514 = vxpose.xlu0.b32.cont [7/16] 0.0, 128
        %2515 = vxpose.xlu0.b32.cont [8/16] 0.0, 128
        %2516 = vxpose.xlu0.b32.cont [9/16] 0.0, 128
        %2517 = vxpose.xlu0.b32.cont [10/16] 0.0, 128
        %2518 = vxpose.xlu0.b32.cont [11/16] 0.0, 128
        %2519 = vxpose.xlu0.b32.cont [12/16] 0.0, 128
        %2520 = vxpose.xlu0.b32.cont [13/16] 0.0, 128
        %2521 = vxpose.xlu0.b32.cont [14/16] 0.0, 128
        %2522 = vxpose.xlu0.b32.cont [15/16] 0.0, 128
        %2523 = vxpose.xlu0.b32.end [16/16] 0.0, 128
        %v2524 = vpop.trf.xlu0
        %v2525 = vpop.trf.xlu0
        %v2526 = vpop.trf.xlu0
        %v2527 = vpop.trf.xlu0
        %v2528 = vpop.trf.xlu0
        %v2529 = vpop.trf.xlu0
        %v2530 = vpop.trf.xlu0
        %v2531 = vpop.trf.xlu0
        %v2532 = vpop.trf.xlu0
        %v2533 = vpop.trf.xlu0
        %v2534 = vpop.trf.xlu0
        %v2535 = vpop.trf.xlu0
        %v2536 = vpop.trf.xlu0
        %v2537 = vpop.trf.xlu0
        %v2538 = vpop.trf.xlu0
        %v2539 = vpop.trf.xlu0
        %2540 = vxpose.xlu0.b32.start [1/16] %v2396, 128
        %2541 = vxpose.xlu0.b32.cont [2/16] %v2401, 128
        %2542 = vxpose.xlu0.b32.cont [3/16] 0.0, 128
        %2543 = vxpose.xlu0.b32.cont [4/16] 0.0, 128
        %2544 = vxpose.xlu0.b32.cont [5/16] 0.0, 128
        %2545 = vxpose.xlu0.b32.cont [6/16] 0.0, 128
        %2546 = vxpose.xlu0.b32.cont [7/16] 0.0, 128
        %2547 = vxpose.xlu0.b32.cont [8/16] 0.0, 128
        %2548 = vxpose.xlu0.b32.cont [9/16] 0.0, 128
        %2549 = vxpose.xlu0.b32.cont [10/16] 0.0, 128
        %2550 = vxpose.xlu0.b32.cont [11/16] 0.0, 128
        %2551 = vxpose.xlu0.b32.cont [12/16] 0.0, 128
        %2552 = vxpose.xlu0.b32.cont [13/16] 0.0, 128
        %2553 = vxpose.xlu0.b32.cont [14/16] 0.0, 128
        %2554 = vxpose.xlu0.b32.cont [15/16] 0.0, 128
        %2555 = vxpose.xlu0.b32.end [16/16] 0.0, 128
        %v2556 = vpop.trf.xlu0
        %v2557 = vpop.trf.xlu0
        %v2558 = vpop.trf.xlu0
        %v2559 = vpop.trf.xlu0
        %v2560 = vpop.trf.xlu0
        %v2561 = vpop.trf.xlu0
        %v2562 = vpop.trf.xlu0
        %v2563 = vpop.trf.xlu0
        %v2564 = vpop.trf.xlu0
        %v2565 = vpop.trf.xlu0
        %v2566 = vpop.trf.xlu0
        %v2567 = vpop.trf.xlu0
        %v2568 = vpop.trf.xlu0
        %v2569 = vpop.trf.xlu0
        %v2570 = vpop.trf.xlu0
        %v2571 = vpop.trf.xlu0
        %vm2572 = vcmask 80896
        %v2573 = vsel %vm2572, %v2428, -inf
        %v2574 = vsel %vm2572, %v2429, -inf
        %v2575 = vmax.f32 %v2573, %v2574
        %v2576 = vsel %vm2572, %v2430, -inf
        %v2577 = vmax.f32 %v2575, %v2576
        %v2578 = vsel %vm2572, %v2431, -inf
        %v2579 = vmax.f32 %v2577, %v2578
        %v2580 = vsel %vm2572, %v2432, -inf
        %v2581 = vmax.f32 %v2579, %v2580
        %v2582 = vsel %vm2572, %v2433, -inf
        %v2583 = vmax.f32 %v2581, %v2582
        %v2584 = vsel %vm2572, %v2434, -inf
        %v2585 = vmax.f32 %v2583, %v2584
        %v2586 = vsel %vm2572, %v2435, -inf
        %v2587 = vmax.f32 %v2585, %v2586
        %v2588 = vrot.slane %v2587, 4
        %v2589 = vmax.f32 %v2587, %v2588
        %v2590 = vrot.slane %v2589, 2
        %v2591 = vmax.f32 %v2589, %v2590
        %v2592 = vrot.slane %v2591, 1
        %v2593 = vmax.f32 %v2591, %v2592
        %v2594 = vsel %vm2572, %v2436, -inf
        %v2595 = vsel %vm2572, %v2437, -inf
        %v2596 = vmax.f32 %v2594, %v2595
        %v2597 = vsel %vm2572, %v2438, -inf
        %v2598 = vmax.f32 %v2596, %v2597
        %v2599 = vsel %vm2572, %v2439, -inf
        %v2600 = vmax.f32 %v2598, %v2599
        %v2601 = vsel %vm2572, %v2440, -inf
        %v2602 = vmax.f32 %v2600, %v2601
        %v2603 = vsel %vm2572, %v2441, -inf
        %v2604 = vmax.f32 %v2602, %v2603
        %v2605 = vsel %vm2572, %v2442, -inf
        %v2606 = vmax.f32 %v2604, %v2605
        %v2607 = vsel %vm2572, %v2443, -inf
        %v2608 = vmax.f32 %v2606, %v2607
        %v2609 = vrot.slane %v2608, 4
        %v2610 = vmax.f32 %v2608, %v2609
        %v2611 = vrot.slane %v2610, 2
        %v2612 = vmax.f32 %v2610, %v2611
        %v2613 = vrot.slane %v2612, 1
        %v2614 = vmax.f32 %v2612, %v2613
        %v2615 = vsel %vm2572, %v2460, -inf
        %v2616 = vsel %vm2572, %v2461, -inf
        %v2617 = vmax.f32 %v2615, %v2616
        %v2618 = vsel %vm2572, %v2462, -inf
        %v2619 = vmax.f32 %v2617, %v2618
        %v2620 = vsel %vm2572, %v2463, -inf
        %v2621 = vmax.f32 %v2619, %v2620
        %v2622 = vsel %vm2572, %v2464, -inf
        %v2623 = vmax.f32 %v2621, %v2622
        %v2624 = vsel %vm2572, %v2465, -inf
        %v2625 = vmax.f32 %v2623, %v2624
        %v2626 = vsel %vm2572, %v2466, -inf
        %v2627 = vmax.f32 %v2625, %v2626
        %v2628 = vsel %vm2572, %v2467, -inf
        %v2629 = vmax.f32 %v2627, %v2628
        %v2630 = vrot.slane %v2629, 4
        %v2631 = vmax.f32 %v2629, %v2630
        %v2632 = vrot.slane %v2631, 2
        %v2633 = vmax.f32 %v2631, %v2632
        %v2634 = vrot.slane %v2633, 1
        %v2635 = vmax.f32 %v2633, %v2634
        %v2636 = vsel %vm2572, %v2468, -inf
        %v2637 = vsel %vm2572, %v2469, -inf
        %v2638 = vmax.f32 %v2636, %v2637
        %v2639 = vsel %vm2572, %v2470, -inf
        %v2640 = vmax.f32 %v2638, %v2639
        %v2641 = vsel %vm2572, %v2471, -inf
        %v2642 = vmax.f32 %v2640, %v2641
        %v2643 = vsel %vm2572, %v2472, -inf
        %v2644 = vmax.f32 %v2642, %v2643
        %v2645 = vsel %vm2572, %v2473, -inf
        %v2646 = vmax.f32 %v2644, %v2645
        %v2647 = vsel %vm2572, %v2474, -inf
        %v2648 = vmax.f32 %v2646, %v2647
        %v2649 = vsel %vm2572, %v2475, -inf
        %v2650 = vmax.f32 %v2648, %v2649
        %v2651 = vrot.slane %v2650, 4
        %v2652 = vmax.f32 %v2650, %v2651
        %v2653 = vrot.slane %v2652, 2
        %v2654 = vmax.f32 %v2652, %v2653
        %v2655 = vrot.slane %v2654, 1
        %v2656 = vmax.f32 %v2654, %v2655
        %v2657 = vsel %vm2572, %v2492, -inf
        %v2658 = vsel %vm2572, %v2493, -inf
        %v2659 = vmax.f32 %v2657, %v2658
        %v2660 = vsel %vm2572, %v2494, -inf
        %v2661 = vmax.f32 %v2659, %v2660
        %v2662 = vsel %vm2572, %v2495, -inf
        %v2663 = vmax.f32 %v2661, %v2662
        %v2664 = vsel %vm2572, %v2496, -inf
        %v2665 = vmax.f32 %v2663, %v2664
        %v2666 = vsel %vm2572, %v2497, -inf
        %v2667 = vmax.f32 %v2665, %v2666
        %v2668 = vsel %vm2572, %v2498, -inf
        %v2669 = vmax.f32 %v2667, %v2668
        %v2670 = vsel %vm2572, %v2499, -inf
        %v2671 = vmax.f32 %v2669, %v2670
        %v2672 = vrot.slane %v2671, 4
        %v2673 = vmax.f32 %v2671, %v2672
        %v2674 = vrot.slane %v2673, 2
        %v2675 = vmax.f32 %v2673, %v2674
        %v2676 = vrot.slane %v2675, 1
        %v2677 = vmax.f32 %v2675, %v2676
        %v2678 = vsel %vm2572, %v2500, -inf
        %v2679 = vsel %vm2572, %v2501, -inf
        %v2680 = vmax.f32 %v2678, %v2679
        %v2681 = vsel %vm2572, %v2502, -inf
        %v2682 = vmax.f32 %v2680, %v2681
        %v2683 = vsel %vm2572, %v2503, -inf
        %v2684 = vmax.f32 %v2682, %v2683
        %v2685 = vsel %vm2572, %v2504, -inf
        %v2686 = vmax.f32 %v2684, %v2685
        %v2687 = vsel %vm2572, %v2505, -inf
        %v2688 = vmax.f32 %v2686, %v2687
        %v2689 = vsel %vm2572, %v2506, -inf
        %v2690 = vmax.f32 %v2688, %v2689
        %v2691 = vsel %vm2572, %v2507, -inf
        %v2692 = vmax.f32 %v2690, %v2691
        %v2693 = vrot.slane %v2692, 4
        %v2694 = vmax.f32 %v2692, %v2693
        %v2695 = vrot.slane %v2694, 2
        %v2696 = vmax.f32 %v2694, %v2695
        %v2697 = vrot.slane %v2696, 1
        %v2698 = vmax.f32 %v2696, %v2697
        %v2699 = vsel %vm2572, %v2524, -inf
        %v2700 = vsel %vm2572, %v2525, -inf
        %v2701 = vmax.f32 %v2699, %v2700
        %v2702 = vsel %vm2572, %v2526, -inf
        %v2703 = vmax.f32 %v2701, %v2702
        %v2704 = vsel %vm2572, %v2527, -inf
        %v2705 = vmax.f32 %v2703, %v2704
        %v2706 = vsel %vm2572, %v2528, -inf
        %v2707 = vmax.f32 %v2705, %v2706
        %v2708 = vsel %vm2572, %v2529, -inf
        %v2709 = vmax.f32 %v2707, %v2708
        %v2710 = vsel %vm2572, %v2530, -inf
        %v2711 = vmax.f32 %v2709, %v2710
        %v2712 = vsel %vm2572, %v2531, -inf
        %v2713 = vmax.f32 %v2711, %v2712
        %v2714 = vrot.slane %v2713, 4
        %v2715 = vmax.f32 %v2713, %v2714
        %v2716 = vrot.slane %v2715, 2
        %v2717 = vmax.f32 %v2715, %v2716
        %v2718 = vrot.slane %v2717, 1
        %v2719 = vmax.f32 %v2717, %v2718
        %v2720 = vsel %vm2572, %v2532, -inf
        %v2721 = vsel %vm2572, %v2533, -inf
        %v2722 = vmax.f32 %v2720, %v2721
        %v2723 = vsel %vm2572, %v2534, -inf
        %v2724 = vmax.f32 %v2722, %v2723
        %v2725 = vsel %vm2572, %v2535, -inf
        %v2726 = vmax.f32 %v2724, %v2725
        %v2727 = vsel %vm2572, %v2536, -inf
        %v2728 = vmax.f32 %v2726, %v2727
        %v2729 = vsel %vm2572, %v2537, -inf
        %v2730 = vmax.f32 %v2728, %v2729
        %v2731 = vsel %vm2572, %v2538, -inf
        %v2732 = vmax.f32 %v2730, %v2731
        %v2733 = vsel %vm2572, %v2539, -inf
        %v2734 = vmax.f32 %v2732, %v2733
        %v2735 = vrot.slane %v2734, 4
        %v2736 = vmax.f32 %v2734, %v2735
        %v2737 = vrot.slane %v2736, 2
        %v2738 = vmax.f32 %v2736, %v2737
        %v2739 = vrot.slane %v2738, 1
        %v2740 = vmax.f32 %v2738, %v2739
        %v2741 = vsel %vm2572, %v2556, -inf
        %v2742 = vsel %vm2572, %v2557, -inf
        %v2743 = vmax.f32 %v2741, %v2742
        %v2744 = vsel %vm2572, %v2558, -inf
        %v2745 = vmax.f32 %v2743, %v2744
        %v2746 = vsel %vm2572, %v2559, -inf
        %v2747 = vmax.f32 %v2745, %v2746
        %v2748 = vsel %vm2572, %v2560, -inf
        %v2749 = vmax.f32 %v2747, %v2748
        %v2750 = vsel %vm2572, %v2561, -inf
        %v2751 = vmax.f32 %v2749, %v2750
        %v2752 = vsel %vm2572, %v2562, -inf
        %v2753 = vmax.f32 %v2751, %v2752
        %v2754 = vsel %vm2572, %v2563, -inf
        %v2755 = vmax.f32 %v2753, %v2754
        %v2756 = vrot.slane %v2755, 4
        %v2757 = vmax.f32 %v2755, %v2756
        %v2758 = vrot.slane %v2757, 2
        %v2759 = vmax.f32 %v2757, %v2758
        %v2760 = vrot.slane %v2759, 1
        %v2761 = vmax.f32 %v2759, %v2760
        %v2762 = vsel %vm2572, %v2564, -inf
        %v2763 = vsel %vm2572, %v2565, -inf
        %v2764 = vmax.f32 %v2762, %v2763
        %v2765 = vsel %vm2572, %v2566, -inf
        %v2766 = vmax.f32 %v2764, %v2765
        %v2767 = vsel %vm2572, %v2567, -inf
        %v2768 = vmax.f32 %v2766, %v2767
        %v2769 = vsel %vm2572, %v2568, -inf
        %v2770 = vmax.f32 %v2768, %v2769
        %v2771 = vsel %vm2572, %v2569, -inf
        %v2772 = vmax.f32 %v2770, %v2771
        %v2773 = vsel %vm2572, %v2570, -inf
        %v2774 = vmax.f32 %v2772, %v2773
        %v2775 = vsel %vm2572, %v2571, -inf
        %v2776 = vmax.f32 %v2774, %v2775
        %v2777 = vrot.slane %v2776, 4
        %v2778 = vmax.f32 %v2776, %v2777
        %v2779 = vrot.slane %v2778, 2
        %v2780 = vmax.f32 %v2778, %v2779
        %v2781 = vrot.slane %v2780, 1
        %v2782 = vmax.f32 %v2780, %v2781
        %v2793 = vsel %vm2355, %v2614, %v2593
        %v2794 = vsel %vm2357, %v2635, %v2793
        %v2795 = vsel %vm2359, %v2656, %v2794
        %v2796 = vsel %vm2361, %v2677, %v2795
        %v2797 = vsel %vm2363, %v2698, %v2796
        %v2798 = vsel %vm2365, %v2719, %v2797
        %v2799 = vsel %vm2367, %v2740, %v2798
        %v2800 = vsel %vm2355, %v2782, %v2761
        %2803 = vxpose.xlu0.b32.start [1/16] %v2799, 128
        %2804 = vxpose.xlu0.b32.cont [2/16] %v2800, 128
        %2805 = vxpose.xlu0.b32.cont [3/16] 0.0, 128
        %2806 = vxpose.xlu0.b32.cont [4/16] 0.0, 128
        %2807 = vxpose.xlu0.b32.cont [5/16] 0.0, 128
        %2808 = vxpose.xlu0.b32.cont [6/16] 0.0, 128
        %2809 = vxpose.xlu0.b32.cont [7/16] 0.0, 128
        %2810 = vxpose.xlu0.b32.cont [8/16] 0.0, 128
        %2811 = vxpose.xlu0.b32.cont [9/16] 0.0, 128
        %2812 = vxpose.xlu0.b32.cont [10/16] 0.0, 128
        %2813 = vxpose.xlu0.b32.cont [11/16] 0.0, 128
        %2814 = vxpose.xlu0.b32.cont [12/16] 0.0, 128
        %2815 = vxpose.xlu0.b32.cont [13/16] 0.0, 128
        %2816 = vxpose.xlu0.b32.cont [14/16] 0.0, 128
        %2817 = vxpose.xlu0.b32.cont [15/16] 0.0, 128
        %2818 = vxpose.xlu0.b32.end [16/16] 0.0, 128
        %v2819 = vpop.trf.xlu0
        %v2820 = vpop.trf.xlu0
        %v2821 = vpop.trf.xlu0
        %v2822 = vpop.trf.xlu0
        %v2823 = vpop.trf.xlu0
        %v2824 = vpop.trf.xlu0
        %v2825 = vpop.trf.xlu0
        %v2826 = vpop.trf.xlu0
        %v2827 = vpop.trf.xlu0
        %v2828 = vpop.trf.xlu0
        %v2829 = vpop.trf.xlu0
        %v2830 = vpop.trf.xlu0
        %v2831 = vpop.trf.xlu0
        %v2832 = vpop.trf.xlu0
        %v2833 = vpop.trf.xlu0
        %v2834 = vpop.trf.xlu0
        %v2835 = vld [vmem:[%s318] sm:$0xff]
        %v2836 = vld [vmem:[%s318 + $0x8] sm:$0x3]
        %v2837 = vmul.f32 %v2835, 2.0
        %v2838 = vmul.f32 %v2836, 2.0
        %v2839 = vsel %vm2572, %v2837, -inf
        %vm2840 = vcmask 74752
        %v2841 = vsel %vm2840, %v2838, -inf
        %v2842 = vmax.f32 %v2839, %v2841
        %2843 = vmax.xlane.f32.xlu0 %v2842
        %v2844 = vpop.xlane.xlu0 %2843
        %v2845 = vrot.slane %v2844, 4
        %v2846 = vmax.f32 %v2844, %v2845
        %v2847 = vrot.slane %v2846, 2
        %v2848 = vmax.f32 %v2846, %v2847
        %v2849 = vrot.slane %v2848, 1
        %v2850 = vmax.f32 %v2848, %v2849
        %s2851 = vtos %v2850
        %v2852 = vstv %s2851
        %v2853 = vsub.f32 %v2837, %v2852
        %v2854 = vsub.f32 %v2838, %v2852
        %v2855 = vmul.f32 %v2853, 1.442695
        %v2856 = vpow.pop %v2855
        %v2857 = vmul.f32 %v2854, 1.442695
        %v2858 = vpow.pop %v2857
        %v2859 = vsel %vm2572, %v2856, 0.0
        %v2860 = vsel %vm2840, %v2858, 0.0
        %v2861 = vadd.f32 %v2859, %v2860
        %2862 = vadd.xlane.f32.xlu0 %v2861
        %v2863 = vpop.xlane.xlu0 %2862
        %v2864 = vrot.slane %v2863, 4
        %v2865 = vadd.f32 %v2863, %v2864
        %v2866 = vrot.slane %v2865, 2
        %v2867 = vadd.f32 %v2865, %v2866
        %v2868 = vrot.slane %v2867, 1
        %v2869 = vadd.f32 %v2867, %v2868
        %s2870 = vtos %v2869
        %v2871 = vstv %s2870
        %v2872 = vlog2.pop %v2871
        %v2873 = vmul.f32 %v2872, 0.6931472
        %v2874 = vadd.f32 %v2852, %v2873
        %v2875 = vsub.f32 %v2837, %v2874
        %v2876 = vsub.f32 %v2838, %v2874
        %vm2877 = vcmp.gt.f32.partialorder %v2819, 0.01
        %vm2878 = vcmp.gt.f32.partialorder %v2820, 0.01
        %v2879 = vmul.f32 %v2875, %v2819
        %v2880 = vmul.f32 %v2876, %v2820
        %v2881 = vsel %vm2877, %v2879, 0.0
        %v2882 = vsel %vm2878, %v2880, 0.0
        %v2883 = vsel %vm2572, %v2881, 0.0
        %v2884 = vsel %vm2840, %v2882, 0.0
        %v2885 = vadd.f32 %v2883, %v2884
        %2886 = vadd.xlane.f32.xlu0 %v2885
        %v2887 = vpop.xlane.xlu0 %2886
        %v2888 = vrot.slane %v2887, 4
        %v2889 = vadd.f32 %v2887, %v2888
        %v2890 = vrot.slane %v2889, 2
        %v2891 = vadd.f32 %v2889, %v2890
        %v2892 = vrot.slane %v2891, 1
        %v2893 = vadd.f32 %v2891, %v2892
        %s2894 = vtos %v2893
        %v2895 = vsel %vm2877, %v2819, 0.0
        %v2896 = vsel %vm2878, %v2820, 0.0
        %v2897 = vsel %vm2572, %v2895, 0.0
        %v2898 = vsel %vm2840, %v2896, 0.0
        %v2899 = vadd.f32 %v2897, %v2898
        %2900 = vadd.xlane.f32.xlu0 %v2899
        %v2901 = vpop.xlane.xlu0 %2900
        %v2902 = vrot.slane %v2901, 4
        %v2903 = vadd.f32 %v2901, %v2902
        %v2904 = vrot.slane %v2903, 2
        %v2905 = vadd.f32 %v2903, %v2904
        %v2906 = vrot.slane %v2905, 1
        %v2907 = vadd.f32 %v2905, %v2906
        %s2908 = vtos %v2907
        %v2909 = vunpack.c.l.bf16 %v325
        %v2910 = vunpack.c.h.bf16 %v325
        %v2911 = vunpack.c.l.bf16 %v326
        %v2912 = vunpack.c.h.bf16 %v326
        %v2913 = vunpack.c.l.bf16 %v327
        %v2914 = vunpack.c.l.bf16 %v328
        %v2915 = vunpack.c.h.bf16 %v328
        %v2916 = vunpack.c.l.bf16 %v329
        %v2917 = vunpack.c.h.bf16 %v329
        %v2918 = vunpack.c.l.bf16 %v330
        %v2919 = vunpack.c.l.bf16 %v331
        %v2920 = vunpack.c.h.bf16 %v331
        %v2921 = vunpack.c.l.bf16 %v332
        %v2922 = vunpack.c.h.bf16 %v332
        %v2923 = vunpack.c.l.bf16 %v333
        %v2924 = vunpack.c.l.bf16 %v334
        %v2925 = vunpack.c.h.bf16 %v334
        %v2926 = vunpack.c.l.bf16 %v335
        %v2927 = vunpack.c.h.bf16 %v335
        %v2928 = vunpack.c.l.bf16 %v336
        %v2929 = vunpack.c.l.bf16 %v337
        %v2930 = vunpack.c.h.bf16 %v337
        %v2931 = vunpack.c.l.bf16 %v338
        %v2932 = vunpack.c.h.bf16 %v338
        %v2933 = vunpack.c.l.bf16 %v339
        %v2934 = vunpack.c.l.bf16 %v340
        %v2935 = vunpack.c.h.bf16 %v340
        %v2936 = vunpack.c.l.bf16 %v341
        %v2937 = vunpack.c.h.bf16 %v341
        %v2938 = vunpack.c.l.bf16 %v342
        %v2939 = vunpack.c.l.bf16 %v343
        %v2940 = vunpack.c.h.bf16 %v343
        %v2941 = vunpack.c.l.bf16 %v344
        %v2942 = vunpack.c.h.bf16 %v344
        %v2943 = vunpack.c.l.bf16 %v345
        %v2944 = vunpack.c.l.bf16 %v346
        %v2945 = vunpack.c.h.bf16 %v346
        %v2946 = vunpack.c.l.bf16 %v347
        %v2947 = vunpack.c.h.bf16 %v347
        %v2948 = vunpack.c.l.bf16 %v348
        %v2949 = vunpack.c.l.bf16 %v349
        %v2950 = vunpack.c.h.bf16 %v349
        %v2951 = vunpack.c.l.bf16 %v350
        %v2952 = vunpack.c.h.bf16 %v350
        %v2953 = vunpack.c.l.bf16 %v351
        %v2954 = vunpack.c.l.bf16 %v352
        %v2955 = vunpack.c.h.bf16 %v352
        %v2956 = vunpack.c.l.bf16 %v353
        %v2957 = vunpack.c.h.bf16 %v353
        %v2958 = vunpack.c.l.bf16 %v354
        %v2959 = vunpack.c.l.bf16 %v355
        %v2960 = vunpack.c.h.bf16 %v355
        %v2961 = vunpack.c.l.bf16 %v356
        %v2962 = vunpack.c.h.bf16 %v356
        %v2963 = vunpack.c.l.bf16 %v357
        %v2964 = vunpack.c.l.bf16 %v358
        %v2965 = vunpack.c.h.bf16 %v358
        %v2966 = vunpack.c.l.bf16 %v359
        %v2967 = vunpack.c.h.bf16 %v359
        %v2968 = vunpack.c.l.bf16 %v360
        %v2969 = vunpack.c.l.bf16 %v361
        %v2970 = vunpack.c.h.bf16 %v361
        %v2971 = vunpack.c.l.bf16 %v362
        %v2972 = vunpack.c.h.bf16 %v362
        %v2973 = vunpack.c.l.bf16 %v363
        %v2974 = vunpack.c.l.bf16 %v364
        %v2975 = vunpack.c.h.bf16 %v364
        %v2976 = vunpack.c.l.bf16 %v365
        %v2977 = vunpack.c.h.bf16 %v365
        %v2978 = vunpack.c.l.bf16 %v366
        %v2979 = vunpack.c.l.bf16 %v367
        %v2980 = vunpack.c.h.bf16 %v367
        %v2981 = vunpack.c.l.bf16 %v368
        %v2982 = vunpack.c.h.bf16 %v368
        %v2983 = vunpack.c.l.bf16 %v369
        %v2984 = vunpack.c.l.bf16 %v370
        %v2985 = vunpack.c.h.bf16 %v370
        %v2986 = vunpack.c.l.bf16 %v371
        %v2987 = vunpack.c.h.bf16 %v371
        %v2988 = vunpack.c.l.bf16 %v372
        %v2989 = vunpack.c.l.bf16 %v373
        %v2990 = vunpack.c.h.bf16 %v373
        %v2991 = vunpack.c.l.bf16 %v374
        %v2992 = vunpack.c.h.bf16 %v374
        %v2993 = vunpack.c.l.bf16 %v375
        %v2994 = vunpack.c.l.bf16 %v376
        %v2995 = vunpack.c.h.bf16 %v376
        %v2996 = vunpack.c.l.bf16 %v377
        %v2997 = vunpack.c.h.bf16 %v377
        %v2998 = vunpack.c.l.bf16 %v378
        %v2999 = vunpack.c.l.bf16 %v379
        %v3000 = vunpack.c.h.bf16 %v379
        %v3001 = vunpack.c.l.bf16 %v380
        %v3002 = vunpack.c.h.bf16 %v380
        %v3003 = vunpack.c.l.bf16 %v381
        %v3004 = vunpack.c.l.bf16 %v382
        %v3005 = vunpack.c.h.bf16 %v382
        %v3006 = vunpack.c.l.bf16 %v383
        %v3007 = vunpack.c.h.bf16 %v383
        %v3008 = vunpack.c.l.bf16 %v384
        %v3009 = vunpack.c.l.bf16 %v385
        %v3010 = vunpack.c.h.bf16 %v385
        %v3011 = vunpack.c.l.bf16 %v386
        %v3012 = vunpack.c.h.bf16 %v386
        %v3013 = vunpack.c.l.bf16 %v387
        %v3014 = vunpack.c.l.bf16 %v388
        %v3015 = vunpack.c.h.bf16 %v388
        %v3016 = vunpack.c.l.bf16 %v389
        %v3017 = vunpack.c.h.bf16 %v389
        %v3018 = vunpack.c.l.bf16 %v390
        %v3019 = vunpack.c.l.bf16 %v391
        %v3020 = vunpack.c.h.bf16 %v391
        %v3021 = vunpack.c.l.bf16 %v392
        %v3022 = vunpack.c.h.bf16 %v392
        %v3023 = vunpack.c.l.bf16 %v393
        %v3024 = vunpack.c.l.bf16 %v394
        %v3025 = vunpack.c.h.bf16 %v394
        %v3026 = vunpack.c.l.bf16 %v395
        %v3027 = vunpack.c.h.bf16 %v395
        %v3028 = vunpack.c.l.bf16 %v396
        %v3029 = vunpack.c.l.bf16 %v397
        %v3030 = vunpack.c.h.bf16 %v397
        %v3031 = vunpack.c.l.bf16 %v398
        %v3032 = vunpack.c.h.bf16 %v398
        %v3033 = vunpack.c.l.bf16 %v399
        %v3034 = vunpack.c.l.bf16 %v400
        %v3035 = vunpack.c.h.bf16 %v400
        %v3036 = vunpack.c.l.bf16 %v401
        %v3037 = vunpack.c.h.bf16 %v401
        %v3038 = vunpack.c.l.bf16 %v402
        %v3039 = vunpack.c.l.bf16 %v403
        %v3040 = vunpack.c.h.bf16 %v403
        %v3041 = vunpack.c.l.bf16 %v404
        %v3042 = vunpack.c.h.bf16 %v404
        %v3043 = vunpack.c.l.bf16 %v405
        %v3044 = vunpack.c.l.bf16 %v406
        %v3045 = vunpack.c.h.bf16 %v406
        %v3046 = vunpack.c.l.bf16 %v407
        %v3047 = vunpack.c.h.bf16 %v407
        %v3048 = vunpack.c.l.bf16 %v408
        %v3049 = vunpack.c.l.bf16 %v409
        %v3050 = vunpack.c.h.bf16 %v409
        %v3051 = vunpack.c.l.bf16 %v410
        %v3052 = vunpack.c.h.bf16 %v410
        %v3053 = vunpack.c.l.bf16 %v411
        %v3054 = vunpack.c.l.bf16 %v412
        %v3055 = vunpack.c.h.bf16 %v412
        %v3056 = vunpack.c.l.bf16 %v413
        %v3057 = vunpack.c.h.bf16 %v413
        %v3058 = vunpack.c.l.bf16 %v414
        %v3059 = vunpack.c.l.bf16 %v415
        %v3060 = vunpack.c.h.bf16 %v415
        %v3061 = vunpack.c.l.bf16 %v416
        %v3062 = vunpack.c.h.bf16 %v416
        %v3063 = vunpack.c.l.bf16 %v417
        %v3064 = vunpack.c.l.bf16 %v418
        %v3065 = vunpack.c.h.bf16 %v418
        %v3066 = vunpack.c.l.bf16 %v419
        %v3067 = vunpack.c.h.bf16 %v419
        %v3068 = vunpack.c.l.bf16 %v420
        %v3069 = vunpack.c.l.bf16 %v421
        %v3070 = vunpack.c.h.bf16 %v421
        %v3071 = vunpack.c.l.bf16 %v422
        %v3072 = vunpack.c.h.bf16 %v422
        %v3073 = vunpack.c.l.bf16 %v423
        %v3074 = vunpack.c.l.bf16 %v424
        %v3075 = vunpack.c.h.bf16 %v424
        %v3076 = vunpack.c.l.bf16 %v425
        %v3077 = vunpack.c.h.bf16 %v425
        %v3078 = vunpack.c.l.bf16 %v426
        %v3079 = vunpack.c.l.bf16 %v427
        %v3080 = vunpack.c.h.bf16 %v427
        %v3081 = vunpack.c.l.bf16 %v428
        %v3082 = vunpack.c.h.bf16 %v428
        %v3083 = vunpack.c.l.bf16 %v429
        %v3084 = vunpack.c.l.bf16 %v430
        %v3085 = vunpack.c.h.bf16 %v430
        %v3086 = vunpack.c.l.bf16 %v431
        %v3087 = vunpack.c.h.bf16 %v431
        %v3088 = vunpack.c.l.bf16 %v432
        %v3089 = vunpack.c.l.bf16 %v433
        %v3090 = vunpack.c.h.bf16 %v433
        %v3091 = vunpack.c.l.bf16 %v434
        %v3092 = vunpack.c.h.bf16 %v434
        %v3093 = vunpack.c.l.bf16 %v435
        %v3094 = vunpack.c.l.bf16 %v436
        %v3095 = vunpack.c.h.bf16 %v436
        %v3096 = vunpack.c.l.bf16 %v437
        %v3097 = vunpack.c.h.bf16 %v437
        %v3098 = vunpack.c.l.bf16 %v438
        %v3099 = vunpack.c.l.bf16 %v439
        %v3100 = vunpack.c.h.bf16 %v439
        %v3101 = vunpack.c.l.bf16 %v440
        %v3102 = vunpack.c.h.bf16 %v440
        %v3103 = vunpack.c.l.bf16 %v441
        %v3104 = vunpack.c.l.bf16 %v442
        %v3105 = vunpack.c.h.bf16 %v442
        %v3106 = vunpack.c.l.bf16 %v443
        %v3107 = vunpack.c.h.bf16 %v443
        %v3108 = vunpack.c.l.bf16 %v444
        %v3109 = vunpack.c.l.bf16 %v445
        %v3110 = vunpack.c.h.bf16 %v445
        %v3111 = vunpack.c.l.bf16 %v446
        %v3112 = vunpack.c.h.bf16 %v446
        %v3113 = vunpack.c.l.bf16 %v447
        %v3114 = vunpack.c.l.bf16 %v448
        %v3115 = vunpack.c.h.bf16 %v448
        %v3116 = vunpack.c.l.bf16 %v449
        %v3117 = vunpack.c.h.bf16 %v449
        %v3118 = vunpack.c.l.bf16 %v450
        %v3119 = vunpack.c.l.bf16 %v451
        %v3120 = vunpack.c.h.bf16 %v451
        %v3121 = vunpack.c.l.bf16 %v452
        %v3122 = vunpack.c.h.bf16 %v452
        %v3123 = vunpack.c.l.bf16 %v453
        %v3124 = vunpack.c.l.bf16 %v454
        %v3125 = vunpack.c.h.bf16 %v454
        %v3126 = vunpack.c.l.bf16 %v455
        %v3127 = vunpack.c.h.bf16 %v455
        %v3128 = vunpack.c.l.bf16 %v456
        %v3129 = vunpack.c.l.bf16 %v457
        %v3130 = vunpack.c.h.bf16 %v457
        %v3131 = vunpack.c.l.bf16 %v458
        %v3132 = vunpack.c.h.bf16 %v458
        %v3133 = vunpack.c.l.bf16 %v459
        %v3134 = vunpack.c.l.bf16 %v460
        %v3135 = vunpack.c.h.bf16 %v460
        %v3136 = vunpack.c.l.bf16 %v461
        %v3137 = vunpack.c.h.bf16 %v461
        %v3138 = vunpack.c.l.bf16 %v462
        %v3139 = vunpack.c.l.bf16 %v463
        %v3140 = vunpack.c.h.bf16 %v463
        %v3141 = vunpack.c.l.bf16 %v464
        %v3142 = vunpack.c.h.bf16 %v464
        %v3143 = vunpack.c.l.bf16 %v465
        %v3144 = vunpack.c.l.bf16 %v466
        %v3145 = vunpack.c.h.bf16 %v466
        %v3146 = vunpack.c.l.bf16 %v467
        %v3147 = vunpack.c.h.bf16 %v467
        %v3148 = vunpack.c.l.bf16 %v468
        %v3149 = vunpack.c.l.bf16 %v469
        %v3150 = vunpack.c.h.bf16 %v469
        %v3151 = vunpack.c.l.bf16 %v470
        %v3152 = vunpack.c.h.bf16 %v470
        %v3153 = vunpack.c.l.bf16 %v471
        %v3154 = vunpack.c.l.bf16 %v472
        %v3155 = vunpack.c.h.bf16 %v472
        %v3156 = vunpack.c.l.bf16 %v473
        %v3157 = vunpack.c.h.bf16 %v473
        %v3158 = vunpack.c.l.bf16 %v474
        %v3159 = vunpack.c.l.bf16 %v475
        %v3160 = vunpack.c.h.bf16 %v475
        %v3161 = vunpack.c.l.bf16 %v476
        %v3162 = vunpack.c.h.bf16 %v476
        %v3163 = vunpack.c.l.bf16 %v477
        %v3164 = vunpack.c.l.bf16 %v478
        %v3165 = vunpack.c.h.bf16 %v478
        %v3166 = vunpack.c.l.bf16 %v479
        %v3167 = vunpack.c.h.bf16 %v479
        %v3168 = vunpack.c.l.bf16 %v480
        %v3169 = vunpack.c.l.bf16 %v481
        %v3170 = vunpack.c.h.bf16 %v481
        %v3171 = vunpack.c.l.bf16 %v482
        %v3172 = vunpack.c.h.bf16 %v482
        %v3173 = vunpack.c.l.bf16 %v483
        %v3174 = vunpack.c.l.bf16 %v484
        %v3175 = vunpack.c.h.bf16 %v484
        %v3176 = vunpack.c.l.bf16 %v485
        %v3177 = vunpack.c.h.bf16 %v485
        %v3178 = vunpack.c.l.bf16 %v486
        %v3179 = vunpack.c.l.bf16 %v487
        %v3180 = vunpack.c.h.bf16 %v487
        %v3181 = vunpack.c.l.bf16 %v488
        %v3182 = vunpack.c.h.bf16 %v488
        %v3183 = vunpack.c.l.bf16 %v489
        %v3184 = vunpack.c.l.bf16 %v490
        %v3185 = vunpack.c.h.bf16 %v490
        %v3186 = vunpack.c.l.bf16 %v491
        %v3187 = vunpack.c.h.bf16 %v491
        %v3188 = vunpack.c.l.bf16 %v492
        %v3189 = vunpack.c.l.bf16 %v493
        %v3190 = vunpack.c.h.bf16 %v493
        %v3191 = vunpack.c.l.bf16 %v494
        %v3192 = vunpack.c.h.bf16 %v494
        %v3193 = vunpack.c.l.bf16 %v495
        %v3194 = vunpack.c.l.bf16 %v496
        %v3195 = vunpack.c.h.bf16 %v496
        %v3196 = vunpack.c.l.bf16 %v497
        %v3197 = vunpack.c.h.bf16 %v497
        %v3198 = vunpack.c.l.bf16 %v498
        %v3199 = vunpack.c.l.bf16 %v499
        %v3200 = vunpack.c.h.bf16 %v499
        %v3201 = vunpack.c.l.bf16 %v500
        %v3202 = vunpack.c.h.bf16 %v500
        %v3203 = vunpack.c.l.bf16 %v501
        %v3204 = vunpack.c.l.bf16 %v502
        %v3205 = vunpack.c.h.bf16 %v502
        %v3206 = vunpack.c.l.bf16 %v503
        %v3207 = vunpack.c.h.bf16 %v503
        %v3208 = vunpack.c.l.bf16 %v504
        %v3209 = vunpack.c.l.bf16 %v505
        %v3210 = vunpack.c.h.bf16 %v505
        %v3211 = vunpack.c.l.bf16 %v506
        %v3212 = vunpack.c.h.bf16 %v506
        %v3213 = vunpack.c.l.bf16 %v507
        %v3214 = vunpack.c.l.bf16 %v508
        %v3215 = vunpack.c.h.bf16 %v508
        %v3216 = vunpack.c.l.bf16 %v509
        %v3217 = vunpack.c.h.bf16 %v509
        %v3218 = vunpack.c.l.bf16 %v510
        %v3219 = vunpack.c.l.bf16 %v511
        %v3220 = vunpack.c.h.bf16 %v511
        %v3221 = vunpack.c.l.bf16 %v512
        %v3222 = vunpack.c.h.bf16 %v512
        %v3223 = vunpack.c.l.bf16 %v513
        %v3224 = vunpack.c.l.bf16 %v514
        %v3225 = vunpack.c.h.bf16 %v514
        %v3226 = vunpack.c.l.bf16 %v515
        %v3227 = vunpack.c.h.bf16 %v515
        %v3228 = vunpack.c.l.bf16 %v516
        %v3229 = vunpack.c.l.bf16 %v517
        %v3230 = vunpack.c.h.bf16 %v517
        %v3231 = vunpack.c.l.bf16 %v518
        %v3232 = vunpack.c.h.bf16 %v518
        %v3233 = vunpack.c.l.bf16 %v519
        %v3234 = vunpack.c.l.bf16 %v520
        %v3235 = vunpack.c.h.bf16 %v520
        %v3236 = vunpack.c.l.bf16 %v521
        %v3237 = vunpack.c.h.bf16 %v521
        %v3238 = vunpack.c.l.bf16 %v522
        %v3239 = vunpack.c.l.bf16 %v523
        %v3240 = vunpack.c.h.bf16 %v523
        %v3241 = vunpack.c.l.bf16 %v524
        %v3242 = vunpack.c.h.bf16 %v524
        %v3243 = vunpack.c.l.bf16 %v525
        %v3244 = vunpack.c.l.bf16 %v526
        %v3245 = vunpack.c.h.bf16 %v526
        %v3246 = vunpack.c.l.bf16 %v527
        %v3247 = vunpack.c.h.bf16 %v527
        %v3248 = vunpack.c.l.bf16 %v528
        %v3249 = vunpack.c.l.bf16 %v529
        %v3250 = vunpack.c.h.bf16 %v529
        %v3251 = vunpack.c.l.bf16 %v530
        %v3252 = vunpack.c.h.bf16 %v530
        %v3253 = vunpack.c.l.bf16 %v531
        %v3254 = vunpack.c.l.bf16 %v532
        %v3255 = vunpack.c.h.bf16 %v532
        %v3256 = vunpack.c.l.bf16 %v533
        %v3257 = vunpack.c.h.bf16 %v533
        %v3258 = vunpack.c.l.bf16 %v534
        %v3259 = vunpack.c.l.bf16 %v535
        %v3260 = vunpack.c.h.bf16 %v535
        %v3261 = vunpack.c.l.bf16 %v536
        %v3262 = vunpack.c.h.bf16 %v536
        %v3263 = vunpack.c.l.bf16 %v537
        %v3264 = vunpack.c.l.bf16 %v538
        %v3265 = vunpack.c.h.bf16 %v538
        %v3266 = vunpack.c.l.bf16 %v539
        %v3267 = vunpack.c.h.bf16 %v539
        %v3268 = vunpack.c.l.bf16 %v540
        %v3269 = vunpack.c.l.bf16 %v541
        %v3270 = vunpack.c.h.bf16 %v541
        %v3271 = vunpack.c.l.bf16 %v542
        %v3272 = vunpack.c.h.bf16 %v542
        %v3273 = vunpack.c.l.bf16 %v543
        %v3274 = vunpack.c.l.bf16 %v544
        %v3275 = vunpack.c.h.bf16 %v544
        %v3276 = vunpack.c.l.bf16 %v545
        %v3277 = vunpack.c.h.bf16 %v545
        %v3278 = vunpack.c.l.bf16 %v546
        %v3279 = vunpack.c.l.bf16 %v547
        %v3280 = vunpack.c.h.bf16 %v547
        %v3281 = vunpack.c.l.bf16 %v548
        %v3282 = vunpack.c.h.bf16 %v548
        %v3283 = vunpack.c.l.bf16 %v549
        %v3284 = vunpack.c.l.bf16 %v550
        %v3285 = vunpack.c.h.bf16 %v550
        %v3286 = vunpack.c.l.bf16 %v551
        %v3287 = vunpack.c.h.bf16 %v551
        %v3288 = vunpack.c.l.bf16 %v552
        %v3289 = vunpack.c.l.bf16 %v553
        %v3290 = vunpack.c.h.bf16 %v553
        %v3291 = vunpack.c.l.bf16 %v554
        %v3292 = vunpack.c.h.bf16 %v554
        %v3293 = vunpack.c.l.bf16 %v555
        %v3294 = vunpack.c.l.bf16 %v556
        %v3295 = vunpack.c.h.bf16 %v556
        %v3296 = vunpack.c.l.bf16 %v557
        %v3297 = vunpack.c.h.bf16 %v557
        %v3298 = vunpack.c.l.bf16 %v558
        %v3299 = vunpack.c.l.bf16 %v559
        %v3300 = vunpack.c.h.bf16 %v559
        %v3301 = vunpack.c.l.bf16 %v560
        %v3302 = vunpack.c.h.bf16 %v560
        %v3303 = vunpack.c.l.bf16 %v561
        %v3304 = vunpack.c.l.bf16 %v562
        %v3305 = vunpack.c.h.bf16 %v562
        %v3306 = vunpack.c.l.bf16 %v563
        %v3307 = vunpack.c.h.bf16 %v563
        %v3308 = vunpack.c.l.bf16 %v564
        %v3309 = vld [vmem:[%s278] sm:$0xff]
        %v3310 = vld [vmem:[%s278 + $0x8] sm:$0xff]
        %v3311 = vld [vmem:[%s278 + $0x10] sm:$0xf]
        %v3312 = vld [vmem:[%s278 + $0x14] sm:$0xff]
        %v3313 = vld [vmem:[%s278 + $0x1c] sm:$0xff]
        %v3314 = vld [vmem:[%s278 + $0x24] sm:$0xf]
        %v3315 = vld [vmem:[%s278 + $0x28] sm:$0xff]
        %v3316 = vld [vmem:[%s278 + $0x30] sm:$0xff]
        %v3317 = vld [vmem:[%s278 + $0x38] sm:$0xf]
        %v3318 = vld [vmem:[%s278 + $0x3c] sm:$0xff]
        %v3319 = vld [vmem:[%s278 + $0x44] sm:$0xff]
        %v3320 = vld [vmem:[%s278 + $0x4c] sm:$0xf]
        %v3321 = vld [vmem:[%s278 + $0x50] sm:$0xff]
        %v3322 = vld [vmem:[%s278 + $0x58] sm:$0xff]
        %v3323 = vld [vmem:[%s278 + $0x60] sm:$0xf]
        %v3324 = vld [vmem:[%s278 + $0x64] sm:$0xff]
        %v3325 = vld [vmem:[%s278 + $0x6c] sm:$0xff]
        %v3326 = vld [vmem:[%s278 + $0x74] sm:$0xf]
        %v3327 = vld [vmem:[%s278 + $0x78] sm:$0xff]
        %v3328 = vld [vmem:[%s278 + $0x80] sm:$0xff]
        %v3329 = vld [vmem:[%s278 + $0x88] sm:$0xf]
        %v3330 = vld [vmem:[%s278 + $0x8c] sm:$0xff]
        %v3331 = vld [vmem:[%s278 + $0x94] sm:$0xff]
        %v3332 = vld [vmem:[%s278 + $0x9c] sm:$0xf]
        %v3333 = vld [vmem:[%s278 + $0xa0] sm:$0xff]
        %v3334 = vld [vmem:[%s278 + $0xa8] sm:$0xff]
        %v3335 = vld [vmem:[%s278 + $0xb0] sm:$0xf]
        %v3336 = vld [vmem:[%s278 + $0xb4] sm:$0xff]
        %v3337 = vld [vmem:[%s278 + $0xbc] sm:$0xff]
        %v3338 = vld [vmem:[%s278 + $0xc4] sm:$0xf]
        %v3339 = vld [vmem:[%s278 + $0xc8] sm:$0xff]
        %v3340 = vld [vmem:[%s278 + $0xd0] sm:$0xff]
        %v3341 = vld [vmem:[%s278 + $0xd8] sm:$0xf]
        %v3342 = vld [vmem:[%s278 + $0xdc] sm:$0xff]
        %v3343 = vld [vmem:[%s278 + $0xe4] sm:$0xff]
        %v3344 = vld [vmem:[%s278 + $0xec] sm:$0xf]
        %v3345 = vld [vmem:[%s278 + $0xf0] sm:$0xff]
        %v3346 = vld [vmem:[%s278 + $0xf8] sm:$0xff]
        %v3347 = vld [vmem:[%s278 + $0x100] sm:$0xf]
        %v3348 = vld [vmem:[%s278 + $0x104] sm:$0xff]
        %v3349 = vld [vmem:[%s278 + $0x10c] sm:$0xff]
        %v3350 = vld [vmem:[%s278 + $0x114] sm:$0xf]
        %v3351 = vld [vmem:[%s278 + $0x118] sm:$0xff]
        %v3352 = vld [vmem:[%s278 + $0x120] sm:$0xff]
        %v3353 = vld [vmem:[%s278 + $0x128] sm:$0xf]
        %v3354 = vld [vmem:[%s278 + $0x12c] sm:$0xff]
        %v3355 = vld [vmem:[%s278 + $0x134] sm:$0xff]
        %v3356 = vld [vmem:[%s278 + $0x13c] sm:$0xf]
        %v3357 = vld [vmem:[%s278 + $0x140] sm:$0xff]
        %v3358 = vld [vmem:[%s278 + $0x148] sm:$0xff]
        %v3359 = vld [vmem:[%s278 + $0x150] sm:$0xf]
        %v3360 = vld [vmem:[%s278 + $0x154] sm:$0xff]
        %v3361 = vld [vmem:[%s278 + $0x15c] sm:$0xff]
        %v3362 = vld [vmem:[%s278 + $0x164] sm:$0xf]
        %v3363 = vld [vmem:[%s278 + $0x168] sm:$0xff]
        %v3364 = vld [vmem:[%s278 + $0x170] sm:$0xff]
        %v3365 = vld [vmem:[%s278 + $0x178] sm:$0xf]
        %v3366 = vld [vmem:[%s278 + $0x17c] sm:$0xff]
        %v3367 = vld [vmem:[%s278 + $0x184] sm:$0xff]
        %v3368 = vld [vmem:[%s278 + $0x18c] sm:$0xf]
        %v3369 = vld [vmem:[%s278 + $0x190] sm:$0xff]
        %v3370 = vld [vmem:[%s278 + $0x198] sm:$0xff]
        %v3371 = vld [vmem:[%s278 + $0x1a0] sm:$0xf]
        %v3372 = vld [vmem:[%s278 + $0x1a4] sm:$0xff]
        %v3373 = vld [vmem:[%s278 + $0x1ac] sm:$0xff]
        %v3374 = vld [vmem:[%s278 + $0x1b4] sm:$0xf]
        %v3375 = vld [vmem:[%s278 + $0x1b8] sm:$0xff]
        %v3376 = vld [vmem:[%s278 + $0x1c0] sm:$0xff]
        %v3377 = vld [vmem:[%s278 + $0x1c8] sm:$0xf]
        %v3378 = vld [vmem:[%s278 + $0x1cc] sm:$0xff]
        %v3379 = vld [vmem:[%s278 + $0x1d4] sm:$0xff]
        %v3380 = vld [vmem:[%s278 + $0x1dc] sm:$0xf]
        %v3381 = vld [vmem:[%s278 + $0x1e0] sm:$0xff]
        %v3382 = vld [vmem:[%s278 + $0x1e8] sm:$0xff]
        %v3383 = vld [vmem:[%s278 + $0x1f0] sm:$0xf]
        %v3384 = vld [vmem:[%s278 + $0x1f4] sm:$0xff]
        %v3385 = vld [vmem:[%s278 + $0x1fc] sm:$0xff]
        %v3386 = vld [vmem:[%s278 + $0x204] sm:$0xf]
        %v3387 = vld [vmem:[%s278 + $0x208] sm:$0xff]
        %v3388 = vld [vmem:[%s278 + $0x210] sm:$0xff]
        %v3389 = vld [vmem:[%s278 + $0x218] sm:$0xf]
        %v3390 = vld [vmem:[%s278 + $0x21c] sm:$0xff]
        %v3391 = vld [vmem:[%s278 + $0x224] sm:$0xff]
        %v3392 = vld [vmem:[%s278 + $0x22c] sm:$0xf]
        %v3393 = vld [vmem:[%s278 + $0x230] sm:$0xff]
        %v3394 = vld [vmem:[%s278 + $0x238] sm:$0xff]
        %v3395 = vld [vmem:[%s278 + $0x240] sm:$0xf]
        %v3396 = vld [vmem:[%s278 + $0x244] sm:$0xff]
        %v3397 = vld [vmem:[%s278 + $0x24c] sm:$0xff]
        %v3398 = vld [vmem:[%s278 + $0x254] sm:$0xf]
        %v3399 = vld [vmem:[%s278 + $0x258] sm:$0xff]
        %v3400 = vld [vmem:[%s278 + $0x260] sm:$0xff]
        %v3401 = vld [vmem:[%s278 + $0x268] sm:$0xf]
        %v3402 = vld [vmem:[%s278 + $0x26c] sm:$0xff]
        %v3403 = vld [vmem:[%s278 + $0x274] sm:$0xff]
        %v3404 = vld [vmem:[%s278 + $0x27c] sm:$0xf]
        %v3405 = vld [vmem:[%s278 + $0x280] sm:$0xff]
        %v3406 = vld [vmem:[%s278 + $0x288] sm:$0xff]
        %v3407 = vld [vmem:[%s278 + $0x290] sm:$0xf]
        %v3408 = vld [vmem:[%s278 + $0x294] sm:$0xff]
        %v3409 = vld [vmem:[%s278 + $0x29c] sm:$0xff]
        %v3410 = vld [vmem:[%s278 + $0x2a4] sm:$0xf]
        %v3411 = vld [vmem:[%s278 + $0x2a8] sm:$0xff]
        %v3412 = vld [vmem:[%s278 + $0x2b0] sm:$0xff]
        %v3413 = vld [vmem:[%s278 + $0x2b8] sm:$0xf]
        %v3414 = vld [vmem:[%s278 + $0x2bc] sm:$0xff]
        %v3415 = vld [vmem:[%s278 + $0x2c4] sm:$0xff]
        %v3416 = vld [vmem:[%s278 + $0x2cc] sm:$0xf]
        %v3417 = vld [vmem:[%s278 + $0x2d0] sm:$0xff]
        %v3418 = vld [vmem:[%s278 + $0x2d8] sm:$0xff]
        %v3419 = vld [vmem:[%s278 + $0x2e0] sm:$0xf]
        %v3420 = vld [vmem:[%s278 + $0x2e4] sm:$0xff]
        %v3421 = vld [vmem:[%s278 + $0x2ec] sm:$0xff]
        %v3422 = vld [vmem:[%s278 + $0x2f4] sm:$0xf]
        %v3423 = vld [vmem:[%s278 + $0x2f8] sm:$0xff]
        %v3424 = vld [vmem:[%s278 + $0x300] sm:$0xff]
        %v3425 = vld [vmem:[%s278 + $0x308] sm:$0xf]
        %v3426 = vld [vmem:[%s278 + $0x30c] sm:$0xff]
        %v3427 = vld [vmem:[%s278 + $0x314] sm:$0xff]
        %v3428 = vld [vmem:[%s278 + $0x31c] sm:$0xf]
        %v3429 = vld [vmem:[%s278 + $0x320] sm:$0xff]
        %v3430 = vld [vmem:[%s278 + $0x328] sm:$0xff]
        %v3431 = vld [vmem:[%s278 + $0x330] sm:$0xf]
        %v3432 = vld [vmem:[%s278 + $0x334] sm:$0xff]
        %v3433 = vld [vmem:[%s278 + $0x33c] sm:$0xff]
        %v3434 = vld [vmem:[%s278 + $0x344] sm:$0xf]
        %v3435 = vld [vmem:[%s278 + $0x348] sm:$0xff]
        %v3436 = vld [vmem:[%s278 + $0x350] sm:$0xff]
        %v3437 = vld [vmem:[%s278 + $0x358] sm:$0xf]
        %v3438 = vld [vmem:[%s278 + $0x35c] sm:$0xff]
        %v3439 = vld [vmem:[%s278 + $0x364] sm:$0xff]
        %v3440 = vld [vmem:[%s278 + $0x36c] sm:$0xf]
        %v3441 = vld [vmem:[%s278 + $0x370] sm:$0xff]
        %v3442 = vld [vmem:[%s278 + $0x378] sm:$0xff]
        %v3443 = vld [vmem:[%s278 + $0x380] sm:$0xf]
        %v3444 = vld [vmem:[%s278 + $0x384] sm:$0xff]
        %v3445 = vld [vmem:[%s278 + $0x38c] sm:$0xff]
        %v3446 = vld [vmem:[%s278 + $0x394] sm:$0xf]
        %v3447 = vld [vmem:[%s278 + $0x398] sm:$0xff]
        %v3448 = vld [vmem:[%s278 + $0x3a0] sm:$0xff]
        %v3449 = vld [vmem:[%s278 + $0x3a8] sm:$0xf]
        %v3450 = vld [vmem:[%s278 + $0x3ac] sm:$0xff]
        %v3451 = vld [vmem:[%s278 + $0x3b4] sm:$0xff]
        %v3452 = vld [vmem:[%s278 + $0x3bc] sm:$0xf]
        %v3453 = vld [vmem:[%s278 + $0x3c0] sm:$0xff]
        %v3454 = vld [vmem:[%s278 + $0x3c8] sm:$0xff]
        %v3455 = vld [vmem:[%s278 + $0x3d0] sm:$0xf]
        %v3456 = vld [vmem:[%s278 + $0x3d4] sm:$0xff]
        %v3457 = vld [vmem:[%s278 + $0x3dc] sm:$0xff]
        %v3458 = vld [vmem:[%s278 + $0x3e4] sm:$0xf]
        %v3459 = vld [vmem:[%s278 + $0x3e8] sm:$0xff]
        %v3460 = vld [vmem:[%s278 + $0x3f0] sm:$0xff]
        %v3461 = vld [vmem:[%s278 + $0x3f8] sm:$0xf]
        %v3462 = vld [vmem:[%s278 + $0x3fc] sm:$0xff]
        %v3463 = vld [vmem:[%s278 + $0x404] sm:$0xff]
        %v3464 = vld [vmem:[%s278 + $0x40c] sm:$0xf]
        %v3465 = vld [vmem:[%s278 + $0x410] sm:$0xff]
        %v3466 = vld [vmem:[%s278 + $0x418] sm:$0xff]
        %v3467 = vld [vmem:[%s278 + $0x420] sm:$0xf]
        %v3468 = vld [vmem:[%s278 + $0x424] sm:$0xff]
        %v3469 = vld [vmem:[%s278 + $0x42c] sm:$0xff]
        %v3470 = vld [vmem:[%s278 + $0x434] sm:$0xf]
        %v3471 = vld [vmem:[%s278 + $0x438] sm:$0xff]
        %v3472 = vld [vmem:[%s278 + $0x440] sm:$0xff]
        %v3473 = vld [vmem:[%s278 + $0x448] sm:$0xf]
        %v3474 = vld [vmem:[%s278 + $0x44c] sm:$0xff]
        %v3475 = vld [vmem:[%s278 + $0x454] sm:$0xff]
        %v3476 = vld [vmem:[%s278 + $0x45c] sm:$0xf]
        %v3477 = vld [vmem:[%s278 + $0x460] sm:$0xff]
        %v3478 = vld [vmem:[%s278 + $0x468] sm:$0xff]
        %v3479 = vld [vmem:[%s278 + $0x470] sm:$0xf]
        %v3480 = vld [vmem:[%s278 + $0x474] sm:$0xff]
        %v3481 = vld [vmem:[%s278 + $0x47c] sm:$0xff]
        %v3482 = vld [vmem:[%s278 + $0x484] sm:$0xf]
        %v3483 = vld [vmem:[%s278 + $0x488] sm:$0xff]
        %v3484 = vld [vmem:[%s278 + $0x490] sm:$0xff]
        %v3485 = vld [vmem:[%s278 + $0x498] sm:$0xf]
        %v3486 = vld [vmem:[%s278 + $0x49c] sm:$0xff]
        %v3487 = vld [vmem:[%s278 + $0x4a4] sm:$0xff]
        %v3488 = vld [vmem:[%s278 + $0x4ac] sm:$0xf]
        %v3489 = vld [vmem:[%s278 + $0x4b0] sm:$0xff]
        %v3490 = vld [vmem:[%s278 + $0x4b8] sm:$0xff]
        %v3491 = vld [vmem:[%s278 + $0x4c0] sm:$0xf]
        %v3492 = vld [vmem:[%s278 + $0x4c4] sm:$0xff]
        %v3493 = vld [vmem:[%s278 + $0x4cc] sm:$0xff]
        %v3494 = vld [vmem:[%s278 + $0x4d4] sm:$0xf]
        %v3495 = vld [vmem:[%s278 + $0x4d8] sm:$0xff]
        %v3496 = vld [vmem:[%s278 + $0x4e0] sm:$0xff]
        %v3497 = vld [vmem:[%s278 + $0x4e8] sm:$0xf]
        %v3498 = vld [vmem:[%s278 + $0x4ec] sm:$0xff]
        %v3499 = vld [vmem:[%s278 + $0x4f4] sm:$0xff]
        %v3500 = vld [vmem:[%s278 + $0x4fc] sm:$0xf]
        %v3501 = vld [vmem:[%s278 + $0x500] sm:$0xff]
        %v3502 = vld [vmem:[%s278 + $0x508] sm:$0xff]
        %v3503 = vld [vmem:[%s278 + $0x510] sm:$0xf]
        %v3504 = vld [vmem:[%s278 + $0x514] sm:$0xff]
        %v3505 = vld [vmem:[%s278 + $0x51c] sm:$0xff]
        %v3506 = vld [vmem:[%s278 + $0x524] sm:$0xf]
        %v3507 = vld [vmem:[%s278 + $0x528] sm:$0xff]
        %v3508 = vld [vmem:[%s278 + $0x530] sm:$0xff]
        %v3509 = vld [vmem:[%s278 + $0x538] sm:$0xf]
        %v3510 = vld [vmem:[%s278 + $0x53c] sm:$0xff]
        %v3511 = vld [vmem:[%s278 + $0x544] sm:$0xff]
        %v3512 = vld [vmem:[%s278 + $0x54c] sm:$0xf]
        %v3513 = vld [vmem:[%s278 + $0x550] sm:$0xff]
        %v3514 = vld [vmem:[%s278 + $0x558] sm:$0xff]
        %v3515 = vld [vmem:[%s278 + $0x560] sm:$0xf]
        %v3516 = vld [vmem:[%s278 + $0x564] sm:$0xff]
        %v3517 = vld [vmem:[%s278 + $0x56c] sm:$0xff]
        %v3518 = vld [vmem:[%s278 + $0x574] sm:$0xf]
        %v3519 = vld [vmem:[%s278 + $0x578] sm:$0xff]
        %v3520 = vld [vmem:[%s278 + $0x580] sm:$0xff]
        %v3521 = vld [vmem:[%s278 + $0x588] sm:$0xf]
        %v3522 = vld [vmem:[%s278 + $0x58c] sm:$0xff]
        %v3523 = vld [vmem:[%s278 + $0x594] sm:$0xff]
        %v3524 = vld [vmem:[%s278 + $0x59c] sm:$0xf]
        %v3525 = vld [vmem:[%s278 + $0x5a0] sm:$0xff]
        %v3526 = vld [vmem:[%s278 + $0x5a8] sm:$0xff]
        %v3527 = vld [vmem:[%s278 + $0x5b0] sm:$0xf]
        %v3528 = vld [vmem:[%s278 + $0x5b4] sm:$0xff]
        %v3529 = vld [vmem:[%s278 + $0x5bc] sm:$0xff]
        %v3530 = vld [vmem:[%s278 + $0x5c4] sm:$0xf]
        %v3531 = vld [vmem:[%s278 + $0x5c8] sm:$0xff]
        %v3532 = vld [vmem:[%s278 + $0x5d0] sm:$0xff]
        %v3533 = vld [vmem:[%s278 + $0x5d8] sm:$0xf]
        %v3534 = vld [vmem:[%s278 + $0x5dc] sm:$0xff]
        %v3535 = vld [vmem:[%s278 + $0x5e4] sm:$0xff]
        %v3536 = vld [vmem:[%s278 + $0x5ec] sm:$0xf]
        %v3537 = vld [vmem:[%s278 + $0x5f0] sm:$0xff]
        %v3538 = vld [vmem:[%s278 + $0x5f8] sm:$0xff]
        %v3539 = vld [vmem:[%s278 + $0x600] sm:$0xf]
        %v3540 = vld [vmem:[%s278 + $0x604] sm:$0xff]
        %v3541 = vld [vmem:[%s278 + $0x60c] sm:$0xff]
        %v3542 = vld [vmem:[%s278 + $0x614] sm:$0xf]
        %v3543 = vld [vmem:[%s278 + $0x618] sm:$0xff]
        %v3544 = vld [vmem:[%s278 + $0x620] sm:$0xff]
        %v3545 = vld [vmem:[%s278 + $0x628] sm:$0xf]
        %v3546 = vld [vmem:[%s278 + $0x62c] sm:$0xff]
        %v3547 = vld [vmem:[%s278 + $0x634] sm:$0xff]
        %v3548 = vld [vmem:[%s278 + $0x63c] sm:$0xf]
        %v3549 = vunpack.c.l.bf16 %v3309
        %v3550 = vunpack.c.h.bf16 %v3309
        %v3551 = vunpack.c.l.bf16 %v3310
        %v3552 = vunpack.c.h.bf16 %v3310
        %v3553 = vunpack.c.l.bf16 %v3311
        %v3554 = vunpack.c.l.bf16 %v3312
        %v3555 = vunpack.c.h.bf16 %v3312
        %v3556 = vunpack.c.l.bf16 %v3313
        %v3557 = vunpack.c.h.bf16 %v3313
        %v3558 = vunpack.c.l.bf16 %v3314
        %v3559 = vunpack.c.l.bf16 %v3315
        %v3560 = vunpack.c.h.bf16 %v3315
        %v3561 = vunpack.c.l.bf16 %v3316
        %v3562 = vunpack.c.h.bf16 %v3316
        %v3563 = vunpack.c.l.bf16 %v3317
        %v3564 = vunpack.c.l.bf16 %v3318
        %v3565 = vunpack.c.h.bf16 %v3318
        %v3566 = vunpack.c.l.bf16 %v3319
        %v3567 = vunpack.c.h.bf16 %v3319
        %v3568 = vunpack.c.l.bf16 %v3320
        %v3569 = vunpack.c.l.bf16 %v3321
        %v3570 = vunpack.c.h.bf16 %v3321
        %v3571 = vunpack.c.l.bf16 %v3322
        %v3572 = vunpack.c.h.bf16 %v3322
        %v3573 = vunpack.c.l.bf16 %v3323
        %v3574 = vunpack.c.l.bf16 %v3324
        %v3575 = vunpack.c.h.bf16 %v3324
        %v3576 = vunpack.c.l.bf16 %v3325
        %v3577 = vunpack.c.h.bf16 %v3325
        %v3578 = vunpack.c.l.bf16 %v3326
        %v3579 = vunpack.c.l.bf16 %v3327
        %v3580 = vunpack.c.h.bf16 %v3327
        %v3581 = vunpack.c.l.bf16 %v3328
        %v3582 = vunpack.c.h.bf16 %v3328
        %v3583 = vunpack.c.l.bf16 %v3329
        %v3584 = vunpack.c.l.bf16 %v3330
        %v3585 = vunpack.c.h.bf16 %v3330
        %v3586 = vunpack.c.l.bf16 %v3331
        %v3587 = vunpack.c.h.bf16 %v3331
        %v3588 = vunpack.c.l.bf16 %v3332
        %v3589 = vunpack.c.l.bf16 %v3333
        %v3590 = vunpack.c.h.bf16 %v3333
        %v3591 = vunpack.c.l.bf16 %v3334
        %v3592 = vunpack.c.h.bf16 %v3334
        %v3593 = vunpack.c.l.bf16 %v3335
        %v3594 = vunpack.c.l.bf16 %v3336
        %v3595 = vunpack.c.h.bf16 %v3336
        %v3596 = vunpack.c.l.bf16 %v3337
        %v3597 = vunpack.c.h.bf16 %v3337
        %v3598 = vunpack.c.l.bf16 %v3338
        %v3599 = vunpack.c.l.bf16 %v3339
        %v3600 = vunpack.c.h.bf16 %v3339
        %v3601 = vunpack.c.l.bf16 %v3340
        %v3602 = vunpack.c.h.bf16 %v3340
        %v3603 = vunpack.c.l.bf16 %v3341
        %v3604 = vunpack.c.l.bf16 %v3342
        %v3605 = vunpack.c.h.bf16 %v3342
        %v3606 = vunpack.c.l.bf16 %v3343
        %v3607 = vunpack.c.h.bf16 %v3343
        %v3608 = vunpack.c.l.bf16 %v3344
        %v3609 = vunpack.c.l.bf16 %v3345
        %v3610 = vunpack.c.h.bf16 %v3345
        %v3611 = vunpack.c.l.bf16 %v3346
        %v3612 = vunpack.c.h.bf16 %v3346
        %v3613 = vunpack.c.l.bf16 %v3347
        %v3614 = vunpack.c.l.bf16 %v3348
        %v3615 = vunpack.c.h.bf16 %v3348
        %v3616 = vunpack.c.l.bf16 %v3349
        %v3617 = vunpack.c.h.bf16 %v3349
        %v3618 = vunpack.c.l.bf16 %v3350
        %v3619 = vunpack.c.l.bf16 %v3351
        %v3620 = vunpack.c.h.bf16 %v3351
        %v3621 = vunpack.c.l.bf16 %v3352
        %v3622 = vunpack.c.h.bf16 %v3352
        %v3623 = vunpack.c.l.bf16 %v3353
        %v3624 = vunpack.c.l.bf16 %v3354
        %v3625 = vunpack.c.h.bf16 %v3354
        %v3626 = vunpack.c.l.bf16 %v3355
        %v3627 = vunpack.c.h.bf16 %v3355
        %v3628 = vunpack.c.l.bf16 %v3356
        %v3629 = vunpack.c.l.bf16 %v3357
        %v3630 = vunpack.c.h.bf16 %v3357
        %v3631 = vunpack.c.l.bf16 %v3358
        %v3632 = vunpack.c.h.bf16 %v3358
        %v3633 = vunpack.c.l.bf16 %v3359
        %v3634 = vunpack.c.l.bf16 %v3360
        %v3635 = vunpack.c.h.bf16 %v3360
        %v3636 = vunpack.c.l.bf16 %v3361
        %v3637 = vunpack.c.h.bf16 %v3361
        %v3638 = vunpack.c.l.bf16 %v3362
        %v3639 = vunpack.c.l.bf16 %v3363
        %v3640 = vunpack.c.h.bf16 %v3363
        %v3641 = vunpack.c.l.bf16 %v3364
        %v3642 = vunpack.c.h.bf16 %v3364
        %v3643 = vunpack.c.l.bf16 %v3365
        %v3644 = vunpack.c.l.bf16 %v3366
        %v3645 = vunpack.c.h.bf16 %v3366
        %v3646 = vunpack.c.l.bf16 %v3367
        %v3647 = vunpack.c.h.bf16 %v3367
        %v3648 = vunpack.c.l.bf16 %v3368
        %v3649 = vunpack.c.l.bf16 %v3369
        %v3650 = vunpack.c.h.bf16 %v3369
        %v3651 = vunpack.c.l.bf16 %v3370
        %v3652 = vunpack.c.h.bf16 %v3370
        %v3653 = vunpack.c.l.bf16 %v3371
        %v3654 = vunpack.c.l.bf16 %v3372
        %v3655 = vunpack.c.h.bf16 %v3372
        %v3656 = vunpack.c.l.bf16 %v3373
        %v3657 = vunpack.c.h.bf16 %v3373
        %v3658 = vunpack.c.l.bf16 %v3374
        %v3659 = vunpack.c.l.bf16 %v3375
        %v3660 = vunpack.c.h.bf16 %v3375
        %v3661 = vunpack.c.l.bf16 %v3376
        %v3662 = vunpack.c.h.bf16 %v3376
        %v3663 = vunpack.c.l.bf16 %v3377
        %v3664 = vunpack.c.l.bf16 %v3378
        %v3665 = vunpack.c.h.bf16 %v3378
        %v3666 = vunpack.c.l.bf16 %v3379
        %v3667 = vunpack.c.h.bf16 %v3379
        %v3668 = vunpack.c.l.bf16 %v3380
        %v3669 = vunpack.c.l.bf16 %v3381
        %v3670 = vunpack.c.h.bf16 %v3381
        %v3671 = vunpack.c.l.bf16 %v3382
        %v3672 = vunpack.c.h.bf16 %v3382
        %v3673 = vunpack.c.l.bf16 %v3383
        %v3674 = vunpack.c.l.bf16 %v3384
        %v3675 = vunpack.c.h.bf16 %v3384
        %v3676 = vunpack.c.l.bf16 %v3385
        %v3677 = vunpack.c.h.bf16 %v3385
        %v3678 = vunpack.c.l.bf16 %v3386
        %v3679 = vunpack.c.l.bf16 %v3387
        %v3680 = vunpack.c.h.bf16 %v3387
        %v3681 = vunpack.c.l.bf16 %v3388
        %v3682 = vunpack.c.h.bf16 %v3388
        %v3683 = vunpack.c.l.bf16 %v3389
        %v3684 = vunpack.c.l.bf16 %v3390
        %v3685 = vunpack.c.h.bf16 %v3390
        %v3686 = vunpack.c.l.bf16 %v3391
        %v3687 = vunpack.c.h.bf16 %v3391
        %v3688 = vunpack.c.l.bf16 %v3392
        %v3689 = vunpack.c.l.bf16 %v3393
        %v3690 = vunpack.c.h.bf16 %v3393
        %v3691 = vunpack.c.l.bf16 %v3394
        %v3692 = vunpack.c.h.bf16 %v3394
        %v3693 = vunpack.c.l.bf16 %v3395
        %v3694 = vunpack.c.l.bf16 %v3396
        %v3695 = vunpack.c.h.bf16 %v3396
        %v3696 = vunpack.c.l.bf16 %v3397
        %v3697 = vunpack.c.h.bf16 %v3397
        %v3698 = vunpack.c.l.bf16 %v3398
        %v3699 = vunpack.c.l.bf16 %v3399
        %v3700 = vunpack.c.h.bf16 %v3399
        %v3701 = vunpack.c.l.bf16 %v3400
        %v3702 = vunpack.c.h.bf16 %v3400
        %v3703 = vunpack.c.l.bf16 %v3401
        %v3704 = vunpack.c.l.bf16 %v3402
        %v3705 = vunpack.c.h.bf16 %v3402
        %v3706 = vunpack.c.l.bf16 %v3403
        %v3707 = vunpack.c.h.bf16 %v3403
        %v3708 = vunpack.c.l.bf16 %v3404
        %v3709 = vunpack.c.l.bf16 %v3405
        %v3710 = vunpack.c.h.bf16 %v3405
        %v3711 = vunpack.c.l.bf16 %v3406
        %v3712 = vunpack.c.h.bf16 %v3406
        %v3713 = vunpack.c.l.bf16 %v3407
        %v3714 = vunpack.c.l.bf16 %v3408
        %v3715 = vunpack.c.h.bf16 %v3408
        %v3716 = vunpack.c.l.bf16 %v3409
        %v3717 = vunpack.c.h.bf16 %v3409
        %v3718 = vunpack.c.l.bf16 %v3410
        %v3719 = vunpack.c.l.bf16 %v3411
        %v3720 = vunpack.c.h.bf16 %v3411
        %v3721 = vunpack.c.l.bf16 %v3412
        %v3722 = vunpack.c.h.bf16 %v3412
        %v3723 = vunpack.c.l.bf16 %v3413
        %v3724 = vunpack.c.l.bf16 %v3414
        %v3725 = vunpack.c.h.bf16 %v3414
        %v3726 = vunpack.c.l.bf16 %v3415
        %v3727 = vunpack.c.h.bf16 %v3415
        %v3728 = vunpack.c.l.bf16 %v3416
        %v3729 = vunpack.c.l.bf16 %v3417
        %v3730 = vunpack.c.h.bf16 %v3417
        %v3731 = vunpack.c.l.bf16 %v3418
        %v3732 = vunpack.c.h.bf16 %v3418
        %v3733 = vunpack.c.l.bf16 %v3419
        %v3734 = vunpack.c.l.bf16 %v3420
        %v3735 = vunpack.c.h.bf16 %v3420
        %v3736 = vunpack.c.l.bf16 %v3421
        %v3737 = vunpack.c.h.bf16 %v3421
        %v3738 = vunpack.c.l.bf16 %v3422
        %v3739 = vunpack.c.l.bf16 %v3423
        %v3740 = vunpack.c.h.bf16 %v3423
        %v3741 = vunpack.c.l.bf16 %v3424
        %v3742 = vunpack.c.h.bf16 %v3424
        %v3743 = vunpack.c.l.bf16 %v3425
        %v3744 = vunpack.c.l.bf16 %v3426
        %v3745 = vunpack.c.h.bf16 %v3426
        %v3746 = vunpack.c.l.bf16 %v3427
        %v3747 = vunpack.c.h.bf16 %v3427
        %v3748 = vunpack.c.l.bf16 %v3428
        %v3749 = vunpack.c.l.bf16 %v3429
        %v3750 = vunpack.c.h.bf16 %v3429
        %v3751 = vunpack.c.l.bf16 %v3430
        %v3752 = vunpack.c.h.bf16 %v3430
        %v3753 = vunpack.c.l.bf16 %v3431
        %v3754 = vunpack.c.l.bf16 %v3432
        %v3755 = vunpack.c.h.bf16 %v3432
        %v3756 = vunpack.c.l.bf16 %v3433
        %v3757 = vunpack.c.h.bf16 %v3433
        %v3758 = vunpack.c.l.bf16 %v3434
        %v3759 = vunpack.c.l.bf16 %v3435
        %v3760 = vunpack.c.h.bf16 %v3435
        %v3761 = vunpack.c.l.bf16 %v3436
        %v3762 = vunpack.c.h.bf16 %v3436
        %v3763 = vunpack.c.l.bf16 %v3437
        %v3764 = vunpack.c.l.bf16 %v3438
        %v3765 = vunpack.c.h.bf16 %v3438
        %v3766 = vunpack.c.l.bf16 %v3439
        %v3767 = vunpack.c.h.bf16 %v3439
        %v3768 = vunpack.c.l.bf16 %v3440
        %v3769 = vunpack.c.l.bf16 %v3441
        %v3770 = vunpack.c.h.bf16 %v3441
        %v3771 = vunpack.c.l.bf16 %v3442
        %v3772 = vunpack.c.h.bf16 %v3442
        %v3773 = vunpack.c.l.bf16 %v3443
        %v3774 = vunpack.c.l.bf16 %v3444
        %v3775 = vunpack.c.h.bf16 %v3444
        %v3776 = vunpack.c.l.bf16 %v3445
        %v3777 = vunpack.c.h.bf16 %v3445
        %v3778 = vunpack.c.l.bf16 %v3446
        %v3779 = vunpack.c.l.bf16 %v3447
        %v3780 = vunpack.c.h.bf16 %v3447
        %v3781 = vunpack.c.l.bf16 %v3448
        %v3782 = vunpack.c.h.bf16 %v3448
        %v3783 = vunpack.c.l.bf16 %v3449
        %v3784 = vunpack.c.l.bf16 %v3450
        %v3785 = vunpack.c.h.bf16 %v3450
        %v3786 = vunpack.c.l.bf16 %v3451
        %v3787 = vunpack.c.h.bf16 %v3451
        %v3788 = vunpack.c.l.bf16 %v3452
        %v3789 = vunpack.c.l.bf16 %v3453
        %v3790 = vunpack.c.h.bf16 %v3453
        %v3791 = vunpack.c.l.bf16 %v3454
        %v3792 = vunpack.c.h.bf16 %v3454
        %v3793 = vunpack.c.l.bf16 %v3455
        %v3794 = vunpack.c.l.bf16 %v3456
        %v3795 = vunpack.c.h.bf16 %v3456
        %v3796 = vunpack.c.l.bf16 %v3457
        %v3797 = vunpack.c.h.bf16 %v3457
        %v3798 = vunpack.c.l.bf16 %v3458
        %v3799 = vunpack.c.l.bf16 %v3459
        %v3800 = vunpack.c.h.bf16 %v3459
        %v3801 = vunpack.c.l.bf16 %v3460
        %v3802 = vunpack.c.h.bf16 %v3460
        %v3803 = vunpack.c.l.bf16 %v3461
        %v3804 = vunpack.c.l.bf16 %v3462
        %v3805 = vunpack.c.h.bf16 %v3462
        %v3806 = vunpack.c.l.bf16 %v3463
        %v3807 = vunpack.c.h.bf16 %v3463
        %v3808 = vunpack.c.l.bf16 %v3464
        %v3809 = vunpack.c.l.bf16 %v3465
        %v3810 = vunpack.c.h.bf16 %v3465
        %v3811 = vunpack.c.l.bf16 %v3466
        %v3812 = vunpack.c.h.bf16 %v3466
        %v3813 = vunpack.c.l.bf16 %v3467
        %v3814 = vunpack.c.l.bf16 %v3468
        %v3815 = vunpack.c.h.bf16 %v3468
        %v3816 = vunpack.c.l.bf16 %v3469
        %v3817 = vunpack.c.h.bf16 %v3469
        %v3818 = vunpack.c.l.bf16 %v3470
        %v3819 = vunpack.c.l.bf16 %v3471
        %v3820 = vunpack.c.h.bf16 %v3471
        %v3821 = vunpack.c.l.bf16 %v3472
        %v3822 = vunpack.c.h.bf16 %v3472
        %v3823 = vunpack.c.l.bf16 %v3473
        %v3824 = vunpack.c.l.bf16 %v3474
        %v3825 = vunpack.c.h.bf16 %v3474
        %v3826 = vunpack.c.l.bf16 %v3475
        %v3827 = vunpack.c.h.bf16 %v3475
        %v3828 = vunpack.c.l.bf16 %v3476
        %v3829 = vunpack.c.l.bf16 %v3477
        %v3830 = vunpack.c.h.bf16 %v3477
        %v3831 = vunpack.c.l.bf16 %v3478
        %v3832 = vunpack.c.h.bf16 %v3478
        %v3833 = vunpack.c.l.bf16 %v3479
        %v3834 = vunpack.c.l.bf16 %v3480
        %v3835 = vunpack.c.h.bf16 %v3480
        %v3836 = vunpack.c.l.bf16 %v3481
        %v3837 = vunpack.c.h.bf16 %v3481
        %v3838 = vunpack.c.l.bf16 %v3482
        %v3839 = vunpack.c.l.bf16 %v3483
        %v3840 = vunpack.c.h.bf16 %v3483
        %v3841 = vunpack.c.l.bf16 %v3484
        %v3842 = vunpack.c.h.bf16 %v3484
        %v3843 = vunpack.c.l.bf16 %v3485
        %v3844 = vunpack.c.l.bf16 %v3486
        %v3845 = vunpack.c.h.bf16 %v3486
        %v3846 = vunpack.c.l.bf16 %v3487
        %v3847 = vunpack.c.h.bf16 %v3487
        %v3848 = vunpack.c.l.bf16 %v3488
        %v3849 = vunpack.c.l.bf16 %v3489
        %v3850 = vunpack.c.h.bf16 %v3489
        %v3851 = vunpack.c.l.bf16 %v3490
        %v3852 = vunpack.c.h.bf16 %v3490
        %v3853 = vunpack.c.l.bf16 %v3491
        %v3854 = vunpack.c.l.bf16 %v3492
        %v3855 = vunpack.c.h.bf16 %v3492
        %v3856 = vunpack.c.l.bf16 %v3493
        %v3857 = vunpack.c.h.bf16 %v3493
        %v3858 = vunpack.c.l.bf16 %v3494
        %v3859 = vunpack.c.l.bf16 %v3495
        %v3860 = vunpack.c.h.bf16 %v3495
        %v3861 = vunpack.c.l.bf16 %v3496
        %v3862 = vunpack.c.h.bf16 %v3496
        %v3863 = vunpack.c.l.bf16 %v3497
        %v3864 = vunpack.c.l.bf16 %v3498
        %v3865 = vunpack.c.h.bf16 %v3498
        %v3866 = vunpack.c.l.bf16 %v3499
        %v3867 = vunpack.c.h.bf16 %v3499
        %v3868 = vunpack.c.l.bf16 %v3500
        %v3869 = vunpack.c.l.bf16 %v3501
        %v3870 = vunpack.c.h.bf16 %v3501
        %v3871 = vunpack.c.l.bf16 %v3502
        %v3872 = vunpack.c.h.bf16 %v3502
        %v3873 = vunpack.c.l.bf16 %v3503
        %v3874 = vunpack.c.l.bf16 %v3504
        %v3875 = vunpack.c.h.bf16 %v3504
        %v3876 = vunpack.c.l.bf16 %v3505
        %v3877 = vunpack.c.h.bf16 %v3505
        %v3878 = vunpack.c.l.bf16 %v3506
        %v3879 = vunpack.c.l.bf16 %v3507
        %v3880 = vunpack.c.h.bf16 %v3507
        %v3881 = vunpack.c.l.bf16 %v3508
        %v3882 = vunpack.c.h.bf16 %v3508
        %v3883 = vunpack.c.l.bf16 %v3509
        %v3884 = vunpack.c.l.bf16 %v3510
        %v3885 = vunpack.c.h.bf16 %v3510
        %v3886 = vunpack.c.l.bf16 %v3511
        %v3887 = vunpack.c.h.bf16 %v3511
        %v3888 = vunpack.c.l.bf16 %v3512
        %v3889 = vunpack.c.l.bf16 %v3513
        %v3890 = vunpack.c.h.bf16 %v3513
        %v3891 = vunpack.c.l.bf16 %v3514
        %v3892 = vunpack.c.h.bf16 %v3514
        %v3893 = vunpack.c.l.bf16 %v3515
        %v3894 = vunpack.c.l.bf16 %v3516
        %v3895 = vunpack.c.h.bf16 %v3516
        %v3896 = vunpack.c.l.bf16 %v3517
        %v3897 = vunpack.c.h.bf16 %v3517
        %v3898 = vunpack.c.l.bf16 %v3518
        %v3899 = vunpack.c.l.bf16 %v3519
        %v3900 = vunpack.c.h.bf16 %v3519
        %v3901 = vunpack.c.l.bf16 %v3520
        %v3902 = vunpack.c.h.bf16 %v3520
        %v3903 = vunpack.c.l.bf16 %v3521
        %v3904 = vunpack.c.l.bf16 %v3522
        %v3905 = vunpack.c.h.bf16 %v3522
        %v3906 = vunpack.c.l.bf16 %v3523
        %v3907 = vunpack.c.h.bf16 %v3523
        %v3908 = vunpack.c.l.bf16 %v3524
        %v3909 = vunpack.c.l.bf16 %v3525
        %v3910 = vunpack.c.h.bf16 %v3525
        %v3911 = vunpack.c.l.bf16 %v3526
        %v3912 = vunpack.c.h.bf16 %v3526
        %v3913 = vunpack.c.l.bf16 %v3527
        %v3914 = vunpack.c.l.bf16 %v3528
        %v3915 = vunpack.c.h.bf16 %v3528
        %v3916 = vunpack.c.l.bf16 %v3529
        %v3917 = vunpack.c.h.bf16 %v3529
        %v3918 = vunpack.c.l.bf16 %v3530
        %v3919 = vunpack.c.l.bf16 %v3531
        %v3920 = vunpack.c.h.bf16 %v3531
        %v3921 = vunpack.c.l.bf16 %v3532
        %v3922 = vunpack.c.h.bf16 %v3532
        %v3923 = vunpack.c.l.bf16 %v3533
        %v3924 = vunpack.c.l.bf16 %v3534
        %v3925 = vunpack.c.h.bf16 %v3534
        %v3926 = vunpack.c.l.bf16 %v3535
        %v3927 = vunpack.c.h.bf16 %v3535
        %v3928 = vunpack.c.l.bf16 %v3536
        %v3929 = vunpack.c.l.bf16 %v3537
        %v3930 = vunpack.c.h.bf16 %v3537
        %v3931 = vunpack.c.l.bf16 %v3538
        %v3932 = vunpack.c.h.bf16 %v3538
        %v3933 = vunpack.c.l.bf16 %v3539
        %v3934 = vunpack.c.l.bf16 %v3540
        %v3935 = vunpack.c.h.bf16 %v3540
        %v3936 = vunpack.c.l.bf16 %v3541
        %v3937 = vunpack.c.h.bf16 %v3541
        %v3938 = vunpack.c.l.bf16 %v3542
        %v3939 = vunpack.c.l.bf16 %v3543
        %v3940 = vunpack.c.h.bf16 %v3543
        %v3941 = vunpack.c.l.bf16 %v3544
        %v3942 = vunpack.c.h.bf16 %v3544
        %v3943 = vunpack.c.l.bf16 %v3545
        %v3944 = vunpack.c.l.bf16 %v3546
        %v3945 = vunpack.c.h.bf16 %v3546
        %v3946 = vunpack.c.l.bf16 %v3547
        %v3947 = vunpack.c.h.bf16 %v3547
        %v3948 = vunpack.c.l.bf16 %v3548
        %v3949 = vmul.f32 %v2909, %v3549
        %v3950 = vmul.f32 %v2910, %v3550
        %v3951 = vmul.f32 %v2911, %v3551
        %v3952 = vmul.f32 %v2912, %v3552
        %v3953 = vmul.f32 %v2913, %v3553
        %v3954 = vmul.f32 %v2914, %v3554
        %v3955 = vmul.f32 %v2915, %v3555
        %v3956 = vmul.f32 %v2916, %v3556
        %v3957 = vmul.f32 %v2917, %v3557
        %v3958 = vmul.f32 %v2918, %v3558
        %v3959 = vmul.f32 %v2919, %v3559
        %v3960 = vmul.f32 %v2920, %v3560
        %v3961 = vmul.f32 %v2921, %v3561
        %v3962 = vmul.f32 %v2922, %v3562
        %v3963 = vmul.f32 %v2923, %v3563
        %v3964 = vmul.f32 %v2924, %v3564
        %v3965 = vmul.f32 %v2925, %v3565
        %v3966 = vmul.f32 %v2926, %v3566
        %v3967 = vmul.f32 %v2927, %v3567
        %v3968 = vmul.f32 %v2928, %v3568
        %v3969 = vmul.f32 %v2929, %v3569
        %v3970 = vmul.f32 %v2930, %v3570
        %v3971 = vmul.f32 %v2931, %v3571
        %v3972 = vmul.f32 %v2932, %v3572
        %v3973 = vmul.f32 %v2933, %v3573
        %v3974 = vmul.f32 %v2934, %v3574
        %v3975 = vmul.f32 %v2935, %v3575
        %v3976 = vmul.f32 %v2936, %v3576
        %v3977 = vmul.f32 %v2937, %v3577
        %v3978 = vmul.f32 %v2938, %v3578
        %v3979 = vmul.f32 %v2939, %v3579
        %v3980 = vmul.f32 %v2940, %v3580
        %v3981 = vmul.f32 %v2941, %v3581
        %v3982 = vmul.f32 %v2942, %v3582
        %v3983 = vmul.f32 %v2943, %v3583
        %v3984 = vmul.f32 %v2944, %v3584
        %v3985 = vmul.f32 %v2945, %v3585
        %v3986 = vmul.f32 %v2946, %v3586
        %v3987 = vmul.f32 %v2947, %v3587
        %v3988 = vmul.f32 %v2948, %v3588
        %v3989 = vmul.f32 %v2949, %v3589
        %v3990 = vmul.f32 %v2950, %v3590
        %v3991 = vmul.f32 %v2951, %v3591
        %v3992 = vmul.f32 %v2952, %v3592
        %v3993 = vmul.f32 %v2953, %v3593
        %v3994 = vmul.f32 %v2954, %v3594
        %v3995 = vmul.f32 %v2955, %v3595
        %v3996 = vmul.f32 %v2956, %v3596
        %v3997 = vmul.f32 %v2957, %v3597
        %v3998 = vmul.f32 %v2958, %v3598
        %v3999 = vmul.f32 %v2959, %v3599
        %v4000 = vmul.f32 %v2960, %v3600
        %v4001 = vmul.f32 %v2961, %v3601
        %v4002 = vmul.f32 %v2962, %v3602
        %v4003 = vmul.f32 %v2963, %v3603
        %v4004 = vmul.f32 %v2964, %v3604
        %v4005 = vmul.f32 %v2965, %v3605
        %v4006 = vmul.f32 %v2966, %v3606
        %v4007 = vmul.f32 %v2967, %v3607
        %v4008 = vmul.f32 %v2968, %v3608
        %v4009 = vmul.f32 %v2969, %v3609
        %v4010 = vmul.f32 %v2970, %v3610
        %v4011 = vmul.f32 %v2971, %v3611
        %v4012 = vmul.f32 %v2972, %v3612
        %v4013 = vmul.f32 %v2973, %v3613
        %v4014 = vmul.f32 %v2974, %v3614
        %v4015 = vmul.f32 %v2975, %v3615
        %v4016 = vmul.f32 %v2976, %v3616
        %v4017 = vmul.f32 %v2977, %v3617
        %v4018 = vmul.f32 %v2978, %v3618
        %v4019 = vmul.f32 %v2979, %v3619
        %v4020 = vmul.f32 %v2980, %v3620
        %v4021 = vmul.f32 %v2981, %v3621
        %v4022 = vmul.f32 %v2982, %v3622
        %v4023 = vmul.f32 %v2983, %v3623
        %v4024 = vmul.f32 %v2984, %v3624
        %v4025 = vmul.f32 %v2985, %v3625
        %v4026 = vmul.f32 %v2986, %v3626
        %v4027 = vmul.f32 %v2987, %v3627
        %v4028 = vmul.f32 %v2988, %v3628
        %v4029 = vmul.f32 %v2989, %v3629
        %v4030 = vmul.f32 %v2990, %v3630
        %v4031 = vmul.f32 %v2991, %v3631
        %v4032 = vmul.f32 %v2992, %v3632
        %v4033 = vmul.f32 %v2993, %v3633
        %v4034 = vmul.f32 %v2994, %v3634
        %v4035 = vmul.f32 %v2995, %v3635
        %v4036 = vmul.f32 %v2996, %v3636
        %v4037 = vmul.f32 %v2997, %v3637
        %v4038 = vmul.f32 %v2998, %v3638
        %v4039 = vmul.f32 %v2999, %v3639
        %v4040 = vmul.f32 %v3000, %v3640
        %v4041 = vmul.f32 %v3001, %v3641
        %v4042 = vmul.f32 %v3002, %v3642
        %v4043 = vmul.f32 %v3003, %v3643
        %v4044 = vmul.f32 %v3004, %v3644
        %v4045 = vmul.f32 %v3005, %v3645
        %v4046 = vmul.f32 %v3006, %v3646
        %v4047 = vmul.f32 %v3007, %v3647
        %v4048 = vmul.f32 %v3008, %v3648
        %v4049 = vmul.f32 %v3009, %v3649
        %v4050 = vmul.f32 %v3010, %v3650
        %v4051 = vmul.f32 %v3011, %v3651
        %v4052 = vmul.f32 %v3012, %v3652
        %v4053 = vmul.f32 %v3013, %v3653
        %v4054 = vmul.f32 %v3014, %v3654
        %v4055 = vmul.f32 %v3015, %v3655
        %v4056 = vmul.f32 %v3016, %v3656
        %v4057 = vmul.f32 %v3017, %v3657
        %v4058 = vmul.f32 %v3018, %v3658
        %v4059 = vmul.f32 %v3019, %v3659
        %v4060 = vmul.f32 %v3020, %v3660
        %v4061 = vmul.f32 %v3021, %v3661
        %v4062 = vmul.f32 %v3022, %v3662
        %v4063 = vmul.f32 %v3023, %v3663
        %v4064 = vmul.f32 %v3024, %v3664
        %v4065 = vmul.f32 %v3025, %v3665
        %v4066 = vmul.f32 %v3026, %v3666
        %v4067 = vmul.f32 %v3027, %v3667
        %v4068 = vmul.f32 %v3028, %v3668
        %v4069 = vmul.f32 %v3029, %v3669
        %v4070 = vmul.f32 %v3030, %v3670
        %v4071 = vmul.f32 %v3031, %v3671
        %v4072 = vmul.f32 %v3032, %v3672
        %v4073 = vmul.f32 %v3033, %v3673
        %v4074 = vmul.f32 %v3034, %v3674
        %v4075 = vmul.f32 %v3035, %v3675
        %v4076 = vmul.f32 %v3036, %v3676
        %v4077 = vmul.f32 %v3037, %v3677
        %v4078 = vmul.f32 %v3038, %v3678
        %v4079 = vmul.f32 %v3039, %v3679
        %v4080 = vmul.f32 %v3040, %v3680
        %v4081 = vmul.f32 %v3041, %v3681
        %v4082 = vmul.f32 %v3042, %v3682
        %v4083 = vmul.f32 %v3043, %v3683
        %v4084 = vmul.f32 %v3044, %v3684
        %v4085 = vmul.f32 %v3045, %v3685
        %v4086 = vmul.f32 %v3046, %v3686
        %v4087 = vmul.f32 %v3047, %v3687
        %v4088 = vmul.f32 %v3048, %v3688
        %v4089 = vmul.f32 %v3049, %v3689
        %v4090 = vmul.f32 %v3050, %v3690
        %v4091 = vmul.f32 %v3051, %v3691
        %v4092 = vmul.f32 %v3052, %v3692
        %v4093 = vmul.f32 %v3053, %v3693
        %v4094 = vmul.f32 %v3054, %v3694
        %v4095 = vmul.f32 %v3055, %v3695
        %v4096 = vmul.f32 %v3056, %v3696
        %v4097 = vmul.f32 %v3057, %v3697
        %v4098 = vmul.f32 %v3058, %v3698
        %v4099 = vmul.f32 %v3059, %v3699
        %v4100 = vmul.f32 %v3060, %v3700
        %v4101 = vmul.f32 %v3061, %v3701
        %v4102 = vmul.f32 %v3062, %v3702
        %v4103 = vmul.f32 %v3063, %v3703
        %v4104 = vmul.f32 %v3064, %v3704
        %v4105 = vmul.f32 %v3065, %v3705
        %v4106 = vmul.f32 %v3066, %v3706
        %v4107 = vmul.f32 %v3067, %v3707
        %v4108 = vmul.f32 %v3068, %v3708
        %v4109 = vmul.f32 %v3069, %v3709
        %v4110 = vmul.f32 %v3070, %v3710
        %v4111 = vmul.f32 %v3071, %v3711
        %v4112 = vmul.f32 %v3072, %v3712
        %v4113 = vmul.f32 %v3073, %v3713
        %v4114 = vmul.f32 %v3074, %v3714
        %v4115 = vmul.f32 %v3075, %v3715
        %v4116 = vmul.f32 %v3076, %v3716
        %v4117 = vmul.f32 %v3077, %v3717
        %v4118 = vmul.f32 %v3078, %v3718
        %v4119 = vmul.f32 %v3079, %v3719
        %v4120 = vmul.f32 %v3080, %v3720
        %v4121 = vmul.f32 %v3081, %v3721
        %v4122 = vmul.f32 %v3082, %v3722
        %v4123 = vmul.f32 %v3083, %v3723
        %v4124 = vmul.f32 %v3084, %v3724
        %v4125 = vmul.f32 %v3085, %v3725
        %v4126 = vmul.f32 %v3086, %v3726
        %v4127 = vmul.f32 %v3087, %v3727
        %v4128 = vmul.f32 %v3088, %v3728
        %v4129 = vmul.f32 %v3089, %v3729
        %v4130 = vmul.f32 %v3090, %v3730
        %v4131 = vmul.f32 %v3091, %v3731
        %v4132 = vmul.f32 %v3092, %v3732
        %v4133 = vmul.f32 %v3093, %v3733
        %v4134 = vmul.f32 %v3094, %v3734
        %v4135 = vmul.f32 %v3095, %v3735
        %v4136 = vmul.f32 %v3096, %v3736
        %v4137 = vmul.f32 %v3097, %v3737
        %v4138 = vmul.f32 %v3098, %v3738
        %v4139 = vmul.f32 %v3099, %v3739
        %v4140 = vmul.f32 %v3100, %v3740
        %v4141 = vmul.f32 %v3101, %v3741
        %v4142 = vmul.f32 %v3102, %v3742
        %v4143 = vmul.f32 %v3103, %v3743
        %v4144 = vmul.f32 %v3104, %v3744
        %v4145 = vmul.f32 %v3105, %v3745
        %v4146 = vmul.f32 %v3106, %v3746
        %v4147 = vmul.f32 %v3107, %v3747
        %v4148 = vmul.f32 %v3108, %v3748
        %v4149 = vmul.f32 %v3109, %v3749
        %v4150 = vmul.f32 %v3110, %v3750
        %v4151 = vmul.f32 %v3111, %v3751
        %v4152 = vmul.f32 %v3112, %v3752
        %v4153 = vmul.f32 %v3113, %v3753
        %v4154 = vmul.f32 %v3114, %v3754
        %v4155 = vmul.f32 %v3115, %v3755
        %v4156 = vmul.f32 %v3116, %v3756
        %v4157 = vmul.f32 %v3117, %v3757
        %v4158 = vmul.f32 %v3118, %v3758
        %v4159 = vmul.f32 %v3119, %v3759
        %v4160 = vmul.f32 %v3120, %v3760
        %v4161 = vmul.f32 %v3121, %v3761
        %v4162 = vmul.f32 %v3122, %v3762
        %v4163 = vmul.f32 %v3123, %v3763
        %v4164 = vmul.f32 %v3124, %v3764
        %v4165 = vmul.f32 %v3125, %v3765
        %v4166 = vmul.f32 %v3126, %v3766
        %v4167 = vmul.f32 %v3127, %v3767
        %v4168 = vmul.f32 %v3128, %v3768
        %v4169 = vmul.f32 %v3129, %v3769
        %v4170 = vmul.f32 %v3130, %v3770
        %v4171 = vmul.f32 %v3131, %v3771
        %v4172 = vmul.f32 %v3132, %v3772
        %v4173 = vmul.f32 %v3133, %v3773
        %v4174 = vmul.f32 %v3134, %v3774
        %v4175 = vmul.f32 %v3135, %v3775
        %v4176 = vmul.f32 %v3136, %v3776
        %v4177 = vmul.f32 %v3137, %v3777
        %v4178 = vmul.f32 %v3138, %v3778
        %v4179 = vmul.f32 %v3139, %v3779
        %v4180 = vmul.f32 %v3140, %v3780
        %v4181 = vmul.f32 %v3141, %v3781
        %v4182 = vmul.f32 %v3142, %v3782
        %v4183 = vmul.f32 %v3143, %v3783
        %v4184 = vmul.f32 %v3144, %v3784
        %v4185 = vmul.f32 %v3145, %v3785
        %v4186 = vmul.f32 %v3146, %v3786
        %v4187 = vmul.f32 %v3147, %v3787
        %v4188 = vmul.f32 %v3148, %v3788
        %v4189 = vmul.f32 %v3149, %v3789
        %v4190 = vmul.f32 %v3150, %v3790
        %v4191 = vmul.f32 %v3151, %v3791
        %v4192 = vmul.f32 %v3152, %v3792
        %v4193 = vmul.f32 %v3153, %v3793
        %v4194 = vmul.f32 %v3154, %v3794
        %v4195 = vmul.f32 %v3155, %v3795
        %v4196 = vmul.f32 %v3156, %v3796
        %v4197 = vmul.f32 %v3157, %v3797
        %v4198 = vmul.f32 %v3158, %v3798
        %v4199 = vmul.f32 %v3159, %v3799
        %v4200 = vmul.f32 %v3160, %v3800
        %v4201 = vmul.f32 %v3161, %v3801
        %v4202 = vmul.f32 %v3162, %v3802
        %v4203 = vmul.f32 %v3163, %v3803
        %v4204 = vmul.f32 %v3164, %v3804
        %v4205 = vmul.f32 %v3165, %v3805
        %v4206 = vmul.f32 %v3166, %v3806
        %v4207 = vmul.f32 %v3167, %v3807
        %v4208 = vmul.f32 %v3168, %v3808
        %v4209 = vmul.f32 %v3169, %v3809
        %v4210 = vmul.f32 %v3170, %v3810
        %v4211 = vmul.f32 %v3171, %v3811
        %v4212 = vmul.f32 %v3172, %v3812
        %v4213 = vmul.f32 %v3173, %v3813
        %v4214 = vmul.f32 %v3174, %v3814
        %v4215 = vmul.f32 %v3175, %v3815
        %v4216 = vmul.f32 %v3176, %v3816
        %v4217 = vmul.f32 %v3177, %v3817
        %v4218 = vmul.f32 %v3178, %v3818
        %v4219 = vmul.f32 %v3179, %v3819
        %v4220 = vmul.f32 %v3180, %v3820
        %v4221 = vmul.f32 %v3181, %v3821
        %v4222 = vmul.f32 %v3182, %v3822
        %v4223 = vmul.f32 %v3183, %v3823
        %v4224 = vmul.f32 %v3184, %v3824
        %v4225 = vmul.f32 %v3185, %v3825
        %v4226 = vmul.f32 %v3186, %v3826
        %v4227 = vmul.f32 %v3187, %v3827
        %v4228 = vmul.f32 %v3188, %v3828
        %v4229 = vmul.f32 %v3189, %v3829
        %v4230 = vmul.f32 %v3190, %v3830
        %v4231 = vmul.f32 %v3191, %v3831
        %v4232 = vmul.f32 %v3192, %v3832
        %v4233 = vmul.f32 %v3193, %v3833
        %v4234 = vmul.f32 %v3194, %v3834
        %v4235 = vmul.f32 %v3195, %v3835
        %v4236 = vmul.f32 %v3196, %v3836
        %v4237 = vmul.f32 %v3197, %v3837
        %v4238 = vmul.f32 %v3198, %v3838
        %v4239 = vmul.f32 %v3199, %v3839
        %v4240 = vmul.f32 %v3200, %v3840
        %v4241 = vmul.f32 %v3201, %v3841
        %v4242 = vmul.f32 %v3202, %v3842
        %v4243 = vmul.f32 %v3203, %v3843
        %v4244 = vmul.f32 %v3204, %v3844
        %v4245 = vmul.f32 %v3205, %v3845
        %v4246 = vmul.f32 %v3206, %v3846
        %v4247 = vmul.f32 %v3207, %v3847
        %v4248 = vmul.f32 %v3208, %v3848
        %v4249 = vmul.f32 %v3209, %v3849
        %v4250 = vmul.f32 %v3210, %v3850
        %v4251 = vmul.f32 %v3211, %v3851
        %v4252 = vmul.f32 %v3212, %v3852
        %v4253 = vmul.f32 %v3213, %v3853
        %v4254 = vmul.f32 %v3214, %v3854
        %v4255 = vmul.f32 %v3215, %v3855
        %v4256 = vmul.f32 %v3216, %v3856
        %v4257 = vmul.f32 %v3217, %v3857
        %v4258 = vmul.f32 %v3218, %v3858
        %v4259 = vmul.f32 %v3219, %v3859
        %v4260 = vmul.f32 %v3220, %v3860
        %v4261 = vmul.f32 %v3221, %v3861
        %v4262 = vmul.f32 %v3222, %v3862
        %v4263 = vmul.f32 %v3223, %v3863
        %v4264 = vmul.f32 %v3224, %v3864
        %v4265 = vmul.f32 %v3225, %v3865
        %v4266 = vmul.f32 %v3226, %v3866
        %v4267 = vmul.f32 %v3227, %v3867
        %v4268 = vmul.f32 %v3228, %v3868
        %v4269 = vmul.f32 %v3229, %v3869
        %v4270 = vmul.f32 %v3230, %v3870
        %v4271 = vmul.f32 %v3231, %v3871
        %v4272 = vmul.f32 %v3232, %v3872
        %v4273 = vmul.f32 %v3233, %v3873
        %v4274 = vmul.f32 %v3234, %v3874
        %v4275 = vmul.f32 %v3235, %v3875
        %v4276 = vmul.f32 %v3236, %v3876
        %v4277 = vmul.f32 %v3237, %v3877
        %v4278 = vmul.f32 %v3238, %v3878
        %v4279 = vmul.f32 %v3239, %v3879
        %v4280 = vmul.f32 %v3240, %v3880
        %v4281 = vmul.f32 %v3241, %v3881
        %v4282 = vmul.f32 %v3242, %v3882
        %v4283 = vmul.f32 %v3243, %v3883
        %v4284 = vmul.f32 %v3244, %v3884
        %v4285 = vmul.f32 %v3245, %v3885
        %v4286 = vmul.f32 %v3246, %v3886
        %v4287 = vmul.f32 %v3247, %v3887
        %v4288 = vmul.f32 %v3248, %v3888
        %v4289 = vmul.f32 %v3249, %v3889
        %v4290 = vmul.f32 %v3250, %v3890
        %v4291 = vmul.f32 %v3251, %v3891
        %v4292 = vmul.f32 %v3252, %v3892
        %v4293 = vmul.f32 %v3253, %v3893
        %v4294 = vmul.f32 %v3254, %v3894
        %v4295 = vmul.f32 %v3255, %v3895
        %v4296 = vmul.f32 %v3256, %v3896
        %v4297 = vmul.f32 %v3257, %v3897
        %v4298 = vmul.f32 %v3258, %v3898
        %v4299 = vmul.f32 %v3259, %v3899
        %v4300 = vmul.f32 %v3260, %v3900
        %v4301 = vmul.f32 %v3261, %v3901
        %v4302 = vmul.f32 %v3262, %v3902
        %v4303 = vmul.f32 %v3263, %v3903
        %v4304 = vmul.f32 %v3264, %v3904
        %v4305 = vmul.f32 %v3265, %v3905
        %v4306 = vmul.f32 %v3266, %v3906
        %v4307 = vmul.f32 %v3267, %v3907
        %v4308 = vmul.f32 %v3268, %v3908
        %v4309 = vmul.f32 %v3269, %v3909
        %v4310 = vmul.f32 %v3270, %v3910
        %v4311 = vmul.f32 %v3271, %v3911
        %v4312 = vmul.f32 %v3272, %v3912
        %v4313 = vmul.f32 %v3273, %v3913
        %v4314 = vmul.f32 %v3274, %v3914
        %v4315 = vmul.f32 %v3275, %v3915
        %v4316 = vmul.f32 %v3276, %v3916
        %v4317 = vmul.f32 %v3277, %v3917
        %v4318 = vmul.f32 %v3278, %v3918
        %v4319 = vmul.f32 %v3279, %v3919
        %v4320 = vmul.f32 %v3280, %v3920
        %v4321 = vmul.f32 %v3281, %v3921
        %v4322 = vmul.f32 %v3282, %v3922
        %v4323 = vmul.f32 %v3283, %v3923
        %v4324 = vmul.f32 %v3284, %v3924
        %v4325 = vmul.f32 %v3285, %v3925
        %v4326 = vmul.f32 %v3286, %v3926
        %v4327 = vmul.f32 %v3287, %v3927
        %v4328 = vmul.f32 %v3288, %v3928
        %v4329 = vmul.f32 %v3289, %v3929
        %v4330 = vmul.f32 %v3290, %v3930
        %v4331 = vmul.f32 %v3291, %v3931
        %v4332 = vmul.f32 %v3292, %v3932
        %v4333 = vmul.f32 %v3293, %v3933
        %v4334 = vmul.f32 %v3294, %v3934
        %v4335 = vmul.f32 %v3295, %v3935
        %v4336 = vmul.f32 %v3296, %v3936
        %v4337 = vmul.f32 %v3297, %v3937
        %v4338 = vmul.f32 %v3298, %v3938
        %v4339 = vmul.f32 %v3299, %v3939
        %v4340 = vmul.f32 %v3300, %v3940
        %v4341 = vmul.f32 %v3301, %v3941
        %v4342 = vmul.f32 %v3302, %v3942
        %v4343 = vmul.f32 %v3303, %v3943
        %v4344 = vmul.f32 %v3304, %v3944
        %v4345 = vmul.f32 %v3305, %v3945
        %v4346 = vmul.f32 %v3306, %v3946
        %v4347 = vmul.f32 %v3307, %v3947
        %v4348 = vmul.f32 %v3308, %v3948
        %v4349 = vadd.f32 %v3949, %v3950
        %v4350 = vadd.f32 %v4349, %v3951
        %v4351 = vadd.f32 %v4350, %v3952
        %v4352 = vadd.f32 %v4351, %v3953
        %v4353 = vadd.f32 %v4352, %v3954
        %v4354 = vadd.f32 %v4353, %v3955
        %v4355 = vadd.f32 %v4354, %v3956
        %v4356 = vadd.f32 %v4355, %v3957
        %v4357 = vadd.f32 %v4356, %v3958
        %v4358 = vadd.f32 %v4357, %v3959
        %v4359 = vadd.f32 %v4358, %v3960
        %v4360 = vadd.f32 %v4359, %v3961
        %v4361 = vadd.f32 %v4360, %v3962
        %v4362 = vadd.f32 %v4361, %v3963
        %v4363 = vadd.f32 %v4362, %v3964
        %v4364 = vadd.f32 %v4363, %v3965
        %v4365 = vadd.f32 %v4364, %v3966
        %v4366 = vadd.f32 %v4365, %v3967
        %v4367 = vadd.f32 %v4366, %v3968
        %v4368 = vadd.f32 %v4367, %v3969
        %v4369 = vadd.f32 %v4368, %v3970
        %v4370 = vadd.f32 %v4369, %v3971
        %v4371 = vadd.f32 %v4370, %v3972
        %v4372 = vadd.f32 %v4371, %v3973
        %v4373 = vadd.f32 %v4372, %v3974
        %v4374 = vadd.f32 %v4373, %v3975
        %v4375 = vadd.f32 %v4374, %v3976
        %v4376 = vadd.f32 %v4375, %v3977
        %v4377 = vadd.f32 %v4376, %v3978
        %v4378 = vadd.f32 %v4377, %v3979
        %v4379 = vadd.f32 %v4378, %v3980
        %v4380 = vadd.f32 %v4379, %v3981
        %v4381 = vadd.f32 %v4380, %v3982
        %v4382 = vadd.f32 %v4381, %v3983
        %v4383 = vadd.f32 %v4382, %v3984
        %v4384 = vadd.f32 %v4383, %v3985
        %v4385 = vadd.f32 %v4384, %v3986
        %v4386 = vadd.f32 %v4385, %v3987
        %v4387 = vadd.f32 %v4386, %v3988
        %v4388 = vadd.f32 %v4387, %v3989
        %v4389 = vadd.f32 %v4388, %v3990
        %v4390 = vadd.f32 %v4389, %v3991
        %v4391 = vadd.f32 %v4390, %v3992
        %v4392 = vadd.f32 %v4391, %v3993
        %v4393 = vadd.f32 %v4392, %v3994
        %v4394 = vadd.f32 %v4393, %v3995
        %v4395 = vadd.f32 %v4394, %v3996
        %v4396 = vadd.f32 %v4395, %v3997
        %v4397 = vadd.f32 %v4396, %v3998
        %v4398 = vadd.f32 %v4397, %v3999
        %v4399 = vadd.f32 %v4398, %v4000
        %v4400 = vadd.f32 %v4399, %v4001
        %v4401 = vadd.f32 %v4400, %v4002
        %v4402 = vadd.f32 %v4401, %v4003
        %v4403 = vadd.f32 %v4402, %v4004
        %v4404 = vadd.f32 %v4403, %v4005
        %v4405 = vadd.f32 %v4404, %v4006
        %v4406 = vadd.f32 %v4405, %v4007
        %v4407 = vadd.f32 %v4406, %v4008
        %v4408 = vadd.f32 %v4407, %v4009
        %v4409 = vadd.f32 %v4408, %v4010
        %v4410 = vadd.f32 %v4409, %v4011
        %v4411 = vadd.f32 %v4410, %v4012
        %v4412 = vadd.f32 %v4411, %v4013
        %v4413 = vadd.f32 %v4412, %v4014
        %v4414 = vadd.f32 %v4413, %v4015
        %v4415 = vadd.f32 %v4414, %v4016
        %v4416 = vadd.f32 %v4415, %v4017
        %v4417 = vadd.f32 %v4416, %v4018
        %v4418 = vadd.f32 %v4417, %v4019
        %v4419 = vadd.f32 %v4418, %v4020
        %v4420 = vadd.f32 %v4419, %v4021
        %v4421 = vadd.f32 %v4420, %v4022
        %v4422 = vadd.f32 %v4421, %v4023
        %v4423 = vadd.f32 %v4422, %v4024
        %v4424 = vadd.f32 %v4423, %v4025
        %v4425 = vadd.f32 %v4424, %v4026
        %v4426 = vadd.f32 %v4425, %v4027
        %v4427 = vadd.f32 %v4426, %v4028
        %v4428 = vadd.f32 %v4427, %v4029
        %v4429 = vadd.f32 %v4428, %v4030
        %v4430 = vadd.f32 %v4429, %v4031
        %v4431 = vadd.f32 %v4430, %v4032
        %v4432 = vadd.f32 %v4431, %v4033
        %v4433 = vadd.f32 %v4432, %v4034
        %v4434 = vadd.f32 %v4433, %v4035
        %v4435 = vadd.f32 %v4434, %v4036
        %v4436 = vadd.f32 %v4435, %v4037
        %v4437 = vadd.f32 %v4436, %v4038
        %v4438 = vadd.f32 %v4437, %v4039
        %v4439 = vadd.f32 %v4438, %v4040
        %v4440 = vadd.f32 %v4439, %v4041
        %v4441 = vadd.f32 %v4440, %v4042
        %v4442 = vadd.f32 %v4441, %v4043
        %v4443 = vadd.f32 %v4442, %v4044
        %v4444 = vadd.f32 %v4443, %v4045
        %v4445 = vadd.f32 %v4444, %v4046
        %v4446 = vadd.f32 %v4445, %v4047
        %v4447 = vadd.f32 %v4446, %v4048
        %v4448 = vadd.f32 %v4447, %v4049
        %v4449 = vadd.f32 %v4448, %v4050
        %v4450 = vadd.f32 %v4449, %v4051
        %v4451 = vadd.f32 %v4450, %v4052
        %v4452 = vadd.f32 %v4451, %v4053
        %v4453 = vadd.f32 %v4452, %v4054
        %v4454 = vadd.f32 %v4453, %v4055
        %v4455 = vadd.f32 %v4454, %v4056
        %v4456 = vadd.f32 %v4455, %v4057
        %v4457 = vadd.f32 %v4456, %v4058
        %v4458 = vadd.f32 %v4457, %v4059
        %v4459 = vadd.f32 %v4458, %v4060
        %v4460 = vadd.f32 %v4459, %v4061
        %v4461 = vadd.f32 %v4460, %v4062
        %v4462 = vadd.f32 %v4461, %v4063
        %v4463 = vadd.f32 %v4462, %v4064
        %v4464 = vadd.f32 %v4463, %v4065
        %v4465 = vadd.f32 %v4464, %v4066
        %v4466 = vadd.f32 %v4465, %v4067
        %v4467 = vadd.f32 %v4466, %v4068
        %v4468 = vadd.f32 %v4467, %v4069
        %v4469 = vadd.f32 %v4468, %v4070
        %v4470 = vadd.f32 %v4469, %v4071
        %v4471 = vadd.f32 %v4470, %v4072
        %v4472 = vadd.f32 %v4471, %v4073
        %v4473 = vadd.f32 %v4472, %v4074
        %v4474 = vadd.f32 %v4473, %v4075
        %v4475 = vadd.f32 %v4474, %v4076
        %v4476 = vadd.f32 %v4475, %v4077
        %v4477 = vadd.f32 %v4476, %v4078
        %v4478 = vadd.f32 %v4477, %v4079
        %v4479 = vadd.f32 %v4478, %v4080
        %v4480 = vadd.f32 %v4479, %v4081
        %v4481 = vadd.f32 %v4480, %v4082
        %v4482 = vadd.f32 %v4481, %v4083
        %v4483 = vadd.f32 %v4482, %v4084
        %v4484 = vadd.f32 %v4483, %v4085
        %v4485 = vadd.f32 %v4484, %v4086
        %v4486 = vadd.f32 %v4485, %v4087
        %v4487 = vadd.f32 %v4486, %v4088
        %v4488 = vadd.f32 %v4487, %v4089
        %v4489 = vadd.f32 %v4488, %v4090
        %v4490 = vadd.f32 %v4489, %v4091
        %v4491 = vadd.f32 %v4490, %v4092
        %v4492 = vadd.f32 %v4491, %v4093
        %v4493 = vadd.f32 %v4492, %v4094
        %v4494 = vadd.f32 %v4493, %v4095
        %v4495 = vadd.f32 %v4494, %v4096
        %v4496 = vadd.f32 %v4495, %v4097
        %v4497 = vadd.f32 %v4496, %v4098
        %v4498 = vadd.f32 %v4497, %v4099
        %v4499 = vadd.f32 %v4498, %v4100
        %v4500 = vadd.f32 %v4499, %v4101
        %v4501 = vadd.f32 %v4500, %v4102
        %v4502 = vadd.f32 %v4501, %v4103
        %v4503 = vadd.f32 %v4502, %v4104
        %v4504 = vadd.f32 %v4503, %v4105
        %v4505 = vadd.f32 %v4504, %v4106
        %v4506 = vadd.f32 %v4505, %v4107
        %v4507 = vadd.f32 %v4506, %v4108
        %v4508 = vadd.f32 %v4507, %v4109
        %v4509 = vadd.f32 %v4508, %v4110
        %v4510 = vadd.f32 %v4509, %v4111
        %v4511 = vadd.f32 %v4510, %v4112
        %v4512 = vadd.f32 %v4511, %v4113
        %v4513 = vadd.f32 %v4512, %v4114
        %v4514 = vadd.f32 %v4513, %v4115
        %v4515 = vadd.f32 %v4514, %v4116
        %v4516 = vadd.f32 %v4515, %v4117
        %v4517 = vadd.f32 %v4516, %v4118
        %v4518 = vadd.f32 %v4517, %v4119
        %v4519 = vadd.f32 %v4518, %v4120
        %v4520 = vadd.f32 %v4519, %v4121
        %v4521 = vadd.f32 %v4520, %v4122
        %v4522 = vadd.f32 %v4521, %v4123
        %v4523 = vadd.f32 %v4522, %v4124
        %v4524 = vadd.f32 %v4523, %v4125
        %v4525 = vadd.f32 %v4524, %v4126
        %v4526 = vadd.f32 %v4525, %v4127
        %v4527 = vadd.f32 %v4526, %v4128
        %v4528 = vadd.f32 %v4527, %v4129
        %v4529 = vadd.f32 %v4528, %v4130
        %v4530 = vadd.f32 %v4529, %v4131
        %v4531 = vadd.f32 %v4530, %v4132
        %v4532 = vadd.f32 %v4531, %v4133
        %v4533 = vadd.f32 %v4532, %v4134
        %v4534 = vadd.f32 %v4533, %v4135
        %v4535 = vadd.f32 %v4534, %v4136
        %v4536 = vadd.f32 %v4535, %v4137
        %v4537 = vadd.f32 %v4536, %v4138
        %v4538 = vadd.f32 %v4537, %v4139
        %v4539 = vadd.f32 %v4538, %v4140
        %v4540 = vadd.f32 %v4539, %v4141
        %v4541 = vadd.f32 %v4540, %v4142
        %v4542 = vadd.f32 %v4541, %v4143
        %v4543 = vadd.f32 %v4542, %v4144
        %v4544 = vadd.f32 %v4543, %v4145
        %v4545 = vadd.f32 %v4544, %v4146
        %v4546 = vadd.f32 %v4545, %v4147
        %v4547 = vadd.f32 %v4546, %v4148
        %v4548 = vadd.f32 %v4547, %v4149
        %v4549 = vadd.f32 %v4548, %v4150
        %v4550 = vadd.f32 %v4549, %v4151
        %v4551 = vadd.f32 %v4550, %v4152
        %v4552 = vadd.f32 %v4551, %v4153
        %v4553 = vadd.f32 %v4552, %v4154
        %v4554 = vadd.f32 %v4553, %v4155
        %v4555 = vadd.f32 %v4554, %v4156
        %v4556 = vadd.f32 %v4555, %v4157
        %v4557 = vadd.f32 %v4556, %v4158
        %v4558 = vadd.f32 %v4557, %v4159
        %v4559 = vadd.f32 %v4558, %v4160
        %v4560 = vadd.f32 %v4559, %v4161
        %v4561 = vadd.f32 %v4560, %v4162
        %v4562 = vadd.f32 %v4561, %v4163
        %v4563 = vadd.f32 %v4562, %v4164
        %v4564 = vadd.f32 %v4563, %v4165
        %v4565 = vadd.f32 %v4564, %v4166
        %v4566 = vadd.f32 %v4565, %v4167
        %v4567 = vadd.f32 %v4566, %v4168
        %v4568 = vadd.f32 %v4567, %v4169
        %v4569 = vadd.f32 %v4568, %v4170
        %v4570 = vadd.f32 %v4569, %v4171
        %v4571 = vadd.f32 %v4570, %v4172
        %v4572 = vadd.f32 %v4571, %v4173
        %v4573 = vadd.f32 %v4572, %v4174
        %v4574 = vadd.f32 %v4573, %v4175
        %v4575 = vadd.f32 %v4574, %v4176
        %v4576 = vadd.f32 %v4575, %v4177
        %v4577 = vadd.f32 %v4576, %v4178
        %v4578 = vadd.f32 %v4577, %v4179
        %v4579 = vadd.f32 %v4578, %v4180
        %v4580 = vadd.f32 %v4579, %v4181
        %v4581 = vadd.f32 %v4580, %v4182
        %v4582 = vadd.f32 %v4581, %v4183
        %v4583 = vadd.f32 %v4582, %v4184
        %v4584 = vadd.f32 %v4583, %v4185
        %v4585 = vadd.f32 %v4584, %v4186
        %v4586 = vadd.f32 %v4585, %v4187
        %v4587 = vadd.f32 %v4586, %v4188
        %v4588 = vadd.f32 %v4587, %v4189
        %v4589 = vadd.f32 %v4588, %v4190
        %v4590 = vadd.f32 %v4589, %v4191
        %v4591 = vadd.f32 %v4590, %v4192
        %v4592 = vadd.f32 %v4591, %v4193
        %v4593 = vadd.f32 %v4592, %v4194
        %v4594 = vadd.f32 %v4593, %v4195
        %v4595 = vadd.f32 %v4594, %v4196
        %v4596 = vadd.f32 %v4595, %v4197
        %v4597 = vadd.f32 %v4596, %v4198
        %v4598 = vadd.f32 %v4597, %v4199
        %v4599 = vadd.f32 %v4598, %v4200
        %v4600 = vadd.f32 %v4599, %v4201
        %v4601 = vadd.f32 %v4600, %v4202
        %v4602 = vadd.f32 %v4601, %v4203
        %v4603 = vadd.f32 %v4602, %v4204
        %v4604 = vadd.f32 %v4603, %v4205
        %v4605 = vadd.f32 %v4604, %v4206
        %v4606 = vadd.f32 %v4605, %v4207
        %v4607 = vadd.f32 %v4606, %v4208
        %v4608 = vadd.f32 %v4607, %v4209
        %v4609 = vadd.f32 %v4608, %v4210
        %v4610 = vadd.f32 %v4609, %v4211
        %v4611 = vadd.f32 %v4610, %v4212
        %v4612 = vadd.f32 %v4611, %v4213
        %v4613 = vadd.f32 %v4612, %v4214
        %v4614 = vadd.f32 %v4613, %v4215
        %v4615 = vadd.f32 %v4614, %v4216
        %v4616 = vadd.f32 %v4615, %v4217
        %v4617 = vadd.f32 %v4616, %v4218
        %v4618 = vadd.f32 %v4617, %v4219
        %v4619 = vadd.f32 %v4618, %v4220
        %v4620 = vadd.f32 %v4619, %v4221
        %v4621 = vadd.f32 %v4620, %v4222
        %v4622 = vadd.f32 %v4621, %v4223
        %v4623 = vadd.f32 %v4622, %v4224
        %v4624 = vadd.f32 %v4623, %v4225
        %v4625 = vadd.f32 %v4624, %v4226
        %v4626 = vadd.f32 %v4625, %v4227
        %v4627 = vadd.f32 %v4626, %v4228
        %v4628 = vadd.f32 %v4627, %v4229
        %v4629 = vadd.f32 %v4628, %v4230
        %v4630 = vadd.f32 %v4629, %v4231
        %v4631 = vadd.f32 %v4630, %v4232
        %v4632 = vadd.f32 %v4631, %v4233
        %v4633 = vadd.f32 %v4632, %v4234
        %v4634 = vadd.f32 %v4633, %v4235
        %v4635 = vadd.f32 %v4634, %v4236
        %v4636 = vadd.f32 %v4635, %v4237
        %v4637 = vadd.f32 %v4636, %v4238
        %v4638 = vadd.f32 %v4637, %v4239
        %v4639 = vadd.f32 %v4638, %v4240
        %v4640 = vadd.f32 %v4639, %v4241
        %v4641 = vadd.f32 %v4640, %v4242
        %v4642 = vadd.f32 %v4641, %v4243
        %v4643 = vadd.f32 %v4642, %v4244
        %v4644 = vadd.f32 %v4643, %v4245
        %v4645 = vadd.f32 %v4644, %v4246
        %v4646 = vadd.f32 %v4645, %v4247
        %v4647 = vadd.f32 %v4646, %v4248
        %v4648 = vadd.f32 %v4647, %v4249
        %v4649 = vadd.f32 %v4648, %v4250
        %v4650 = vadd.f32 %v4649, %v4251
        %v4651 = vadd.f32 %v4650, %v4252
        %v4652 = vadd.f32 %v4651, %v4253
        %v4653 = vadd.f32 %v4652, %v4254
        %v4654 = vadd.f32 %v4653, %v4255
        %v4655 = vadd.f32 %v4654, %v4256
        %v4656 = vadd.f32 %v4655, %v4257
        %v4657 = vadd.f32 %v4656, %v4258
        %v4658 = vadd.f32 %v4657, %v4259
        %v4659 = vadd.f32 %v4658, %v4260
        %v4660 = vadd.f32 %v4659, %v4261
        %v4661 = vadd.f32 %v4660, %v4262
        %v4662 = vadd.f32 %v4661, %v4263
        %v4663 = vadd.f32 %v4662, %v4264
        %v4664 = vadd.f32 %v4663, %v4265
        %v4665 = vadd.f32 %v4664, %v4266
        %v4666 = vadd.f32 %v4665, %v4267
        %v4667 = vadd.f32 %v4666, %v4268
        %v4668 = vadd.f32 %v4667, %v4269
        %v4669 = vadd.f32 %v4668, %v4270
        %v4670 = vadd.f32 %v4669, %v4271
        %v4671 = vadd.f32 %v4670, %v4272
        %v4672 = vadd.f32 %v4671, %v4273
        %v4673 = vadd.f32 %v4672, %v4274
        %v4674 = vadd.f32 %v4673, %v4275
        %v4675 = vadd.f32 %v4674, %v4276
        %v4676 = vadd.f32 %v4675, %v4277
        %v4677 = vadd.f32 %v4676, %v4278
        %v4678 = vadd.f32 %v4677, %v4279
        %v4679 = vadd.f32 %v4678, %v4280
        %v4680 = vadd.f32 %v4679, %v4281
        %v4681 = vadd.f32 %v4680, %v4282
        %v4682 = vadd.f32 %v4681, %v4283
        %v4683 = vadd.f32 %v4682, %v4284
        %v4684 = vadd.f32 %v4683, %v4285
        %v4685 = vadd.f32 %v4684, %v4286
        %v4686 = vadd.f32 %v4685, %v4287
        %v4687 = vadd.f32 %v4686, %v4288
        %v4688 = vadd.f32 %v4687, %v4289
        %v4689 = vadd.f32 %v4688, %v4290
        %v4690 = vadd.f32 %v4689, %v4291
        %v4691 = vadd.f32 %v4690, %v4292
        %v4692 = vadd.f32 %v4691, %v4293
        %v4693 = vadd.f32 %v4692, %v4294
        %v4694 = vadd.f32 %v4693, %v4295
        %v4695 = vadd.f32 %v4694, %v4296
        %v4696 = vadd.f32 %v4695, %v4297
        %v4697 = vadd.f32 %v4696, %v4298
        %v4698 = vadd.f32 %v4697, %v4299
        %v4699 = vadd.f32 %v4698, %v4300
        %v4700 = vadd.f32 %v4699, %v4301
        %v4701 = vadd.f32 %v4700, %v4302
        %v4702 = vadd.f32 %v4701, %v4303
        %v4703 = vadd.f32 %v4702, %v4304
        %v4704 = vadd.f32 %v4703, %v4305
        %v4705 = vadd.f32 %v4704, %v4306
        %v4706 = vadd.f32 %v4705, %v4307
        %v4707 = vadd.f32 %v4706, %v4308
        %v4708 = vadd.f32 %v4707, %v4309
        %v4709 = vadd.f32 %v4708, %v4310
        %v4710 = vadd.f32 %v4709, %v4311
        %v4711 = vadd.f32 %v4710, %v4312
        %v4712 = vadd.f32 %v4711, %v4313
        %v4713 = vadd.f32 %v4712, %v4314
        %v4714 = vadd.f32 %v4713, %v4315
        %v4715 = vadd.f32 %v4714, %v4316
        %v4716 = vadd.f32 %v4715, %v4317
        %v4717 = vadd.f32 %v4716, %v4318
        %v4718 = vadd.f32 %v4717, %v4319
        %v4719 = vadd.f32 %v4718, %v4320
        %v4720 = vadd.f32 %v4719, %v4321
        %v4721 = vadd.f32 %v4720, %v4322
        %v4722 = vadd.f32 %v4721, %v4323
        %v4723 = vadd.f32 %v4722, %v4324
        %v4724 = vadd.f32 %v4723, %v4325
        %v4725 = vadd.f32 %v4724, %v4326
        %v4726 = vadd.f32 %v4725, %v4327
        %v4727 = vadd.f32 %v4726, %v4328
        %v4728 = vadd.f32 %v4727, %v4329
        %v4729 = vadd.f32 %v4728, %v4330
        %v4730 = vadd.f32 %v4729, %v4331
        %v4731 = vadd.f32 %v4730, %v4332
        %v4732 = vadd.f32 %v4731, %v4333
        %v4733 = vadd.f32 %v4732, %v4334
        %v4734 = vadd.f32 %v4733, %v4335
        %v4735 = vadd.f32 %v4734, %v4336
        %v4736 = vadd.f32 %v4735, %v4337
        %v4737 = vadd.f32 %v4736, %v4338
        %v4738 = vadd.f32 %v4737, %v4339
        %v4739 = vadd.f32 %v4738, %v4340
        %v4740 = vadd.f32 %v4739, %v4341
        %v4741 = vadd.f32 %v4740, %v4342
        %v4742 = vadd.f32 %v4741, %v4343
        %v4743 = vadd.f32 %v4742, %v4344
        %v4744 = vadd.f32 %v4743, %v4345
        %v4745 = vadd.f32 %v4744, %v4346
        %v4746 = vadd.f32 %v4745, %v4347
        %v4747 = vadd.f32 %v4746, %v4348
        %4748 = vadd.xlane.f32.xlu0 %v4747
        %v4749 = vpop.xlane.xlu0 %4748
        %v4750 = vrot.slane %v4749, 4
        %v4751 = vadd.f32 %v4749, %v4750
        %v4752 = vrot.slane %v4751, 2
        %v4753 = vadd.f32 %v4751, %v4752
        %v4754 = vrot.slane %v4753, 1
        %v4755 = vadd.f32 %v4753, %v4754
        %s4756 = vtos %v4755
        %v4757 = vadd.f32 %v2909, %v2910
        %v4758 = vadd.f32 %v4757, %v2911
        %v4759 = vadd.f32 %v4758, %v2912
        %v4760 = vadd.f32 %v4759, %v2913
        %v4761 = vadd.f32 %v4760, %v2914
        %v4762 = vadd.f32 %v4761, %v2915
        %v4763 = vadd.f32 %v4762, %v2916
        %v4764 = vadd.f32 %v4763, %v2917
        %v4765 = vadd.f32 %v4764, %v2918
        %v4766 = vadd.f32 %v4765, %v2919
        %v4767 = vadd.f32 %v4766, %v2920
        %v4768 = vadd.f32 %v4767, %v2921
        %v4769 = vadd.f32 %v4768, %v2922
        %v4770 = vadd.f32 %v4769, %v2923
        %v4771 = vadd.f32 %v4770, %v2924
        %v4772 = vadd.f32 %v4771, %v2925
        %v4773 = vadd.f32 %v4772, %v2926
        %v4774 = vadd.f32 %v4773, %v2927
        %v4775 = vadd.f32 %v4774, %v2928
        %v4776 = vadd.f32 %v4775, %v2929
        %v4777 = vadd.f32 %v4776, %v2930
        %v4778 = vadd.f32 %v4777, %v2931
        %v4779 = vadd.f32 %v4778, %v2932
        %v4780 = vadd.f32 %v4779, %v2933
        %v4781 = vadd.f32 %v4780, %v2934
        %v4782 = vadd.f32 %v4781, %v2935
        %v4783 = vadd.f32 %v4782, %v2936
        %v4784 = vadd.f32 %v4783, %v2937
        %v4785 = vadd.f32 %v4784, %v2938
        %v4786 = vadd.f32 %v4785, %v2939
        %v4787 = vadd.f32 %v4786, %v2940
        %v4788 = vadd.f32 %v4787, %v2941
        %v4789 = vadd.f32 %v4788, %v2942
        %v4790 = vadd.f32 %v4789, %v2943
        %v4791 = vadd.f32 %v4790, %v2944
        %v4792 = vadd.f32 %v4791, %v2945
        %v4793 = vadd.f32 %v4792, %v2946
        %v4794 = vadd.f32 %v4793, %v2947
        %v4795 = vadd.f32 %v4794, %v2948
        %v4796 = vadd.f32 %v4795, %v2949
        %v4797 = vadd.f32 %v4796, %v2950
        %v4798 = vadd.f32 %v4797, %v2951
        %v4799 = vadd.f32 %v4798, %v2952
        %v4800 = vadd.f32 %v4799, %v2953
        %v4801 = vadd.f32 %v4800, %v2954
        %v4802 = vadd.f32 %v4801, %v2955
        %v4803 = vadd.f32 %v4802, %v2956
        %v4804 = vadd.f32 %v4803, %v2957
        %v4805 = vadd.f32 %v4804, %v2958
        %v4806 = vadd.f32 %v4805, %v2959
        %v4807 = vadd.f32 %v4806, %v2960
        %v4808 = vadd.f32 %v4807, %v2961
        %v4809 = vadd.f32 %v4808, %v2962
        %v4810 = vadd.f32 %v4809, %v2963
        %v4811 = vadd.f32 %v4810, %v2964
        %v4812 = vadd.f32 %v4811, %v2965
        %v4813 = vadd.f32 %v4812, %v2966
        %v4814 = vadd.f32 %v4813, %v2967
        %v4815 = vadd.f32 %v4814, %v2968
        %v4816 = vadd.f32 %v4815, %v2969
        %v4817 = vadd.f32 %v4816, %v2970
        %v4818 = vadd.f32 %v4817, %v2971
        %v4819 = vadd.f32 %v4818, %v2972
        %v4820 = vadd.f32 %v4819, %v2973
        %v4821 = vadd.f32 %v4820, %v2974
        %v4822 = vadd.f32 %v4821, %v2975
        %v4823 = vadd.f32 %v4822, %v2976
        %v4824 = vadd.f32 %v4823, %v2977
        %v4825 = vadd.f32 %v4824, %v2978
        %v4826 = vadd.f32 %v4825, %v2979
        %v4827 = vadd.f32 %v4826, %v2980
        %v4828 = vadd.f32 %v4827, %v2981
        %v4829 = vadd.f32 %v4828, %v2982
        %v4830 = vadd.f32 %v4829, %v2983
        %v4831 = vadd.f32 %v4830, %v2984
        %v4832 = vadd.f32 %v4831, %v2985
        %v4833 = vadd.f32 %v4832, %v2986
        %v4834 = vadd.f32 %v4833, %v2987
        %v4835 = vadd.f32 %v4834, %v2988
        %v4836 = vadd.f32 %v4835, %v2989
        %v4837 = vadd.f32 %v4836, %v2990
        %v4838 = vadd.f32 %v4837, %v2991
        %v4839 = vadd.f32 %v4838, %v2992
        %v4840 = vadd.f32 %v4839, %v2993
        %v4841 = vadd.f32 %v4840, %v2994
        %v4842 = vadd.f32 %v4841, %v2995
        %v4843 = vadd.f32 %v4842, %v2996
        %v4844 = vadd.f32 %v4843, %v2997
        %v4845 = vadd.f32 %v4844, %v2998
        %v4846 = vadd.f32 %v4845, %v2999
        %v4847 = vadd.f32 %v4846, %v3000
        %v4848 = vadd.f32 %v4847, %v3001
        %v4849 = vadd.f32 %v4848, %v3002
        %v4850 = vadd.f32 %v4849, %v3003
        %v4851 = vadd.f32 %v4850, %v3004
        %v4852 = vadd.f32 %v4851, %v3005
        %v4853 = vadd.f32 %v4852, %v3006
        %v4854 = vadd.f32 %v4853, %v3007
        %v4855 = vadd.f32 %v4854, %v3008
        %v4856 = vadd.f32 %v4855, %v3009
        %v4857 = vadd.f32 %v4856, %v3010
        %v4858 = vadd.f32 %v4857, %v3011
        %v4859 = vadd.f32 %v4858, %v3012
        %v4860 = vadd.f32 %v4859, %v3013
        %v4861 = vadd.f32 %v4860, %v3014
        %v4862 = vadd.f32 %v4861, %v3015
        %v4863 = vadd.f32 %v4862, %v3016
        %v4864 = vadd.f32 %v4863, %v3017
        %v4865 = vadd.f32 %v4864, %v3018
        %v4866 = vadd.f32 %v4865, %v3019
        %v4867 = vadd.f32 %v4866, %v3020
        %v4868 = vadd.f32 %v4867, %v3021
        %v4869 = vadd.f32 %v4868, %v3022
        %v4870 = vadd.f32 %v4869, %v3023
        %v4871 = vadd.f32 %v4870, %v3024
        %v4872 = vadd.f32 %v4871, %v3025
        %v4873 = vadd.f32 %v4872, %v3026
        %v4874 = vadd.f32 %v4873, %v3027
        %v4875 = vadd.f32 %v4874, %v3028
        %v4876 = vadd.f32 %v4875, %v3029
        %v4877 = vadd.f32 %v4876, %v3030
        %v4878 = vadd.f32 %v4877, %v3031
        %v4879 = vadd.f32 %v4878, %v3032
        %v4880 = vadd.f32 %v4879, %v3033
        %v4881 = vadd.f32 %v4880, %v3034
        %v4882 = vadd.f32 %v4881, %v3035
        %v4883 = vadd.f32 %v4882, %v3036
        %v4884 = vadd.f32 %v4883, %v3037
        %v4885 = vadd.f32 %v4884, %v3038
        %v4886 = vadd.f32 %v4885, %v3039
        %v4887 = vadd.f32 %v4886, %v3040
        %v4888 = vadd.f32 %v4887, %v3041
        %v4889 = vadd.f32 %v4888, %v3042
        %v4890 = vadd.f32 %v4889, %v3043
        %v4891 = vadd.f32 %v4890, %v3044
        %v4892 = vadd.f32 %v4891, %v3045
        %v4893 = vadd.f32 %v4892, %v3046
        %v4894 = vadd.f32 %v4893, %v3047
        %v4895 = vadd.f32 %v4894, %v3048
        %v4896 = vadd.f32 %v4895, %v3049
        %v4897 = vadd.f32 %v4896, %v3050
        %v4898 = vadd.f32 %v4897, %v3051
        %v4899 = vadd.f32 %v4898, %v3052
        %v4900 = vadd.f32 %v4899, %v3053
        %v4901 = vadd.f32 %v4900, %v3054
        %v4902 = vadd.f32 %v4901, %v3055
        %v4903 = vadd.f32 %v4902, %v3056
        %v4904 = vadd.f32 %v4903, %v3057
        %v4905 = vadd.f32 %v4904, %v3058
        %v4906 = vadd.f32 %v4905, %v3059
        %v4907 = vadd.f32 %v4906, %v3060
        %v4908 = vadd.f32 %v4907, %v3061
        %v4909 = vadd.f32 %v4908, %v3062
        %v4910 = vadd.f32 %v4909, %v3063
        %v4911 = vadd.f32 %v4910, %v3064
        %v4912 = vadd.f32 %v4911, %v3065
        %v4913 = vadd.f32 %v4912, %v3066
        %v4914 = vadd.f32 %v4913, %v3067
        %v4915 = vadd.f32 %v4914, %v3068
        %v4916 = vadd.f32 %v4915, %v3069
        %v4917 = vadd.f32 %v4916, %v3070
        %v4918 = vadd.f32 %v4917, %v3071
        %v4919 = vadd.f32 %v4918, %v3072
        %v4920 = vadd.f32 %v4919, %v3073
        %v4921 = vadd.f32 %v4920, %v3074
        %v4922 = vadd.f32 %v4921, %v3075
        %v4923 = vadd.f32 %v4922, %v3076
        %v4924 = vadd.f32 %v4923, %v3077
        %v4925 = vadd.f32 %v4924, %v3078
        %v4926 = vadd.f32 %v4925, %v3079
        %v4927 = vadd.f32 %v4926, %v3080
        %v4928 = vadd.f32 %v4927, %v3081
        %v4929 = vadd.f32 %v4928, %v3082
        %v4930 = vadd.f32 %v4929, %v3083
        %v4931 = vadd.f32 %v4930, %v3084
        %v4932 = vadd.f32 %v4931, %v3085
        %v4933 = vadd.f32 %v4932, %v3086
        %v4934 = vadd.f32 %v4933, %v3087
        %v4935 = vadd.f32 %v4934, %v3088
        %v4936 = vadd.f32 %v4935, %v3089
        %v4937 = vadd.f32 %v4936, %v3090
        %v4938 = vadd.f32 %v4937, %v3091
        %v4939 = vadd.f32 %v4938, %v3092
        %v4940 = vadd.f32 %v4939, %v3093
        %v4941 = vadd.f32 %v4940, %v3094
        %v4942 = vadd.f32 %v4941, %v3095
        %v4943 = vadd.f32 %v4942, %v3096
        %v4944 = vadd.f32 %v4943, %v3097
        %v4945 = vadd.f32 %v4944, %v3098
        %v4946 = vadd.f32 %v4945, %v3099
        %v4947 = vadd.f32 %v4946, %v3100
        %v4948 = vadd.f32 %v4947, %v3101
        %v4949 = vadd.f32 %v4948, %v3102
        %v4950 = vadd.f32 %v4949, %v3103
        %v4951 = vadd.f32 %v4950, %v3104
        %v4952 = vadd.f32 %v4951, %v3105
        %v4953 = vadd.f32 %v4952, %v3106
        %v4954 = vadd.f32 %v4953, %v3107
        %v4955 = vadd.f32 %v4954, %v3108
        %v4956 = vadd.f32 %v4955, %v3109
        %v4957 = vadd.f32 %v4956, %v3110
        %v4958 = vadd.f32 %v4957, %v3111
        %v4959 = vadd.f32 %v4958, %v3112
        %v4960 = vadd.f32 %v4959, %v3113
        %v4961 = vadd.f32 %v4960, %v3114
        %v4962 = vadd.f32 %v4961, %v3115
        %v4963 = vadd.f32 %v4962, %v3116
        %v4964 = vadd.f32 %v4963, %v3117
        %v4965 = vadd.f32 %v4964, %v3118
        %v4966 = vadd.f32 %v4965, %v3119
        %v4967 = vadd.f32 %v4966, %v3120
        %v4968 = vadd.f32 %v4967, %v3121
        %v4969 = vadd.f32 %v4968, %v3122
        %v4970 = vadd.f32 %v4969, %v3123
        %v4971 = vadd.f32 %v4970, %v3124
        %v4972 = vadd.f32 %v4971, %v3125
        %v4973 = vadd.f32 %v4972, %v3126
        %v4974 = vadd.f32 %v4973, %v3127
        %v4975 = vadd.f32 %v4974, %v3128
        %v4976 = vadd.f32 %v4975, %v3129
        %v4977 = vadd.f32 %v4976, %v3130
        %v4978 = vadd.f32 %v4977, %v3131
        %v4979 = vadd.f32 %v4978, %v3132
        %v4980 = vadd.f32 %v4979, %v3133
        %v4981 = vadd.f32 %v4980, %v3134
        %v4982 = vadd.f32 %v4981, %v3135
        %v4983 = vadd.f32 %v4982, %v3136
        %v4984 = vadd.f32 %v4983, %v3137
        %v4985 = vadd.f32 %v4984, %v3138
        %v4986 = vadd.f32 %v4985, %v3139
        %v4987 = vadd.f32 %v4986, %v3140
        %v4988 = vadd.f32 %v4987, %v3141
        %v4989 = vadd.f32 %v4988, %v3142
        %v4990 = vadd.f32 %v4989, %v3143
        %v4991 = vadd.f32 %v4990, %v3144
        %v4992 = vadd.f32 %v4991, %v3145
        %v4993 = vadd.f32 %v4992, %v3146
        %v4994 = vadd.f32 %v4993, %v3147
        %v4995 = vadd.f32 %v4994, %v3148
        %v4996 = vadd.f32 %v4995, %v3149
        %v4997 = vadd.f32 %v4996, %v3150
        %v4998 = vadd.f32 %v4997, %v3151
        %v4999 = vadd.f32 %v4998, %v3152
        %v5000 = vadd.f32 %v4999, %v3153
        %v5001 = vadd.f32 %v5000, %v3154
        %v5002 = vadd.f32 %v5001, %v3155
        %v5003 = vadd.f32 %v5002, %v3156
        %v5004 = vadd.f32 %v5003, %v3157
        %v5005 = vadd.f32 %v5004, %v3158
        %v5006 = vadd.f32 %v5005, %v3159
        %v5007 = vadd.f32 %v5006, %v3160
        %v5008 = vadd.f32 %v5007, %v3161
        %v5009 = vadd.f32 %v5008, %v3162
        %v5010 = vadd.f32 %v5009, %v3163
        %v5011 = vadd.f32 %v5010, %v3164
        %v5012 = vadd.f32 %v5011, %v3165
        %v5013 = vadd.f32 %v5012, %v3166
        %v5014 = vadd.f32 %v5013, %v3167
        %v5015 = vadd.f32 %v5014, %v3168
        %v5016 = vadd.f32 %v5015, %v3169
        %v5017 = vadd.f32 %v5016, %v3170
        %v5018 = vadd.f32 %v5017, %v3171
        %v5019 = vadd.f32 %v5018, %v3172
        %v5020 = vadd.f32 %v5019, %v3173
        %v5021 = vadd.f32 %v5020, %v3174
        %v5022 = vadd.f32 %v5021, %v3175
        %v5023 = vadd.f32 %v5022, %v3176
        %v5024 = vadd.f32 %v5023, %v3177
        %v5025 = vadd.f32 %v5024, %v3178
        %v5026 = vadd.f32 %v5025, %v3179
        %v5027 = vadd.f32 %v5026, %v3180
        %v5028 = vadd.f32 %v5027, %v3181
        %v5029 = vadd.f32 %v5028, %v3182
        %v5030 = vadd.f32 %v5029, %v3183
        %v5031 = vadd.f32 %v5030, %v3184
        %v5032 = vadd.f32 %v5031, %v3185
        %v5033 = vadd.f32 %v5032, %v3186
        %v5034 = vadd.f32 %v5033, %v3187
        %v5035 = vadd.f32 %v5034, %v3188
        %v5036 = vadd.f32 %v5035, %v3189
        %v5037 = vadd.f32 %v5036, %v3190
        %v5038 = vadd.f32 %v5037, %v3191
        %v5039 = vadd.f32 %v5038, %v3192
        %v5040 = vadd.f32 %v5039, %v3193
        %v5041 = vadd.f32 %v5040, %v3194
        %v5042 = vadd.f32 %v5041, %v3195
        %v5043 = vadd.f32 %v5042, %v3196
        %v5044 = vadd.f32 %v5043, %v3197
        %v5045 = vadd.f32 %v5044, %v3198
        %v5046 = vadd.f32 %v5045, %v3199
        %v5047 = vadd.f32 %v5046, %v3200
        %v5048 = vadd.f32 %v5047, %v3201
        %v5049 = vadd.f32 %v5048, %v3202
        %v5050 = vadd.f32 %v5049, %v3203
        %v5051 = vadd.f32 %v5050, %v3204
        %v5052 = vadd.f32 %v5051, %v3205
        %v5053 = vadd.f32 %v5052, %v3206
        %v5054 = vadd.f32 %v5053, %v3207
        %v5055 = vadd.f32 %v5054, %v3208
        %v5056 = vadd.f32 %v5055, %v3209
        %v5057 = vadd.f32 %v5056, %v3210
        %v5058 = vadd.f32 %v5057, %v3211
        %v5059 = vadd.f32 %v5058, %v3212
        %v5060 = vadd.f32 %v5059, %v3213
        %v5061 = vadd.f32 %v5060, %v3214
        %v5062 = vadd.f32 %v5061, %v3215
        %v5063 = vadd.f32 %v5062, %v3216
        %v5064 = vadd.f32 %v5063, %v3217
        %v5065 = vadd.f32 %v5064, %v3218
        %v5066 = vadd.f32 %v5065, %v3219
        %v5067 = vadd.f32 %v5066, %v3220
        %v5068 = vadd.f32 %v5067, %v3221
        %v5069 = vadd.f32 %v5068, %v3222
        %v5070 = vadd.f32 %v5069, %v3223
        %v5071 = vadd.f32 %v5070, %v3224
        %v5072 = vadd.f32 %v5071, %v3225
        %v5073 = vadd.f32 %v5072, %v3226
        %v5074 = vadd.f32 %v5073, %v3227
        %v5075 = vadd.f32 %v5074, %v3228
        %v5076 = vadd.f32 %v5075, %v3229
        %v5077 = vadd.f32 %v5076, %v3230
        %v5078 = vadd.f32 %v5077, %v3231
        %v5079 = vadd.f32 %v5078, %v3232
        %v5080 = vadd.f32 %v5079, %v3233
        %v5081 = vadd.f32 %v5080, %v3234
        %v5082 = vadd.f32 %v5081, %v3235
        %v5083 = vadd.f32 %v5082, %v3236
        %v5084 = vadd.f32 %v5083, %v3237
        %v5085 = vadd.f32 %v5084, %v3238
        %v5086 = vadd.f32 %v5085, %v3239
        %v5087 = vadd.f32 %v5086, %v3240
        %v5088 = vadd.f32 %v5087, %v3241
        %v5089 = vadd.f32 %v5088, %v3242
        %v5090 = vadd.f32 %v5089, %v3243
        %v5091 = vadd.f32 %v5090, %v3244
        %v5092 = vadd.f32 %v5091, %v3245
        %v5093 = vadd.f32 %v5092, %v3246
        %v5094 = vadd.f32 %v5093, %v3247
        %v5095 = vadd.f32 %v5094, %v3248
        %v5096 = vadd.f32 %v5095, %v3249
        %v5097 = vadd.f32 %v5096, %v3250
        %v5098 = vadd.f32 %v5097, %v3251
        %v5099 = vadd.f32 %v5098, %v3252
        %v5100 = vadd.f32 %v5099, %v3253
        %v5101 = vadd.f32 %v5100, %v3254
        %v5102 = vadd.f32 %v5101, %v3255
        %v5103 = vadd.f32 %v5102, %v3256
        %v5104 = vadd.f32 %v5103, %v3257
        %v5105 = vadd.f32 %v5104, %v3258
        %v5106 = vadd.f32 %v5105, %v3259
        %v5107 = vadd.f32 %v5106, %v3260
        %v5108 = vadd.f32 %v5107, %v3261
        %v5109 = vadd.f32 %v5108, %v3262
        %v5110 = vadd.f32 %v5109, %v3263
        %v5111 = vadd.f32 %v5110, %v3264
        %v5112 = vadd.f32 %v5111, %v3265
        %v5113 = vadd.f32 %v5112, %v3266
        %v5114 = vadd.f32 %v5113, %v3267
        %v5115 = vadd.f32 %v5114, %v3268
        %v5116 = vadd.f32 %v5115, %v3269
        %v5117 = vadd.f32 %v5116, %v3270
        %v5118 = vadd.f32 %v5117, %v3271
        %v5119 = vadd.f32 %v5118, %v3272
        %v5120 = vadd.f32 %v5119, %v3273
        %v5121 = vadd.f32 %v5120, %v3274
        %v5122 = vadd.f32 %v5121, %v3275
        %v5123 = vadd.f32 %v5122, %v3276
        %v5124 = vadd.f32 %v5123, %v3277
        %v5125 = vadd.f32 %v5124, %v3278
        %v5126 = vadd.f32 %v5125, %v3279
        %v5127 = vadd.f32 %v5126, %v3280
        %v5128 = vadd.f32 %v5127, %v3281
        %v5129 = vadd.f32 %v5128, %v3282
        %v5130 = vadd.f32 %v5129, %v3283
        %v5131 = vadd.f32 %v5130, %v3284
        %v5132 = vadd.f32 %v5131, %v3285
        %v5133 = vadd.f32 %v5132, %v3286
        %v5134 = vadd.f32 %v5133, %v3287
        %v5135 = vadd.f32 %v5134, %v3288
        %v5136 = vadd.f32 %v5135, %v3289
        %v5137 = vadd.f32 %v5136, %v3290
        %v5138 = vadd.f32 %v5137, %v3291
        %v5139 = vadd.f32 %v5138, %v3292
        %v5140 = vadd.f32 %v5139, %v3293
        %v5141 = vadd.f32 %v5140, %v3294
        %v5142 = vadd.f32 %v5141, %v3295
        %v5143 = vadd.f32 %v5142, %v3296
        %v5144 = vadd.f32 %v5143, %v3297
        %v5145 = vadd.f32 %v5144, %v3298
        %v5146 = vadd.f32 %v5145, %v3299
        %v5147 = vadd.f32 %v5146, %v3300
        %v5148 = vadd.f32 %v5147, %v3301
        %v5149 = vadd.f32 %v5148, %v3302
        %v5150 = vadd.f32 %v5149, %v3303
        %v5151 = vadd.f32 %v5150, %v3304
        %v5152 = vadd.f32 %v5151, %v3305
        %v5153 = vadd.f32 %v5152, %v3306
        %v5154 = vadd.f32 %v5153, %v3307
        %v5155 = vadd.f32 %v5154, %v3308
        %5156 = vadd.xlane.f32.xlu0 %v5155
        %v5157 = vpop.xlane.xlu0 %5156
        %v5158 = vrot.slane %v5157, 4
        %v5159 = vadd.f32 %v5157, %v5158
        %v5160 = vrot.slane %v5159, 2
        %v5161 = vadd.f32 %v5159, %v5160
        %v5162 = vrot.slane %v5161, 1
        %v5163 = vadd.f32 %v5161, %v5162
        %s5164 = vtos %v5163
        %v5165 = vmax.f32 %v3549, %v3553
        %v5166 = vmax.f32 %v3550, %v3554
        %v5167 = vmax.f32 %v3551, %v3555
        %v5168 = vmax.f32 %v3552, %v3556
        %v5169 = vmax.f32 %v5165, %v3557
        %v5170 = vmax.f32 %v5166, %v3558
        %v5171 = vmax.f32 %v5167, %v3559
        %v5172 = vmax.f32 %v5168, %v3560
        %v5173 = vmax.f32 %v5169, %v3561
        %v5174 = vmax.f32 %v5170, %v3562
        %v5175 = vmax.f32 %v5171, %v3563
        %v5176 = vmax.f32 %v5172, %v3564
        %v5177 = vmax.f32 %v5173, %v3565
        %v5178 = vmax.f32 %v5174, %v3566
        %v5179 = vmax.f32 %v5175, %v3567
        %v5180 = vmax.f32 %v5176, %v3568
        %v5181 = vmax.f32 %v5177, %v3569
        %v5182 = vmax.f32 %v5178, %v3570
        %v5183 = vmax.f32 %v5179, %v3571
        %v5184 = vmax.f32 %v5180, %v3572
        %v5185 = vmax.f32 %v5181, %v3573
        %v5186 = vmax.f32 %v5182, %v3574
        %v5187 = vmax.f32 %v5183, %v3575
        %v5188 = vmax.f32 %v5184, %v3576
        %v5189 = vmax.f32 %v5185, %v3577
        %v5190 = vmax.f32 %v5186, %v3578
        %v5191 = vmax.f32 %v5187, %v3579
        %v5192 = vmax.f32 %v5188, %v3580
        %v5193 = vmax.f32 %v5189, %v3581
        %v5194 = vmax.f32 %v5190, %v3582
        %v5195 = vmax.f32 %v5191, %v3583
        %v5196 = vmax.f32 %v5192, %v3584
        %v5197 = vmax.f32 %v5193, %v3585
        %v5198 = vmax.f32 %v5194, %v3586
        %v5199 = vmax.f32 %v5195, %v3587
        %v5200 = vmax.f32 %v5196, %v3588
        %v5201 = vmax.f32 %v5197, %v3589
        %v5202 = vmax.f32 %v5198, %v3590
        %v5203 = vmax.f32 %v5199, %v3591
        %v5204 = vmax.f32 %v5200, %v3592
        %v5205 = vmax.f32 %v5201, %v3593
        %v5206 = vmax.f32 %v5202, %v3594
        %v5207 = vmax.f32 %v5203, %v3595
        %v5208 = vmax.f32 %v5204, %v3596
        %v5209 = vmax.f32 %v5205, %v3597
        %v5210 = vmax.f32 %v5206, %v3598
        %v5211 = vmax.f32 %v5207, %v3599
        %v5212 = vmax.f32 %v5208, %v3600
        %v5213 = vmax.f32 %v5209, %v3601
        %v5214 = vmax.f32 %v5210, %v3602
        %v5215 = vmax.f32 %v5211, %v3603
        %v5216 = vmax.f32 %v5212, %v3604
        %v5217 = vmax.f32 %v5213, %v3605
        %v5218 = vmax.f32 %v5214, %v3606
        %v5219 = vmax.f32 %v5215, %v3607
        %v5220 = vmax.f32 %v5216, %v3608
        %v5221 = vmax.f32 %v5217, %v3609
        %v5222 = vmax.f32 %v5218, %v3610
        %v5223 = vmax.f32 %v5219, %v3611
        %v5224 = vmax.f32 %v5220, %v3612
        %v5225 = vmax.f32 %v5221, %v3613
        %v5226 = vmax.f32 %v5222, %v3614
        %v5227 = vmax.f32 %v5223, %v3615
        %v5228 = vmax.f32 %v5224, %v3616
        %v5229 = vmax.f32 %v5225, %v3617
        %v5230 = vmax.f32 %v5226, %v3618
        %v5231 = vmax.f32 %v5227, %v3619
        %v5232 = vmax.f32 %v5228, %v3620
        %v5233 = vmax.f32 %v5229, %v3621
        %v5234 = vmax.f32 %v5230, %v3622
        %v5235 = vmax.f32 %v5231, %v3623
        %v5236 = vmax.f32 %v5232, %v3624
        %v5237 = vmax.f32 %v5233, %v3625
        %v5238 = vmax.f32 %v5234, %v3626
        %v5239 = vmax.f32 %v5235, %v3627
        %v5240 = vmax.f32 %v5236, %v3628
        %v5241 = vmax.f32 %v5237, %v3629
        %v5242 = vmax.f32 %v5238, %v3630
        %v5243 = vmax.f32 %v5239, %v3631
        %v5244 = vmax.f32 %v5240, %v3632
        %v5245 = vmax.f32 %v5241, %v3633
        %v5246 = vmax.f32 %v5242, %v3634
        %v5247 = vmax.f32 %v5243, %v3635
        %v5248 = vmax.f32 %v5244, %v3636
        %v5249 = vmax.f32 %v5245, %v3637
        %v5250 = vmax.f32 %v5246, %v3638
        %v5251 = vmax.f32 %v5247, %v3639
        %v5252 = vmax.f32 %v5248, %v3640
        %v5253 = vmax.f32 %v5249, %v3641
        %v5254 = vmax.f32 %v5250, %v3642
        %v5255 = vmax.f32 %v5251, %v3643
        %v5256 = vmax.f32 %v5252, %v3644
        %v5257 = vmax.f32 %v5253, %v3645
        %v5258 = vmax.f32 %v5254, %v3646
        %v5259 = vmax.f32 %v5255, %v3647
        %v5260 = vmax.f32 %v5256, %v3648
        %v5261 = vmax.f32 %v5257, %v3649
        %v5262 = vmax.f32 %v5258, %v3650
        %v5263 = vmax.f32 %v5259, %v3651
        %v5264 = vmax.f32 %v5260, %v3652
        %v5265 = vmax.f32 %v5261, %v3653
        %v5266 = vmax.f32 %v5262, %v3654
        %v5267 = vmax.f32 %v5263, %v3655
        %v5268 = vmax.f32 %v5264, %v3656
        %v5269 = vmax.f32 %v5265, %v3657
        %v5270 = vmax.f32 %v5266, %v3658
        %v5271 = vmax.f32 %v5267, %v3659
        %v5272 = vmax.f32 %v5268, %v3660
        %v5273 = vmax.f32 %v5269, %v3661
        %v5274 = vmax.f32 %v5270, %v3662
        %v5275 = vmax.f32 %v5271, %v3663
        %v5276 = vmax.f32 %v5272, %v3664
        %v5277 = vmax.f32 %v5273, %v3665
        %v5278 = vmax.f32 %v5274, %v3666
        %v5279 = vmax.f32 %v5275, %v3667
        %v5280 = vmax.f32 %v5276, %v3668
        %v5281 = vmax.f32 %v5277, %v3669
        %v5282 = vmax.f32 %v5278, %v3670
        %v5283 = vmax.f32 %v5279, %v3671
        %v5284 = vmax.f32 %v5280, %v3672
        %v5285 = vmax.f32 %v5281, %v3673
        %v5286 = vmax.f32 %v5282, %v3674
        %v5287 = vmax.f32 %v5283, %v3675
        %v5288 = vmax.f32 %v5284, %v3676
        %v5289 = vmax.f32 %v5285, %v3677
        %v5290 = vmax.f32 %v5286, %v3678
        %v5291 = vmax.f32 %v5287, %v3679
        %v5292 = vmax.f32 %v5288, %v3680
        %v5293 = vmax.f32 %v5289, %v3681
        %v5294 = vmax.f32 %v5290, %v3682
        %v5295 = vmax.f32 %v5291, %v3683
        %v5296 = vmax.f32 %v5292, %v3684
        %v5297 = vmax.f32 %v5293, %v3685
        %v5298 = vmax.f32 %v5294, %v3686
        %v5299 = vmax.f32 %v5295, %v3687
        %v5300 = vmax.f32 %v5296, %v3688
        %v5301 = vmax.f32 %v5297, %v3689
        %v5302 = vmax.f32 %v5298, %v3690
        %v5303 = vmax.f32 %v5299, %v3691
        %v5304 = vmax.f32 %v5300, %v3692
        %v5305 = vmax.f32 %v5301, %v3693
        %v5306 = vmax.f32 %v5302, %v3694
        %v5307 = vmax.f32 %v5303, %v3695
        %v5308 = vmax.f32 %v5304, %v3696
        %v5309 = vmax.f32 %v5305, %v3697
        %v5310 = vmax.f32 %v5306, %v3698
        %v5311 = vmax.f32 %v5307, %v3699
        %v5312 = vmax.f32 %v5308, %v3700
        %v5313 = vmax.f32 %v5309, %v3701
        %v5314 = vmax.f32 %v5310, %v3702
        %v5315 = vmax.f32 %v5311, %v3703
        %v5316 = vmax.f32 %v5312, %v3704
        %v5317 = vmax.f32 %v5313, %v3705
        %v5318 = vmax.f32 %v5314, %v3706
        %v5319 = vmax.f32 %v5315, %v3707
        %v5320 = vmax.f32 %v5316, %v3708
        %v5321 = vmax.f32 %v5317, %v3709
        %v5322 = vmax.f32 %v5318, %v3710
        %v5323 = vmax.f32 %v5319, %v3711
        %v5324 = vmax.f32 %v5320, %v3712
        %v5325 = vmax.f32 %v5321, %v3713
        %v5326 = vmax.f32 %v5322, %v3714
        %v5327 = vmax.f32 %v5323, %v3715
        %v5328 = vmax.f32 %v5324, %v3716
        %v5329 = vmax.f32 %v5325, %v3717
        %v5330 = vmax.f32 %v5326, %v3718
        %v5331 = vmax.f32 %v5327, %v3719
        %v5332 = vmax.f32 %v5328, %v3720
        %v5333 = vmax.f32 %v5329, %v3721
        %v5334 = vmax.f32 %v5330, %v3722
        %v5335 = vmax.f32 %v5331, %v3723
        %v5336 = vmax.f32 %v5332, %v3724
        %v5337 = vmax.f32 %v5333, %v3725
        %v5338 = vmax.f32 %v5334, %v3726
        %v5339 = vmax.f32 %v5335, %v3727
        %v5340 = vmax.f32 %v5336, %v3728
        %v5341 = vmax.f32 %v5337, %v3729
        %v5342 = vmax.f32 %v5338, %v3730
        %v5343 = vmax.f32 %v5339, %v3731
        %v5344 = vmax.f32 %v5340, %v3732
        %v5345 = vmax.f32 %v5341, %v3733
        %v5346 = vmax.f32 %v5342, %v3734
        %v5347 = vmax.f32 %v5343, %v3735
        %v5348 = vmax.f32 %v5344, %v3736
        %v5349 = vmax.f32 %v5345, %v3737
        %v5350 = vmax.f32 %v5346, %v3738
        %v5351 = vmax.f32 %v5347, %v3739
        %v5352 = vmax.f32 %v5348, %v3740
        %v5353 = vmax.f32 %v5349, %v3741
        %v5354 = vmax.f32 %v5350, %v3742
        %v5355 = vmax.f32 %v5351, %v3743
        %v5356 = vmax.f32 %v5352, %v3744
        %v5357 = vmax.f32 %v5353, %v3745
        %v5358 = vmax.f32 %v5354, %v3746
        %v5359 = vmax.f32 %v5355, %v3747
        %v5360 = vmax.f32 %v5356, %v3748
        %v5361 = vmax.f32 %v5357, %v3749
        %v5362 = vmax.f32 %v5358, %v3750
        %v5363 = vmax.f32 %v5359, %v3751
        %v5364 = vmax.f32 %v5360, %v3752
        %v5365 = vmax.f32 %v5361, %v3753
        %v5366 = vmax.f32 %v5362, %v3754
        %v5367 = vmax.f32 %v5363, %v3755
        %v5368 = vmax.f32 %v5364, %v3756
        %v5369 = vmax.f32 %v5365, %v3757
        %v5370 = vmax.f32 %v5366, %v3758
        %v5371 = vmax.f32 %v5367, %v3759
        %v5372 = vmax.f32 %v5368, %v3760
        %v5373 = vmax.f32 %v5369, %v3761
        %v5374 = vmax.f32 %v5370, %v3762
        %v5375 = vmax.f32 %v5371, %v3763
        %v5376 = vmax.f32 %v5372, %v3764
        %v5377 = vmax.f32 %v5373, %v3765
        %v5378 = vmax.f32 %v5374, %v3766
        %v5379 = vmax.f32 %v5375, %v3767
        %v5380 = vmax.f32 %v5376, %v3768
        %v5381 = vmax.f32 %v5377, %v3769
        %v5382 = vmax.f32 %v5378, %v3770
        %v5383 = vmax.f32 %v5379, %v3771
        %v5384 = vmax.f32 %v5380, %v3772
        %v5385 = vmax.f32 %v5381, %v3773
        %v5386 = vmax.f32 %v5382, %v3774
        %v5387 = vmax.f32 %v5383, %v3775
        %v5388 = vmax.f32 %v5384, %v3776
        %v5389 = vmax.f32 %v5385, %v3777
        %v5390 = vmax.f32 %v5386, %v3778
        %v5391 = vmax.f32 %v5387, %v3779
        %v5392 = vmax.f32 %v5388, %v3780
        %v5393 = vmax.f32 %v5389, %v3781
        %v5394 = vmax.f32 %v5390, %v3782
        %v5395 = vmax.f32 %v5391, %v3783
        %v5396 = vmax.f32 %v5392, %v3784
        %v5397 = vmax.f32 %v5393, %v3785
        %v5398 = vmax.f32 %v5394, %v3786
        %v5399 = vmax.f32 %v5395, %v3787
        %v5400 = vmax.f32 %v5396, %v3788
        %v5401 = vmax.f32 %v5397, %v3789
        %v5402 = vmax.f32 %v5398, %v3790
        %v5403 = vmax.f32 %v5399, %v3791
        %v5404 = vmax.f32 %v5400, %v3792
        %v5405 = vmax.f32 %v5401, %v3793
        %v5406 = vmax.f32 %v5402, %v3794
        %v5407 = vmax.f32 %v5403, %v3795
        %v5408 = vmax.f32 %v5404, %v3796
        %v5409 = vmax.f32 %v5405, %v3797
        %v5410 = vmax.f32 %v5406, %v3798
        %v5411 = vmax.f32 %v5407, %v3799
        %v5412 = vmax.f32 %v5408, %v3800
        %v5413 = vmax.f32 %v5409, %v3801
        %v5414 = vmax.f32 %v5410, %v3802
        %v5415 = vmax.f32 %v5411, %v3803
        %v5416 = vmax.f32 %v5412, %v3804
        %v5417 = vmax.f32 %v5413, %v3805
        %v5418 = vmax.f32 %v5414, %v3806
        %v5419 = vmax.f32 %v5415, %v3807
        %v5420 = vmax.f32 %v5416, %v3808
        %v5421 = vmax.f32 %v5417, %v3809
        %v5422 = vmax.f32 %v5418, %v3810
        %v5423 = vmax.f32 %v5419, %v3811
        %v5424 = vmax.f32 %v5420, %v3812
        %v5425 = vmax.f32 %v5421, %v3813
        %v5426 = vmax.f32 %v5422, %v3814
        %v5427 = vmax.f32 %v5423, %v3815
        %v5428 = vmax.f32 %v5424, %v3816
        %v5429 = vmax.f32 %v5425, %v3817
        %v5430 = vmax.f32 %v5426, %v3818
        %v5431 = vmax.f32 %v5427, %v3819
        %v5432 = vmax.f32 %v5428, %v3820
        %v5433 = vmax.f32 %v5429, %v3821
        %v5434 = vmax.f32 %v5430, %v3822
        %v5435 = vmax.f32 %v5431, %v3823
        %v5436 = vmax.f32 %v5432, %v3824
        %v5437 = vmax.f32 %v5433, %v3825
        %v5438 = vmax.f32 %v5434, %v3826
        %v5439 = vmax.f32 %v5435, %v3827
        %v5440 = vmax.f32 %v5436, %v3828
        %v5441 = vmax.f32 %v5437, %v3829
        %v5442 = vmax.f32 %v5438, %v3830
        %v5443 = vmax.f32 %v5439, %v3831
        %v5444 = vmax.f32 %v5440, %v3832
        %v5445 = vmax.f32 %v5441, %v3833
        %v5446 = vmax.f32 %v5442, %v3834
        %v5447 = vmax.f32 %v5443, %v3835
        %v5448 = vmax.f32 %v5444, %v3836
        %v5449 = vmax.f32 %v5445, %v3837
        %v5450 = vmax.f32 %v5446, %v3838
        %v5451 = vmax.f32 %v5447, %v3839
        %v5452 = vmax.f32 %v5448, %v3840
        %v5453 = vmax.f32 %v5449, %v3841
        %v5454 = vmax.f32 %v5450, %v3842
        %v5455 = vmax.f32 %v5451, %v3843
        %v5456 = vmax.f32 %v5452, %v3844
        %v5457 = vmax.f32 %v5453, %v3845
        %v5458 = vmax.f32 %v5454, %v3846
        %v5459 = vmax.f32 %v5455, %v3847
        %v5460 = vmax.f32 %v5456, %v3848
        %v5461 = vmax.f32 %v5457, %v3849
        %v5462 = vmax.f32 %v5458, %v3850
        %v5463 = vmax.f32 %v5459, %v3851
        %v5464 = vmax.f32 %v5460, %v3852
        %v5465 = vmax.f32 %v5461, %v3853
        %v5466 = vmax.f32 %v5462, %v3854
        %v5467 = vmax.f32 %v5463, %v3855
        %v5468 = vmax.f32 %v5464, %v3856
        %v5469 = vmax.f32 %v5465, %v3857
        %v5470 = vmax.f32 %v5466, %v3858
        %v5471 = vmax.f32 %v5467, %v3859
        %v5472 = vmax.f32 %v5468, %v3860
        %v5473 = vmax.f32 %v5469, %v3861
        %v5474 = vmax.f32 %v5470, %v3862
        %v5475 = vmax.f32 %v5471, %v3863
        %v5476 = vmax.f32 %v5472, %v3864
        %v5477 = vmax.f32 %v5473, %v3865
        %v5478 = vmax.f32 %v5474, %v3866
        %v5479 = vmax.f32 %v5475, %v3867
        %v5480 = vmax.f32 %v5476, %v3868
        %v5481 = vmax.f32 %v5477, %v3869
        %v5482 = vmax.f32 %v5478, %v3870
        %v5483 = vmax.f32 %v5479, %v3871
        %v5484 = vmax.f32 %v5480, %v3872
        %v5485 = vmax.f32 %v5481, %v3873
        %v5486 = vmax.f32 %v5482, %v3874
        %v5487 = vmax.f32 %v5483, %v3875
        %v5488 = vmax.f32 %v5484, %v3876
        %v5489 = vmax.f32 %v5485, %v3877
        %v5490 = vmax.f32 %v5486, %v3878
        %v5491 = vmax.f32 %v5487, %v3879
        %v5492 = vmax.f32 %v5488, %v3880
        %v5493 = vmax.f32 %v5489, %v3881
        %v5494 = vmax.f32 %v5490, %v3882
        %v5495 = vmax.f32 %v5491, %v3883
        %v5496 = vmax.f32 %v5492, %v3884
        %v5497 = vmax.f32 %v5493, %v3885
        %v5498 = vmax.f32 %v5494, %v3886
        %v5499 = vmax.f32 %v5495, %v3887
        %v5500 = vmax.f32 %v5496, %v3888
        %v5501 = vmax.f32 %v5497, %v3889
        %v5502 = vmax.f32 %v5498, %v3890
        %v5503 = vmax.f32 %v5499, %v3891
        %v5504 = vmax.f32 %v5500, %v3892
        %v5505 = vmax.f32 %v5501, %v3893
        %v5506 = vmax.f32 %v5502, %v3894
        %v5507 = vmax.f32 %v5503, %v3895
        %v5508 = vmax.f32 %v5504, %v3896
        %v5509 = vmax.f32 %v5505, %v3897
        %v5510 = vmax.f32 %v5506, %v3898
        %v5511 = vmax.f32 %v5507, %v3899
        %v5512 = vmax.f32 %v5508, %v3900
        %v5513 = vmax.f32 %v5509, %v3901
        %v5514 = vmax.f32 %v5510, %v3902
        %v5515 = vmax.f32 %v5511, %v3903
        %v5516 = vmax.f32 %v5512, %v3904
        %v5517 = vmax.f32 %v5513, %v3905
        %v5518 = vmax.f32 %v5514, %v3906
        %v5519 = vmax.f32 %v5515, %v3907
        %v5520 = vmax.f32 %v5516, %v3908
        %v5521 = vmax.f32 %v5517, %v3909
        %v5522 = vmax.f32 %v5518, %v3910
        %v5523 = vmax.f32 %v5519, %v3911
        %v5524 = vmax.f32 %v5520, %v3912
        %v5525 = vmax.f32 %v5521, %v3913
        %v5526 = vmax.f32 %v5522, %v3914
        %v5527 = vmax.f32 %v5523, %v3915
        %v5528 = vmax.f32 %v5524, %v3916
        %v5529 = vmax.f32 %v5525, %v3917
        %v5530 = vmax.f32 %v5526, %v3918
        %v5531 = vmax.f32 %v5527, %v3919
        %v5532 = vmax.f32 %v5528, %v3920
        %v5533 = vmax.f32 %v5529, %v3921
        %v5534 = vmax.f32 %v5530, %v3922
        %v5535 = vmax.f32 %v5531, %v3923
        %v5536 = vmax.f32 %v5532, %v3924
        %v5537 = vmax.f32 %v5533, %v3925
        %v5538 = vmax.f32 %v5534, %v3926
        %v5539 = vmax.f32 %v5535, %v3927
        %v5540 = vmax.f32 %v5536, %v3928
        %v5541 = vmax.f32 %v5537, %v3929
        %v5542 = vmax.f32 %v5538, %v3930
        %v5543 = vmax.f32 %v5539, %v3931
        %v5544 = vmax.f32 %v5540, %v3932
        %v5545 = vmax.f32 %v5541, %v3933
        %v5546 = vmax.f32 %v5542, %v3934
        %v5547 = vmax.f32 %v5543, %v3935
        %v5548 = vmax.f32 %v5544, %v3936
        %v5549 = vmax.f32 %v5545, %v3937
        %v5550 = vmax.f32 %v5546, %v3938
        %v5551 = vmax.f32 %v5547, %v3939
        %v5552 = vmax.f32 %v5548, %v3940
        %v5553 = vmax.f32 %v5549, %v3941
        %v5554 = vmax.f32 %v5550, %v3942
        %v5555 = vmax.f32 %v5551, %v3943
        %v5556 = vmax.f32 %v5552, %v3944
        %v5557 = vmax.f32 %v5553, %v3945
        %v5558 = vmax.f32 %v5554, %v3946
        %v5559 = vmax.f32 %v5555, %v3947
        %v5560 = vmax.f32 %v5556, %v3948
        %v5561 = vmax.f32 %v5557, %v5558
        %v5562 = vmax.f32 %v5559, %v5560
        %v5563 = vmax.f32 %v5561, %v5562
        %5564 = vmax.xlane.f32.xlu0 %v5563
        %v5565 = vpop.xlane.xlu0 %5564
        %v5566 = vrot.slane %v5565, 4
        %v5567 = vmax.f32 %v5565, %v5566
        %v5568 = vrot.slane %v5567, 2
        %v5569 = vmax.f32 %v5567, %v5568
        %v5570 = vrot.slane %v5569, 1
        %v5571 = vmax.f32 %v5569, %v5570
        %s5572 = vtos %v5571
        %v5573 = vstv %s5572
        %v5574 = vsub.f32 %v3549, %v5573
        %v5575 = vsub.f32 %v3550, %v5573
        %v5576 = vsub.f32 %v3551, %v5573
        %v5577 = vsub.f32 %v3552, %v5573
        %v5578 = vsub.f32 %v3553, %v5573
        %v5579 = vsub.f32 %v3554, %v5573
        %v5580 = vsub.f32 %v3555, %v5573
        %v5581 = vsub.f32 %v3556, %v5573
        %v5582 = vsub.f32 %v3557, %v5573
        %v5583 = vsub.f32 %v3558, %v5573
        %v5584 = vsub.f32 %v3559, %v5573
        %v5585 = vsub.f32 %v3560, %v5573
        %v5586 = vsub.f32 %v3561, %v5573
        %v5587 = vsub.f32 %v3562, %v5573
        %v5588 = vsub.f32 %v3563, %v5573
        %v5589 = vsub.f32 %v3564, %v5573
        %v5590 = vsub.f32 %v3565, %v5573
        %v5591 = vsub.f32 %v3566, %v5573
        %v5592 = vsub.f32 %v3567, %v5573
        %v5593 = vsub.f32 %v3568, %v5573
        %v5594 = vsub.f32 %v3569, %v5573
        %v5595 = vsub.f32 %v3570, %v5573
        %v5596 = vsub.f32 %v3571, %v5573
        %v5597 = vsub.f32 %v3572, %v5573
        %v5598 = vsub.f32 %v3573, %v5573
        %v5599 = vsub.f32 %v3574, %v5573
        %v5600 = vsub.f32 %v3575, %v5573
        %v5601 = vsub.f32 %v3576, %v5573
        %v5602 = vsub.f32 %v3577, %v5573
        %v5603 = vsub.f32 %v3578, %v5573
        %v5604 = vsub.f32 %v3579, %v5573
        %v5605 = vsub.f32 %v3580, %v5573
        %v5606 = vsub.f32 %v3581, %v5573
        %v5607 = vsub.f32 %v3582, %v5573
        %v5608 = vsub.f32 %v3583, %v5573
        %v5609 = vsub.f32 %v3584, %v5573
        %v5610 = vsub.f32 %v3585, %v5573
        %v5611 = vsub.f32 %v3586, %v5573
        %v5612 = vsub.f32 %v3587, %v5573
        %v5613 = vsub.f32 %v3588, %v5573
        %v5614 = vsub.f32 %v3589, %v5573
        %v5615 = vsub.f32 %v3590, %v5573
        %v5616 = vsub.f32 %v3591, %v5573
        %v5617 = vsub.f32 %v3592, %v5573
        %v5618 = vsub.f32 %v3593, %v5573
        %v5619 = vsub.f32 %v3594, %v5573
        %v5620 = vsub.f32 %v3595, %v5573
        %v5621 = vsub.f32 %v3596, %v5573
        %v5622 = vsub.f32 %v3597, %v5573
        %v5623 = vsub.f32 %v3598, %v5573
        %v5624 = vsub.f32 %v3599, %v5573
        %v5625 = vsub.f32 %v3600, %v5573
        %v5626 = vsub.f32 %v3601, %v5573
        %v5627 = vsub.f32 %v3602, %v5573
        %v5628 = vsub.f32 %v3603, %v5573
        %v5629 = vsub.f32 %v3604, %v5573
        %v5630 = vsub.f32 %v3605, %v5573
        %v5631 = vsub.f32 %v3606, %v5573
        %v5632 = vsub.f32 %v3607, %v5573
        %v5633 = vsub.f32 %v3608, %v5573
        %v5634 = vsub.f32 %v3609, %v5573
        %v5635 = vsub.f32 %v3610, %v5573
        %v5636 = vsub.f32 %v3611, %v5573
        %v5637 = vsub.f32 %v3612, %v5573
        %v5638 = vsub.f32 %v3613, %v5573
        %v5639 = vsub.f32 %v3614, %v5573
        %v5640 = vsub.f32 %v3615, %v5573
        %v5641 = vsub.f32 %v3616, %v5573
        %v5642 = vsub.f32 %v3617, %v5573
        %v5643 = vsub.f32 %v3618, %v5573
        %v5644 = vsub.f32 %v3619, %v5573
        %v5645 = vsub.f32 %v3620, %v5573
        %v5646 = vsub.f32 %v3621, %v5573
        %v5647 = vsub.f32 %v3622, %v5573
        %v5648 = vsub.f32 %v3623, %v5573
        %v5649 = vsub.f32 %v3624, %v5573
        %v5650 = vsub.f32 %v3625, %v5573
        %v5651 = vsub.f32 %v3626, %v5573
        %v5652 = vsub.f32 %v3627, %v5573
        %v5653 = vsub.f32 %v3628, %v5573
        %v5654 = vsub.f32 %v3629, %v5573
        %v5655 = vsub.f32 %v3630, %v5573
        %v5656 = vsub.f32 %v3631, %v5573
        %v5657 = vsub.f32 %v3632, %v5573
        %v5658 = vsub.f32 %v3633, %v5573
        %v5659 = vsub.f32 %v3634, %v5573
        %v5660 = vsub.f32 %v3635, %v5573
        %v5661 = vsub.f32 %v3636, %v5573
        %v5662 = vsub.f32 %v3637, %v5573
        %v5663 = vsub.f32 %v3638, %v5573
        %v5664 = vsub.f32 %v3639, %v5573
        %v5665 = vsub.f32 %v3640, %v5573
        %v5666 = vsub.f32 %v3641, %v5573
        %v5667 = vsub.f32 %v3642, %v5573
        %v5668 = vsub.f32 %v3643, %v5573
        %v5669 = vsub.f32 %v3644, %v5573
        %v5670 = vsub.f32 %v3645, %v5573
        %v5671 = vsub.f32 %v3646, %v5573
        %v5672 = vsub.f32 %v3647, %v5573
        %v5673 = vsub.f32 %v3648, %v5573
        %v5674 = vsub.f32 %v3649, %v5573
        %v5675 = vsub.f32 %v3650, %v5573
        %v5676 = vsub.f32 %v3651, %v5573
        %v5677 = vsub.f32 %v3652, %v5573
        %v5678 = vsub.f32 %v3653, %v5573
        %v5679 = vsub.f32 %v3654, %v5573
        %v5680 = vsub.f32 %v3655, %v5573
        %v5681 = vsub.f32 %v3656, %v5573
        %v5682 = vsub.f32 %v3657, %v5573
        %v5683 = vsub.f32 %v3658, %v5573
        %v5684 = vsub.f32 %v3659, %v5573
        %v5685 = vsub.f32 %v3660, %v5573
        %v5686 = vsub.f32 %v3661, %v5573
        %v5687 = vsub.f32 %v3662, %v5573
        %v5688 = vsub.f32 %v3663, %v5573
        %v5689 = vsub.f32 %v3664, %v5573
        %v5690 = vsub.f32 %v3665, %v5573
        %v5691 = vsub.f32 %v3666, %v5573
        %v5692 = vsub.f32 %v3667, %v5573
        %v5693 = vsub.f32 %v3668, %v5573
        %v5694 = vsub.f32 %v3669, %v5573
        %v5695 = vsub.f32 %v3670, %v5573
        %v5696 = vsub.f32 %v3671, %v5573
        %v5697 = vsub.f32 %v3672, %v5573
        %v5698 = vsub.f32 %v3673, %v5573
        %v5699 = vsub.f32 %v3674, %v5573
        %v5700 = vsub.f32 %v3675, %v5573
        %v5701 = vsub.f32 %v3676, %v5573
        %v5702 = vsub.f32 %v3677, %v5573
        %v5703 = vsub.f32 %v3678, %v5573
        %v5704 = vsub.f32 %v3679, %v5573
        %v5705 = vsub.f32 %v3680, %v5573
        %v5706 = vsub.f32 %v3681, %v5573
        %v5707 = vsub.f32 %v3682, %v5573
        %v5708 = vsub.f32 %v3683, %v5573
        %v5709 = vsub.f32 %v3684, %v5573
        %v5710 = vsub.f32 %v3685, %v5573
        %v5711 = vsub.f32 %v3686, %v5573
        %v5712 = vsub.f32 %v3687, %v5573
        %v5713 = vsub.f32 %v3688, %v5573
        %v5714 = vsub.f32 %v3689, %v5573
        %v5715 = vsub.f32 %v3690, %v5573
        %v5716 = vsub.f32 %v3691, %v5573
        %v5717 = vsub.f32 %v3692, %v5573
        %v5718 = vsub.f32 %v3693, %v5573
        %v5719 = vsub.f32 %v3694, %v5573
        %v5720 = vsub.f32 %v3695, %v5573
        %v5721 = vsub.f32 %v3696, %v5573
        %v5722 = vsub.f32 %v3697, %v5573
        %v5723 = vsub.f32 %v3698, %v5573
        %v5724 = vsub.f32 %v3699, %v5573
        %v5725 = vsub.f32 %v3700, %v5573
        %v5726 = vsub.f32 %v3701, %v5573
        %v5727 = vsub.f32 %v3702, %v5573
        %v5728 = vsub.f32 %v3703, %v5573
        %v5729 = vsub.f32 %v3704, %v5573
        %v5730 = vsub.f32 %v3705, %v5573
        %v5731 = vsub.f32 %v3706, %v5573
        %v5732 = vsub.f32 %v3707, %v5573
        %v5733 = vsub.f32 %v3708, %v5573
        %v5734 = vsub.f32 %v3709, %v5573
        %v5735 = vsub.f32 %v3710, %v5573
        %v5736 = vsub.f32 %v3711, %v5573
        %v5737 = vsub.f32 %v3712, %v5573
        %v5738 = vsub.f32 %v3713, %v5573
        %v5739 = vsub.f32 %v3714, %v5573
        %v5740 = vsub.f32 %v3715, %v5573
        %v5741 = vsub.f32 %v3716, %v5573
        %v5742 = vsub.f32 %v3717, %v5573
        %v5743 = vsub.f32 %v3718, %v5573
        %v5744 = vsub.f32 %v3719, %v5573
        %v5745 = vsub.f32 %v3720, %v5573
        %v5746 = vsub.f32 %v3721, %v5573
        %v5747 = vsub.f32 %v3722, %v5573
        %v5748 = vsub.f32 %v3723, %v5573
        %v5749 = vsub.f32 %v3724, %v5573
        %v5750 = vsub.f32 %v3725, %v5573
        %v5751 = vsub.f32 %v3726, %v5573
        %v5752 = vsub.f32 %v3727, %v5573
        %v5753 = vsub.f32 %v3728, %v5573
        %v5754 = vsub.f32 %v3729, %v5573
        %v5755 = vsub.f32 %v3730, %v5573
        %v5756 = vsub.f32 %v3731, %v5573
        %v5757 = vsub.f32 %v3732, %v5573
        %v5758 = vsub.f32 %v3733, %v5573
        %v5759 = vsub.f32 %v3734, %v5573
        %v5760 = vsub.f32 %v3735, %v5573
        %v5761 = vsub.f32 %v3736, %v5573
        %v5762 = vsub.f32 %v3737, %v5573
        %v5763 = vsub.f32 %v3738, %v5573
        %v5764 = vsub.f32 %v3739, %v5573
        %v5765 = vsub.f32 %v3740, %v5573
        %v5766 = vsub.f32 %v3741, %v5573
        %v5767 = vsub.f32 %v3742, %v5573
        %v5768 = vsub.f32 %v3743, %v5573
        %v5769 = vsub.f32 %v3744, %v5573
        %v5770 = vsub.f32 %v3745, %v5573
        %v5771 = vsub.f32 %v3746, %v5573
        %v5772 = vsub.f32 %v3747, %v5573
        %v5773 = vsub.f32 %v3748, %v5573
        %v5774 = vsub.f32 %v3749, %v5573
        %v5775 = vsub.f32 %v3750, %v5573
        %v5776 = vsub.f32 %v3751, %v5573
        %v5777 = vsub.f32 %v3752, %v5573
        %v5778 = vsub.f32 %v3753, %v5573
        %v5779 = vsub.f32 %v3754, %v5573
        %v5780 = vsub.f32 %v3755, %v5573
        %v5781 = vsub.f32 %v3756, %v5573
        %v5782 = vsub.f32 %v3757, %v5573
        %v5783 = vsub.f32 %v3758, %v5573
        %v5784 = vsub.f32 %v3759, %v5573
        %v5785 = vsub.f32 %v3760, %v5573
        %v5786 = vsub.f32 %v3761, %v5573
        %v5787 = vsub.f32 %v3762, %v5573
        %v5788 = vsub.f32 %v3763, %v5573
        %v5789 = vsub.f32 %v3764, %v5573
        %v5790 = vsub.f32 %v3765, %v5573
        %v5791 = vsub.f32 %v3766, %v5573
        %v5792 = vsub.f32 %v3767, %v5573
        %v5793 = vsub.f32 %v3768, %v5573
        %v5794 = vsub.f32 %v3769, %v5573
        %v5795 = vsub.f32 %v3770, %v5573
        %v5796 = vsub.f32 %v3771, %v5573
        %v5797 = vsub.f32 %v3772, %v5573
        %v5798 = vsub.f32 %v3773, %v5573
        %v5799 = vsub.f32 %v3774, %v5573
        %v5800 = vsub.f32 %v3775, %v5573
        %v5801 = vsub.f32 %v3776, %v5573
        %v5802 = vsub.f32 %v3777, %v5573
        %v5803 = vsub.f32 %v3778, %v5573
        %v5804 = vsub.f32 %v3779, %v5573
        %v5805 = vsub.f32 %v3780, %v5573
        %v5806 = vsub.f32 %v3781, %v5573
        %v5807 = vsub.f32 %v3782, %v5573
        %v5808 = vsub.f32 %v3783, %v5573
        %v5809 = vsub.f32 %v3784, %v5573
        %v5810 = vsub.f32 %v3785, %v5573
        %v5811 = vsub.f32 %v3786, %v5573
        %v5812 = vsub.f32 %v3787, %v5573
        %v5813 = vsub.f32 %v3788, %v5573
        %v5814 = vsub.f32 %v3789, %v5573
        %v5815 = vsub.f32 %v3790, %v5573
        %v5816 = vsub.f32 %v3791, %v5573
        %v5817 = vsub.f32 %v3792, %v5573
        %v5818 = vsub.f32 %v3793, %v5573
        %v5819 = vsub.f32 %v3794, %v5573
        %v5820 = vsub.f32 %v3795, %v5573
        %v5821 = vsub.f32 %v3796, %v5573
        %v5822 = vsub.f32 %v3797, %v5573
        %v5823 = vsub.f32 %v3798, %v5573
        %v5824 = vsub.f32 %v3799, %v5573
        %v5825 = vsub.f32 %v3800, %v5573
        %v5826 = vsub.f32 %v3801, %v5573
        %v5827 = vsub.f32 %v3802, %v5573
        %v5828 = vsub.f32 %v3803, %v5573
        %v5829 = vsub.f32 %v3804, %v5573
        %v5830 = vsub.f32 %v3805, %v5573
        %v5831 = vsub.f32 %v3806, %v5573
        %v5832 = vsub.f32 %v3807, %v5573
        %v5833 = vsub.f32 %v3808, %v5573
        %v5834 = vsub.f32 %v3809, %v5573
        %v5835 = vsub.f32 %v3810, %v5573
        %v5836 = vsub.f32 %v3811, %v5573
        %v5837 = vsub.f32 %v3812, %v5573
        %v5838 = vsub.f32 %v3813, %v5573
        %v5839 = vsub.f32 %v3814, %v5573
        %v5840 = vsub.f32 %v3815, %v5573
        %v5841 = vsub.f32 %v3816, %v5573
        %v5842 = vsub.f32 %v3817, %v5573
        %v5843 = vsub.f32 %v3818, %v5573
        %v5844 = vsub.f32 %v3819, %v5573
        %v5845 = vsub.f32 %v3820, %v5573
        %v5846 = vsub.f32 %v3821, %v5573
        %v5847 = vsub.f32 %v3822, %v5573
        %v5848 = vsub.f32 %v3823, %v5573
        %v5849 = vsub.f32 %v3824, %v5573
        %v5850 = vsub.f32 %v3825, %v5573
        %v5851 = vsub.f32 %v3826, %v5573
        %v5852 = vsub.f32 %v3827, %v5573
        %v5853 = vsub.f32 %v3828, %v5573
        %v5854 = vsub.f32 %v3829, %v5573
        %v5855 = vsub.f32 %v3830, %v5573
        %v5856 = vsub.f32 %v3831, %v5573
        %v5857 = vsub.f32 %v3832, %v5573
        %v5858 = vsub.f32 %v3833, %v5573
        %v5859 = vsub.f32 %v3834, %v5573
        %v5860 = vsub.f32 %v3835, %v5573
        %v5861 = vsub.f32 %v3836, %v5573
        %v5862 = vsub.f32 %v3837, %v5573
        %v5863 = vsub.f32 %v3838, %v5573
        %v5864 = vsub.f32 %v3839, %v5573
        %v5865 = vsub.f32 %v3840, %v5573
        %v5866 = vsub.f32 %v3841, %v5573
        %v5867 = vsub.f32 %v3842, %v5573
        %v5868 = vsub.f32 %v3843, %v5573
        %v5869 = vsub.f32 %v3844, %v5573
        %v5870 = vsub.f32 %v3845, %v5573
        %v5871 = vsub.f32 %v3846, %v5573
        %v5872 = vsub.f32 %v3847, %v5573
        %v5873 = vsub.f32 %v3848, %v5573
        %v5874 = vsub.f32 %v3849, %v5573
        %v5875 = vsub.f32 %v3850, %v5573
        %v5876 = vsub.f32 %v3851, %v5573
        %v5877 = vsub.f32 %v3852, %v5573
        %v5878 = vsub.f32 %v3853, %v5573
        %v5879 = vsub.f32 %v3854, %v5573
        %v5880 = vsub.f32 %v3855, %v5573
        %v5881 = vsub.f32 %v3856, %v5573
        %v5882 = vsub.f32 %v3857, %v5573
        %v5883 = vsub.f32 %v3858, %v5573
        %v5884 = vsub.f32 %v3859, %v5573
        %v5885 = vsub.f32 %v3860, %v5573
        %v5886 = vsub.f32 %v3861, %v5573
        %v5887 = vsub.f32 %v3862, %v5573
        %v5888 = vsub.f32 %v3863, %v5573
        %v5889 = vsub.f32 %v3864, %v5573
        %v5890 = vsub.f32 %v3865, %v5573
        %v5891 = vsub.f32 %v3866, %v5573
        %v5892 = vsub.f32 %v3867, %v5573
        %v5893 = vsub.f32 %v3868, %v5573
        %v5894 = vsub.f32 %v3869, %v5573
        %v5895 = vsub.f32 %v3870, %v5573
        %v5896 = vsub.f32 %v3871, %v5573
        %v5897 = vsub.f32 %v3872, %v5573
        %v5898 = vsub.f32 %v3873, %v5573
        %v5899 = vsub.f32 %v3874, %v5573
        %v5900 = vsub.f32 %v3875, %v5573
        %v5901 = vsub.f32 %v3876, %v5573
        %v5902 = vsub.f32 %v3877, %v5573
        %v5903 = vsub.f32 %v3878, %v5573
        %v5904 = vsub.f32 %v3879, %v5573
        %v5905 = vsub.f32 %v3880, %v5573
        %v5906 = vsub.f32 %v3881, %v5573
        %v5907 = vsub.f32 %v3882, %v5573
        %v5908 = vsub.f32 %v3883, %v5573
        %v5909 = vsub.f32 %v3884, %v5573
        %v5910 = vsub.f32 %v3885, %v5573
        %v5911 = vsub.f32 %v3886, %v5573
        %v5912 = vsub.f32 %v3887, %v5573
        %v5913 = vsub.f32 %v3888, %v5573
        %v5914 = vsub.f32 %v3889, %v5573
        %v5915 = vsub.f32 %v3890, %v5573
        %v5916 = vsub.f32 %v3891, %v5573
        %v5917 = vsub.f32 %v3892, %v5573
        %v5918 = vsub.f32 %v3893, %v5573
        %v5919 = vsub.f32 %v3894, %v5573
        %v5920 = vsub.f32 %v3895, %v5573
        %v5921 = vsub.f32 %v3896, %v5573
        %v5922 = vsub.f32 %v3897, %v5573
        %v5923 = vsub.f32 %v3898, %v5573
        %v5924 = vsub.f32 %v3899, %v5573
        %v5925 = vsub.f32 %v3900, %v5573
        %v5926 = vsub.f32 %v3901, %v5573
        %v5927 = vsub.f32 %v3902, %v5573
        %v5928 = vsub.f32 %v3903, %v5573
        %v5929 = vsub.f32 %v3904, %v5573
        %v5930 = vsub.f32 %v3905, %v5573
        %v5931 = vsub.f32 %v3906, %v5573
        %v5932 = vsub.f32 %v3907, %v5573
        %v5933 = vsub.f32 %v3908, %v5573
        %v5934 = vsub.f32 %v3909, %v5573
        %v5935 = vsub.f32 %v3910, %v5573
        %v5936 = vsub.f32 %v3911, %v5573
        %v5937 = vsub.f32 %v3912, %v5573
        %v5938 = vsub.f32 %v3913, %v5573
        %v5939 = vsub.f32 %v3914, %v5573
        %v5940 = vsub.f32 %v3915, %v5573
        %v5941 = vsub.f32 %v3916, %v5573
        %v5942 = vsub.f32 %v3917, %v5573
        %v5943 = vsub.f32 %v3918, %v5573
        %v5944 = vsub.f32 %v3919, %v5573
        %v5945 = vsub.f32 %v3920, %v5573
        %v5946 = vsub.f32 %v3921, %v5573
        %v5947 = vsub.f32 %v3922, %v5573
        %v5948 = vsub.f32 %v3923, %v5573
        %v5949 = vsub.f32 %v3924, %v5573
        %v5950 = vsub.f32 %v3925, %v5573
        %v5951 = vsub.f32 %v3926, %v5573
        %v5952 = vsub.f32 %v3927, %v5573
        %v5953 = vsub.f32 %v3928, %v5573
        %v5954 = vsub.f32 %v3929, %v5573
        %v5955 = vsub.f32 %v3930, %v5573
        %v5956 = vsub.f32 %v3931, %v5573
        %v5957 = vsub.f32 %v3932, %v5573
        %v5958 = vsub.f32 %v3933, %v5573
        %v5959 = vsub.f32 %v3934, %v5573
        %v5960 = vsub.f32 %v3935, %v5573
        %v5961 = vsub.f32 %v3936, %v5573
        %v5962 = vsub.f32 %v3937, %v5573
        %v5963 = vsub.f32 %v3938, %v5573
        %v5964 = vsub.f32 %v3939, %v5573
        %v5965 = vsub.f32 %v3940, %v5573
        %v5966 = vsub.f32 %v3941, %v5573
        %v5967 = vsub.f32 %v3942, %v5573
        %v5968 = vsub.f32 %v3943, %v5573
        %v5969 = vsub.f32 %v3944, %v5573
        %v5970 = vsub.f32 %v3945, %v5573
        %v5971 = vsub.f32 %v3946, %v5573
        %v5972 = vsub.f32 %v3947, %v5573
        %v5973 = vsub.f32 %v3948, %v5573
        %v5974 = vmul.f32 %v5574, 1.442695
        %v5975 = vpow.pop %v5974
        %v5976 = vmul.f32 %v5575, 1.442695
        %v5977 = vpow.pop %v5976
        %v5978 = vmul.f32 %v5576, 1.442695
        %v5979 = vpow.pop %v5978
        %v5980 = vmul.f32 %v5577, 1.442695
        %v5981 = vpow.pop %v5980
        %v5982 = vmul.f32 %v5578, 1.442695
        %v5983 = vpow.pop %v5982
        %v5984 = vmul.f32 %v5579, 1.442695
        %v5985 = vpow.pop %v5984
        %v5986 = vmul.f32 %v5580, 1.442695
        %v5987 = vpow.pop %v5986
        %v5988 = vmul.f32 %v5581, 1.442695
        %v5989 = vpow.pop %v5988
        %v5990 = vmul.f32 %v5582, 1.442695
        %v5991 = vpow.pop %v5990
        %v5992 = vmul.f32 %v5583, 1.442695
        %v5993 = vpow.pop %v5992
        %v5994 = vmul.f32 %v5584, 1.442695
        %v5995 = vpow.pop %v5994
        %v5996 = vmul.f32 %v5585, 1.442695
        %v5997 = vpow.pop %v5996
        %v5998 = vmul.f32 %v5586, 1.442695
        %v5999 = vpow.pop %v5998
        %v6000 = vmul.f32 %v5587, 1.442695
        %v6001 = vpow.pop %v6000
        %v6002 = vmul.f32 %v5588, 1.442695
        %v6003 = vpow.pop %v6002
        %v6004 = vmul.f32 %v5589, 1.442695
        %v6005 = vpow.pop %v6004
        %v6006 = vmul.f32 %v5590, 1.442695
        %v6007 = vpow.pop %v6006
        %v6008 = vmul.f32 %v5591, 1.442695
        %v6009 = vpow.pop %v6008
        %v6010 = vmul.f32 %v5592, 1.442695
        %v6011 = vpow.pop %v6010
        %v6012 = vmul.f32 %v5593, 1.442695
        %v6013 = vpow.pop %v6012
        %v6014 = vmul.f32 %v5594, 1.442695
        %v6015 = vpow.pop %v6014
        %v6016 = vmul.f32 %v5595, 1.442695
        %v6017 = vpow.pop %v6016
        %v6018 = vmul.f32 %v5596, 1.442695
        %v6019 = vpow.pop %v6018
        %v6020 = vmul.f32 %v5597, 1.442695
        %v6021 = vpow.pop %v6020
        %v6022 = vmul.f32 %v5598, 1.442695
        %v6023 = vpow.pop %v6022
        %v6024 = vmul.f32 %v5599, 1.442695
        %v6025 = vpow.pop %v6024
        %v6026 = vmul.f32 %v5600, 1.442695
        %v6027 = vpow.pop %v6026
        %v6028 = vmul.f32 %v5601, 1.442695
        %v6029 = vpow.pop %v6028
        %v6030 = vmul.f32 %v5602, 1.442695
        %v6031 = vpow.pop %v6030
        %v6032 = vmul.f32 %v5603, 1.442695
        %v6033 = vpow.pop %v6032
        %v6034 = vmul.f32 %v5604, 1.442695
        %v6035 = vpow.pop %v6034
        %v6036 = vmul.f32 %v5605, 1.442695
        %v6037 = vpow.pop %v6036
        %v6038 = vmul.f32 %v5606, 1.442695
        %v6039 = vpow.pop %v6038
        %v6040 = vmul.f32 %v5607, 1.442695
        %v6041 = vpow.pop %v6040
        %v6042 = vmul.f32 %v5608, 1.442695
        %v6043 = vpow.pop %v6042
        %v6044 = vmul.f32 %v5609, 1.442695
        %v6045 = vpow.pop %v6044
        %v6046 = vmul.f32 %v5610, 1.442695
        %v6047 = vpow.pop %v6046
        %v6048 = vmul.f32 %v5611, 1.442695
        %v6049 = vpow.pop %v6048
        %v6050 = vmul.f32 %v5612, 1.442695
        %v6051 = vpow.pop %v6050
        %v6052 = vmul.f32 %v5613, 1.442695
        %v6053 = vpow.pop %v6052
        %v6054 = vmul.f32 %v5614, 1.442695
        %v6055 = vpow.pop %v6054
        %v6056 = vmul.f32 %v5615, 1.442695
        %v6057 = vpow.pop %v6056
        %v6058 = vmul.f32 %v5616, 1.442695
        %v6059 = vpow.pop %v6058
        %v6060 = vmul.f32 %v5617, 1.442695
        %v6061 = vpow.pop %v6060
        %v6062 = vmul.f32 %v5618, 1.442695
        %v6063 = vpow.pop %v6062
        %v6064 = vmul.f32 %v5619, 1.442695
        %v6065 = vpow.pop %v6064
        %v6066 = vmul.f32 %v5620, 1.442695
        %v6067 = vpow.pop %v6066
        %v6068 = vmul.f32 %v5621, 1.442695
        %v6069 = vpow.pop %v6068
        %v6070 = vmul.f32 %v5622, 1.442695
        %v6071 = vpow.pop %v6070
        %v6072 = vmul.f32 %v5623, 1.442695
        %v6073 = vpow.pop %v6072
        %v6074 = vmul.f32 %v5624, 1.442695
        %v6075 = vpow.pop %v6074
        %v6076 = vmul.f32 %v5625, 1.442695
        %v6077 = vpow.pop %v6076
        %v6078 = vmul.f32 %v5626, 1.442695
        %v6079 = vpow.pop %v6078
        %v6080 = vmul.f32 %v5627, 1.442695
        %v6081 = vpow.pop %v6080
        %v6082 = vmul.f32 %v5628, 1.442695
        %v6083 = vpow.pop %v6082
        %v6084 = vmul.f32 %v5629, 1.442695
        %v6085 = vpow.pop %v6084
        %v6086 = vmul.f32 %v5630, 1.442695
        %v6087 = vpow.pop %v6086
        %v6088 = vmul.f32 %v5631, 1.442695
        %v6089 = vpow.pop %v6088
        %v6090 = vmul.f32 %v5632, 1.442695
        %v6091 = vpow.pop %v6090
        %v6092 = vmul.f32 %v5633, 1.442695
        %v6093 = vpow.pop %v6092
        %v6094 = vmul.f32 %v5634, 1.442695
        %v6095 = vpow.pop %v6094
        %v6096 = vmul.f32 %v5635, 1.442695
        %v6097 = vpow.pop %v6096
        %v6098 = vmul.f32 %v5636, 1.442695
        %v6099 = vpow.pop %v6098
        %v6100 = vmul.f32 %v5637, 1.442695
        %v6101 = vpow.pop %v6100
        %v6102 = vmul.f32 %v5638, 1.442695
        %v6103 = vpow.pop %v6102
        %v6104 = vmul.f32 %v5639, 1.442695
        %v6105 = vpow.pop %v6104
        %v6106 = vmul.f32 %v5640, 1.442695
        %v6107 = vpow.pop %v6106
        %v6108 = vmul.f32 %v5641, 1.442695
        %v6109 = vpow.pop %v6108
        %v6110 = vmul.f32 %v5642, 1.442695
        %v6111 = vpow.pop %v6110
        %v6112 = vmul.f32 %v5643, 1.442695
        %v6113 = vpow.pop %v6112
        %v6114 = vmul.f32 %v5644, 1.442695
        %v6115 = vpow.pop %v6114
        %v6116 = vmul.f32 %v5645, 1.442695
        %v6117 = vpow.pop %v6116
        %v6118 = vmul.f32 %v5646, 1.442695
        %v6119 = vpow.pop %v6118
        %v6120 = vmul.f32 %v5647, 1.442695
        %v6121 = vpow.pop %v6120
        %v6122 = vmul.f32 %v5648, 1.442695
        %v6123 = vpow.pop %v6122
        %v6124 = vmul.f32 %v5649, 1.442695
        %v6125 = vpow.pop %v6124
        %v6126 = vmul.f32 %v5650, 1.442695
        %v6127 = vpow.pop %v6126
        %v6128 = vmul.f32 %v5651, 1.442695
        %v6129 = vpow.pop %v6128
        %v6130 = vmul.f32 %v5652, 1.442695
        %v6131 = vpow.pop %v6130
        %v6132 = vmul.f32 %v5653, 1.442695
        %v6133 = vpow.pop %v6132
        %v6134 = vmul.f32 %v5654, 1.442695
        %v6135 = vpow.pop %v6134
        %v6136 = vmul.f32 %v5655, 1.442695
        %v6137 = vpow.pop %v6136
        %v6138 = vmul.f32 %v5656, 1.442695
        %v6139 = vpow.pop %v6138
        %v6140 = vmul.f32 %v5657, 1.442695
        %v6141 = vpow.pop %v6140
        %v6142 = vmul.f32 %v5658, 1.442695
        %v6143 = vpow.pop %v6142
        %v6144 = vmul.f32 %v5659, 1.442695
        %v6145 = vpow.pop %v6144
        %v6146 = vmul.f32 %v5660, 1.442695
        %v6147 = vpow.pop %v6146
        %v6148 = vmul.f32 %v5661, 1.442695
        %v6149 = vpow.pop %v6148
        %v6150 = vmul.f32 %v5662, 1.442695
        %v6151 = vpow.pop %v6150
        %v6152 = vmul.f32 %v5663, 1.442695
        %v6153 = vpow.pop %v6152
        %v6154 = vmul.f32 %v5664, 1.442695
        %v6155 = vpow.pop %v6154
        %v6156 = vmul.f32 %v5665, 1.442695
        %v6157 = vpow.pop %v6156
        %v6158 = vmul.f32 %v5666, 1.442695
        %v6159 = vpow.pop %v6158
        %v6160 = vmul.f32 %v5667, 1.442695
        %v6161 = vpow.pop %v6160
        %v6162 = vmul.f32 %v5668, 1.442695
        %v6163 = vpow.pop %v6162
        %v6164 = vmul.f32 %v5669, 1.442695
        %v6165 = vpow.pop %v6164
        %v6166 = vmul.f32 %v5670, 1.442695
        %v6167 = vpow.pop %v6166
        %v6168 = vmul.f32 %v5671, 1.442695
        %v6169 = vpow.pop %v6168
        %v6170 = vmul.f32 %v5672, 1.442695
        %v6171 = vpow.pop %v6170
        %v6172 = vmul.f32 %v5673, 1.442695
        %v6173 = vpow.pop %v6172
        %v6174 = vmul.f32 %v5674, 1.442695
        %v6175 = vpow.pop %v6174
        %v6176 = vmul.f32 %v5675, 1.442695
        %v6177 = vpow.pop %v6176
        %v6178 = vmul.f32 %v5676, 1.442695
        %v6179 = vpow.pop %v6178
        %v6180 = vmul.f32 %v5677, 1.442695
        %v6181 = vpow.pop %v6180
        %v6182 = vmul.f32 %v5678, 1.442695
        %v6183 = vpow.pop %v6182
        %v6184 = vmul.f32 %v5679, 1.442695
        %v6185 = vpow.pop %v6184
        %v6186 = vmul.f32 %v5680, 1.442695
        %v6187 = vpow.pop %v6186
        %v6188 = vmul.f32 %v5681, 1.442695
        %v6189 = vpow.pop %v6188
        %v6190 = vmul.f32 %v5682, 1.442695
        %v6191 = vpow.pop %v6190
        %v6192 = vmul.f32 %v5683, 1.442695
        %v6193 = vpow.pop %v6192
        %v6194 = vmul.f32 %v5684, 1.442695
        %v6195 = vpow.pop %v6194
        %v6196 = vmul.f32 %v5685, 1.442695
        %v6197 = vpow.pop %v6196
        %v6198 = vmul.f32 %v5686, 1.442695
        %v6199 = vpow.pop %v6198
        %v6200 = vmul.f32 %v5687, 1.442695
        %v6201 = vpow.pop %v6200
        %v6202 = vmul.f32 %v5688, 1.442695
        %v6203 = vpow.pop %v6202
        %v6204 = vmul.f32 %v5689, 1.442695
        %v6205 = vpow.pop %v6204
        %v6206 = vmul.f32 %v5690, 1.442695
        %v6207 = vpow.pop %v6206
        %v6208 = vmul.f32 %v5691, 1.442695
        %v6209 = vpow.pop %v6208
        %v6210 = vmul.f32 %v5692, 1.442695
        %v6211 = vpow.pop %v6210
        %v6212 = vmul.f32 %v5693, 1.442695
        %v6213 = vpow.pop %v6212
        %v6214 = vmul.f32 %v5694, 1.442695
        %v6215 = vpow.pop %v6214
        %v6216 = vmul.f32 %v5695, 1.442695
        %v6217 = vpow.pop %v6216
        %v6218 = vmul.f32 %v5696, 1.442695
        %v6219 = vpow.pop %v6218
        %v6220 = vmul.f32 %v5697, 1.442695
        %v6221 = vpow.pop %v6220
        %v6222 = vmul.f32 %v5698, 1.442695
        %v6223 = vpow.pop %v6222
        %v6224 = vmul.f32 %v5699, 1.442695
        %v6225 = vpow.pop %v6224
        %v6226 = vmul.f32 %v5700, 1.442695
        %v6227 = vpow.pop %v6226
        %v6228 = vmul.f32 %v5701, 1.442695
        %v6229 = vpow.pop %v6228
        %v6230 = vmul.f32 %v5702, 1.442695
        %v6231 = vpow.pop %v6230
        %v6232 = vmul.f32 %v5703, 1.442695
        %v6233 = vpow.pop %v6232
        %v6234 = vmul.f32 %v5704, 1.442695
        %v6235 = vpow.pop %v6234
        %v6236 = vmul.f32 %v5705, 1.442695
        %v6237 = vpow.pop %v6236
        %v6238 = vmul.f32 %v5706, 1.442695
        %v6239 = vpow.pop %v6238
        %v6240 = vmul.f32 %v5707, 1.442695
        %v6241 = vpow.pop %v6240
        %v6242 = vmul.f32 %v5708, 1.442695
        %v6243 = vpow.pop %v6242
        %v6244 = vmul.f32 %v5709, 1.442695
        %v6245 = vpow.pop %v6244
        %v6246 = vmul.f32 %v5710, 1.442695
        %v6247 = vpow.pop %v6246
        %v6248 = vmul.f32 %v5711, 1.442695
        %v6249 = vpow.pop %v6248
        %v6250 = vmul.f32 %v5712, 1.442695
        %v6251 = vpow.pop %v6250
        %v6252 = vmul.f32 %v5713, 1.442695
        %v6253 = vpow.pop %v6252
        %v6254 = vmul.f32 %v5714, 1.442695
        %v6255 = vpow.pop %v6254
        %v6256 = vmul.f32 %v5715, 1.442695
        %v6257 = vpow.pop %v6256
        %v6258 = vmul.f32 %v5716, 1.442695
        %v6259 = vpow.pop %v6258
        %v6260 = vmul.f32 %v5717, 1.442695
        %v6261 = vpow.pop %v6260
        %v6262 = vmul.f32 %v5718, 1.442695
        %v6263 = vpow.pop %v6262
        %v6264 = vmul.f32 %v5719, 1.442695
        %v6265 = vpow.pop %v6264
        %v6266 = vmul.f32 %v5720, 1.442695
        %v6267 = vpow.pop %v6266
        %v6268 = vmul.f32 %v5721, 1.442695
        %v6269 = vpow.pop %v6268
        %v6270 = vmul.f32 %v5722, 1.442695
        %v6271 = vpow.pop %v6270
        %v6272 = vmul.f32 %v5723, 1.442695
        %v6273 = vpow.pop %v6272
        %v6274 = vmul.f32 %v5724, 1.442695
        %v6275 = vpow.pop %v6274
        %v6276 = vmul.f32 %v5725, 1.442695
        %v6277 = vpow.pop %v6276
        %v6278 = vmul.f32 %v5726, 1.442695
        %v6279 = vpow.pop %v6278
        %v6280 = vmul.f32 %v5727, 1.442695
        %v6281 = vpow.pop %v6280
        %v6282 = vmul.f32 %v5728, 1.442695
        %v6283 = vpow.pop %v6282
        %v6284 = vmul.f32 %v5729, 1.442695
        %v6285 = vpow.pop %v6284
        %v6286 = vmul.f32 %v5730, 1.442695
        %v6287 = vpow.pop %v6286
        %v6288 = vmul.f32 %v5731, 1.442695
        %v6289 = vpow.pop %v6288
        %v6290 = vmul.f32 %v5732, 1.442695
        %v6291 = vpow.pop %v6290
        %v6292 = vmul.f32 %v5733, 1.442695
        %v6293 = vpow.pop %v6292
        %v6294 = vmul.f32 %v5734, 1.442695
        %v6295 = vpow.pop %v6294
        %v6296 = vmul.f32 %v5735, 1.442695
        %v6297 = vpow.pop %v6296
        %v6298 = vmul.f32 %v5736, 1.442695
        %v6299 = vpow.pop %v6298
        %v6300 = vmul.f32 %v5737, 1.442695
        %v6301 = vpow.pop %v6300
        %v6302 = vmul.f32 %v5738, 1.442695
        %v6303 = vpow.pop %v6302
        %v6304 = vmul.f32 %v5739, 1.442695
        %v6305 = vpow.pop %v6304
        %v6306 = vmul.f32 %v5740, 1.442695
        %v6307 = vpow.pop %v6306
        %v6308 = vmul.f32 %v5741, 1.442695
        %v6309 = vpow.pop %v6308
        %v6310 = vmul.f32 %v5742, 1.442695
        %v6311 = vpow.pop %v6310
        %v6312 = vmul.f32 %v5743, 1.442695
        %v6313 = vpow.pop %v6312
        %v6314 = vmul.f32 %v5744, 1.442695
        %v6315 = vpow.pop %v6314
        %v6316 = vmul.f32 %v5745, 1.442695
        %v6317 = vpow.pop %v6316
        %v6318 = vmul.f32 %v5746, 1.442695
        %v6319 = vpow.pop %v6318
        %v6320 = vmul.f32 %v5747, 1.442695
        %v6321 = vpow.pop %v6320
        %v6322 = vmul.f32 %v5748, 1.442695
        %v6323 = vpow.pop %v6322
        %v6324 = vmul.f32 %v5749, 1.442695
        %v6325 = vpow.pop %v6324
        %v6326 = vmul.f32 %v5750, 1.442695
        %v6327 = vpow.pop %v6326
        %v6328 = vmul.f32 %v5751, 1.442695
        %v6329 = vpow.pop %v6328
        %v6330 = vmul.f32 %v5752, 1.442695
        %v6331 = vpow.pop %v6330
        %v6332 = vmul.f32 %v5753, 1.442695
        %v6333 = vpow.pop %v6332
        %v6334 = vmul.f32 %v5754, 1.442695
        %v6335 = vpow.pop %v6334
        %v6336 = vmul.f32 %v5755, 1.442695
        %v6337 = vpow.pop %v6336
        %v6338 = vmul.f32 %v5756, 1.442695
        %v6339 = vpow.pop %v6338
        %v6340 = vmul.f32 %v5757, 1.442695
        %v6341 = vpow.pop %v6340
        %v6342 = vmul.f32 %v5758, 1.442695
        %v6343 = vpow.pop %v6342
        %v6344 = vmul.f32 %v5759, 1.442695
        %v6345 = vpow.pop %v6344
        %v6346 = vmul.f32 %v5760, 1.442695
        %v6347 = vpow.pop %v6346
        %v6348 = vmul.f32 %v5761, 1.442695
        %v6349 = vpow.pop %v6348
        %v6350 = vmul.f32 %v5762, 1.442695
        %v6351 = vpow.pop %v6350
        %v6352 = vmul.f32 %v5763, 1.442695
        %v6353 = vpow.pop %v6352
        %v6354 = vmul.f32 %v5764, 1.442695
        %v6355 = vpow.pop %v6354
        %v6356 = vmul.f32 %v5765, 1.442695
        %v6357 = vpow.pop %v6356
        %v6358 = vmul.f32 %v5766, 1.442695
        %v6359 = vpow.pop %v6358
        %v6360 = vmul.f32 %v5767, 1.442695
        %v6361 = vpow.pop %v6360
        %v6362 = vmul.f32 %v5768, 1.442695
        %v6363 = vpow.pop %v6362
        %v6364 = vmul.f32 %v5769, 1.442695
        %v6365 = vpow.pop %v6364
        %v6366 = vmul.f32 %v5770, 1.442695
        %v6367 = vpow.pop %v6366
        %v6368 = vmul.f32 %v5771, 1.442695
        %v6369 = vpow.pop %v6368
        %v6370 = vmul.f32 %v5772, 1.442695
        %v6371 = vpow.pop %v6370
        %v6372 = vmul.f32 %v5773, 1.442695
        %v6373 = vpow.pop %v6372
        %v6374 = vmul.f32 %v5774, 1.442695
        %v6375 = vpow.pop %v6374
        %v6376 = vmul.f32 %v5775, 1.442695
        %v6377 = vpow.pop %v6376
        %v6378 = vmul.f32 %v5776, 1.442695
        %v6379 = vpow.pop %v6378
        %v6380 = vmul.f32 %v5777, 1.442695
        %v6381 = vpow.pop %v6380
        %v6382 = vmul.f32 %v5778, 1.442695
        %v6383 = vpow.pop %v6382
        %v6384 = vmul.f32 %v5779, 1.442695
        %v6385 = vpow.pop %v6384
        %v6386 = vmul.f32 %v5780, 1.442695
        %v6387 = vpow.pop %v6386
        %v6388 = vmul.f32 %v5781, 1.442695
        %v6389 = vpow.pop %v6388
        %v6390 = vmul.f32 %v5782, 1.442695
        %v6391 = vpow.pop %v6390
        %v6392 = vmul.f32 %v5783, 1.442695
        %v6393 = vpow.pop %v6392
        %v6394 = vmul.f32 %v5784, 1.442695
        %v6395 = vpow.pop %v6394
        %v6396 = vmul.f32 %v5785, 1.442695
        %v6397 = vpow.pop %v6396
        %v6398 = vmul.f32 %v5786, 1.442695
        %v6399 = vpow.pop %v6398
        %v6400 = vmul.f32 %v5787, 1.442695
        %v6401 = vpow.pop %v6400
        %v6402 = vmul.f32 %v5788, 1.442695
        %v6403 = vpow.pop %v6402
        %v6404 = vmul.f32 %v5789, 1.442695
        %v6405 = vpow.pop %v6404
        %v6406 = vmul.f32 %v5790, 1.442695
        %v6407 = vpow.pop %v6406
        %v6408 = vmul.f32 %v5791, 1.442695
        %v6409 = vpow.pop %v6408
        %v6410 = vmul.f32 %v5792, 1.442695
        %v6411 = vpow.pop %v6410
        %v6412 = vmul.f32 %v5793, 1.442695
        %v6413 = vpow.pop %v6412
        %v6414 = vmul.f32 %v5794, 1.442695
        %v6415 = vpow.pop %v6414
        %v6416 = vmul.f32 %v5795, 1.442695
        %v6417 = vpow.pop %v6416
        %v6418 = vmul.f32 %v5796, 1.442695
        %v6419 = vpow.pop %v6418
        %v6420 = vmul.f32 %v5797, 1.442695
        %v6421 = vpow.pop %v6420
        %v6422 = vmul.f32 %v5798, 1.442695
        %v6423 = vpow.pop %v6422
        %v6424 = vmul.f32 %v5799, 1.442695
        %v6425 = vpow.pop %v6424
        %v6426 = vmul.f32 %v5800, 1.442695
        %v6427 = vpow.pop %v6426
        %v6428 = vmul.f32 %v5801, 1.442695
        %v6429 = vpow.pop %v6428
        %v6430 = vmul.f32 %v5802, 1.442695
        %v6431 = vpow.pop %v6430
        %v6432 = vmul.f32 %v5803, 1.442695
        %v6433 = vpow.pop %v6432
        %v6434 = vmul.f32 %v5804, 1.442695
        %v6435 = vpow.pop %v6434
        %v6436 = vmul.f32 %v5805, 1.442695
        %v6437 = vpow.pop %v6436
        %v6438 = vmul.f32 %v5806, 1.442695
        %v6439 = vpow.pop %v6438
        %v6440 = vmul.f32 %v5807, 1.442695
        %v6441 = vpow.pop %v6440
        %v6442 = vmul.f32 %v5808, 1.442695
        %v6443 = vpow.pop %v6442
        %v6444 = vmul.f32 %v5809, 1.442695
        %v6445 = vpow.pop %v6444
        %v6446 = vmul.f32 %v5810, 1.442695
        %v6447 = vpow.pop %v6446
        %v6448 = vmul.f32 %v5811, 1.442695
        %v6449 = vpow.pop %v6448
        %v6450 = vmul.f32 %v5812, 1.442695
        %v6451 = vpow.pop %v6450
        %v6452 = vmul.f32 %v5813, 1.442695
        %v6453 = vpow.pop %v6452
        %v6454 = vmul.f32 %v5814, 1.442695
        %v6455 = vpow.pop %v6454
        %v6456 = vmul.f32 %v5815, 1.442695
        %v6457 = vpow.pop %v6456
        %v6458 = vmul.f32 %v5816, 1.442695
        %v6459 = vpow.pop %v6458
        %v6460 = vmul.f32 %v5817, 1.442695
        %v6461 = vpow.pop %v6460
        %v6462 = vmul.f32 %v5818, 1.442695
        %v6463 = vpow.pop %v6462
        %v6464 = vmul.f32 %v5819, 1.442695
        %v6465 = vpow.pop %v6464
        %v6466 = vmul.f32 %v5820, 1.442695
        %v6467 = vpow.pop %v6466
        %v6468 = vmul.f32 %v5821, 1.442695
        %v6469 = vpow.pop %v6468
        %v6470 = vmul.f32 %v5822, 1.442695
        %v6471 = vpow.pop %v6470
        %v6472 = vmul.f32 %v5823, 1.442695
        %v6473 = vpow.pop %v6472
        %v6474 = vmul.f32 %v5824, 1.442695
        %v6475 = vpow.pop %v6474
        %v6476 = vmul.f32 %v5825, 1.442695
        %v6477 = vpow.pop %v6476
        %v6478 = vmul.f32 %v5826, 1.442695
        %v6479 = vpow.pop %v6478
        %v6480 = vmul.f32 %v5827, 1.442695
        %v6481 = vpow.pop %v6480
        %v6482 = vmul.f32 %v5828, 1.442695
        %v6483 = vpow.pop %v6482
        %v6484 = vmul.f32 %v5829, 1.442695
        %v6485 = vpow.pop %v6484
        %v6486 = vmul.f32 %v5830, 1.442695
        %v6487 = vpow.pop %v6486
        %v6488 = vmul.f32 %v5831, 1.442695
        %v6489 = vpow.pop %v6488
        %v6490 = vmul.f32 %v5832, 1.442695
        %v6491 = vpow.pop %v6490
        %v6492 = vmul.f32 %v5833, 1.442695
        %v6493 = vpow.pop %v6492
        %v6494 = vmul.f32 %v5834, 1.442695
        %v6495 = vpow.pop %v6494
        %v6496 = vmul.f32 %v5835, 1.442695
        %v6497 = vpow.pop %v6496
        %v6498 = vmul.f32 %v5836, 1.442695
        %v6499 = vpow.pop %v6498
        %v6500 = vmul.f32 %v5837, 1.442695
        %v6501 = vpow.pop %v6500
        %v6502 = vmul.f32 %v5838, 1.442695
        %v6503 = vpow.pop %v6502
        %v6504 = vmul.f32 %v5839, 1.442695
        %v6505 = vpow.pop %v6504
        %v6506 = vmul.f32 %v5840, 1.442695
        %v6507 = vpow.pop %v6506
        %v6508 = vmul.f32 %v5841, 1.442695
        %v6509 = vpow.pop %v6508
        %v6510 = vmul.f32 %v5842, 1.442695
        %v6511 = vpow.pop %v6510
        %v6512 = vmul.f32 %v5843, 1.442695
        %v6513 = vpow.pop %v6512
        %v6514 = vmul.f32 %v5844, 1.442695
        %v6515 = vpow.pop %v6514
        %v6516 = vmul.f32 %v5845, 1.442695
        %v6517 = vpow.pop %v6516
        %v6518 = vmul.f32 %v5846, 1.442695
        %v6519 = vpow.pop %v6518
        %v6520 = vmul.f32 %v5847, 1.442695
        %v6521 = vpow.pop %v6520
        %v6522 = vmul.f32 %v5848, 1.442695
        %v6523 = vpow.pop %v6522
        %v6524 = vmul.f32 %v5849, 1.442695
        %v6525 = vpow.pop %v6524
        %v6526 = vmul.f32 %v5850, 1.442695
        %v6527 = vpow.pop %v6526
        %v6528 = vmul.f32 %v5851, 1.442695
        %v6529 = vpow.pop %v6528
        %v6530 = vmul.f32 %v5852, 1.442695
        %v6531 = vpow.pop %v6530
        %v6532 = vmul.f32 %v5853, 1.442695
        %v6533 = vpow.pop %v6532
        %v6534 = vmul.f32 %v5854, 1.442695
        %v6535 = vpow.pop %v6534
        %v6536 = vmul.f32 %v5855, 1.442695
        %v6537 = vpow.pop %v6536
        %v6538 = vmul.f32 %v5856, 1.442695
        %v6539 = vpow.pop %v6538
        %v6540 = vmul.f32 %v5857, 1.442695
        %v6541 = vpow.pop %v6540
        %v6542 = vmul.f32 %v5858, 1.442695
        %v6543 = vpow.pop %v6542
        %v6544 = vmul.f32 %v5859, 1.442695
        %v6545 = vpow.pop %v6544
        %v6546 = vmul.f32 %v5860, 1.442695
        %v6547 = vpow.pop %v6546
        %v6548 = vmul.f32 %v5861, 1.442695
        %v6549 = vpow.pop %v6548
        %v6550 = vmul.f32 %v5862, 1.442695
        %v6551 = vpow.pop %v6550
        %v6552 = vmul.f32 %v5863, 1.442695
        %v6553 = vpow.pop %v6552
        %v6554 = vmul.f32 %v5864, 1.442695
        %v6555 = vpow.pop %v6554
        %v6556 = vmul.f32 %v5865, 1.442695
        %v6557 = vpow.pop %v6556
        %v6558 = vmul.f32 %v5866, 1.442695
        %v6559 = vpow.pop %v6558
        %v6560 = vmul.f32 %v5867, 1.442695
        %v6561 = vpow.pop %v6560
        %v6562 = vmul.f32 %v5868, 1.442695
        %v6563 = vpow.pop %v6562
        %v6564 = vmul.f32 %v5869, 1.442695
        %v6565 = vpow.pop %v6564
        %v6566 = vmul.f32 %v5870, 1.442695
        %v6567 = vpow.pop %v6566
        %v6568 = vmul.f32 %v5871, 1.442695
        %v6569 = vpow.pop %v6568
        %v6570 = vmul.f32 %v5872, 1.442695
        %v6571 = vpow.pop %v6570
        %v6572 = vmul.f32 %v5873, 1.442695
        %v6573 = vpow.pop %v6572
        %v6574 = vmul.f32 %v5874, 1.442695
        %v6575 = vpow.pop %v6574
        %v6576 = vmul.f32 %v5875, 1.442695
        %v6577 = vpow.pop %v6576
        %v6578 = vmul.f32 %v5876, 1.442695
        %v6579 = vpow.pop %v6578
        %v6580 = vmul.f32 %v5877, 1.442695
        %v6581 = vpow.pop %v6580
        %v6582 = vmul.f32 %v5878, 1.442695
        %v6583 = vpow.pop %v6582
        %v6584 = vmul.f32 %v5879, 1.442695
        %v6585 = vpow.pop %v6584
        %v6586 = vmul.f32 %v5880, 1.442695
        %v6587 = vpow.pop %v6586
        %v6588 = vmul.f32 %v5881, 1.442695
        %v6589 = vpow.pop %v6588
        %v6590 = vmul.f32 %v5882, 1.442695
        %v6591 = vpow.pop %v6590
        %v6592 = vmul.f32 %v5883, 1.442695
        %v6593 = vpow.pop %v6592
        %v6594 = vmul.f32 %v5884, 1.442695
        %v6595 = vpow.pop %v6594
        %v6596 = vmul.f32 %v5885, 1.442695
        %v6597 = vpow.pop %v6596
        %v6598 = vmul.f32 %v5886, 1.442695
        %v6599 = vpow.pop %v6598
        %v6600 = vmul.f32 %v5887, 1.442695
        %v6601 = vpow.pop %v6600
        %v6602 = vmul.f32 %v5888, 1.442695
        %v6603 = vpow.pop %v6602
        %v6604 = vmul.f32 %v5889, 1.442695
        %v6605 = vpow.pop %v6604
        %v6606 = vmul.f32 %v5890, 1.442695
        %v6607 = vpow.pop %v6606
        %v6608 = vmul.f32 %v5891, 1.442695
        %v6609 = vpow.pop %v6608
        %v6610 = vmul.f32 %v5892, 1.442695
        %v6611 = vpow.pop %v6610
        %v6612 = vmul.f32 %v5893, 1.442695
        %v6613 = vpow.pop %v6612
        %v6614 = vmul.f32 %v5894, 1.442695
        %v6615 = vpow.pop %v6614
        %v6616 = vmul.f32 %v5895, 1.442695
        %v6617 = vpow.pop %v6616
        %v6618 = vmul.f32 %v5896, 1.442695
        %v6619 = vpow.pop %v6618
        %v6620 = vmul.f32 %v5897, 1.442695
        %v6621 = vpow.pop %v6620
        %v6622 = vmul.f32 %v5898, 1.442695
        %v6623 = vpow.pop %v6622
        %v6624 = vmul.f32 %v5899, 1.442695
        %v6625 = vpow.pop %v6624
        %v6626 = vmul.f32 %v5900, 1.442695
        %v6627 = vpow.pop %v6626
        %v6628 = vmul.f32 %v5901, 1.442695
        %v6629 = vpow.pop %v6628
        %v6630 = vmul.f32 %v5902, 1.442695
        %v6631 = vpow.pop %v6630
        %v6632 = vmul.f32 %v5903, 1.442695
        %v6633 = vpow.pop %v6632
        %v6634 = vmul.f32 %v5904, 1.442695
        %v6635 = vpow.pop %v6634
        %v6636 = vmul.f32 %v5905, 1.442695
        %v6637 = vpow.pop %v6636
        %v6638 = vmul.f32 %v5906, 1.442695
        %v6639 = vpow.pop %v6638
        %v6640 = vmul.f32 %v5907, 1.442695
        %v6641 = vpow.pop %v6640
        %v6642 = vmul.f32 %v5908, 1.442695
        %v6643 = vpow.pop %v6642
        %v6644 = vmul.f32 %v5909, 1.442695
        %v6645 = vpow.pop %v6644
        %v6646 = vmul.f32 %v5910, 1.442695
        %v6647 = vpow.pop %v6646
        %v6648 = vmul.f32 %v5911, 1.442695
        %v6649 = vpow.pop %v6648
        %v6650 = vmul.f32 %v5912, 1.442695
        %v6651 = vpow.pop %v6650
        %v6652 = vmul.f32 %v5913, 1.442695
        %v6653 = vpow.pop %v6652
        %v6654 = vmul.f32 %v5914, 1.442695
        %v6655 = vpow.pop %v6654
        %v6656 = vmul.f32 %v5915, 1.442695
        %v6657 = vpow.pop %v6656
        %v6658 = vmul.f32 %v5916, 1.442695
        %v6659 = vpow.pop %v6658
        %v6660 = vmul.f32 %v5917, 1.442695
        %v6661 = vpow.pop %v6660
        %v6662 = vmul.f32 %v5918, 1.442695
        %v6663 = vpow.pop %v6662
        %v6664 = vmul.f32 %v5919, 1.442695
        %v6665 = vpow.pop %v6664
        %v6666 = vmul.f32 %v5920, 1.442695
        %v6667 = vpow.pop %v6666
        %v6668 = vmul.f32 %v5921, 1.442695
        %v6669 = vpow.pop %v6668
        %v6670 = vmul.f32 %v5922, 1.442695
        %v6671 = vpow.pop %v6670
        %v6672 = vmul.f32 %v5923, 1.442695
        %v6673 = vpow.pop %v6672
        %v6674 = vmul.f32 %v5924, 1.442695
        %v6675 = vpow.pop %v6674
        %v6676 = vmul.f32 %v5925, 1.442695
        %v6677 = vpow.pop %v6676
        %v6678 = vmul.f32 %v5926, 1.442695
        %v6679 = vpow.pop %v6678
        %v6680 = vmul.f32 %v5927, 1.442695
        %v6681 = vpow.pop %v6680
        %v6682 = vmul.f32 %v5928, 1.442695
        %v6683 = vpow.pop %v6682
        %v6684 = vmul.f32 %v5929, 1.442695
        %v6685 = vpow.pop %v6684
        %v6686 = vmul.f32 %v5930, 1.442695
        %v6687 = vpow.pop %v6686
        %v6688 = vmul.f32 %v5931, 1.442695
        %v6689 = vpow.pop %v6688
        %v6690 = vmul.f32 %v5932, 1.442695
        %v6691 = vpow.pop %v6690
        %v6692 = vmul.f32 %v5933, 1.442695
        %v6693 = vpow.pop %v6692
        %v6694 = vmul.f32 %v5934, 1.442695
        %v6695 = vpow.pop %v6694
        %v6696 = vmul.f32 %v5935, 1.442695
        %v6697 = vpow.pop %v6696
        %v6698 = vmul.f32 %v5936, 1.442695
        %v6699 = vpow.pop %v6698
        %v6700 = vmul.f32 %v5937, 1.442695
        %v6701 = vpow.pop %v6700
        %v6702 = vmul.f32 %v5938, 1.442695
        %v6703 = vpow.pop %v6702
        %v6704 = vmul.f32 %v5939, 1.442695
        %v6705 = vpow.pop %v6704
        %v6706 = vmul.f32 %v5940, 1.442695
        %v6707 = vpow.pop %v6706
        %v6708 = vmul.f32 %v5941, 1.442695
        %v6709 = vpow.pop %v6708
        %v6710 = vmul.f32 %v5942, 1.442695
        %v6711 = vpow.pop %v6710
        %v6712 = vmul.f32 %v5943, 1.442695
        %v6713 = vpow.pop %v6712
        %v6714 = vmul.f32 %v5944, 1.442695
        %v6715 = vpow.pop %v6714
        %v6716 = vmul.f32 %v5945, 1.442695
        %v6717 = vpow.pop %v6716
        %v6718 = vmul.f32 %v5946, 1.442695
        %v6719 = vpow.pop %v6718
        %v6720 = vmul.f32 %v5947, 1.442695
        %v6721 = vpow.pop %v6720
        %v6722 = vmul.f32 %v5948, 1.442695
        %v6723 = vpow.pop %v6722
        %v6724 = vmul.f32 %v5949, 1.442695
        %v6725 = vpow.pop %v6724
        %v6726 = vmul.f32 %v5950, 1.442695
        %v6727 = vpow.pop %v6726
        %v6728 = vmul.f32 %v5951, 1.442695
        %v6729 = vpow.pop %v6728
        %v6730 = vmul.f32 %v5952, 1.442695
        %v6731 = vpow.pop %v6730
        %v6732 = vmul.f32 %v5953, 1.442695
        %v6733 = vpow.pop %v6732
        %v6734 = vmul.f32 %v5954, 1.442695
        %v6735 = vpow.pop %v6734
        %v6736 = vmul.f32 %v5955, 1.442695
        %v6737 = vpow.pop %v6736
        %v6738 = vmul.f32 %v5956, 1.442695
        %v6739 = vpow.pop %v6738
        %v6740 = vmul.f32 %v5957, 1.442695
        %v6741 = vpow.pop %v6740
        %v6742 = vmul.f32 %v5958, 1.442695
        %v6743 = vpow.pop %v6742
        %v6744 = vmul.f32 %v5959, 1.442695
        %v6745 = vpow.pop %v6744
        %v6746 = vmul.f32 %v5960, 1.442695
        %v6747 = vpow.pop %v6746
        %v6748 = vmul.f32 %v5961, 1.442695
        %v6749 = vpow.pop %v6748
        %v6750 = vmul.f32 %v5962, 1.442695
        %v6751 = vpow.pop %v6750
        %v6752 = vmul.f32 %v5963, 1.442695
        %v6753 = vpow.pop %v6752
        %v6754 = vmul.f32 %v5964, 1.442695
        %v6755 = vpow.pop %v6754
        %v6756 = vmul.f32 %v5965, 1.442695
        %v6757 = vpow.pop %v6756
        %v6758 = vmul.f32 %v5966, 1.442695
        %v6759 = vpow.pop %v6758
        %v6760 = vmul.f32 %v5967, 1.442695
        %v6761 = vpow.pop %v6760
        %v6762 = vmul.f32 %v5968, 1.442695
        %v6763 = vpow.pop %v6762
        %v6764 = vmul.f32 %v5969, 1.442695
        %v6765 = vpow.pop %v6764
        %v6766 = vmul.f32 %v5970, 1.442695
        %v6767 = vpow.pop %v6766
        %v6768 = vmul.f32 %v5971, 1.442695
        %v6769 = vpow.pop %v6768
        %v6770 = vmul.f32 %v5972, 1.442695
        %v6771 = vpow.pop %v6770
        %v6772 = vmul.f32 %v5973, 1.442695
        %v6773 = vpow.pop %v6772
        %v6774 = vadd.f32 %v5975, %v5977
        %v6775 = vadd.f32 %v6774, %v5979
        %v6776 = vadd.f32 %v6775, %v5981
        %v6777 = vadd.f32 %v6776, %v5983
        %v6778 = vadd.f32 %v6777, %v5985
        %v6779 = vadd.f32 %v6778, %v5987
        %v6780 = vadd.f32 %v6779, %v5989
        %v6781 = vadd.f32 %v6780, %v5991
        %v6782 = vadd.f32 %v6781, %v5993
        %v6783 = vadd.f32 %v6782, %v5995
        %v6784 = vadd.f32 %v6783, %v5997
        %v6785 = vadd.f32 %v6784, %v5999
        %v6786 = vadd.f32 %v6785, %v6001
        %v6787 = vadd.f32 %v6786, %v6003
        %v6788 = vadd.f32 %v6787, %v6005
        %v6789 = vadd.f32 %v6788, %v6007
        %v6790 = vadd.f32 %v6789, %v6009
        %v6791 = vadd.f32 %v6790, %v6011
        %v6792 = vadd.f32 %v6791, %v6013
        %v6793 = vadd.f32 %v6792, %v6015
        %v6794 = vadd.f32 %v6793, %v6017
        %v6795 = vadd.f32 %v6794, %v6019
        %v6796 = vadd.f32 %v6795, %v6021
        %v6797 = vadd.f32 %v6796, %v6023
        %v6798 = vadd.f32 %v6797, %v6025
        %v6799 = vadd.f32 %v6798, %v6027
        %v6800 = vadd.f32 %v6799, %v6029
        %v6801 = vadd.f32 %v6800, %v6031
        %v6802 = vadd.f32 %v6801, %v6033
        %v6803 = vadd.f32 %v6802, %v6035
        %v6804 = vadd.f32 %v6803, %v6037
        %v6805 = vadd.f32 %v6804, %v6039
        %v6806 = vadd.f32 %v6805, %v6041
        %v6807 = vadd.f32 %v6806, %v6043
        %v6808 = vadd.f32 %v6807, %v6045
        %v6809 = vadd.f32 %v6808, %v6047
        %v6810 = vadd.f32 %v6809, %v6049
        %v6811 = vadd.f32 %v6810, %v6051
        %v6812 = vadd.f32 %v6811, %v6053
        %v6813 = vadd.f32 %v6812, %v6055
        %v6814 = vadd.f32 %v6813, %v6057
        %v6815 = vadd.f32 %v6814, %v6059
        %v6816 = vadd.f32 %v6815, %v6061
        %v6817 = vadd.f32 %v6816, %v6063
        %v6818 = vadd.f32 %v6817, %v6065
        %v6819 = vadd.f32 %v6818, %v6067
        %v6820 = vadd.f32 %v6819, %v6069
        %v6821 = vadd.f32 %v6820, %v6071
        %v6822 = vadd.f32 %v6821, %v6073
        %v6823 = vadd.f32 %v6822, %v6075
        %v6824 = vadd.f32 %v6823, %v6077
        %v6825 = vadd.f32 %v6824, %v6079
        %v6826 = vadd.f32 %v6825, %v6081
        %v6827 = vadd.f32 %v6826, %v6083
        %v6828 = vadd.f32 %v6827, %v6085
        %v6829 = vadd.f32 %v6828, %v6087
        %v6830 = vadd.f32 %v6829, %v6089
        %v6831 = vadd.f32 %v6830, %v6091
        %v6832 = vadd.f32 %v6831, %v6093
        %v6833 = vadd.f32 %v6832, %v6095
        %v6834 = vadd.f32 %v6833, %v6097
        %v6835 = vadd.f32 %v6834, %v6099
        %v6836 = vadd.f32 %v6835, %v6101
        %v6837 = vadd.f32 %v6836, %v6103
        %v6838 = vadd.f32 %v6837, %v6105
        %v6839 = vadd.f32 %v6838, %v6107
        %v6840 = vadd.f32 %v6839, %v6109
        %v6841 = vadd.f32 %v6840, %v6111
        %v6842 = vadd.f32 %v6841, %v6113
        %v6843 = vadd.f32 %v6842, %v6115
        %v6844 = vadd.f32 %v6843, %v6117
        %v6845 = vadd.f32 %v6844, %v6119
        %v6846 = vadd.f32 %v6845, %v6121
        %v6847 = vadd.f32 %v6846, %v6123
        %v6848 = vadd.f32 %v6847, %v6125
        %v6849 = vadd.f32 %v6848, %v6127
        %v6850 = vadd.f32 %v6849, %v6129
        %v6851 = vadd.f32 %v6850, %v6131
        %v6852 = vadd.f32 %v6851, %v6133
        %v6853 = vadd.f32 %v6852, %v6135
        %v6854 = vadd.f32 %v6853, %v6137
        %v6855 = vadd.f32 %v6854, %v6139
        %v6856 = vadd.f32 %v6855, %v6141
        %v6857 = vadd.f32 %v6856, %v6143
        %v6858 = vadd.f32 %v6857, %v6145
        %v6859 = vadd.f32 %v6858, %v6147
        %v6860 = vadd.f32 %v6859, %v6149
        %v6861 = vadd.f32 %v6860, %v6151
        %v6862 = vadd.f32 %v6861, %v6153
        %v6863 = vadd.f32 %v6862, %v6155
        %v6864 = vadd.f32 %v6863, %v6157
        %v6865 = vadd.f32 %v6864, %v6159
        %v6866 = vadd.f32 %v6865, %v6161
        %v6867 = vadd.f32 %v6866, %v6163
        %v6868 = vadd.f32 %v6867, %v6165
        %v6869 = vadd.f32 %v6868, %v6167
        %v6870 = vadd.f32 %v6869, %v6169
        %v6871 = vadd.f32 %v6870, %v6171
        %v6872 = vadd.f32 %v6871, %v6173
        %v6873 = vadd.f32 %v6872, %v6175
        %v6874 = vadd.f32 %v6873, %v6177
        %v6875 = vadd.f32 %v6874, %v6179
        %v6876 = vadd.f32 %v6875, %v6181
        %v6877 = vadd.f32 %v6876, %v6183
        %v6878 = vadd.f32 %v6877, %v6185
        %v6879 = vadd.f32 %v6878, %v6187
        %v6880 = vadd.f32 %v6879, %v6189
        %v6881 = vadd.f32 %v6880, %v6191
        %v6882 = vadd.f32 %v6881, %v6193
        %v6883 = vadd.f32 %v6882, %v6195
        %v6884 = vadd.f32 %v6883, %v6197
        %v6885 = vadd.f32 %v6884, %v6199
        %v6886 = vadd.f32 %v6885, %v6201
        %v6887 = vadd.f32 %v6886, %v6203
        %v6888 = vadd.f32 %v6887, %v6205
        %v6889 = vadd.f32 %v6888, %v6207
        %v6890 = vadd.f32 %v6889, %v6209
        %v6891 = vadd.f32 %v6890, %v6211
        %v6892 = vadd.f32 %v6891, %v6213
        %v6893 = vadd.f32 %v6892, %v6215
        %v6894 = vadd.f32 %v6893, %v6217
        %v6895 = vadd.f32 %v6894, %v6219
        %v6896 = vadd.f32 %v6895, %v6221
        %v6897 = vadd.f32 %v6896, %v6223
        %v6898 = vadd.f32 %v6897, %v6225
        %v6899 = vadd.f32 %v6898, %v6227
        %v6900 = vadd.f32 %v6899, %v6229
        %v6901 = vadd.f32 %v6900, %v6231
        %v6902 = vadd.f32 %v6901, %v6233
        %v6903 = vadd.f32 %v6902, %v6235
        %v6904 = vadd.f32 %v6903, %v6237
        %v6905 = vadd.f32 %v6904, %v6239
        %v6906 = vadd.f32 %v6905, %v6241
        %v6907 = vadd.f32 %v6906, %v6243
        %v6908 = vadd.f32 %v6907, %v6245
        %v6909 = vadd.f32 %v6908, %v6247
        %v6910 = vadd.f32 %v6909, %v6249
        %v6911 = vadd.f32 %v6910, %v6251
        %v6912 = vadd.f32 %v6911, %v6253
        %v6913 = vadd.f32 %v6912, %v6255
        %v6914 = vadd.f32 %v6913, %v6257
        %v6915 = vadd.f32 %v6914, %v6259
        %v6916 = vadd.f32 %v6915, %v6261
        %v6917 = vadd.f32 %v6916, %v6263
        %v6918 = vadd.f32 %v6917, %v6265
        %v6919 = vadd.f32 %v6918, %v6267
        %v6920 = vadd.f32 %v6919, %v6269
        %v6921 = vadd.f32 %v6920, %v6271
        %v6922 = vadd.f32 %v6921, %v6273
        %v6923 = vadd.f32 %v6922, %v6275
        %v6924 = vadd.f32 %v6923, %v6277
        %v6925 = vadd.f32 %v6924, %v6279
        %v6926 = vadd.f32 %v6925, %v6281
        %v6927 = vadd.f32 %v6926, %v6283
        %v6928 = vadd.f32 %v6927, %v6285
        %v6929 = vadd.f32 %v6928, %v6287
        %v6930 = vadd.f32 %v6929, %v6289
        %v6931 = vadd.f32 %v6930, %v6291
        %v6932 = vadd.f32 %v6931, %v6293
        %v6933 = vadd.f32 %v6932, %v6295
        %v6934 = vadd.f32 %v6933, %v6297
        %v6935 = vadd.f32 %v6934, %v6299
        %v6936 = vadd.f32 %v6935, %v6301
        %v6937 = vadd.f32 %v6936, %v6303
        %v6938 = vadd.f32 %v6937, %v6305
        %v6939 = vadd.f32 %v6938, %v6307
        %v6940 = vadd.f32 %v6939, %v6309
        %v6941 = vadd.f32 %v6940, %v6311
        %v6942 = vadd.f32 %v6941, %v6313
        %v6943 = vadd.f32 %v6942, %v6315
        %v6944 = vadd.f32 %v6943, %v6317
        %v6945 = vadd.f32 %v6944, %v6319
        %v6946 = vadd.f32 %v6945, %v6321
        %v6947 = vadd.f32 %v6946, %v6323
        %v6948 = vadd.f32 %v6947, %v6325
        %v6949 = vadd.f32 %v6948, %v6327
        %v6950 = vadd.f32 %v6949, %v6329
        %v6951 = vadd.f32 %v6950, %v6331
        %v6952 = vadd.f32 %v6951, %v6333
        %v6953 = vadd.f32 %v6952, %v6335
        %v6954 = vadd.f32 %v6953, %v6337
        %v6955 = vadd.f32 %v6954, %v6339
        %v6956 = vadd.f32 %v6955, %v6341
        %v6957 = vadd.f32 %v6956, %v6343
        %v6958 = vadd.f32 %v6957, %v6345
        %v6959 = vadd.f32 %v6958, %v6347
        %v6960 = vadd.f32 %v6959, %v6349
        %v6961 = vadd.f32 %v6960, %v6351
        %v6962 = vadd.f32 %v6961, %v6353
        %v6963 = vadd.f32 %v6962, %v6355
        %v6964 = vadd.f32 %v6963, %v6357
        %v6965 = vadd.f32 %v6964, %v6359
        %v6966 = vadd.f32 %v6965, %v6361
        %v6967 = vadd.f32 %v6966, %v6363
        %v6968 = vadd.f32 %v6967, %v6365
        %v6969 = vadd.f32 %v6968, %v6367
        %v6970 = vadd.f32 %v6969, %v6369
        %v6971 = vadd.f32 %v6970, %v6371
        %v6972 = vadd.f32 %v6971, %v6373
        %v6973 = vadd.f32 %v6972, %v6375
        %v6974 = vadd.f32 %v6973, %v6377
        %v6975 = vadd.f32 %v6974, %v6379
        %v6976 = vadd.f32 %v6975, %v6381
        %v6977 = vadd.f32 %v6976, %v6383
        %v6978 = vadd.f32 %v6977, %v6385
        %v6979 = vadd.f32 %v6978, %v6387
        %v6980 = vadd.f32 %v6979, %v6389
        %v6981 = vadd.f32 %v6980, %v6391
        %v6982 = vadd.f32 %v6981, %v6393
        %v6983 = vadd.f32 %v6982, %v6395
        %v6984 = vadd.f32 %v6983, %v6397
        %v6985 = vadd.f32 %v6984, %v6399
        %v6986 = vadd.f32 %v6985, %v6401
        %v6987 = vadd.f32 %v6986, %v6403
        %v6988 = vadd.f32 %v6987, %v6405
        %v6989 = vadd.f32 %v6988, %v6407
        %v6990 = vadd.f32 %v6989, %v6409
        %v6991 = vadd.f32 %v6990, %v6411
        %v6992 = vadd.f32 %v6991, %v6413
        %v6993 = vadd.f32 %v6992, %v6415
        %v6994 = vadd.f32 %v6993, %v6417
        %v6995 = vadd.f32 %v6994, %v6419
        %v6996 = vadd.f32 %v6995, %v6421
        %v6997 = vadd.f32 %v6996, %v6423
        %v6998 = vadd.f32 %v6997, %v6425
        %v6999 = vadd.f32 %v6998, %v6427
        %v7000 = vadd.f32 %v6999, %v6429
        %v7001 = vadd.f32 %v7000, %v6431
        %v7002 = vadd.f32 %v7001, %v6433
        %v7003 = vadd.f32 %v7002, %v6435
        %v7004 = vadd.f32 %v7003, %v6437
        %v7005 = vadd.f32 %v7004, %v6439
        %v7006 = vadd.f32 %v7005, %v6441
        %v7007 = vadd.f32 %v7006, %v6443
        %v7008 = vadd.f32 %v7007, %v6445
        %v7009 = vadd.f32 %v7008, %v6447
        %v7010 = vadd.f32 %v7009, %v6449
        %v7011 = vadd.f32 %v7010, %v6451
        %v7012 = vadd.f32 %v7011, %v6453
        %v7013 = vadd.f32 %v7012, %v6455
        %v7014 = vadd.f32 %v7013, %v6457
        %v7015 = vadd.f32 %v7014, %v6459
        %v7016 = vadd.f32 %v7015, %v6461
        %v7017 = vadd.f32 %v7016, %v6463
        %v7018 = vadd.f32 %v7017, %v6465
        %v7019 = vadd.f32 %v7018, %v6467
        %v7020 = vadd.f32 %v7019, %v6469
        %v7021 = vadd.f32 %v7020, %v6471
        %v7022 = vadd.f32 %v7021, %v6473
        %v7023 = vadd.f32 %v7022, %v6475
        %v7024 = vadd.f32 %v7023, %v6477
        %v7025 = vadd.f32 %v7024, %v6479
        %v7026 = vadd.f32 %v7025, %v6481
        %v7027 = vadd.f32 %v7026, %v6483
        %v7028 = vadd.f32 %v7027, %v6485
        %v7029 = vadd.f32 %v7028, %v6487
        %v7030 = vadd.f32 %v7029, %v6489
        %v7031 = vadd.f32 %v7030, %v6491
        %v7032 = vadd.f32 %v7031, %v6493
        %v7033 = vadd.f32 %v7032, %v6495
        %v7034 = vadd.f32 %v7033, %v6497
        %v7035 = vadd.f32 %v7034, %v6499
        %v7036 = vadd.f32 %v7035, %v6501
        %v7037 = vadd.f32 %v7036, %v6503
        %v7038 = vadd.f32 %v7037, %v6505
        %v7039 = vadd.f32 %v7038, %v6507
        %v7040 = vadd.f32 %v7039, %v6509
        %v7041 = vadd.f32 %v7040, %v6511
        %v7042 = vadd.f32 %v7041, %v6513
        %v7043 = vadd.f32 %v7042, %v6515
        %v7044 = vadd.f32 %v7043, %v6517
        %v7045 = vadd.f32 %v7044, %v6519
        %v7046 = vadd.f32 %v7045, %v6521
        %v7047 = vadd.f32 %v7046, %v6523
        %v7048 = vadd.f32 %v7047, %v6525
        %v7049 = vadd.f32 %v7048, %v6527
        %v7050 = vadd.f32 %v7049, %v6529
        %v7051 = vadd.f32 %v7050, %v6531
        %v7052 = vadd.f32 %v7051, %v6533
        %v7053 = vadd.f32 %v7052, %v6535
        %v7054 = vadd.f32 %v7053, %v6537
        %v7055 = vadd.f32 %v7054, %v6539
        %v7056 = vadd.f32 %v7055, %v6541
        %v7057 = vadd.f32 %v7056, %v6543
        %v7058 = vadd.f32 %v7057, %v6545
        %v7059 = vadd.f32 %v7058, %v6547
        %v7060 = vadd.f32 %v7059, %v6549
        %v7061 = vadd.f32 %v7060, %v6551
        %v7062 = vadd.f32 %v7061, %v6553
        %v7063 = vadd.f32 %v7062, %v6555
        %v7064 = vadd.f32 %v7063, %v6557
        %v7065 = vadd.f32 %v7064, %v6559
        %v7066 = vadd.f32 %v7065, %v6561
        %v7067 = vadd.f32 %v7066, %v6563
        %v7068 = vadd.f32 %v7067, %v6565
        %v7069 = vadd.f32 %v7068, %v6567
        %v7070 = vadd.f32 %v7069, %v6569
        %v7071 = vadd.f32 %v7070, %v6571
        %v7072 = vadd.f32 %v7071, %v6573
        %v7073 = vadd.f32 %v7072, %v6575
        %v7074 = vadd.f32 %v7073, %v6577
        %v7075 = vadd.f32 %v7074, %v6579
        %v7076 = vadd.f32 %v7075, %v6581
        %v7077 = vadd.f32 %v7076, %v6583
        %v7078 = vadd.f32 %v7077, %v6585
        %v7079 = vadd.f32 %v7078, %v6587
        %v7080 = vadd.f32 %v7079, %v6589
        %v7081 = vadd.f32 %v7080, %v6591
        %v7082 = vadd.f32 %v7081, %v6593
        %v7083 = vadd.f32 %v7082, %v6595
        %v7084 = vadd.f32 %v7083, %v6597
        %v7085 = vadd.f32 %v7084, %v6599
        %v7086 = vadd.f32 %v7085, %v6601
        %v7087 = vadd.f32 %v7086, %v6603
        %v7088 = vadd.f32 %v7087, %v6605
        %v7089 = vadd.f32 %v7088, %v6607
        %v7090 = vadd.f32 %v7089, %v6609
        %v7091 = vadd.f32 %v7090, %v6611
        %v7092 = vadd.f32 %v7091, %v6613
        %v7093 = vadd.f32 %v7092, %v6615
        %v7094 = vadd.f32 %v7093, %v6617
        %v7095 = vadd.f32 %v7094, %v6619
        %v7096 = vadd.f32 %v7095, %v6621
        %v7097 = vadd.f32 %v7096, %v6623
        %v7098 = vadd.f32 %v7097, %v6625
        %v7099 = vadd.f32 %v7098, %v6627
        %v7100 = vadd.f32 %v7099, %v6629
        %v7101 = vadd.f32 %v7100, %v6631
        %v7102 = vadd.f32 %v7101, %v6633
        %v7103 = vadd.f32 %v7102, %v6635
        %v7104 = vadd.f32 %v7103, %v6637
        %v7105 = vadd.f32 %v7104, %v6639
        %v7106 = vadd.f32 %v7105, %v6641
        %v7107 = vadd.f32 %v7106, %v6643
        %v7108 = vadd.f32 %v7107, %v6645
        %v7109 = vadd.f32 %v7108, %v6647
        %v7110 = vadd.f32 %v7109, %v6649
        %v7111 = vadd.f32 %v7110, %v6651
        %v7112 = vadd.f32 %v7111, %v6653
        %v7113 = vadd.f32 %v7112, %v6655
        %v7114 = vadd.f32 %v7113, %v6657
        %v7115 = vadd.f32 %v7114, %v6659
        %v7116 = vadd.f32 %v7115, %v6661
        %v7117 = vadd.f32 %v7116, %v6663
        %v7118 = vadd.f32 %v7117, %v6665
        %v7119 = vadd.f32 %v7118, %v6667
        %v7120 = vadd.f32 %v7119, %v6669
        %v7121 = vadd.f32 %v7120, %v6671
        %v7122 = vadd.f32 %v7121, %v6673
        %v7123 = vadd.f32 %v7122, %v6675
        %v7124 = vadd.f32 %v7123, %v6677
        %v7125 = vadd.f32 %v7124, %v6679
        %v7126 = vadd.f32 %v7125, %v6681
        %v7127 = vadd.f32 %v7126, %v6683
        %v7128 = vadd.f32 %v7127, %v6685
        %v7129 = vadd.f32 %v7128, %v6687
        %v7130 = vadd.f32 %v7129, %v6689
        %v7131 = vadd.f32 %v7130, %v6691
        %v7132 = vadd.f32 %v7131, %v6693
        %v7133 = vadd.f32 %v7132, %v6695
        %v7134 = vadd.f32 %v7133, %v6697
        %v7135 = vadd.f32 %v7134, %v6699
        %v7136 = vadd.f32 %v7135, %v6701
        %v7137 = vadd.f32 %v7136, %v6703
        %v7138 = vadd.f32 %v7137, %v6705
        %v7139 = vadd.f32 %v7138, %v6707
        %v7140 = vadd.f32 %v7139, %v6709
        %v7141 = vadd.f32 %v7140, %v6711
        %v7142 = vadd.f32 %v7141, %v6713
        %v7143 = vadd.f32 %v7142, %v6715
        %v7144 = vadd.f32 %v7143, %v6717
        %v7145 = vadd.f32 %v7144, %v6719
        %v7146 = vadd.f32 %v7145, %v6721
        %v7147 = vadd.f32 %v7146, %v6723
        %v7148 = vadd.f32 %v7147, %v6725
        %v7149 = vadd.f32 %v7148, %v6727
        %v7150 = vadd.f32 %v7149, %v6729
        %v7151 = vadd.f32 %v7150, %v6731
        %v7152 = vadd.f32 %v7151, %v6733
        %v7153 = vadd.f32 %v7152, %v6735
        %v7154 = vadd.f32 %v7153, %v6737
        %v7155 = vadd.f32 %v7154, %v6739
        %v7156 = vadd.f32 %v7155, %v6741
        %v7157 = vadd.f32 %v7156, %v6743
        %v7158 = vadd.f32 %v7157, %v6745
        %v7159 = vadd.f32 %v7158, %v6747
        %v7160 = vadd.f32 %v7159, %v6749
        %v7161 = vadd.f32 %v7160, %v6751
        %v7162 = vadd.f32 %v7161, %v6753
        %v7163 = vadd.f32 %v7162, %v6755
        %v7164 = vadd.f32 %v7163, %v6757
        %v7165 = vadd.f32 %v7164, %v6759
        %v7166 = vadd.f32 %v7165, %v6761
        %v7167 = vadd.f32 %v7166, %v6763
        %v7168 = vadd.f32 %v7167, %v6765
        %v7169 = vadd.f32 %v7168, %v6767
        %v7170 = vadd.f32 %v7169, %v6769
        %v7171 = vadd.f32 %v7170, %v6771
        %v7172 = vadd.f32 %v7171, %v6773
        %7173 = vadd.xlane.f32.xlu0 %v7172
        %v7174 = vpop.xlane.xlu0 %7173
        %v7175 = vrot.slane %v7174, 4
        %v7176 = vadd.f32 %v7174, %v7175
        %v7177 = vrot.slane %v7176, 2
        %v7178 = vadd.f32 %v7176, %v7177
        %v7179 = vrot.slane %v7178, 1
        %v7180 = vadd.f32 %v7178, %v7179
        %s7181 = vtos %v7180
        %v7182 = vstv %s7181
        %v7183 = vlog2.pop %v7182
        %v7184 = vmul.f32 %v7183, 0.6931472
        %v7185 = vadd.f32 %v5573, %v7184
        %vm7186 = vcmp.eq.s32.totalorder %v324, 0
        %v7187 = vstv %s2894
        %v7188 = vsel %vm7186, %v7187, 0.0
        %vm7189 = vcmp.eq.s32.totalorder %v324, 1
        %v7190 = vstv %s2908
        %v7191 = vsel %vm7189, %v7190, 0.0
        %v7192 = vadd.f32 %v7188, %v7191
        %vm7193 = vcmp.eq.s32.totalorder %v324, 2
        %v7194 = vstv %s4756
        %v7195 = vsel %vm7193, %v7194, 0.0
        %v7196 = vadd.f32 %v7192, %v7195
        %vm7197 = vcmp.eq.s32.totalorder %v324, 3
        %v7198 = vstv %s5164
        %v7199 = vsel %vm7197, %v7198, 0.0
        %v7200 = vadd.f32 %v7196, %v7199
        %vm7201 = vcmp.eq.s32.totalorder %v324, 4
        %v7202 = vsel %vm7201, %v7185, 0.0
        %v7203 = vadd.f32 %v7200, %v7202
        %7204 = vst [vmem:[%s322] sm:$0xff] %v7203
        %p7205 = scmp.eq.s32.totalorder %s18, 0
        // Predicated region
        $region57: #{transgeo_loss_forward.1} parent=39 // pred_check
          %p7206 = pneg %p7205
        $region58: #{transgeo_loss_forward.1} parent=39 // pred_check_branch
          %7208 = sbr.rel (%p7206) target = $region60
        $region59: #{transgeo_loss_forward.1} parent=39 // pred_region
          %v7209 = vld [vmem:[#allocation2] sm:$0x3]
          %v7210 = vld [vmem:[#allocation4] sm:$0x3]
          %v7211 = vmul.f32 %v7209, %v7209
          %vm7212 = vcmask 254976
          %v7213 = vsel %vm7212, %v7211, 0.0
          %7214 = vadd.xlane.f32.xlu0 %v7213
          %v7215 = vpop.xlane.xlu0 %7214
          %v7216 = vadd.f32 %v7215, 1e-12
          %v7217 = vrsqrt.pop %v7216
          %v7218 = vmul.f32 %v7209, %v7217
          %v7219 = vmul.f32 %v7210, %v7210
          %v7220 = vsel %vm7212, %v7219, 0.0
          %7221 = vadd.xlane.f32.xlu0 %v7220
          %v7222 = vpop.xlane.xlu0 %7221
          %v7223 = vadd.f32 %v7222, 1e-12
          %v7224 = vrsqrt.pop %v7223
          %v7225 = vmul.f32 %v7210, %v7224
          %vm7226 = vcmask 261120
          %v7228 = vsel %vm7226, %v7218, 0
          %v7231 = vsel %vm7226, %v7225, 0
          %7233 = vmatprep.subr.mxu0 0.0
          %7234 = vmatpush1.xpose.msra.mxu0 %v7231
          %7235 = vmatprep.subr.mxu0 0.0
          %7236 = vmatpush1.xpose.msra.mxu0 0.0
          %7237 = vmatprep.subr.mxu0 0.0
          %7238 = vmatpush1.xpose.msra.mxu0 0.0
          %7239 = vmatprep.subr.mxu0 0.0
          %7240 = vmatpush1.xpose.msra.mxu0 0.0
          %7241 = vmatprep.subr.mxu0 0.0
          %7242 = vmatpush1.xpose.msra.mxu0 0.0
          %7243 = vmatprep.subr.mxu0 0.0
          %7244 = vmatpush1.xpose.msra.mxu0 0.0
          %7245 = vmatprep.subr.mxu0 0.0
          %7246 = vmatpush1.xpose.msra.mxu0 0.0
          %7247 = vmatprep.subr.mxu0 0.0
          %7248 = vmatpush1.xpose.msra.mxu0 0.0
          %7249 = vmatprep.subr.mxu0 0.0
          %7250 = vmatpush1.xpose.msra.mxu0 0.0
          %7251 = vmatprep.subr.mxu0 0.0
          %7252 = vmatpush1.xpose.msra.mxu0 0.0
          %7253 = vmatprep.subr.mxu0 0.0
          %7254 = vmatpush1.xpose.msra.mxu0 0.0
          %7255 = vmatprep.subr.mxu0 0.0
          %7256 = vmatpush1.xpose.msra.mxu0 0.0
          %7257 = vmatprep.subr.mxu0 0.0
          %7258 = vmatpush1.xpose.msra.mxu0 0.0
          %7259 = vmatprep.subr.mxu0 0.0
          %7260 = vmatpush1.xpose.msra.mxu0 0.0
          %7261 = vmatprep.subr.mxu0 0.0
          %7262 = vmatpush1.xpose.msra.mxu0 0.0
          %7263 = vmatprep.subr.mxu0 0.0
          %7264 = vmatpush1.xpose.msra.mxu0 0.0
          %7265 = vmatprep.subr.mxu0 0.0
          %7266 = vmatpush1.xpose.msra.mxu0 0.0
          %7267 = vmatprep.subr.mxu0 0.0
          %7268 = vmatpush1.xpose.msra.mxu0 0.0
          %7269 = vmatprep.subr.mxu0 0.0
          %7270 = vmatpush1.xpose.msra.mxu0 0.0
          %7271 = vmatprep.subr.mxu0 0.0
          %7272 = vmatpush1.xpose.msra.mxu0 0.0
          %7273 = vmatprep.subr.mxu0 0.0
          %7274 = vmatpush1.xpose.msra.mxu0 0.0
          %7275 = vmatprep.subr.mxu0 0.0
          %7276 = vmatpush1.xpose.msra.mxu0 0.0
          %7277 = vmatprep.subr.mxu0 0.0
          %7278 = vmatpush1.xpose.msra.mxu0 0.0
          %7279 = vmatprep.subr.mxu0 0.0
          %7280 = vmatpush1.xpose.msra.mxu0 0.0
          %7281 = vmatprep.subr.mxu0 0.0
          %7282 = vmatpush1.xpose.msra.mxu0 0.0
          %7283 = vmatprep.subr.mxu0 0.0
          %7284 = vmatpush1.xpose.msra.mxu0 0.0
          %7285 = vmatprep.subr.mxu0 0.0
          %7286 = vmatpush1.xpose.msra.mxu0 0.0
          %7287 = vmatprep.subr.mxu0 0.0
          %7288 = vmatpush1.xpose.msra.mxu0 0.0
          %7289 = vmatprep.subr.mxu0 0.0
          %7290 = vmatpush1.xpose.msra.mxu0 0.0
          %7291 = vmatprep.subr.mxu0 0.0
          %7292 = vmatpush1.xpose.msra.mxu0 0.0
          %7293 = vmatprep.subr.mxu0 0.0
          %7294 = vmatpush1.xpose.msra.mxu0 0.0
          %7295 = vmatprep.subr.mxu0 0.0
          %7296 = vmatpush1.xpose.msra.mxu0 0.0
          %7297 = vmatprep.mubr.f32.mxu0 0.0
          %7298 = vmatmul.mubr.f32.gmra.mrb[0].mxu0 %v7228
          %v7299 = vpop.f32.mrb[0].mxu0
          %v7300 = vadd.f32 0.0, %v7299
          %v7301 = vpop.f32.mrb[0].mxu0
          %7302 = vdwg.mxu0
          %v7303 = vlaneseq
          %v7304 = vshrl.u32 %v7303, 7
          %vm7305 = vcmp.eq.s32.totalorder %v7304, %v324
          %v7306 = vsel %vm7305, %v7300, 0.0
          %vm7307 = vcmask 9216
          %v7308 = vsel %vm7307, %v7306, 0.0
          %7309 = vadd.xlane.f32.xlu0 %v7308
          %v7310 = vpop.xlane.xlu0 %7309
          %v7311 = vrot.slane %v7308, 4
          %v7312 = vadd.f32 %v7308, %v7311
          %v7313 = vrot.slane %v7312, 2
          %v7314 = vadd.f32 %v7312, %v7313
          %v7315 = vrot.slane %v7314, 1
          %v7316 = vadd.f32 %v7314, %v7315
          %v7317 = vadd.f32 %v7300, 1.0
          %v7318 = vsub.f32 %v7317, %v7310
          %v7319 = vmax.f32 %v7318, 0.0
          %v7320 = vsel %vm7305, 0.0, %v7319
          %v7321 = vsel %vm7307, %v7320, 0.0
          %7322 = vadd.xlane.f32.xlu0 %v7321
          %v7323 = vpop.xlane.xlu0 %7322
          %v7324 = vrot.slane %v7323, 4
          %v7325 = vadd.f32 %v7323, %v7324
          %v7326 = vrot.slane %v7325, 2
          %v7327 = vadd.f32 %v7325, %v7326
          %v7328 = vrot.slane %v7327, 1
          %v7329 = vadd.f32 %v7327, %v7328
          %s7330 = vtos %v7329
          %v7331 = vstv %s7330
          %v7332 = vrcp.pop 4.0
          %v7333 = vmul.f32 %v7331, %v7332
          %v7334 = vsub.f32 %v7317, %v7316
          %v7335 = vmax.f32 %v7334, 0.0
          %v7336 = vsel %vm7305, 0.0, %v7335
          %v7337 = vsel %vm7307, %v7336, 0.0
          %7338 = vadd.xlane.f32.xlu0 %v7337
          %v7339 = vpop.xlane.xlu0 %7338
          %v7340 = vrot.slane %v7339, 4
          %v7341 = vadd.f32 %v7339, %v7340
          %v7342 = vrot.slane %v7341, 2
          %v7343 = vadd.f32 %v7341, %v7342
          %v7344 = vrot.slane %v7343, 1
          %v7345 = vadd.f32 %v7343, %v7344
          %s7346 = vtos %v7345
          %v7347 = vstv %s7346
          %v7348 = vmul.f32 %v7347, %v7332
          %v7349 = vld [vmem:[%s322] sm:$0xff]
          %vm7350 = vcmp.eq.s32.totalorder %v324, 5
          %v7351 = vadd.f32 %v7333, %v7348
          %v7352 = vsel %vm7350, %v7351, 0.0
          %v7353 = vadd.f32 %v7349, %v7352
          %7354 = vst [vmem:[%s322] sm:$0xff] %v7353
        $region60: #{transgeo_loss_forward.1} parent=39 // pred_fallthru
          _
        %p7355 = scmp.lt.s32.totalorder %s18, 1
        %s7356 = scalar_select %p7355, %s18, 1
        %s7357 = smul.addr %s7356, 8
        %s7358 = scalar_lea.vmem %s5, %s7357
        // Predicated region
        $region61: #{transgeo_loss_forward.1} parent=39 // pred_check
          %p7359 = pneg %p156
        $region62: #{transgeo_loss_forward.1} parent=39 // pred_check_branch
          %7361 = sbr.rel (%p7359) target = $region64
        $region63: #{transgeo_loss_forward.1} parent=39 // pred_region
          _
        $region64: #{transgeo_loss_forward.1} parent=39 // pred_fallthru
          _
      $region40: #{transgeo_loss_forward.1} parent=5 // pred_fallthru
        _
      %p7362 = scmp.le.s32.totalorder 2, %s13
      // Predicated region
      $region65: #{transgeo_loss_forward.1} parent=5 // pred_check
        %p7363 = pneg %p7362
      $region66: #{transgeo_loss_forward.1} parent=5 // pred_check_branch
        %7365 = sbr.rel (%p7363) target = $region68
      $region67: #{transgeo_loss_forward.1} parent=5 // pred_region
        %s7366 = ssub.s32 %s13, 2
        // Predicated region
        $region69: #{transgeo_loss_forward.1} parent=67 // pred_check
          %p7367 = pneg %p162
        $region70: #{transgeo_loss_forward.1} parent=67 // pred_check_branch
          %7369 = sbr.rel (%p7367) target = $region72
        $region71: #{transgeo_loss_forward.1} parent=67 // pred_region
          %p7370 = scmp.lt.s32.totalorder %s19, 1
          %s7371 = scalar_select %p7370, %s19, 1
          %s7372 = smul.addr %s7371, 8
          %s7373 = scalar_lea.vmem %s5, %s7372
        $region72: #{transgeo_loss_forward.1} parent=67 // pred_fallthru
          _
      $region68: #{transgeo_loss_forward.1} parent=5 // pred_fallthru
        _
    $region6: #{transgeo_loss_forward.1} parent=1 // loop_footer
      %s17 = sadd.s32 1, %s13
    $region7: #{transgeo_loss_forward.1} parent=1 // loop_footer_branch
      %12 = sbr.rel target = $region3
    $region8: #{transgeo_loss_forward.1} parent=1 // loop_exit
      _
    %7374 = vsyncpa [#allocation3], 1
    %s7375 = scalar_lea.sflag [#allocation3], 1
    %7376 = vsyncpa %s7375, 1
    %7377 = vsyncpa [#allocation5], 1

</llo_original>
